<compile_context>
chip_gen: v7x
topology: tpu7x:2x2x1
jax: 0.10.0
libtpu: 0.0.40
codegen_flags: <defaults>
</compile_context>

<pallas_src>
import functools

import jax
import jax.numpy as jnp
from jax.experimental import pallas as pl
from jax.experimental.pallas import tpu as pltpu

EPS = 1e-5
LANE = 128


def _round_up(x, m):
    return (x + m - 1) // m * m


# ----------------------------------------------------------------------------
# Fused Bottleneck kernel
# ----------------------------------------------------------------------------
def _bottleneck_kernel(x_ref, w1s_ref, b1_ref, w2_ref, b2_ref, w3_ref,
                       b3s_ref, o_ref, h1s_ref, *, wp, p_img, h_img, w_img,
                       guard):
    """One tile = `tb` whole images on the zero-padded (Hp, Wp) grid, flattened
    to (rt, C) rows.  conv1+bn1+relu -> conv2(3x3)+bn2+relu -> conv3+bn3 +
    shortcut(1x1 conv+bn) + residual add + relu, all fused in VMEM."""
    rt = x_ref.shape[0]          # rows in this tile (= tb * Hp * Wp)
    cp = b1_ref.shape[1]         # padded `planes`

    xb = x_ref[...]              # bf16 (cast once in the wrapper)

    # ---- conv1 (1x1) and shortcut (1x1) fused into one wide-N MXU matmul ---
    fused = jnp.dot(xb, w1s_ref[...], preferred_element_type=jnp.float32)
    h1 = fused[:, :cp]           # conv1 pre-activation
    sc = fused[:, cp:]           # shortcut branch (its BN bias folded into b3s)

    # ---- spatial-validity mask (zero conv2's halo rows), computed in-kernel.
    # f32 floor-division (exact for these magnitudes) avoids vector int div.
    r = jax.lax.broadcasted_iota(jnp.int32, (rt, 1), 0).astype(jnp.float32)
    p = r - jnp.floor((r + 0.5) * (1.0 / p_img)) * p_img   # row within image
    h = jnp.floor((p + 0.5) * (1.0 / wp))                  # padded-grid row
    w = p - h * wp                                         # padded-grid col
    valid = (h >= 1.0) & (h <= float(h_img)) & (w >= 1.0) & (w <= float(w_img))
    mask = jnp.where(valid, 1.0, 0.0).astype(jnp.float32)

    # ---- bn1 + relu + mask, cast to bf16 exactly once while staging ---------
    h1a = (jnp.maximum(h1 + b1_ref[...], 0.0) * mask).astype(jnp.bfloat16)

    # Zero the halo-guard rows every step: with a megacore-parallel grid the
    # scratch is per-core and program_id 0 may never run on this core, so a
    # pl.when(pid == 0) init would be unsafe.  Cost is ~2*guard rows only.
    zg = jnp.zeros((guard, cp), jnp.bfloat16)
    h1s_ref[0:guard, :] = zg
    h1s_ref[guard + rt:2 * guard + rt, :] = zg
    h1s_ref[guard:guard + rt, :] = h1a

    # ---- conv2 (3x3, pad=1): 9 row-shifted MXU matmuls accumulated in f32 --
    # On the flattened zero-guarded (Hp, Wp) grid the tap (di, dj) is the
    # constant row offset (di-1)*Wp + (dj-1).  Wp % 8 == 0 makes the +/-Wp
    # taps sublane-aligned.
    # TODO(synk): optionally stage two +/-1 pre-shifted copies of h1a so all
    # nine tap reads are sublane-aligned (trades 2 shifted stores for 6
    # shifted reads) - mostly relevant on v6e/v7x.
    acc = jnp.zeros((rt, cp), jnp.float32)
    for t in range(9):
        di, dj = divmod(t, 3)
        start = guard + (di - 1) * wp + (dj - 1)            # static, >= 0
        lhs = h1s_ref[start:start + rt, :]                  # bf16 slab
        acc = acc + jnp.dot(lhs, w2_ref[t * cp:(t + 1) * cp, :],
                            preferred_element_type=jnp.float32)
    h2 = jnp.maximum(acc + b2_ref[...], 0.0).astype(jnp.bfloat16)

    # ---- conv3 (1x1) + residual + folded (bn3 + shortcut-bn) bias + relu ----
    y = jnp.dot(h2, w3_ref[...], preferred_element_type=jnp.float32)
    o_ref[...] = jnp.maximum(y + sc + b3s_ref[...], 0.0).astype(o_ref.dtype)


# ----------------------------------------------------------------------------
# Parameter preparation: fold BN, fuse conv1+shortcut weights, pad channels to
# lane-dense widths, cast matmul weights to bf16.
# ----------------------------------------------------------------------------
def prepare_params(params):
    cin, planes = params["w1"].shape
    cout = params["w3"].shape[1]
    cin_p = _round_up(cin, LANE)
    cp = _round_up(planes, LANE)
    cout_p = _round_up(cout, LANE)

    def fold(gamma, beta, mean, var):
        s = gamma / jnp.sqrt(var + EPS)
        return s, beta - mean * s

    s1, b1 = fold(*params["bn1"])
    s2, b2 = fold(*params["bn2"])
    s3, b3 = fold(*params["bn3"])
    ss, bs = fold(*params["bns"])

    def pad_w(w, rows, cols):
        z = jnp.zeros((rows, cols), jnp.float32)
        return z.at[:w.shape[0], :w.shape[1]].set(w)

    def pad_b(b, cols):
        return jnp.zeros((1, cols), jnp.float32).at[0, :b.shape[0]].set(b)

    # conv1 and the shortcut share the same LHS -> fuse along the MXU N dim.
    w1f = pad_w(params["w1"] * s1[None, :], cin_p, cp)
    wsf = pad_w(params["ws"] * ss[None, :], cin_p, cout_p)
    w1s = jnp.concatenate([w1f, wsf], axis=1).astype(jnp.bfloat16)

    w3 = pad_w(params["w3"] * s3[None, :], cp, cout_p).astype(jnp.bfloat16)

    w2f = params["w2"] * s2[None, None, None, :]          # (3, 3, planes, planes)
    w2p = jnp.zeros((3, 3, cp, cp), jnp.float32)
    w2p = w2p.at[:, :, :planes, :planes].set(w2f)
    w2 = w2p.reshape(9 * cp, cp).astype(jnp.bfloat16)

    return {
        "w1s": w1s, "b1": pad_b(b1, cp),
        "w2": w2, "b2": pad_b(b2, cp),
        "w3": w3, "b3s": pad_b(b3, cout_p) + pad_b(bs, cout_p),
        "cin": cin, "planes": planes, "cout": cout,
        "cin_p": cin_p, "cp": cp, "cout_p": cout_p,
    }


# ----------------------------------------------------------------------------
# Forward wrapper (spatial pad / flatten / un-pad are cheap XLA glue)
# ----------------------------------------------------------------------------
def bottleneck_forward(x_nhwc, prepared, *, images_per_tile=None):
    """x_nhwc: (N, H, W, Cin) f32 -> (N, H, W, 4*planes) f32 (stride=1 block)."""
    N, H, W, Cin = x_nhwc.shape
    assert Cin == prepared["cin"]
    cin_p, cp, cout_p = prepared["cin_p"], prepared["cp"], prepared["cout_p"]
    cout = prepared["cout"]

    # Spatial pad of 1 (conv2's zero padding); Wp is rounded to a multiple of
    # 8 so each flattened image plane and the +/-Wp conv2 taps stay
    # sublane-aligned.
    Hp = H + 2
    Wp = _round_up(W + 2, 8)
    P = Hp * Wp
    guard = Wp + 8                       # zero halo rows each side (mult. of 8)

    # Rough per-row VMEM cost (double-buffered bf16 in, f32 out, scratch and
    # f32 live intermediates) -> used both to pick the tile and the vmem cap.
    bytes_per_row = (2 * cin_p * 2 + 2 * cout_p * 4 + cp * 2
                     + (cp + cout_p) * 4 + cp * 4 + cout_p * 4)

    if images_per_tile is None:
        # Amortize the ~0.35us/step overhead, stay inside a VMEM row budget,
        # and keep >= 2 grid steps so both v7x TensorCores get work.
        row_budget = max(P, (28 * 2 ** 20) // bytes_per_row)
        tb = 1
        for cand in range(1, N + 1):
            if N % cand or cand * P > row_budget:
                continue
            if N >= 2 and N // cand < 2:
                continue
            tb = cand
    else:
        tb = images_per_tile if (images_per_tile > 0
                                 and N % images_per_tile == 0) else 1
    rt = tb * P

    # bf16 input: halves the dominant HBM read and the buffered input block.
    x_pad = jnp.pad(
        x_nhwc,
        ((0, 0), (1, Hp - H - 1), (1, Wp - W - 1), (0, cin_p - Cin)),
    ).astype(jnp.bfloat16)
    x_flat = x_pad.reshape(N * P, cin_p)

    kernel = functools.partial(_bottleneck_kernel, wp=Wp, p_img=P,
                               h_img=H, w_img=W, guard=guard)
    const = lambda i: (0, 0)

    wbytes = sum(int(prepared[k].size) * prepared[k].dtype.itemsize
                 for k in ("w1s", "b1", "w2", "b2", "w3", "b3s"))
    est = rt * bytes_per_row + 2 * guard * cp * 2 + 2 * wbytes
    vmem_limit = int(min(max(est * 5 // 4, 32 * 1024 * 1024),
                         64 * 1024 * 1024))

    out_flat = pl.pallas_call(
        kernel,
        out_shape=jax.ShapeDtypeStruct((N * P, cout_p), jnp.float32),
        grid_spec=pltpu.PrefetchScalarGridSpec(
            num_scalar_prefetch=0,
            grid=(N // tb,),
            in_specs=[
                pl.BlockSpec((rt, cin_p), lambda i: (i, 0)),
                pl.BlockSpec(prepared["w1s"].shape, const),
                pl.BlockSpec(prepared["b1"].shape, const),
                pl.BlockSpec(prepared["w2"].shape, const),
                pl.BlockSpec(prepared["b2"].shape, const),
                pl.BlockSpec(prepared["w3"].shape, const),
                pl.BlockSpec(prepared["b3s"].shape, const),
            ],
            out_specs=pl.BlockSpec((rt, cout_p), lambda i: (i, 0)),
            scratch_shapes=[pltpu.VMEM((rt + 2 * guard, cp), jnp.bfloat16)],
        ),
        compiler_params=pltpu.CompilerParams(
            dimension_semantics=("parallel",),
            vmem_limit_bytes=vmem_limit),
    )(x_flat, prepared["w1s"], prepared["b1"], prepared["w2"],
      prepared["b2"], prepared["w3"], prepared["b3s"])

    out = out_flat.reshape(N, Hp, Wp, cout_p)[:, 1:H + 1, 1:W + 1, :cout]
    return out


# ----------------------------------------------------------------------------
# Deterministic parameter init (shapes follow Bottleneck.__init__)
# ----------------------------------------------------------------------------
def init_params(key, in_planes, planes):
    """Raw params in matmul-ready layout: 1x1 conv -> (Cin, Cout); 3x3 conv ->
    (kh, kw, Cin, Cout).  NOTE: PyTorch stores conv weights as
    (Cout, Cin, kh, kw); importing real torch weights needs a transpose."""
    exp = 4
    ks = jax.random.split(key, 8)

    def bn_params(k, c):
        k1, k2, k3, k4 = jax.random.split(k, 4)
        gamma = jax.random.uniform(k1, (c,), jnp.float32, 0.5, 1.5)
        beta = 0.1 * jax.random.normal(k2, (c,), jnp.float32)
        mean = 0.1 * jax.random.normal(k3, (c,), jnp.float32)
        var = jax.random.uniform(k4, (c,), jnp.float32, 0.5, 1.5)
        return (gamma, beta, mean, var)

    w1 = 0.1 * jax.random.normal(ks[0], (in_planes, planes), jnp.float32)
    w2 = 0.1 * jax.random.normal(ks[1], (3, 3, planes, planes), jnp.float32)
    w3 = 0.1 * jax.random.normal(ks[2], (planes, exp * planes), jnp.float32)
    ws = 0.1 * jax.random.normal(ks[3], (in_planes, exp * planes), jnp.float32)

    return {
        "w1": w1, "bn1": bn_params(ks[4], planes),
        "w2": w2, "bn2": bn_params(ks[5], planes),
        "w3": w3, "bn3": bn_params(ks[6], exp * planes),
        "ws": ws, "bns": bn_params(ks[7], exp * planes),
    }


# ----------------------------------------------------------------------------
# Pure-JAX reference with matching numerics (folded BN, bf16 matmul inputs,
# f32 accumulation) for a sanity check.
# ----------------------------------------------------------------------------
def reference_forward(x_nhwc, params):
    N, H, W, Cin = x_nhwc.shape
    M = N * H * W

    def fold(gamma, beta, mean, var):
        s = gamma / jnp.sqrt(var + EPS)
        return s, beta - mean * s

    def mm(a, w):
        return jnp.dot(a.astype(jnp.bfloat16), w.astype(jnp.bfloat16),
                       preferred_element_type=jnp.float32)

    s1, b1 = fold(*params["bn1"])
    s2, b2 = fold(*params["bn2"])
    s3, b3 = fold(*params["bn3"])
    ss, bs = fold(*params["bns"])

    x2d = x_nhwc.reshape(M, Cin)
    h1 = jnp.maximum(mm(x2d, params["w1"] * s1[None, :]) + b1[None, :], 0.0)
    planes = h1.shape[1]

    h1p = jnp.pad(h1.reshape(N, H, W, planes), ((0, 0), (1, 1), (1, 1), (0, 0)))
    patches = jnp.concatenate(
        [h1p[:, i:i + H, j:j + W, :] for i in range(3) for j in range(3)],
        axis=-1).reshape(M, 9 * planes)
    w2f = (params["w2"] * s2[None, None, None, :]).reshape(9 * planes, planes)
    h2 = jnp.maximum(mm(patches, w2f) + b2[None, :], 0.0)

    y = mm(h2, params["w3"] * s3[None, :]) + b3[None, :]
    sc = mm(x2d, params["ws"] * ss[None, :]) + bs[None, :]
    out = jnp.maximum(y + sc, 0.0)
    return out.reshape(N, H, W, out.shape[-1])


if __name__ == "__main__":
    key = jax.random.PRNGKey(0)
    k_x, k_p = jax.random.split(key)

    N, H, W = 2, 16, 16
    in_planes, planes = 4, 4      # expansion*planes = 16 != in_planes -> conv shortcut

    # PyTorch input would be NCHW (2, 4, 16, 16); we use NHWC internally.
    x_nchw = jax.random.normal(k_x, (N, in_planes, H, W), jnp.float32)
    x_nhwc = jnp.transpose(x_nchw, (0, 2, 3, 1))

    params = init_params(k_p, in_planes, planes)
    prepared = prepare_params(params)
    ref = reference_forward(x_nhwc, params)

    # default (auto) tiling: one image per tile -> 2 grid steps
    out = jax.block_until_ready(bottleneck_forward(x_nhwc, prepared))
    assert out.shape == (N, H, W, 4 * planes), out.shape
    err = float(jnp.max(jnp.abs(out - ref)))
    assert jnp.allclose(out, ref, atol=1e-3, rtol=1e-3), f"mismatch: {err}"

    # regression test: multi-image tile (images stacked inside one tile)
    out2 = jax.block_until_ready(
        bottleneck_forward(x_nhwc, prepared, images_per_tile=2))
    err2 = float(jnp.max(jnp.abs(out2 - ref)))
    assert jnp.allclose(out2, ref, atol=1e-3, rtol=1e-3), f"mismatch tb=2: {err2}"

    print("KERNEL_OK")
</pallas_src>

<mosaic_0001>
module attributes {stable_mosaic.version = 11 : i64} {
  func.func @_bottleneck_kernel(%arg0: i32, %arg1: memref<432x128xbf16, #tpu.memory_space<vmem>>, %arg2: memref<128x256xbf16, #tpu.memory_space<vmem>>, %arg3: memref<1x128xf32, #tpu.memory_space<vmem>>, %arg4: memref<1152x128xbf16, #tpu.memory_space<vmem>>, %arg5: memref<1x128xf32, #tpu.memory_space<vmem>>, %arg6: memref<128x128xbf16, #tpu.memory_space<vmem>>, %arg7: memref<1x128xf32, #tpu.memory_space<vmem>>, %arg8: memref<432x128xf32, #tpu.memory_space<vmem>>, %arg9: memref<496x128xbf16, #tpu.memory_space<vmem>>) attributes {dimension_semantics = [#tpu.dimension_semantics<parallel>], iteration_bounds = array<i64: 2>, scalar_prefetch = 0 : i64, scratch_operands = 1 : i64, tpu.core_type = #tpu.core_type<tc>, window_params = [{transform_indices = @transform_0, window_bounds = array<i64: 432, 128>}, {pipeline_mode = #tpu.pipeline_mode<synchronous>, transform_indices = @transform_1, window_bounds = array<i64: 128, 256>}, {pipeline_mode = #tpu.pipeline_mode<synchronous>, transform_indices = @transform_2, window_bounds = array<i64: 1, 128>}, {pipeline_mode = #tpu.pipeline_mode<synchronous>, transform_indices = @transform_3, window_bounds = array<i64: 1152, 128>}, {pipeline_mode = #tpu.pipeline_mode<synchronous>, transform_indices = @transform_4, window_bounds = array<i64: 1, 128>}, {pipeline_mode = #tpu.pipeline_mode<synchronous>, transform_indices = @transform_5, window_bounds = array<i64: 128, 128>}, {pipeline_mode = #tpu.pipeline_mode<synchronous>, transform_indices = @transform_6, window_bounds = array<i64: 1, 128>}, {transform_indices = @transform_7, window_bounds = array<i64: 432, 128>}]} {
    %c0 = arith.constant 0 : index
    %c0_0 = arith.constant 0 : index
    %0 = vector.load %arg1[%c0, %c0_0] : memref<432x128xbf16, #tpu.memory_space<vmem>>, vector<432x128xbf16>
    %c0_1 = arith.constant 0 : index
    %c0_2 = arith.constant 0 : index
    %1 = vector.load %arg2[%c0_1, %c0_2] : memref<128x256xbf16, #tpu.memory_space<vmem>>, vector<128x256xbf16>
    %cst = arith.constant dense<0.000000e+00> : vector<432x256xf32>
    %2 = tpu.matmul %0, %1, %cst {dimension_numbers = #tpu.dot_dimension_numbers<[1], [0], [0], [1], [0, 0, 1, 1], [], []>} : vector<432x128xbf16>, vector<128x256xbf16>, vector<432x256xf32> -> vector<432x256xf32>
    %3 = vector.extract_strided_slice %2 {offsets = [0, 0], sizes = [432, 128], strides = [1, 1]} : vector<432x256xf32> to vector<432x128xf32>
    %4 = vector.extract_strided_slice %2 {offsets = [0, 128], sizes = [432, 128], strides = [1, 1]} : vector<432x256xf32> to vector<432x128xf32>
    %5 = tpu.iota {dimensions = array<i32: 0>} : vector<432x1xi32>
    %6 = arith.sitofp %5 : vector<432x1xi32> to vector<432x1xf32>
    %cst_3 = arith.constant 5.000000e-01 : f32
    %7 = vector.broadcast %cst_3 : f32 to vector<432x1xf32>
    %8 = arith.addf %6, %7 : vector<432x1xf32>
    %cst_4 = arith.constant 0.00231481483 : f32
    %9 = vector.broadcast %cst_4 : f32 to vector<432x1xf32>
    %10 = arith.mulf %8, %9 : vector<432x1xf32>
    %11 = math.floor %10 : vector<432x1xf32>
    %cst_5 = arith.constant 4.320000e+02 : f32
    %12 = vector.broadcast %cst_5 : f32 to vector<432x1xf32>
    %13 = arith.mulf %11, %12 : vector<432x1xf32>
    %14 = arith.subf %6, %13 : vector<432x1xf32>
    %cst_6 = arith.constant 5.000000e-01 : f32
    %15 = vector.broadcast %cst_6 : f32 to vector<432x1xf32>
    %16 = arith.addf %14, %15 : vector<432x1xf32>
    %cst_7 = arith.constant 0.0416666679 : f32
    %17 = vector.broadcast %cst_7 : f32 to vector<432x1xf32>
    %18 = arith.mulf %16, %17 : vector<432x1xf32>
    %19 = math.floor %18 : vector<432x1xf32>
    %cst_8 = arith.constant 2.400000e+01 : f32
    %20 = vector.broadcast %cst_8 : f32 to vector<432x1xf32>
    %21 = arith.mulf %19, %20 : vector<432x1xf32>
    %22 = arith.subf %14, %21 : vector<432x1xf32>
    %cst_9 = arith.constant 1.000000e+00 : f32
    %23 = vector.broadcast %cst_9 : f32 to vector<432x1xf32>
    %24 = arith.cmpf oge, %19, %23 : vector<432x1xf32>
    %cst_10 = arith.constant 1.600000e+01 : f32
    %25 = vector.broadcast %cst_10 : f32 to vector<432x1xf32>
    %26 = arith.cmpf ole, %19, %25 : vector<432x1xf32>
    %27 = arith.andi %24, %26 : vector<432x1xi1>
    %cst_11 = arith.constant 1.000000e+00 : f32
    %28 = vector.broadcast %cst_11 : f32 to vector<432x1xf32>
    %29 = arith.cmpf oge, %22, %28 : vector<432x1xf32>
    %30 = arith.andi %27, %29 : vector<432x1xi1>
    %cst_12 = arith.constant 1.600000e+01 : f32
    %31 = vector.broadcast %cst_12 : f32 to vector<432x1xf32>
    %32 = arith.cmpf ole, %22, %31 : vector<432x1xf32>
    %33 = arith.andi %30, %32 : vector<432x1xi1>
    %cst_13 = arith.constant 1.000000e+00 : f32
    %cst_14 = arith.constant 0.000000e+00 : f32
    %34 = vector.broadcast %cst_13 : f32 to vector<432x1xf32>
    %35 = vector.broadcast %cst_14 : f32 to vector<432x1xf32>
    %36 = arith.select %33, %34, %35 : vector<432x1xi1>, vector<432x1xf32>
    %c0_15 = arith.constant 0 : index
    %c0_16 = arith.constant 0 : index
    %37 = vector.load %arg3[%c0_15, %c0_16] : memref<1x128xf32, #tpu.memory_space<vmem>>, vector<1x128xf32>
    %38 = vector.broadcast %37 : vector<1x128xf32> to vector<432x128xf32>
    %39 = arith.addf %3, %38 : vector<432x128xf32>
    %cst_17 = arith.constant 0.000000e+00 : f32
    %40 = vector.broadcast %cst_17 : f32 to vector<432x128xf32>
    %41 = arith.maximumf %39, %40 : vector<432x128xf32>
    %42 = vector.broadcast %36 : vector<432x1xf32> to vector<432x128xf32>
    %43 = arith.mulf %41, %42 : vector<432x128xf32>
    %44 = arith.truncf %43 : vector<432x128xf32> to vector<432x128xbf16>
    %cst_18 = arith.constant 0.000000e+00 : bf16
    %45 = vector.broadcast %cst_18 : bf16 to vector<32x128xbf16>
    %c0_19 = arith.constant 0 : index
    %c0_20 = arith.constant 0 : index
    %46 = vector.load %arg9[%c0_19, %c0_20] : memref<496x128xbf16, #tpu.memory_space<vmem>>, vector<32x128xbf16>
    tpu.vector_store %arg9[%c0_19, %c0_20], %45 {strides = array<i32>} : memref<496x128xbf16, #tpu.memory_space<vmem>>, vector<32x128xbf16>,
    %c464 = arith.constant 464 : index
    %c0_21 = arith.constant 0 : index
    %47 = vector.load %arg9[%c464, %c0_21] : memref<496x128xbf16, #tpu.memory_space<vmem>>, vector<32x128xbf16>
    tpu.vector_store %arg9[%c464, %c0_21], %45 {strides = array<i32>} : memref<496x128xbf16, #tpu.memory_space<vmem>>, vector<32x128xbf16>,
    %c32 = arith.constant 32 : index
    %c0_22 = arith.constant 0 : index
    %48 = vector.load %arg9[%c32, %c0_22] : memref<496x128xbf16, #tpu.memory_space<vmem>>, vector<432x128xbf16>
    tpu.vector_store %arg9[%c32, %c0_22], %44 {strides = array<i32>} : memref<496x128xbf16, #tpu.memory_space<vmem>>, vector<432x128xbf16>,
    %cst_23 = arith.constant 0.000000e+00 : f32
    %49 = vector.broadcast %cst_23 : f32 to vector<432x128xf32>
    %c7 = arith.constant 7 : index
    %c0_24 = arith.constant 0 : index
    %50 = vector.load %arg9[%c7, %c0_24] : memref<496x128xbf16, #tpu.memory_space<vmem>>, vector<432x128xbf16>
    %c0_25 = arith.constant 0 : index
    %c0_26 = arith.constant 0 : index
    %51 = vector.load %arg4[%c0_25, %c0_26] : memref<1152x128xbf16, #tpu.memory_space<vmem>>, vector<128x128xbf16>
    %cst_27 = arith.constant dense<0.000000e+00> : vector<432x128xf32>
    %52 = tpu.matmul %50, %51, %cst_27 {dimension_numbers = #tpu.dot_dimension_numbers<[1], [0], [0], [1], [0, 0, 1, 1], [], []>} : vector<432x128xbf16>, vector<128x128xbf16>, vector<432x128xf32> -> vector<432x128xf32>
    %53 = arith.addf %49, %52 : vector<432x128xf32>
    %c8 = arith.constant 8 : index
    %c0_28 = arith.constant 0 : index
    %54 = vector.load %arg9[%c8, %c0_28] : memref<496x128xbf16, #tpu.memory_space<vmem>>, vector<432x128xbf16>
    %c128 = arith.constant 128 : index
    %c0_29 = arith.constant 0 : index
    %55 = vector.load %arg4[%c128, %c0_29] : memref<1152x128xbf16, #tpu.memory_space<vmem>>, vector<128x128xbf16>
    %cst_30 = arith.constant dense<0.000000e+00> : vector<432x128xf32>
    %56 = tpu.matmul %54, %55, %cst_30 {dimension_numbers = #tpu.dot_dimension_numbers<[1], [0], [0], [1], [0, 0, 1, 1], [], []>} : vector<432x128xbf16>, vector<128x128xbf16>, vector<432x128xf32> -> vector<432x128xf32>
    %57 = arith.addf %53, %56 : vector<432x128xf32>
    %c9 = arith.constant 9 : index
    %c0_31 = arith.constant 0 : index
    %58 = vector.load %arg9[%c9, %c0_31] : memref<496x128xbf16, #tpu.memory_space<vmem>>, vector<432x128xbf16>
    %c256 = arith.constant 256 : index
    %c0_32 = arith.constant 0 : index
    %59 = vector.load %arg4[%c256, %c0_32] : memref<1152x128xbf16, #tpu.memory_space<vmem>>, vector<128x128xbf16>
    %cst_33 = arith.constant dense<0.000000e+00> : vector<432x128xf32>
    %60 = tpu.matmul %58, %59, %cst_33 {dimension_numbers = #tpu.dot_dimension_numbers<[1], [0], [0], [1], [0, 0, 1, 1], [], []>} : vector<432x128xbf16>, vector<128x128xbf16>, vector<432x128xf32> -> vector<432x128xf32>
    %61 = arith.addf %57, %60 : vector<432x128xf32>
    %c31 = arith.constant 31 : index
    %c0_34 = arith.constant 0 : index
    %62 = vector.load %arg9[%c31, %c0_34] : memref<496x128xbf16, #tpu.memory_space<vmem>>, vector<432x128xbf16>
    %c384 = arith.constant 384 : index
    %c0_35 = arith.constant 0 : index
    %63 = vector.load %arg4[%c384, %c0_35] : memref<1152x128xbf16, #tpu.memory_space<vmem>>, vector<128x128xbf16>
    %cst_36 = arith.constant dense<0.000000e+00> : vector<432x128xf32>
    %64 = tpu.matmul %62, %63, %cst_36 {dimension_numbers = #tpu.dot_dimension_numbers<[1], [0], [0], [1], [0, 0, 1, 1], [], []>} : vector<432x128xbf16>, vector<128x128xbf16>, vector<432x128xf32> -> vector<432x128xf32>
    %65 = arith.addf %61, %64 : vector<432x128xf32>
    %c32_37 = arith.constant 32 : index
    %c0_38 = arith.constant 0 : index
    %66 = vector.load %arg9[%c32_37, %c0_38] : memref<496x128xbf16, #tpu.memory_space<vmem>>, vector<432x128xbf16>
    %c512 = arith.constant 512 : index
    %c0_39 = arith.constant 0 : index
    %67 = vector.load %arg4[%c512, %c0_39] : memref<1152x128xbf16, #tpu.memory_space<vmem>>, vector<128x128xbf16>
    %cst_40 = arith.constant dense<0.000000e+00> : vector<432x128xf32>
    %68 = tpu.matmul %66, %67, %cst_40 {dimension_numbers = #tpu.dot_dimension_numbers<[1], [0], [0], [1], [0, 0, 1, 1], [], []>} : vector<432x128xbf16>, vector<128x128xbf16>, vector<432x128xf32> -> vector<432x128xf32>
    %69 = arith.addf %65, %68 : vector<432x128xf32>
    %c33 = arith.constant 33 : index
    %c0_41 = arith.constant 0 : index
    %70 = vector.load %arg9[%c33, %c0_41] : memref<496x128xbf16, #tpu.memory_space<vmem>>, vector<432x128xbf16>
    %c640 = arith.constant 640 : index
    %c0_42 = arith.constant 0 : index
    %71 = vector.load %arg4[%c640, %c0_42] : memref<1152x128xbf16, #tpu.memory_space<vmem>>, vector<128x128xbf16>
    %cst_43 = arith.constant dense<0.000000e+00> : vector<432x128xf32>
    %72 = tpu.matmul %70, %71, %cst_43 {dimension_numbers = #tpu.dot_dimension_numbers<[1], [0], [0], [1], [0, 0, 1, 1], [], []>} : vector<432x128xbf16>, vector<128x128xbf16>, vector<432x128xf32> -> vector<432x128xf32>
    %73 = arith.addf %69, %72 : vector<432x128xf32>
    %c55 = arith.constant 55 : index
    %c0_44 = arith.constant 0 : index
    %74 = vector.load %arg9[%c55, %c0_44] : memref<496x128xbf16, #tpu.memory_space<vmem>>, vector<432x128xbf16>
    %c768 = arith.constant 768 : index
    %c0_45 = arith.constant 0 : index
    %75 = vector.load %arg4[%c768, %c0_45] : memref<1152x128xbf16, #tpu.memory_space<vmem>>, vector<128x128xbf16>
    %cst_46 = arith.constant dense<0.000000e+00> : vector<432x128xf32>
    %76 = tpu.matmul %74, %75, %cst_46 {dimension_numbers = #tpu.dot_dimension_numbers<[1], [0], [0], [1], [0, 0, 1, 1], [], []>} : vector<432x128xbf16>, vector<128x128xbf16>, vector<432x128xf32> -> vector<432x128xf32>
    %77 = arith.addf %73, %76 : vector<432x128xf32>
    %c56 = arith.constant 56 : index
    %c0_47 = arith.constant 0 : index
    %78 = vector.load %arg9[%c56, %c0_47] : memref<496x128xbf16, #tpu.memory_space<vmem>>, vector<432x128xbf16>
    %c896 = arith.constant 896 : index
    %c0_48 = arith.constant 0 : index
    %79 = vector.load %arg4[%c896, %c0_48] : memref<1152x128xbf16, #tpu.memory_space<vmem>>, vector<128x128xbf16>
    %cst_49 = arith.constant dense<0.000000e+00> : vector<432x128xf32>
    %80 = tpu.matmul %78, %79, %cst_49 {dimension_numbers = #tpu.dot_dimension_numbers<[1], [0], [0], [1], [0, 0, 1, 1], [], []>} : vector<432x128xbf16>, vector<128x128xbf16>, vector<432x128xf32> -> vector<432x128xf32>
    %81 = arith.addf %77, %80 : vector<432x128xf32>
    %c57 = arith.constant 57 : index
    %c0_50 = arith.constant 0 : index
    %82 = vector.load %arg9[%c57, %c0_50] : memref<496x128xbf16, #tpu.memory_space<vmem>>, vector<432x128xbf16>
    %c1024 = arith.constant 1024 : index
    %c0_51 = arith.constant 0 : index
    %83 = vector.load %arg4[%c1024, %c0_51] : memref<1152x128xbf16, #tpu.memory_space<vmem>>, vector<128x128xbf16>
    %cst_52 = arith.constant dense<0.000000e+00> : vector<432x128xf32>
    %84 = tpu.matmul %82, %83, %cst_52 {dimension_numbers = #tpu.dot_dimension_numbers<[1], [0], [0], [1], [0, 0, 1, 1], [], []>} : vector<432x128xbf16>, vector<128x128xbf16>, vector<432x128xf32> -> vector<432x128xf32>
    %85 = arith.addf %81, %84 : vector<432x128xf32>
    %c0_53 = arith.constant 0 : index
    %c0_54 = arith.constant 0 : index
    %86 = vector.load %arg5[%c0_53, %c0_54] : memref<1x128xf32, #tpu.memory_space<vmem>>, vector<1x128xf32>
    %87 = vector.broadcast %86 : vector<1x128xf32> to vector<432x128xf32>
    %88 = arith.addf %85, %87 : vector<432x128xf32>
    %cst_55 = arith.constant 0.000000e+00 : f32
    %89 = vector.broadcast %cst_55 : f32 to vector<432x128xf32>
    %90 = arith.maximumf %88, %89 : vector<432x128xf32>
    %91 = arith.truncf %90 : vector<432x128xf32> to vector<432x128xbf16>
    %c0_56 = arith.constant 0 : index
    %c0_57 = arith.constant 0 : index
    %92 = vector.load %arg6[%c0_56, %c0_57] : memref<128x128xbf16, #tpu.memory_space<vmem>>, vector<128x128xbf16>
    %cst_58 = arith.constant dense<0.000000e+00> : vector<432x128xf32>
    %93 = tpu.matmul %91, %92, %cst_58 {dimension_numbers = #tpu.dot_dimension_numbers<[1], [0], [0], [1], [0, 0, 1, 1], [], []>} : vector<432x128xbf16>, vector<128x128xbf16>, vector<432x128xf32> -> vector<432x128xf32>
    %94 = arith.addf %93, %4 : vector<432x128xf32>
    %c0_59 = arith.constant 0 : index
    %c0_60 = arith.constant 0 : index
    %95 = vector.load %arg7[%c0_59, %c0_60] : memref<1x128xf32, #tpu.memory_space<vmem>>, vector<1x128xf32>
    %96 = vector.broadcast %95 : vector<1x128xf32> to vector<432x128xf32>
    %97 = arith.addf %94, %96 : vector<432x128xf32>
    %cst_61 = arith.constant 0.000000e+00 : f32
    %98 = vector.broadcast %cst_61 : f32 to vector<432x128xf32>
    %99 = arith.maximumf %97, %98 : vector<432x128xf32>
    %c0_62 = arith.constant 0 : index
    %c0_63 = arith.constant 0 : index
    %100 = vector.load %arg8[%c0_62, %c0_63] : memref<432x128xf32, #tpu.memory_space<vmem>>, vector<432x128xf32>
    tpu.vector_store %arg8[%c0_62, %c0_63], %99 {strides = array<i32>} : memref<432x128xf32, #tpu.memory_space<vmem>>, vector<432x128xf32>,
    return
  }
  func.func @transform_0(%arg0: i32) -> (i32, i32) {
    %c0_i32 = arith.constant 0 : i32
    %c0_i32_0 = arith.constant 0 : i32
    return %arg0, %c0_i32 : i32, i32
  }
  func.func @transform_1(%arg0: i32) -> (i32, i32) {
    %c0_i32 = arith.constant 0 : i32
    %c0_i32_0 = arith.constant 0 : i32
    %c0_i32_1 = arith.constant 0 : i32
    return %c0_i32, %c0_i32_0 : i32, i32
  }
  func.func @transform_2(%arg0: i32) -> (i32, i32) {
    %c0_i32 = arith.constant 0 : i32
    %c0_i32_0 = arith.constant 0 : i32
    %c0_i32_1 = arith.constant 0 : i32
    return %c0_i32, %c0_i32_0 : i32, i32
  }
  func.func @transform_3(%arg0: i32) -> (i32, i32) {
    %c0_i32 = arith.constant 0 : i32
    %c0_i32_0 = arith.constant 0 : i32
    %c0_i32_1 = arith.constant 0 : i32
    return %c0_i32, %c0_i32_0 : i32, i32
  }
  func.func @transform_4(%arg0: i32) -> (i32, i32) {
    %c0_i32 = arith.constant 0 : i32
    %c0_i32_0 = arith.constant 0 : i32
    %c0_i32_1 = arith.constant 0 : i32
    return %c0_i32, %c0_i32_0 : i32, i32
  }
  func.func @transform_5(%arg0: i32) -> (i32, i32) {
    %c0_i32 = arith.constant 0 : i32
    %c0_i32_0 = arith.constant 0 : i32
    %c0_i32_1 = arith.constant 0 : i32
    return %c0_i32, %c0_i32_0 : i32, i32
  }
  func.func @transform_6(%arg0: i32) -> (i32, i32) {
    %c0_i32 = arith.constant 0 : i32
    %c0_i32_0 = arith.constant 0 : i32
    %c0_i32_1 = arith.constant 0 : i32
    return %c0_i32, %c0_i32_0 : i32, i32
  }
  func.func @transform_7(%arg0: i32) -> (i32, i32) {
    %c0_i32 = arith.constant 0 : i32
    %c0_i32_0 = arith.constant 0 : i32
    return %arg0, %c0_i32 : i32, i32
  }
}

</mosaic_0001>

<llo_original>
// kernel: tpu_custom_call.1
$region0: #{tpu_custom_call.1}
  #allocation0 [shape = 'u32[]', space=smem, size = 0x4, offset = 0x4, fixed_abs, tag = 'smem constant byte address 0x4 - core index']
  #allocation1 [shape = 'u32[144,128]{1,0:T(1,128)}', space=vmem, size = 0x12000, scoped, tag = 'internal scratch']
  #allocation2 [shape = 'bf16[496,128]{1,0:T(16,128)(2,1)}', space=vmem, size = 0x1f000, scoped, tag = 'scratch operand']
  %s0 = inlined_call_operand.hbm [shape: bf16[864,128], index: 0, kind: input, shape index: {}]
  %s1 = inlined_call_operand.hbm [shape: bf16[128,256], index: 1, kind: input, shape index: {}]
  %s2 = inlined_call_operand.vmem [shape: f32[1,128], index: 2, kind: input, shape index: {}]
  %s3 = inlined_call_operand.hbm [shape: bf16[1152,128], index: 3, kind: input, shape index: {}]
  %s4 = inlined_call_operand.vmem [shape: f32[1,128], index: 4, kind: input, shape index: {}]
  %s5 = inlined_call_operand.hbm [shape: bf16[128,128], index: 5, kind: input, shape index: {}]
  %s6 = inlined_call_operand.vmem [shape: f32[1,128], index: 6, kind: input, shape index: {}]
  %s7 = inlined_call_operand.hbm [shape: f32[864,128], index: 7, kind: output, shape index: {}]
  %s8 = sld [smem:[#allocation0]]
  $region77: #{tpu_custom_call.1} parent=0
    _
  %s10 = ssub.s32 1, %s8
  %s11 = scalar_select 0, %s10, %s8
  $region1: #{tpu_custom_call.1} parent=0
    #allocation3 [shape = 'u8[221184]{0}', space=vmem, size = 0x36000, scoped, tag = 'input window, operand 0']
    #allocation4 [shape = 's32[2]{0}', space=sflag, size = 0x8, scoped, tag = 'scoped memory for tpu_custom_call.1']
    #allocation5 [shape = 's32[2]{0}', space=sflag, size = 0x8, scoped, tag = 'scoped memory for tpu_custom_call.1']
    #allocation6 [shape = 'u8[65536]{0}', space=vmem, size = 0x10000, scoped, tag = 'input window, operand 1, single buffered']
    #allocation7 [shape = 's32[1]{0}', space=sflag, size = 0x4, scoped, tag = 'scoped memory for tpu_custom_call.1']
    #allocation8 [shape = 'u8[294912]{0}', space=vmem, size = 0x48000, scoped, tag = 'input window, operand 3, single buffered']
    #allocation9 [shape = 'u8[32768]{0}', space=vmem, size = 0x8000, scoped, tag = 'input window, operand 5, single buffered']
    #allocation10 [shape = 's32[1]{0}', space=sflag, size = 0x4, scoped, tag = 'scoped memory for tpu_custom_call.1']
    #allocation11 [shape = 'u8[442368]{0}', space=vmem, size = 0x6c000, scoped, tag = 'output window, operand 0']
    %12 = vsyncpa [#allocation4], 0
    %s13 = scalar_lea.sflag [#allocation4], 1
    %14 = vsyncpa %s13, 0
    %15 = vsyncpa [#allocation7], 0
    %16 = vsyncpa [#allocation10], 0
    %17 = vsyncpa [#allocation5], 0
    %s18 = scalar_lea.sflag [#allocation5], 1
    %19 = vsyncpa %s18, 0
    loop: start=0, step=1, limit=4
    $region2: #{tpu_custom_call.1} parent=1 // loop_pre_header
      _
    $region3: #{tpu_custom_call.1} parent=1 // loop_header
      %s21 = sphi 0, %s25
      %p22 = scmp.ge.s32.totalorder %s21, 4
      %s31 = sphi 0, %s33
      %s34 = sphi 0, %s31
      %s35 = sphi 0, %s34
      %s51 = sphi 0, %s35
      %s55 = sphi 0, %s55
      %s57 = sphi 0, %s55
      %s58 = sphi 0, %s57
      %s72 = sphi 0, %s58
      %s76 = sphi 0, %s76
      %s78 = sphi 0, %s76
      %s79 = sphi 0, %s78
      %s93 = sphi 0, %s79
      %s97 = sphi 0, %s97
      %s99 = sphi 0, %s97
      %s100 = sphi 0, %s99
      %s114 = sphi 0, %s100
      %s118 = sphi 0, %s118
      %s120 = sphi 0, %s118
      %s121 = sphi 0, %s120
      %s135 = sphi 0, %s121
      %s139 = sphi 0, %s139
      %s141 = sphi 0, %s139
      %s142 = sphi 0, %s141
      %s156 = sphi 0, %s142
      %s160 = sphi 0, %s160
      %s162 = sphi 0, %s160
      %s163 = sphi 0, %s162
      %s177 = sphi 0, %s163
      %s183 = sphi 0, %s185
      %s186 = sphi 0, %s183
      %s187 = sphi 0, %s186
      %s203 = sphi 0, %s187
    $region4: #{tpu_custom_call.1} parent=1 // loop_header_branch
      %24 = sbr.rel (%p22) target = $region8
    $region5: #{tpu_custom_call.1} parent=1 // loop_body
      %s26 = ssub.s32 %s21, 1
      %s27 = ssub.s32 %s21, 2
      %s28 = sadd.s32 %s21, 1
      %s29 = ssub.s32 %s21, %s28
      %p30 = scmp.eq.s32.totalorder %s29, 0
      %s32 = sadd.s32 %s31, 1
      %s33 = scalar_select %p30, %s31, %s32
      %p36 = pneg %p30
      %p37 = scmp.eq.s32.totalorder %s21, 1
      %p38 = por %p36, %p37
      %p39 = scmp.ne.s32.totalorder %s31, %s34
      %p40 = scmp.eq.s32.totalorder %s21, 0
      %p41 = por %p39, %p40
      %p42 = scmp.ne.s32.totalorder %s31, %s34
      %p43 = scmp.eq.s32.totalorder %s26, 1
      %p44 = por %p42, %p43
      %p45 = scmp.ne.s32.totalorder %s34, %s35
      %p46 = scmp.eq.s32.totalorder %s26, 0
      %p47 = por %p45, %p46
      %p48 = scmp.ne.s32.totalorder %s34, %s35
      %p49 = scmp.eq.s32.totalorder %s27, 1
      %p50 = por %p48, %p49
      %p52 = scmp.ne.s32.totalorder %s35, %s51
      %p53 = scmp.eq.s32.totalorder %s27, 0
      %p54 = por %p52, %p53
      %s56 = sadd.s32 %s55, 1
      %p59 = scmp.eq.s32.totalorder %s21, 1
      %p60 = scmp.ne.s32.totalorder %s55, %s57
      %p61 = scmp.eq.s32.totalorder %s21, 0
      %p62 = por %p60, %p61
      %p63 = scmp.ne.s32.totalorder %s55, %s57
      %p64 = scmp.eq.s32.totalorder %s26, 1
      %p65 = por %p63, %p64
      %p66 = scmp.ne.s32.totalorder %s57, %s58
      %p67 = scmp.eq.s32.totalorder %s26, 0
      %p68 = por %p66, %p67
      %p69 = scmp.ne.s32.totalorder %s57, %s58
      %p70 = scmp.eq.s32.totalorder %s27, 1
      %p71 = por %p69, %p70
      %p73 = scmp.ne.s32.totalorder %s58, %s72
      %p74 = scmp.eq.s32.totalorder %s27, 0
      %p75 = por %p73, %p74
      %s77 = sadd.s32 %s76, 1
      %p80 = scmp.eq.s32.totalorder %s21, 1
      %p81 = scmp.ne.s32.totalorder %s76, %s78
      %p82 = scmp.eq.s32.totalorder %s21, 0
      %p83 = por %p81, %p82
      %p84 = scmp.ne.s32.totalorder %s76, %s78
      %p85 = scmp.eq.s32.totalorder %s26, 1
      %p86 = por %p84, %p85
      %p87 = scmp.ne.s32.totalorder %s78, %s79
      %p88 = scmp.eq.s32.totalorder %s26, 0
      %p89 = por %p87, %p88
      %p90 = scmp.ne.s32.totalorder %s78, %s79
      %p91 = scmp.eq.s32.totalorder %s27, 1
      %p92 = por %p90, %p91
      %p94 = scmp.ne.s32.totalorder %s79, %s93
      %p95 = scmp.eq.s32.totalorder %s27, 0
      %p96 = por %p94, %p95
      %s98 = sadd.s32 %s97, 1
      %p101 = scmp.eq.s32.totalorder %s21, 1
      %p102 = scmp.ne.s32.totalorder %s97, %s99
      %p103 = scmp.eq.s32.totalorder %s21, 0
      %p104 = por %p102, %p103
      %p105 = scmp.ne.s32.totalorder %s97, %s99
      %p106 = scmp.eq.s32.totalorder %s26, 1
      %p107 = por %p105, %p106
      %p108 = scmp.ne.s32.totalorder %s99, %s100
      %p109 = scmp.eq.s32.totalorder %s26, 0
      %p110 = por %p108, %p109
      %p111 = scmp.ne.s32.totalorder %s99, %s100
      %p112 = scmp.eq.s32.totalorder %s27, 1
      %p113 = por %p111, %p112
      %p115 = scmp.ne.s32.totalorder %s100, %s114
      %p116 = scmp.eq.s32.totalorder %s27, 0
      %p117 = por %p115, %p116
      %s119 = sadd.s32 %s118, 1
      %p122 = scmp.eq.s32.totalorder %s21, 1
      %p123 = scmp.ne.s32.totalorder %s118, %s120
      %p124 = scmp.eq.s32.totalorder %s21, 0
      %p125 = por %p123, %p124
      %p126 = scmp.ne.s32.totalorder %s118, %s120
      %p127 = scmp.eq.s32.totalorder %s26, 1
      %p128 = por %p126, %p127
      %p129 = scmp.ne.s32.totalorder %s120, %s121
      %p130 = scmp.eq.s32.totalorder %s26, 0
      %p131 = por %p129, %p130
      %p132 = scmp.ne.s32.totalorder %s120, %s121
      %p133 = scmp.eq.s32.totalorder %s27, 1
      %p134 = por %p132, %p133
      %p136 = scmp.ne.s32.totalorder %s121, %s135
      %p137 = scmp.eq.s32.totalorder %s27, 0
      %p138 = por %p136, %p137
      %s140 = sadd.s32 %s139, 1
      %p143 = scmp.eq.s32.totalorder %s21, 1
      %p144 = scmp.ne.s32.totalorder %s139, %s141
      %p145 = scmp.eq.s32.totalorder %s21, 0
      %p146 = por %p144, %p145
      %p147 = scmp.ne.s32.totalorder %s139, %s141
      %p148 = scmp.eq.s32.totalorder %s26, 1
      %p149 = por %p147, %p148
      %p150 = scmp.ne.s32.totalorder %s141, %s142
      %p151 = scmp.eq.s32.totalorder %s26, 0
      %p152 = por %p150, %p151
      %p153 = scmp.ne.s32.totalorder %s141, %s142
      %p154 = scmp.eq.s32.totalorder %s27, 1
      %p155 = por %p153, %p154
      %p157 = scmp.ne.s32.totalorder %s142, %s156
      %p158 = scmp.eq.s32.totalorder %s27, 0
      %p159 = por %p157, %p158
      %s161 = sadd.s32 %s160, 1
      %p164 = scmp.eq.s32.totalorder %s21, 1
      %p165 = scmp.ne.s32.totalorder %s160, %s162
      %p166 = scmp.eq.s32.totalorder %s21, 0
      %p167 = por %p165, %p166
      %p168 = scmp.ne.s32.totalorder %s160, %s162
      %p169 = scmp.eq.s32.totalorder %s26, 1
      %p170 = por %p168, %p169
      %p171 = scmp.ne.s32.totalorder %s162, %s163
      %p172 = scmp.eq.s32.totalorder %s26, 0
      %p173 = por %p171, %p172
      %p174 = scmp.ne.s32.totalorder %s162, %s163
      %p175 = scmp.eq.s32.totalorder %s27, 1
      %p176 = por %p174, %p175
      %p178 = scmp.ne.s32.totalorder %s163, %s177
      %p179 = scmp.eq.s32.totalorder %s27, 0
      %p180 = por %p178, %p179
      %s181 = ssub.s32 %s21, %s28
      %p182 = scmp.eq.s32.totalorder %s181, 0
      %s184 = sadd.s32 %s183, 1
      %s185 = scalar_select %p182, %s183, %s184
      %p188 = pneg %p182
      %p189 = scmp.eq.s32.totalorder %s21, 1
      %p190 = por %p188, %p189
      %p191 = scmp.ne.s32.totalorder %s183, %s186
      %p192 = scmp.eq.s32.totalorder %s21, 0
      %p193 = por %p191, %p192
      %p194 = scmp.ne.s32.totalorder %s183, %s186
      %p195 = scmp.eq.s32.totalorder %s26, 1
      %p196 = por %p194, %p195
      %p197 = scmp.ne.s32.totalorder %s186, %s187
      %p198 = scmp.eq.s32.totalorder %s26, 0
      %p199 = por %p197, %p198
      %p200 = scmp.ne.s32.totalorder %s186, %s187
      %p201 = scmp.eq.s32.totalorder %s27, 1
      %p202 = por %p200, %p201
      %p204 = scmp.ne.s32.totalorder %s187, %s203
      %p205 = scmp.eq.s32.totalorder %s27, 0
      %p206 = por %p204, %p205
      %p207 = scmp.le.s32.totalorder 1, %s21
      %p208 = scmp.lt.s32.totalorder %s21, 3
      %p209 = pnand %p207, %p208
      %p210 = pneg %p209
      // Predicated region
      $region9: #{tpu_custom_call.1} parent=5 // pred_check
        _
      $region10: #{tpu_custom_call.1} parent=5 // pred_check_branch
        %212 = sbr.rel (%p209) target = $region12
      $region11: #{tpu_custom_call.1} parent=5 // pred_region
        %s213 = ssub.s32 %s21, 1
        // Predicated region
        $region13: #{tpu_custom_call.1} parent=11 // pred_check
          %p214 = pneg %p68
        $region14: #{tpu_custom_call.1} parent=11 // pred_check_branch
          %216 = sbr.rel (%p214) target = $region16
        $region15: #{tpu_custom_call.1} parent=11 // pred_region
          %s218 = ssub.s32 2048, 2048
          %219 = vsyncadd [#allocation7], %s218
          %s220 = sshll.u32 [#allocation6], 4
          %s221 = int_to_ptr.vmem [resolvable:$true] %s220
          %226 = dma.hbm_to_vmem [thread:$0]  %s1, 2048, %s221, [#allocation7], 128, 128, 8
        $region16: #{tpu_custom_call.1} parent=11 // pred_fallthru
          _
        // Predicated region
        $region17: #{tpu_custom_call.1} parent=11 // pred_check
          %p227 = pneg %p89
        $region18: #{tpu_custom_call.1} parent=11 // pred_check_branch
          %229 = sbr.rel (%p227) target = $region20
        $region19: #{tpu_custom_call.1} parent=11 // pred_region
          _
        $region20: #{tpu_custom_call.1} parent=11 // pred_fallthru
          _
        // Predicated region
        $region21: #{tpu_custom_call.1} parent=11 // pred_check
          %p230 = pneg %p110
        $region22: #{tpu_custom_call.1} parent=11 // pred_check_branch
          %232 = sbr.rel (%p230) target = $region24
        $region23: #{tpu_custom_call.1} parent=11 // pred_region
          %s234 = ssub.s32 9216, 9216
          %235 = vsyncadd [#allocation7], %s234
          %s236 = sshll.u32 [#allocation8], 4
          %s237 = int_to_ptr.vmem [resolvable:$true] %s236
          %242 = dma.hbm_to_vmem [thread:$0]  %s3, 9216, %s237, [#allocation7], 64, 64, 4
        $region24: #{tpu_custom_call.1} parent=11 // pred_fallthru
          _
        // Predicated region
        $region25: #{tpu_custom_call.1} parent=11 // pred_check
          %p243 = pneg %p131
        $region26: #{tpu_custom_call.1} parent=11 // pred_check_branch
          %245 = sbr.rel (%p243) target = $region28
        $region27: #{tpu_custom_call.1} parent=11 // pred_region
          _
        $region28: #{tpu_custom_call.1} parent=11 // pred_fallthru
          _
        // Predicated region
        $region29: #{tpu_custom_call.1} parent=11 // pred_check
          %p246 = pneg %p152
        $region30: #{tpu_custom_call.1} parent=11 // pred_check_branch
          %248 = sbr.rel (%p246) target = $region32
        $region31: #{tpu_custom_call.1} parent=11 // pred_region
          %s250 = ssub.s32 1024, 1024
          %251 = vsyncadd [#allocation10], %s250
          %s252 = sshll.u32 [#allocation9], 4
          %s253 = int_to_ptr.vmem [resolvable:$true] %s252
          %258 = dma.hbm_to_vmem [thread:$0]  %s5, 1024, %s253, [#allocation10], 64, 64, 4
        $region32: #{tpu_custom_call.1} parent=11 // pred_fallthru
          _
        // Predicated region
        $region33: #{tpu_custom_call.1} parent=11 // pred_check
          %p259 = pneg %p173
        $region34: #{tpu_custom_call.1} parent=11 // pred_check_branch
          %261 = sbr.rel (%p259) target = $region36
        $region35: #{tpu_custom_call.1} parent=11 // pred_region
          _
        $region36: #{tpu_custom_call.1} parent=11 // pred_fallthru
          _
      $region12: #{tpu_custom_call.1} parent=5 // pred_fallthru
        _
      %p262 = scmp.lt.s32.totalorder %s21, 2
      // Predicated region
      $region37: #{tpu_custom_call.1} parent=5 // pred_check
        %p263 = pneg %p262
      $region38: #{tpu_custom_call.1} parent=5 // pred_check_branch
        %265 = sbr.rel (%p263) target = $region40
      $region39: #{tpu_custom_call.1} parent=5 // pred_region
        // Predicated region
        $region41: #{tpu_custom_call.1} parent=39 // pred_check
          %p266 = pneg %p41
        $region42: #{tpu_custom_call.1} parent=39 // pred_check_branch
          %268 = sbr.rel (%p266) target = $region44
        $region43: #{tpu_custom_call.1} parent=39 // pred_region
          %s269 = sand.u32 %s31, 1
          %s270 = scalar_lea.sflag [#allocation4], %s269
          %s271 = sand.u32 %s31, 1
          %s272 = smul.addr %s271, 216
          %s273 = scalar_lea.vmem [#allocation3], %s272
          %s274 = smul.u32 54, %s21
          %s276 = ssub.s32 3456, 3456
          %277 = vsyncadd %s270, %s276
          %s278 = smul.addr %s274, 64
          %s279 = scalar_lea.hbm %s0, %s278
          %s280 = sshll.u32 %s273, 4
          %s281 = int_to_ptr.vmem [resolvable:$true] %s280
          %286 = dma.hbm_to_vmem [thread:$0]  %s279, 3456, %s281, %s270, 64, 64, 4
        $region44: #{tpu_custom_call.1} parent=39 // pred_fallthru
          _
      $region40: #{tpu_custom_call.1} parent=5 // pred_fallthru
        _
      %p287 = scmp.le.s32.totalorder 1, %s21
      %p288 = scmp.lt.s32.totalorder %s21, 3
      %p289 = pnand %p287, %p288
      %p290 = pneg %p289
      // Predicated region
      $region45: #{tpu_custom_call.1} parent=5 // pred_check
        _
      $region46: #{tpu_custom_call.1} parent=5 // pred_check_branch
        %292 = sbr.rel (%p289) target = $region48
      $region47: #{tpu_custom_call.1} parent=5 // pred_region
        %s293 = ssub.s32 %s21, 1
        %s294 = sand.u32 %s34, 1
        %s295 = scalar_lea.sflag [#allocation4], %s294
        %s296 = sand.u32 %s34, 1
        %s297 = smul.addr %s296, 216
        %s298 = scalar_lea.vmem [#allocation3], %s297
        // Predicated region
        $region49: #{tpu_custom_call.1} parent=47 // pred_check
          %p299 = pneg %p47
        $region50: #{tpu_custom_call.1} parent=47 // pred_check_branch
          %301 = sbr.rel (%p299) target = $region52
        $region51: #{tpu_custom_call.1} parent=47 // pred_region
          %302 = dma.done %s295, 3456
        $region52: #{tpu_custom_call.1} parent=47 // pred_fallthru
          _
        // Predicated region
        $region53: #{tpu_custom_call.1} parent=47 // pred_check
          %p303 = pneg %p68
        $region54: #{tpu_custom_call.1} parent=47 // pred_check_branch
          %305 = sbr.rel (%p303) target = $region56
        $region55: #{tpu_custom_call.1} parent=47 // pred_region
          %306 = dma.done [#allocation7], 2048
        $region56: #{tpu_custom_call.1} parent=47 // pred_fallthru
          _
        // Predicated region
        $region57: #{tpu_custom_call.1} parent=47 // pred_check
          %p307 = pneg %p110
        $region58: #{tpu_custom_call.1} parent=47 // pred_check_branch
          %309 = sbr.rel (%p307) target = $region60
        $region59: #{tpu_custom_call.1} parent=47 // pred_region
          %310 = dma.done [#allocation7], 9216
        $region60: #{tpu_custom_call.1} parent=47 // pred_fallthru
          _
        // Predicated region
        $region61: #{tpu_custom_call.1} parent=47 // pred_check
          %p311 = pneg %p152
        $region62: #{tpu_custom_call.1} parent=47 // pred_check_branch
          %313 = sbr.rel (%p311) target = $region64
        $region63: #{tpu_custom_call.1} parent=47 // pred_region
          %314 = dma.done [#allocation10], 1024
        $region64: #{tpu_custom_call.1} parent=47 // pred_fallthru
          _
        %s315 = sand.u32 %s34, 1
        %s316 = scalar_lea.sflag [#allocation4], %s315
        %s317 = sand.u32 %s34, 1
        %s318 = smul.addr %s317, 216
        %s319 = scalar_lea.vmem [#allocation3], %s318
        %p320 = pneg %p47
        %p321 = pneg %p44
        %p322 = pneg %p68
        %p323 = pneg %p65
        %p324 = pneg %p89
        %p325 = pneg %p86
        %p326 = pneg %p110
        %p327 = pneg %p107
        %p328 = pneg %p131
        %p329 = pneg %p128
        %p330 = pneg %p152
        %p331 = pneg %p149
        %p332 = pneg %p173
        %p333 = pneg %p170
        %p334 = pneg %p199
        %p335 = pneg %p196
        %s336 = sand.u32 %s186, 1
        %s337 = scalar_lea.sflag [#allocation5], %s336
        %s338 = sand.u32 %s186, 1
        %s339 = smul.addr %s338, 432
        %s340 = scalar_lea.vmem [#allocation11], %s339
        %s341 = smul.u32 54, %s26
        %s342 = smul.u32 54, %s26
        %v344 = vld [vmem:[%s298] sm:$0xf]
        %v345 = vld [vmem:[%s298 + $0x4] sm:$0xf]
        %v346 = vld [vmem:[%s298 + $0x8] sm:$0xf]
        %v347 = vld [vmem:[%s298 + $0xc] sm:$0xf]
        %v348 = vld [vmem:[%s298 + $0x10] sm:$0xf]
        %v349 = vld [vmem:[%s298 + $0x14] sm:$0xf]
        %v350 = vld [vmem:[%s298 + $0x18] sm:$0xf]
        %v351 = vld [vmem:[%s298 + $0x1c] sm:$0xf]
        %v352 = vld [vmem:[%s298 + $0x20] sm:$0xf]
        %v353 = vld [vmem:[%s298 + $0x24] sm:$0xf]
        %v354 = vld [vmem:[%s298 + $0x28] sm:$0xf]
        %v355 = vld [vmem:[%s298 + $0x2c] sm:$0xf]
        %v356 = vld [vmem:[%s298 + $0x30] sm:$0xf]
        %v357 = vld [vmem:[%s298 + $0x34] sm:$0xf]
        %v358 = vld [vmem:[%s298 + $0x38] sm:$0xf]
        %v359 = vld [vmem:[%s298 + $0x3c] sm:$0xf]
        %v360 = vld [vmem:[%s298 + $0x40] sm:$0xf]
        %v361 = vld [vmem:[%s298 + $0x44] sm:$0xf]
        %v362 = vld [vmem:[%s298 + $0x48] sm:$0xf]
        %v363 = vld [vmem:[%s298 + $0x4c] sm:$0xf]
        %v364 = vld [vmem:[%s298 + $0x50] sm:$0xf]
        %v365 = vld [vmem:[%s298 + $0x54] sm:$0xf]
        %v366 = vld [vmem:[%s298 + $0x58] sm:$0xf]
        %v367 = vld [vmem:[%s298 + $0x5c] sm:$0xf]
        %v368 = vld [vmem:[%s298 + $0x60] sm:$0xf]
        %v369 = vld [vmem:[%s298 + $0x64] sm:$0xf]
        %v370 = vld [vmem:[%s298 + $0x68] sm:$0xf]
        %v371 = vld [vmem:[%s298 + $0x6c] sm:$0xf]
        %v372 = vld [vmem:[%s298 + $0x70] sm:$0xf]
        %v373 = vld [vmem:[%s298 + $0x74] sm:$0xf]
        %v374 = vld [vmem:[%s298 + $0x78] sm:$0xf]
        %v375 = vld [vmem:[%s298 + $0x7c] sm:$0xf]
        %v376 = vld [vmem:[%s298 + $0x80] sm:$0xf]
        %v377 = vld [vmem:[%s298 + $0x84] sm:$0xf]
        %v378 = vld [vmem:[%s298 + $0x88] sm:$0xf]
        %v379 = vld [vmem:[%s298 + $0x8c] sm:$0xf]
        %v380 = vld [vmem:[%s298 + $0x90] sm:$0xf]
        %v381 = vld [vmem:[%s298 + $0x94] sm:$0xf]
        %v382 = vld [vmem:[%s298 + $0x98] sm:$0xf]
        %v383 = vld [vmem:[%s298 + $0x9c] sm:$0xf]
        %v384 = vld [vmem:[%s298 + $0xa0] sm:$0xf]
        %v385 = vld [vmem:[%s298 + $0xa4] sm:$0xf]
        %v386 = vld [vmem:[%s298 + $0xa8] sm:$0xf]
        %v387 = vld [vmem:[%s298 + $0xac] sm:$0xf]
        %v388 = vld [vmem:[%s298 + $0xb0] sm:$0xf]
        %v389 = vld [vmem:[%s298 + $0xb4] sm:$0xf]
        %v390 = vld [vmem:[%s298 + $0xb8] sm:$0xf]
        %v391 = vld [vmem:[%s298 + $0xbc] sm:$0xf]
        %v392 = vld [vmem:[%s298 + $0xc0] sm:$0xf]
        %v393 = vld [vmem:[%s298 + $0xc4] sm:$0xf]
        %v394 = vld [vmem:[%s298 + $0xc8] sm:$0xf]
        %v395 = vld [vmem:[%s298 + $0xcc] sm:$0xf]
        %v396 = vld [vmem:[%s298 + $0xd0] sm:$0xf]
        %v397 = vld [vmem:[%s298 + $0xd4] sm:$0xf]
        %v398 = vld [vmem:[#allocation6] sm:$0xff]
        %v399 = vld [vmem:[#allocation6 + $0x8] sm:$0xff]
        %v400 = vld [vmem:[#allocation6 + $0x10] sm:$0xff]
        %v401 = vld [vmem:[#allocation6 + $0x18] sm:$0xff]
        %v402 = vld [vmem:[#allocation6 + $0x20] sm:$0xff]
        %v403 = vld [vmem:[#allocation6 + $0x28] sm:$0xff]
        %v404 = vld [vmem:[#allocation6 + $0x30] sm:$0xff]
        %v405 = vld [vmem:[#allocation6 + $0x38] sm:$0xff]
        %v406 = vld [vmem:[#allocation6 + $0x40] sm:$0xff]
        %v407 = vld [vmem:[#allocation6 + $0x48] sm:$0xff]
        %v408 = vld [vmem:[#allocation6 + $0x50] sm:$0xff]
        %v409 = vld [vmem:[#allocation6 + $0x58] sm:$0xff]
        %v410 = vld [vmem:[#allocation6 + $0x60] sm:$0xff]
        %v411 = vld [vmem:[#allocation6 + $0x68] sm:$0xff]
        %v412 = vld [vmem:[#allocation6 + $0x70] sm:$0xff]
        %v413 = vld [vmem:[#allocation6 + $0x78] sm:$0xff]
        %v468 = vunpack.c.l.b16 %v344
        %v469 = vunpack.c.l.b16 %v345
        %v470 = vunpack.c.l.b16 %v346
        %v471 = vunpack.c.l.b16 %v347
        %v472 = vunpack.c.l.b16 %v348
        %v473 = vunpack.c.l.b16 %v349
        %v474 = vunpack.c.l.b16 %v350
        %v475 = vunpack.c.l.b16 %v351
        %v476 = vunpack.c.l.b16 %v352
        %v477 = vunpack.c.l.b16 %v353
        %v478 = vunpack.c.l.b16 %v354
        %v479 = vunpack.c.l.b16 %v355
        %v480 = vunpack.c.l.b16 %v356
        %v481 = vunpack.c.l.b16 %v357
        %v482 = vunpack.c.l.b16 %v358
        %v483 = vunpack.c.l.b16 %v359
        %v484 = vunpack.c.l.b16 %v360
        %v485 = vunpack.c.l.b16 %v361
        %v486 = vunpack.c.l.b16 %v362
        %v487 = vunpack.c.l.b16 %v363
        %v488 = vunpack.c.l.b16 %v364
        %v489 = vunpack.c.l.b16 %v365
        %v490 = vunpack.c.l.b16 %v366
        %v491 = vunpack.c.l.b16 %v367
        %v492 = vunpack.c.l.b16 %v368
        %v493 = vunpack.c.l.b16 %v369
        %v494 = vunpack.c.l.b16 %v370
        %v495 = vunpack.c.l.b16 %v371
        %v496 = vunpack.c.l.b16 %v372
        %v497 = vunpack.c.l.b16 %v373
        %v498 = vunpack.c.l.b16 %v374
        %v499 = vunpack.c.l.b16 %v375
        %v500 = vunpack.c.l.b16 %v376
        %v501 = vunpack.c.l.b16 %v377
        %v502 = vunpack.c.l.b16 %v378
        %v503 = vunpack.c.l.b16 %v379
        %v504 = vunpack.c.l.b16 %v380
        %v505 = vunpack.c.l.b16 %v381
        %v506 = vunpack.c.l.b16 %v382
        %v507 = vunpack.c.l.b16 %v383
        %v508 = vunpack.c.l.b16 %v384
        %v509 = vunpack.c.l.b16 %v385
        %v510 = vunpack.c.l.b16 %v386
        %v511 = vunpack.c.l.b16 %v387
        %v512 = vunpack.c.l.b16 %v388
        %v513 = vunpack.c.l.b16 %v389
        %v514 = vunpack.c.l.b16 %v390
        %v515 = vunpack.c.l.b16 %v391
        %v516 = vunpack.c.l.b16 %v392
        %v517 = vunpack.c.l.b16 %v393
        %v518 = vunpack.c.l.b16 %v394
        %v519 = vunpack.c.l.b16 %v395
        %v520 = vunpack.c.l.b16 %v396
        %v521 = vunpack.c.l.b16 %v397
        %v522 = vpack.c.b16 %v469, %v468
        %v523 = vpack.c.b16 %v471, %v470
        %v524 = vpack.c.b16 %v473, %v472
        %v525 = vpack.c.b16 %v475, %v474
        %v526 = vpack.c.b16 %v477, %v476
        %v527 = vpack.c.b16 %v479, %v478
        %v528 = vpack.c.b16 %v481, %v480
        %v529 = vpack.c.b16 %v483, %v482
        %v530 = vpack.c.b16 %v485, %v484
        %v531 = vpack.c.b16 %v487, %v486
        %v532 = vpack.c.b16 %v489, %v488
        %v533 = vpack.c.b16 %v491, %v490
        %v534 = vpack.c.b16 %v493, %v492
        %v535 = vpack.c.b16 %v495, %v494
        %v536 = vpack.c.b16 %v497, %v496
        %v537 = vpack.c.b16 %v499, %v498
        %v538 = vpack.c.b16 %v501, %v500
        %v539 = vpack.c.b16 %v503, %v502
        %v540 = vpack.c.b16 %v505, %v504
        %v541 = vpack.c.b16 %v507, %v506
        %v542 = vpack.c.b16 %v509, %v508
        %v543 = vpack.c.b16 %v511, %v510
        %v544 = vpack.c.b16 %v513, %v512
        %v545 = vpack.c.b16 %v515, %v514
        %v546 = vpack.c.b16 %v517, %v516
        %v547 = vpack.c.b16 %v519, %v518
        %v548 = vpack.c.b16 %v521, %v520
        %v592 = vunpack.c.l.b16 %v398
        %v593 = vunpack.c.h.b16 %v398
        %v594 = vunpack.c.l.b16 %v399
        %v595 = vunpack.c.h.b16 %v399
        %v596 = vunpack.c.l.b16 %v400
        %v597 = vunpack.c.h.b16 %v400
        %v598 = vunpack.c.l.b16 %v401
        %v599 = vunpack.c.h.b16 %v401
        %v600 = vunpack.c.l.b16 %v402
        %v601 = vunpack.c.h.b16 %v402
        %v602 = vunpack.c.l.b16 %v403
        %v603 = vunpack.c.h.b16 %v403
        %v604 = vunpack.c.l.b16 %v404
        %v605 = vunpack.c.h.b16 %v404
        %v606 = vunpack.c.l.b16 %v405
        %v607 = vunpack.c.h.b16 %v405
        %v608 = vunpack.c.l.b16 %v406
        %v609 = vunpack.c.h.b16 %v406
        %v610 = vunpack.c.l.b16 %v407
        %v611 = vunpack.c.h.b16 %v407
        %v612 = vunpack.c.l.b16 %v408
        %v613 = vunpack.c.h.b16 %v408
        %v614 = vunpack.c.l.b16 %v409
        %v615 = vunpack.c.h.b16 %v409
        %v616 = vunpack.c.l.b16 %v410
        %v617 = vunpack.c.h.b16 %v410
        %v618 = vunpack.c.l.b16 %v411
        %v619 = vunpack.c.h.b16 %v411
        %v620 = vunpack.c.l.b16 %v412
        %v621 = vunpack.c.h.b16 %v412
        %v622 = vunpack.c.l.b16 %v413
        %v623 = vunpack.c.h.b16 %v413
        %v624 = vpack.c.b16 %v594, %v592
        %v625 = vpack.c.b16 %v595, %v593
        %v626 = vpack.c.b16 %v598, %v596
        %v627 = vpack.c.b16 %v599, %v597
        %v628 = vpack.c.b16 %v602, %v600
        %v629 = vpack.c.b16 %v603, %v601
        %v630 = vpack.c.b16 %v606, %v604
        %v631 = vpack.c.b16 %v607, %v605
        %v632 = vpack.c.b16 %v610, %v608
        %v633 = vpack.c.b16 %v611, %v609
        %v634 = vpack.c.b16 %v614, %v612
        %v635 = vpack.c.b16 %v615, %v613
        %v636 = vpack.c.b16 %v618, %v616
        %v637 = vpack.c.b16 %v619, %v617
        %v638 = vpack.c.b16 %v622, %v620
        %v639 = vpack.c.b16 %v623, %v621
        %656 = vmatprep.subr.bf16.mxu0 %v625
        %657 = vmatpush1.bf16.msra.mxu0 %v624
        %658 = vmatprep.subr.bf16.mxu0 %v627
        %659 = vmatpush1.bf16.msra.mxu0 %v626
        %660 = vmatprep.subr.bf16.mxu0 %v629
        %661 = vmatpush1.bf16.msra.mxu0 %v628
        %662 = vmatprep.subr.bf16.mxu0 %v631
        %663 = vmatpush1.bf16.msra.mxu0 %v630
        %664 = vmatprep.subr.bf16.mxu0 %v633
        %665 = vmatpush1.bf16.msra.mxu0 %v632
        %666 = vmatprep.subr.bf16.mxu0 %v635
        %667 = vmatpush1.bf16.msra.mxu0 %v634
        %668 = vmatprep.subr.bf16.mxu0 %v637
        %669 = vmatpush1.bf16.msra.mxu0 %v636
        %670 = vmatprep.subr.bf16.mxu0 %v639
        %671 = vmatpush1.bf16.msra.mxu0 %v638
        %672 = vmatprep.subr.bf16.mxu0 0
        %673 = vmatpush1.bf16.msra.mxu0 0
        %674 = vmatprep.subr.bf16.mxu0 0
        %675 = vmatpush1.bf16.msra.mxu0 0
        %676 = vmatprep.subr.bf16.mxu0 0
        %677 = vmatpush1.bf16.msra.mxu0 0
        %678 = vmatprep.subr.bf16.mxu0 0
        %679 = vmatpush1.bf16.msra.mxu0 0
        %680 = vmatprep.subr.bf16.mxu0 0
        %681 = vmatpush1.bf16.msra.mxu0 0
        %682 = vmatprep.subr.bf16.mxu0 0
        %683 = vmatpush1.bf16.msra.mxu0 0
        %684 = vmatprep.subr.bf16.mxu0 0
        %685 = vmatpush1.bf16.msra.mxu0 0
        %686 = vmatprep.subr.bf16.mxu0 0
        %687 = vmatpush1.bf16.msra.mxu0 0
        %688 = vmatprep.mubr.bf16.mxu0 0
        %689 = vmatmul.mubr.bf16.gmra.mrb[0].mxu0 %v522
        %v690 = vpop.f32.mrb[0].mxu0
        %v691 = vadd.f32 0.0, %v690
        %v692 = vpop.f32.mrb[0].mxu0
        %v693 = vadd.f32 0.0, %v692
        %v694 = vpop.f32.mrb[0].mxu0
        %v695 = vadd.f32 0.0, %v694
        %v696 = vpop.f32.mrb[0].mxu0
        %v697 = vadd.f32 0.0, %v696
        %698 = vmatprep.mubr.bf16.mxu0 0
        %699 = vmatmul.mubr.bf16.gmra.mrb[0].mxu0 %v523
        %v700 = vpop.f32.mrb[0].mxu0
        %v701 = vadd.f32 0.0, %v700
        %v702 = vpop.f32.mrb[0].mxu0
        %v703 = vadd.f32 0.0, %v702
        %v704 = vpop.f32.mrb[0].mxu0
        %v705 = vadd.f32 0.0, %v704
        %v706 = vpop.f32.mrb[0].mxu0
        %v707 = vadd.f32 0.0, %v706
        %708 = vmatprep.mubr.bf16.mxu0 0
        %709 = vmatmul.mubr.bf16.gmra.mrb[0].mxu0 %v524
        %v710 = vpop.f32.mrb[0].mxu0
        %v711 = vadd.f32 0.0, %v710
        %v712 = vpop.f32.mrb[0].mxu0
        %v713 = vadd.f32 0.0, %v712
        %v714 = vpop.f32.mrb[0].mxu0
        %v715 = vadd.f32 0.0, %v714
        %v716 = vpop.f32.mrb[0].mxu0
        %v717 = vadd.f32 0.0, %v716
        %718 = vmatprep.mubr.bf16.mxu0 0
        %719 = vmatmul.mubr.bf16.gmra.mrb[0].mxu0 %v525
        %v720 = vpop.f32.mrb[0].mxu0
        %v721 = vadd.f32 0.0, %v720
        %v722 = vpop.f32.mrb[0].mxu0
        %v723 = vadd.f32 0.0, %v722
        %v724 = vpop.f32.mrb[0].mxu0
        %v725 = vadd.f32 0.0, %v724
        %v726 = vpop.f32.mrb[0].mxu0
        %v727 = vadd.f32 0.0, %v726
        %728 = vmatprep.mubr.bf16.mxu0 0
        %729 = vmatmul.mubr.bf16.gmra.mrb[0].mxu0 %v526
        %v730 = vpop.f32.mrb[0].mxu0
        %v731 = vadd.f32 0.0, %v730
        %v732 = vpop.f32.mrb[0].mxu0
        %v733 = vadd.f32 0.0, %v732
        %v734 = vpop.f32.mrb[0].mxu0
        %v735 = vadd.f32 0.0, %v734
        %v736 = vpop.f32.mrb[0].mxu0
        %v737 = vadd.f32 0.0, %v736
        %738 = vmatprep.mubr.bf16.mxu0 0
        %739 = vmatmul.mubr.bf16.gmra.mrb[0].mxu0 %v527
        %v740 = vpop.f32.mrb[0].mxu0
        %v741 = vadd.f32 0.0, %v740
        %v742 = vpop.f32.mrb[0].mxu0
        %v743 = vadd.f32 0.0, %v742
        %v744 = vpop.f32.mrb[0].mxu0
        %v745 = vadd.f32 0.0, %v744
        %v746 = vpop.f32.mrb[0].mxu0
        %v747 = vadd.f32 0.0, %v746
        %748 = vmatprep.mubr.bf16.mxu0 0
        %749 = vmatmul.mubr.bf16.gmra.mrb[0].mxu0 %v528
        %v750 = vpop.f32.mrb[0].mxu0
        %v751 = vadd.f32 0.0, %v750
        %v752 = vpop.f32.mrb[0].mxu0
        %v753 = vadd.f32 0.0, %v752
        %v754 = vpop.f32.mrb[0].mxu0
        %v755 = vadd.f32 0.0, %v754
        %v756 = vpop.f32.mrb[0].mxu0
        %v757 = vadd.f32 0.0, %v756
        %758 = vmatprep.mubr.bf16.mxu0 0
        %759 = vmatmul.mubr.bf16.gmra.mrb[0].mxu0 %v529
        %v760 = vpop.f32.mrb[0].mxu0
        %v761 = vadd.f32 0.0, %v760
        %v762 = vpop.f32.mrb[0].mxu0
        %v763 = vadd.f32 0.0, %v762
        %v764 = vpop.f32.mrb[0].mxu0
        %v765 = vadd.f32 0.0, %v764
        %v766 = vpop.f32.mrb[0].mxu0
        %v767 = vadd.f32 0.0, %v766
        %768 = vmatprep.mubr.bf16.mxu0 0
        %769 = vmatmul.mubr.bf16.gmra.mrb[0].mxu0 %v530
        %v770 = vpop.f32.mrb[0].mxu0
        %v771 = vadd.f32 0.0, %v770
        %v772 = vpop.f32.mrb[0].mxu0
        %v773 = vadd.f32 0.0, %v772
        %v774 = vpop.f32.mrb[0].mxu0
        %v775 = vadd.f32 0.0, %v774
        %v776 = vpop.f32.mrb[0].mxu0
        %v777 = vadd.f32 0.0, %v776
        %778 = vmatprep.mubr.bf16.mxu0 0
        %779 = vmatmul.mubr.bf16.gmra.mrb[0].mxu0 %v531
        %v780 = vpop.f32.mrb[0].mxu0
        %v781 = vadd.f32 0.0, %v780
        %v782 = vpop.f32.mrb[0].mxu0
        %v783 = vadd.f32 0.0, %v782
        %v784 = vpop.f32.mrb[0].mxu0
        %v785 = vadd.f32 0.0, %v784
        %v786 = vpop.f32.mrb[0].mxu0
        %v787 = vadd.f32 0.0, %v786
        %788 = vmatprep.mubr.bf16.mxu0 0
        %789 = vmatmul.mubr.bf16.gmra.mrb[0].mxu0 %v532
        %v790 = vpop.f32.mrb[0].mxu0
        %v791 = vadd.f32 0.0, %v790
        %v792 = vpop.f32.mrb[0].mxu0
        %v793 = vadd.f32 0.0, %v792
        %v794 = vpop.f32.mrb[0].mxu0
        %v795 = vadd.f32 0.0, %v794
        %v796 = vpop.f32.mrb[0].mxu0
        %v797 = vadd.f32 0.0, %v796
        %798 = vmatprep.mubr.bf16.mxu0 0
        %799 = vmatmul.mubr.bf16.gmra.mrb[0].mxu0 %v533
        %v800 = vpop.f32.mrb[0].mxu0
        %v801 = vadd.f32 0.0, %v800
        %v802 = vpop.f32.mrb[0].mxu0
        %v803 = vadd.f32 0.0, %v802
        %v804 = vpop.f32.mrb[0].mxu0
        %v805 = vadd.f32 0.0, %v804
        %v806 = vpop.f32.mrb[0].mxu0
        %v807 = vadd.f32 0.0, %v806
        %808 = vmatprep.mubr.bf16.mxu0 0
        %809 = vmatmul.mubr.bf16.gmra.mrb[0].mxu0 %v534
        %v810 = vpop.f32.mrb[0].mxu0
        %v811 = vadd.f32 0.0, %v810
        %v812 = vpop.f32.mrb[0].mxu0
        %v813 = vadd.f32 0.0, %v812
        %v814 = vpop.f32.mrb[0].mxu0
        %v815 = vadd.f32 0.0, %v814
        %v816 = vpop.f32.mrb[0].mxu0
        %v817 = vadd.f32 0.0, %v816
        %818 = vmatprep.mubr.bf16.mxu0 0
        %819 = vmatmul.mubr.bf16.gmra.mrb[0].mxu0 %v535
        %v820 = vpop.f32.mrb[0].mxu0
        %v821 = vadd.f32 0.0, %v820
        %v822 = vpop.f32.mrb[0].mxu0
        %v823 = vadd.f32 0.0, %v822
        %v824 = vpop.f32.mrb[0].mxu0
        %v825 = vadd.f32 0.0, %v824
        %v826 = vpop.f32.mrb[0].mxu0
        %v827 = vadd.f32 0.0, %v826
        %828 = vmatprep.mubr.bf16.mxu0 0
        %829 = vmatmul.mubr.bf16.gmra.mrb[0].mxu0 %v536
        %v830 = vpop.f32.mrb[0].mxu0
        %v831 = vadd.f32 0.0, %v830
        %v832 = vpop.f32.mrb[0].mxu0
        %v833 = vadd.f32 0.0, %v832
        %v834 = vpop.f32.mrb[0].mxu0
        %v835 = vadd.f32 0.0, %v834
        %v836 = vpop.f32.mrb[0].mxu0
        %v837 = vadd.f32 0.0, %v836
        %838 = vmatprep.mubr.bf16.mxu0 0
        %839 = vmatmul.mubr.bf16.gmra.mrb[0].mxu0 %v537
        %v840 = vpop.f32.mrb[0].mxu0
        %v841 = vadd.f32 0.0, %v840
        %v842 = vpop.f32.mrb[0].mxu0
        %v843 = vadd.f32 0.0, %v842
        %v844 = vpop.f32.mrb[0].mxu0
        %v845 = vadd.f32 0.0, %v844
        %v846 = vpop.f32.mrb[0].mxu0
        %v847 = vadd.f32 0.0, %v846
        %848 = vmatprep.mubr.bf16.mxu0 0
        %849 = vmatmul.mubr.bf16.gmra.mrb[0].mxu0 %v538
        %v850 = vpop.f32.mrb[0].mxu0
        %v851 = vadd.f32 0.0, %v850
        %v852 = vpop.f32.mrb[0].mxu0
        %v853 = vadd.f32 0.0, %v852
        %v854 = vpop.f32.mrb[0].mxu0
        %v855 = vadd.f32 0.0, %v854
        %v856 = vpop.f32.mrb[0].mxu0
        %v857 = vadd.f32 0.0, %v856
        %858 = vmatprep.mubr.bf16.mxu0 0
        %859 = vmatmul.mubr.bf16.gmra.mrb[0].mxu0 %v539
        %v860 = vpop.f32.mrb[0].mxu0
        %v861 = vadd.f32 0.0, %v860
        %v862 = vpop.f32.mrb[0].mxu0
        %v863 = vadd.f32 0.0, %v862
        %v864 = vpop.f32.mrb[0].mxu0
        %v865 = vadd.f32 0.0, %v864
        %v866 = vpop.f32.mrb[0].mxu0
        %v867 = vadd.f32 0.0, %v866
        %868 = vmatprep.mubr.bf16.mxu0 0
        %869 = vmatmul.mubr.bf16.gmra.mrb[0].mxu0 %v540
        %v870 = vpop.f32.mrb[0].mxu0
        %v871 = vadd.f32 0.0, %v870
        %v872 = vpop.f32.mrb[0].mxu0
        %v873 = vadd.f32 0.0, %v872
        %v874 = vpop.f32.mrb[0].mxu0
        %v875 = vadd.f32 0.0, %v874
        %v876 = vpop.f32.mrb[0].mxu0
        %v877 = vadd.f32 0.0, %v876
        %878 = vmatprep.mubr.bf16.mxu0 0
        %879 = vmatmul.mubr.bf16.gmra.mrb[0].mxu0 %v541
        %v880 = vpop.f32.mrb[0].mxu0
        %v881 = vadd.f32 0.0, %v880
        %v882 = vpop.f32.mrb[0].mxu0
        %v883 = vadd.f32 0.0, %v882
        %v884 = vpop.f32.mrb[0].mxu0
        %v885 = vadd.f32 0.0, %v884
        %v886 = vpop.f32.mrb[0].mxu0
        %v887 = vadd.f32 0.0, %v886
        %888 = vmatprep.mubr.bf16.mxu0 0
        %889 = vmatmul.mubr.bf16.gmra.mrb[0].mxu0 %v542
        %v890 = vpop.f32.mrb[0].mxu0
        %v891 = vadd.f32 0.0, %v890
        %v892 = vpop.f32.mrb[0].mxu0
        %v893 = vadd.f32 0.0, %v892
        %v894 = vpop.f32.mrb[0].mxu0
        %v895 = vadd.f32 0.0, %v894
        %v896 = vpop.f32.mrb[0].mxu0
        %v897 = vadd.f32 0.0, %v896
        %898 = vmatprep.mubr.bf16.mxu0 0
        %899 = vmatmul.mubr.bf16.gmra.mrb[0].mxu0 %v543
        %v900 = vpop.f32.mrb[0].mxu0
        %v901 = vadd.f32 0.0, %v900
        %v902 = vpop.f32.mrb[0].mxu0
        %v903 = vadd.f32 0.0, %v902
        %v904 = vpop.f32.mrb[0].mxu0
        %v905 = vadd.f32 0.0, %v904
        %v906 = vpop.f32.mrb[0].mxu0
        %v907 = vadd.f32 0.0, %v906
        %908 = vmatprep.mubr.bf16.mxu0 0
        %909 = vmatmul.mubr.bf16.gmra.mrb[0].mxu0 %v544
        %v910 = vpop.f32.mrb[0].mxu0
        %v911 = vadd.f32 0.0, %v910
        %v912 = vpop.f32.mrb[0].mxu0
        %v913 = vadd.f32 0.0, %v912
        %v914 = vpop.f32.mrb[0].mxu0
        %v915 = vadd.f32 0.0, %v914
        %v916 = vpop.f32.mrb[0].mxu0
        %v917 = vadd.f32 0.0, %v916
        %918 = vmatprep.mubr.bf16.mxu0 0
        %919 = vmatmul.mubr.bf16.gmra.mrb[0].mxu0 %v545
        %v920 = vpop.f32.mrb[0].mxu0
        %v921 = vadd.f32 0.0, %v920
        %v922 = vpop.f32.mrb[0].mxu0
        %v923 = vadd.f32 0.0, %v922
        %v924 = vpop.f32.mrb[0].mxu0
        %v925 = vadd.f32 0.0, %v924
        %v926 = vpop.f32.mrb[0].mxu0
        %v927 = vadd.f32 0.0, %v926
        %928 = vmatprep.mubr.bf16.mxu0 0
        %929 = vmatmul.mubr.bf16.gmra.mrb[0].mxu0 %v546
        %v930 = vpop.f32.mrb[0].mxu0
        %v931 = vadd.f32 0.0, %v930
        %v932 = vpop.f32.mrb[0].mxu0
        %v933 = vadd.f32 0.0, %v932
        %v934 = vpop.f32.mrb[0].mxu0
        %v935 = vadd.f32 0.0, %v934
        %v936 = vpop.f32.mrb[0].mxu0
        %v937 = vadd.f32 0.0, %v936
        %938 = vmatprep.mubr.bf16.mxu0 0
        %939 = vmatmul.mubr.bf16.gmra.mrb[0].mxu0 %v547
        %v940 = vpop.f32.mrb[0].mxu0
        %v941 = vadd.f32 0.0, %v940
        %v942 = vpop.f32.mrb[0].mxu0
        %v943 = vadd.f32 0.0, %v942
        %v944 = vpop.f32.mrb[0].mxu0
        %v945 = vadd.f32 0.0, %v944
        %v946 = vpop.f32.mrb[0].mxu0
        %v947 = vadd.f32 0.0, %v946
        %948 = vmatprep.mubr.bf16.mxu0 0
        %949 = vmatmul.mubr.bf16.gmra.mrb[0].mxu0 %v548
        %v950 = vpop.f32.mrb[0].mxu0
        %v951 = vadd.f32 0.0, %v950
        %v952 = vpop.f32.mrb[0].mxu0
        %v953 = vadd.f32 0.0, %v952
        %v954 = vpop.f32.mrb[0].mxu0
        %v955 = vadd.f32 0.0, %v954
        %v956 = vpop.f32.mrb[0].mxu0
        %v957 = vadd.f32 0.0, %v956
        %958 = vdwg.mxu0
        %v959 = vlaneseq
        %v960 = vshrl.u32 %v959, 7
        %v961 = vadd.s32 %v960, 8
        %v962 = vadd.s32 %v960, 16
        %v963 = vadd.s32 %v960, 24
        %v964 = vadd.s32 %v960, 32
        %v965 = vadd.s32 %v960, 40
        %v966 = vadd.s32 %v960, 48
        %v967 = vadd.s32 %v960, 56
        %v968 = vadd.s32 %v960, 64
        %v969 = vadd.s32 %v960, 72
        %v970 = vadd.s32 %v960, 80
        %v971 = vadd.s32 %v960, 88
        %v972 = vadd.s32 %v960, 96
        %v973 = vadd.s32 %v960, 104
        %v974 = vadd.s32 %v960, 112
        %v975 = vadd.s32 %v960, 120
        %v976 = vadd.s32 %v960, 128
        %v977 = vadd.s32 %v960, 136
        %v978 = vadd.s32 %v960, 144
        %v979 = vadd.s32 %v960, 152
        %v980 = vadd.s32 %v960, 160
        %v981 = vadd.s32 %v960, 168
        %v982 = vadd.s32 %v960, 176
        %v983 = vadd.s32 %v960, 184
        %v984 = vadd.s32 %v960, 192
        %v985 = vadd.s32 %v960, 200
        %v986 = vadd.s32 %v960, 208
        %v987 = vadd.s32 %v960, 216
        %v988 = vadd.s32 %v960, 224
        %v989 = vadd.s32 %v960, 232
        %v990 = vadd.s32 %v960, 240
        %v991 = vadd.s32 %v960, 248
        %v992 = vadd.s32 %v960, 256
        %v993 = vadd.s32 %v960, 264
        %v994 = vadd.s32 %v960, 272
        %v995 = vadd.s32 %v960, 280
        %v996 = vadd.s32 %v960, 288
        %v997 = vadd.s32 %v960, 296
        %v998 = vadd.s32 %v960, 304
        %v999 = vadd.s32 %v960, 312
        %v1000 = vadd.s32 %v960, 320
        %v1001 = vadd.s32 %v960, 328
        %v1002 = vadd.s32 %v960, 336
        %v1003 = vadd.s32 %v960, 344
        %v1004 = vadd.s32 %v960, 352
        %v1005 = vadd.s32 %v960, 360
        %v1006 = vadd.s32 %v960, 368
        %v1007 = vadd.s32 %v960, 376
        %v1008 = vadd.s32 %v960, 384
        %v1009 = vadd.s32 %v960, 392
        %v1010 = vadd.s32 %v960, 400
        %v1011 = vadd.s32 %v960, 408
        %v1012 = vadd.s32 %v960, 416
        %v1013 = vadd.s32 %v960, 424
        %v1014 = vcvt.s32.f32 %v960
        %v1015 = vcvt.s32.f32 %v961
        %v1016 = vcvt.s32.f32 %v962
        %v1017 = vcvt.s32.f32 %v963
        %v1018 = vcvt.s32.f32 %v964
        %v1019 = vcvt.s32.f32 %v965
        %v1020 = vcvt.s32.f32 %v966
        %v1021 = vcvt.s32.f32 %v967
        %v1022 = vcvt.s32.f32 %v968
        %v1023 = vcvt.s32.f32 %v969
        %v1024 = vcvt.s32.f32 %v970
        %v1025 = vcvt.s32.f32 %v971
        %v1026 = vcvt.s32.f32 %v972
        %v1027 = vcvt.s32.f32 %v973
        %v1028 = vcvt.s32.f32 %v974
        %v1029 = vcvt.s32.f32 %v975
        %v1030 = vcvt.s32.f32 %v976
        %v1031 = vcvt.s32.f32 %v977
        %v1032 = vcvt.s32.f32 %v978
        %v1033 = vcvt.s32.f32 %v979
        %v1034 = vcvt.s32.f32 %v980
        %v1035 = vcvt.s32.f32 %v981
        %v1036 = vcvt.s32.f32 %v982
        %v1037 = vcvt.s32.f32 %v983
        %v1038 = vcvt.s32.f32 %v984
        %v1039 = vcvt.s32.f32 %v985
        %v1040 = vcvt.s32.f32 %v986
        %v1041 = vcvt.s32.f32 %v987
        %v1042 = vcvt.s32.f32 %v988
        %v1043 = vcvt.s32.f32 %v989
        %v1044 = vcvt.s32.f32 %v990
        %v1045 = vcvt.s32.f32 %v991
        %v1046 = vcvt.s32.f32 %v992
        %v1047 = vcvt.s32.f32 %v993
        %v1048 = vcvt.s32.f32 %v994
        %v1049 = vcvt.s32.f32 %v995
        %v1050 = vcvt.s32.f32 %v996
        %v1051 = vcvt.s32.f32 %v997
        %v1052 = vcvt.s32.f32 %v998
        %v1053 = vcvt.s32.f32 %v999
        %v1054 = vcvt.s32.f32 %v1000
        %v1055 = vcvt.s32.f32 %v1001
        %v1056 = vcvt.s32.f32 %v1002
        %v1057 = vcvt.s32.f32 %v1003
        %v1058 = vcvt.s32.f32 %v1004
        %v1059 = vcvt.s32.f32 %v1005
        %v1060 = vcvt.s32.f32 %v1006
        %v1061 = vcvt.s32.f32 %v1007
        %v1062 = vcvt.s32.f32 %v1008
        %v1063 = vcvt.s32.f32 %v1009
        %v1064 = vcvt.s32.f32 %v1010
        %v1065 = vcvt.s32.f32 %v1011
        %v1066 = vcvt.s32.f32 %v1012
        %v1067 = vcvt.s32.f32 %v1013
        %v1068 = vadd.f32 %v1014, 0.5
        %v1069 = vadd.f32 %v1015, 0.5
        %v1070 = vadd.f32 %v1016, 0.5
        %v1071 = vadd.f32 %v1017, 0.5
        %v1072 = vadd.f32 %v1018, 0.5
        %v1073 = vadd.f32 %v1019, 0.5
        %v1074 = vadd.f32 %v1020, 0.5
        %v1075 = vadd.f32 %v1021, 0.5
        %v1076 = vadd.f32 %v1022, 0.5
        %v1077 = vadd.f32 %v1023, 0.5
        %v1078 = vadd.f32 %v1024, 0.5
        %v1079 = vadd.f32 %v1025, 0.5
        %v1080 = vadd.f32 %v1026, 0.5
        %v1081 = vadd.f32 %v1027, 0.5
        %v1082 = vadd.f32 %v1028, 0.5
        %v1083 = vadd.f32 %v1029, 0.5
        %v1084 = vadd.f32 %v1030, 0.5
        %v1085 = vadd.f32 %v1031, 0.5
        %v1086 = vadd.f32 %v1032, 0.5
        %v1087 = vadd.f32 %v1033, 0.5
        %v1088 = vadd.f32 %v1034, 0.5
        %v1089 = vadd.f32 %v1035, 0.5
        %v1090 = vadd.f32 %v1036, 0.5
        %v1091 = vadd.f32 %v1037, 0.5
        %v1092 = vadd.f32 %v1038, 0.5
        %v1093 = vadd.f32 %v1039, 0.5
        %v1094 = vadd.f32 %v1040, 0.5
        %v1095 = vadd.f32 %v1041, 0.5
        %v1096 = vadd.f32 %v1042, 0.5
        %v1097 = vadd.f32 %v1043, 0.5
        %v1098 = vadd.f32 %v1044, 0.5
        %v1099 = vadd.f32 %v1045, 0.5
        %v1100 = vadd.f32 %v1046, 0.5
        %v1101 = vadd.f32 %v1047, 0.5
        %v1102 = vadd.f32 %v1048, 0.5
        %v1103 = vadd.f32 %v1049, 0.5
        %v1104 = vadd.f32 %v1050, 0.5
        %v1105 = vadd.f32 %v1051, 0.5
        %v1106 = vadd.f32 %v1052, 0.5
        %v1107 = vadd.f32 %v1053, 0.5
        %v1108 = vadd.f32 %v1054, 0.5
        %v1109 = vadd.f32 %v1055, 0.5
        %v1110 = vadd.f32 %v1056, 0.5
        %v1111 = vadd.f32 %v1057, 0.5
        %v1112 = vadd.f32 %v1058, 0.5
        %v1113 = vadd.f32 %v1059, 0.5
        %v1114 = vadd.f32 %v1060, 0.5
        %v1115 = vadd.f32 %v1061, 0.5
        %v1116 = vadd.f32 %v1062, 0.5
        %v1117 = vadd.f32 %v1063, 0.5
        %v1118 = vadd.f32 %v1064, 0.5
        %v1119 = vadd.f32 %v1065, 0.5
        %v1120 = vadd.f32 %v1066, 0.5
        %v1121 = vadd.f32 %v1067, 0.5
        %v1122 = vmul.f32 %v1068, 0.0023148148
        %v1123 = vmul.f32 %v1069, 0.0023148148
        %v1124 = vmul.f32 %v1070, 0.0023148148
        %v1125 = vmul.f32 %v1071, 0.0023148148
        %v1126 = vmul.f32 %v1072, 0.0023148148
        %v1127 = vmul.f32 %v1073, 0.0023148148
        %v1128 = vmul.f32 %v1074, 0.0023148148
        %v1129 = vmul.f32 %v1075, 0.0023148148
        %v1130 = vmul.f32 %v1076, 0.0023148148
        %v1131 = vmul.f32 %v1077, 0.0023148148
        %v1132 = vmul.f32 %v1078, 0.0023148148
        %v1133 = vmul.f32 %v1079, 0.0023148148
        %v1134 = vmul.f32 %v1080, 0.0023148148
        %v1135 = vmul.f32 %v1081, 0.0023148148
        %v1136 = vmul.f32 %v1082, 0.0023148148
        %v1137 = vmul.f32 %v1083, 0.0023148148
        %v1138 = vmul.f32 %v1084, 0.0023148148
        %v1139 = vmul.f32 %v1085, 0.0023148148
        %v1140 = vmul.f32 %v1086, 0.0023148148
        %v1141 = vmul.f32 %v1087, 0.0023148148
        %v1142 = vmul.f32 %v1088, 0.0023148148
        %v1143 = vmul.f32 %v1089, 0.0023148148
        %v1144 = vmul.f32 %v1090, 0.0023148148
        %v1145 = vmul.f32 %v1091, 0.0023148148
        %v1146 = vmul.f32 %v1092, 0.0023148148
        %v1147 = vmul.f32 %v1093, 0.0023148148
        %v1148 = vmul.f32 %v1094, 0.0023148148
        %v1149 = vmul.f32 %v1095, 0.0023148148
        %v1150 = vmul.f32 %v1096, 0.0023148148
        %v1151 = vmul.f32 %v1097, 0.0023148148
        %v1152 = vmul.f32 %v1098, 0.0023148148
        %v1153 = vmul.f32 %v1099, 0.0023148148
        %v1154 = vmul.f32 %v1100, 0.0023148148
        %v1155 = vmul.f32 %v1101, 0.0023148148
        %v1156 = vmul.f32 %v1102, 0.0023148148
        %v1157 = vmul.f32 %v1103, 0.0023148148
        %v1158 = vmul.f32 %v1104, 0.0023148148
        %v1159 = vmul.f32 %v1105, 0.0023148148
        %v1160 = vmul.f32 %v1106, 0.0023148148
        %v1161 = vmul.f32 %v1107, 0.0023148148
        %v1162 = vmul.f32 %v1108, 0.0023148148
        %v1163 = vmul.f32 %v1109, 0.0023148148
        %v1164 = vmul.f32 %v1110, 0.0023148148
        %v1165 = vmul.f32 %v1111, 0.0023148148
        %v1166 = vmul.f32 %v1112, 0.0023148148
        %v1167 = vmul.f32 %v1113, 0.0023148148
        %v1168 = vmul.f32 %v1114, 0.0023148148
        %v1169 = vmul.f32 %v1115, 0.0023148148
        %v1170 = vmul.f32 %v1116, 0.0023148148
        %v1171 = vmul.f32 %v1117, 0.0023148148
        %v1172 = vmul.f32 %v1118, 0.0023148148
        %v1173 = vmul.f32 %v1119, 0.0023148148
        %v1174 = vmul.f32 %v1120, 0.0023148148
        %v1175 = vmul.f32 %v1121, 0.0023148148
        %v1176 = vfloor.f32 %v1122
        %v1177 = vfloor.f32 %v1123
        %v1178 = vfloor.f32 %v1124
        %v1179 = vfloor.f32 %v1125
        %v1180 = vfloor.f32 %v1126
        %v1181 = vfloor.f32 %v1127
        %v1182 = vfloor.f32 %v1128
        %v1183 = vfloor.f32 %v1129
        %v1184 = vfloor.f32 %v1130
        %v1185 = vfloor.f32 %v1131
        %v1186 = vfloor.f32 %v1132
        %v1187 = vfloor.f32 %v1133
        %v1188 = vfloor.f32 %v1134
        %v1189 = vfloor.f32 %v1135
        %v1190 = vfloor.f32 %v1136
        %v1191 = vfloor.f32 %v1137
        %v1192 = vfloor.f32 %v1138
        %v1193 = vfloor.f32 %v1139
        %v1194 = vfloor.f32 %v1140
        %v1195 = vfloor.f32 %v1141
        %v1196 = vfloor.f32 %v1142
        %v1197 = vfloor.f32 %v1143
        %v1198 = vfloor.f32 %v1144
        %v1199 = vfloor.f32 %v1145
        %v1200 = vfloor.f32 %v1146
        %v1201 = vfloor.f32 %v1147
        %v1202 = vfloor.f32 %v1148
        %v1203 = vfloor.f32 %v1149
        %v1204 = vfloor.f32 %v1150
        %v1205 = vfloor.f32 %v1151
        %v1206 = vfloor.f32 %v1152
        %v1207 = vfloor.f32 %v1153
        %v1208 = vfloor.f32 %v1154
        %v1209 = vfloor.f32 %v1155
        %v1210 = vfloor.f32 %v1156
        %v1211 = vfloor.f32 %v1157
        %v1212 = vfloor.f32 %v1158
        %v1213 = vfloor.f32 %v1159
        %v1214 = vfloor.f32 %v1160
        %v1215 = vfloor.f32 %v1161
        %v1216 = vfloor.f32 %v1162
        %v1217 = vfloor.f32 %v1163
        %v1218 = vfloor.f32 %v1164
        %v1219 = vfloor.f32 %v1165
        %v1220 = vfloor.f32 %v1166
        %v1221 = vfloor.f32 %v1167
        %v1222 = vfloor.f32 %v1168
        %v1223 = vfloor.f32 %v1169
        %v1224 = vfloor.f32 %v1170
        %v1225 = vfloor.f32 %v1171
        %v1226 = vfloor.f32 %v1172
        %v1227 = vfloor.f32 %v1173
        %v1228 = vfloor.f32 %v1174
        %v1229 = vfloor.f32 %v1175
        %v1230 = vmul.f32 %v1176, 432.0
        %v1231 = vmul.f32 %v1177, 432.0
        %v1232 = vmul.f32 %v1178, 432.0
        %v1233 = vmul.f32 %v1179, 432.0
        %v1234 = vmul.f32 %v1180, 432.0
        %v1235 = vmul.f32 %v1181, 432.0
        %v1236 = vmul.f32 %v1182, 432.0
        %v1237 = vmul.f32 %v1183, 432.0
        %v1238 = vmul.f32 %v1184, 432.0
        %v1239 = vmul.f32 %v1185, 432.0
        %v1240 = vmul.f32 %v1186, 432.0
        %v1241 = vmul.f32 %v1187, 432.0
        %v1242 = vmul.f32 %v1188, 432.0
        %v1243 = vmul.f32 %v1189, 432.0
        %v1244 = vmul.f32 %v1190, 432.0
        %v1245 = vmul.f32 %v1191, 432.0
        %v1246 = vmul.f32 %v1192, 432.0
        %v1247 = vmul.f32 %v1193, 432.0
        %v1248 = vmul.f32 %v1194, 432.0
        %v1249 = vmul.f32 %v1195, 432.0
        %v1250 = vmul.f32 %v1196, 432.0
        %v1251 = vmul.f32 %v1197, 432.0
        %v1252 = vmul.f32 %v1198, 432.0
        %v1253 = vmul.f32 %v1199, 432.0
        %v1254 = vmul.f32 %v1200, 432.0
        %v1255 = vmul.f32 %v1201, 432.0
        %v1256 = vmul.f32 %v1202, 432.0
        %v1257 = vmul.f32 %v1203, 432.0
        %v1258 = vmul.f32 %v1204, 432.0
        %v1259 = vmul.f32 %v1205, 432.0
        %v1260 = vmul.f32 %v1206, 432.0
        %v1261 = vmul.f32 %v1207, 432.0
        %v1262 = vmul.f32 %v1208, 432.0
        %v1263 = vmul.f32 %v1209, 432.0
        %v1264 = vmul.f32 %v1210, 432.0
        %v1265 = vmul.f32 %v1211, 432.0
        %v1266 = vmul.f32 %v1212, 432.0
        %v1267 = vmul.f32 %v1213, 432.0
        %v1268 = vmul.f32 %v1214, 432.0
        %v1269 = vmul.f32 %v1215, 432.0
        %v1270 = vmul.f32 %v1216, 432.0
        %v1271 = vmul.f32 %v1217, 432.0
        %v1272 = vmul.f32 %v1218, 432.0
        %v1273 = vmul.f32 %v1219, 432.0
        %v1274 = vmul.f32 %v1220, 432.0
        %v1275 = vmul.f32 %v1221, 432.0
        %v1276 = vmul.f32 %v1222, 432.0
        %v1277 = vmul.f32 %v1223, 432.0
        %v1278 = vmul.f32 %v1224, 432.0
        %v1279 = vmul.f32 %v1225, 432.0
        %v1280 = vmul.f32 %v1226, 432.0
        %v1281 = vmul.f32 %v1227, 432.0
        %v1282 = vmul.f32 %v1228, 432.0
        %v1283 = vmul.f32 %v1229, 432.0
        %v1284 = vsub.f32 %v1014, %v1230
        %v1285 = vsub.f32 %v1015, %v1231
        %v1286 = vsub.f32 %v1016, %v1232
        %v1287 = vsub.f32 %v1017, %v1233
        %v1288 = vsub.f32 %v1018, %v1234
        %v1289 = vsub.f32 %v1019, %v1235
        %v1290 = vsub.f32 %v1020, %v1236
        %v1291 = vsub.f32 %v1021, %v1237
        %v1292 = vsub.f32 %v1022, %v1238
        %v1293 = vsub.f32 %v1023, %v1239
        %v1294 = vsub.f32 %v1024, %v1240
        %v1295 = vsub.f32 %v1025, %v1241
        %v1296 = vsub.f32 %v1026, %v1242
        %v1297 = vsub.f32 %v1027, %v1243
        %v1298 = vsub.f32 %v1028, %v1244
        %v1299 = vsub.f32 %v1029, %v1245
        %v1300 = vsub.f32 %v1030, %v1246
        %v1301 = vsub.f32 %v1031, %v1247
        %v1302 = vsub.f32 %v1032, %v1248
        %v1303 = vsub.f32 %v1033, %v1249
        %v1304 = vsub.f32 %v1034, %v1250
        %v1305 = vsub.f32 %v1035, %v1251
        %v1306 = vsub.f32 %v1036, %v1252
        %v1307 = vsub.f32 %v1037, %v1253
        %v1308 = vsub.f32 %v1038, %v1254
        %v1309 = vsub.f32 %v1039, %v1255
        %v1310 = vsub.f32 %v1040, %v1256
        %v1311 = vsub.f32 %v1041, %v1257
        %v1312 = vsub.f32 %v1042, %v1258
        %v1313 = vsub.f32 %v1043, %v1259
        %v1314 = vsub.f32 %v1044, %v1260
        %v1315 = vsub.f32 %v1045, %v1261
        %v1316 = vsub.f32 %v1046, %v1262
        %v1317 = vsub.f32 %v1047, %v1263
        %v1318 = vsub.f32 %v1048, %v1264
        %v1319 = vsub.f32 %v1049, %v1265
        %v1320 = vsub.f32 %v1050, %v1266
        %v1321 = vsub.f32 %v1051, %v1267
        %v1322 = vsub.f32 %v1052, %v1268
        %v1323 = vsub.f32 %v1053, %v1269
        %v1324 = vsub.f32 %v1054, %v1270
        %v1325 = vsub.f32 %v1055, %v1271
        %v1326 = vsub.f32 %v1056, %v1272
        %v1327 = vsub.f32 %v1057, %v1273
        %v1328 = vsub.f32 %v1058, %v1274
        %v1329 = vsub.f32 %v1059, %v1275
        %v1330 = vsub.f32 %v1060, %v1276
        %v1331 = vsub.f32 %v1061, %v1277
        %v1332 = vsub.f32 %v1062, %v1278
        %v1333 = vsub.f32 %v1063, %v1279
        %v1334 = vsub.f32 %v1064, %v1280
        %v1335 = vsub.f32 %v1065, %v1281
        %v1336 = vsub.f32 %v1066, %v1282
        %v1337 = vsub.f32 %v1067, %v1283
        %v1338 = vadd.f32 %v1284, 0.5
        %v1339 = vadd.f32 %v1285, 0.5
        %v1340 = vadd.f32 %v1286, 0.5
        %v1341 = vadd.f32 %v1287, 0.5
        %v1342 = vadd.f32 %v1288, 0.5
        %v1343 = vadd.f32 %v1289, 0.5
        %v1344 = vadd.f32 %v1290, 0.5
        %v1345 = vadd.f32 %v1291, 0.5
        %v1346 = vadd.f32 %v1292, 0.5
        %v1347 = vadd.f32 %v1293, 0.5
        %v1348 = vadd.f32 %v1294, 0.5
        %v1349 = vadd.f32 %v1295, 0.5
        %v1350 = vadd.f32 %v1296, 0.5
        %v1351 = vadd.f32 %v1297, 0.5
        %v1352 = vadd.f32 %v1298, 0.5
        %v1353 = vadd.f32 %v1299, 0.5
        %v1354 = vadd.f32 %v1300, 0.5
        %v1355 = vadd.f32 %v1301, 0.5
        %v1356 = vadd.f32 %v1302, 0.5
        %v1357 = vadd.f32 %v1303, 0.5
        %v1358 = vadd.f32 %v1304, 0.5
        %v1359 = vadd.f32 %v1305, 0.5
        %v1360 = vadd.f32 %v1306, 0.5
        %v1361 = vadd.f32 %v1307, 0.5
        %v1362 = vadd.f32 %v1308, 0.5
        %v1363 = vadd.f32 %v1309, 0.5
        %v1364 = vadd.f32 %v1310, 0.5
        %v1365 = vadd.f32 %v1311, 0.5
        %v1366 = vadd.f32 %v1312, 0.5
        %v1367 = vadd.f32 %v1313, 0.5
        %v1368 = vadd.f32 %v1314, 0.5
        %v1369 = vadd.f32 %v1315, 0.5
        %v1370 = vadd.f32 %v1316, 0.5
        %v1371 = vadd.f32 %v1317, 0.5
        %v1372 = vadd.f32 %v1318, 0.5
        %v1373 = vadd.f32 %v1319, 0.5
        %v1374 = vadd.f32 %v1320, 0.5
        %v1375 = vadd.f32 %v1321, 0.5
        %v1376 = vadd.f32 %v1322, 0.5
        %v1377 = vadd.f32 %v1323, 0.5
        %v1378 = vadd.f32 %v1324, 0.5
        %v1379 = vadd.f32 %v1325, 0.5
        %v1380 = vadd.f32 %v1326, 0.5
        %v1381 = vadd.f32 %v1327, 0.5
        %v1382 = vadd.f32 %v1328, 0.5
        %v1383 = vadd.f32 %v1329, 0.5
        %v1384 = vadd.f32 %v1330, 0.5
        %v1385 = vadd.f32 %v1331, 0.5
        %v1386 = vadd.f32 %v1332, 0.5
        %v1387 = vadd.f32 %v1333, 0.5
        %v1388 = vadd.f32 %v1334, 0.5
        %v1389 = vadd.f32 %v1335, 0.5
        %v1390 = vadd.f32 %v1336, 0.5
        %v1391 = vadd.f32 %v1337, 0.5
        %v1392 = vmul.f32 %v1338, 0.041666668
        %v1393 = vmul.f32 %v1339, 0.041666668
        %v1394 = vmul.f32 %v1340, 0.041666668
        %v1395 = vmul.f32 %v1341, 0.041666668
        %v1396 = vmul.f32 %v1342, 0.041666668
        %v1397 = vmul.f32 %v1343, 0.041666668
        %v1398 = vmul.f32 %v1344, 0.041666668
        %v1399 = vmul.f32 %v1345, 0.041666668
        %v1400 = vmul.f32 %v1346, 0.041666668
        %v1401 = vmul.f32 %v1347, 0.041666668
        %v1402 = vmul.f32 %v1348, 0.041666668
        %v1403 = vmul.f32 %v1349, 0.041666668
        %v1404 = vmul.f32 %v1350, 0.041666668
        %v1405 = vmul.f32 %v1351, 0.041666668
        %v1406 = vmul.f32 %v1352, 0.041666668
        %v1407 = vmul.f32 %v1353, 0.041666668
        %v1408 = vmul.f32 %v1354, 0.041666668
        %v1409 = vmul.f32 %v1355, 0.041666668
        %v1410 = vmul.f32 %v1356, 0.041666668
        %v1411 = vmul.f32 %v1357, 0.041666668
        %v1412 = vmul.f32 %v1358, 0.041666668
        %v1413 = vmul.f32 %v1359, 0.041666668
        %v1414 = vmul.f32 %v1360, 0.041666668
        %v1415 = vmul.f32 %v1361, 0.041666668
        %v1416 = vmul.f32 %v1362, 0.041666668
        %v1417 = vmul.f32 %v1363, 0.041666668
        %v1418 = vmul.f32 %v1364, 0.041666668
        %v1419 = vmul.f32 %v1365, 0.041666668
        %v1420 = vmul.f32 %v1366, 0.041666668
        %v1421 = vmul.f32 %v1367, 0.041666668
        %v1422 = vmul.f32 %v1368, 0.041666668
        %v1423 = vmul.f32 %v1369, 0.041666668
        %v1424 = vmul.f32 %v1370, 0.041666668
        %v1425 = vmul.f32 %v1371, 0.041666668
        %v1426 = vmul.f32 %v1372, 0.041666668
        %v1427 = vmul.f32 %v1373, 0.041666668
        %v1428 = vmul.f32 %v1374, 0.041666668
        %v1429 = vmul.f32 %v1375, 0.041666668
        %v1430 = vmul.f32 %v1376, 0.041666668
        %v1431 = vmul.f32 %v1377, 0.041666668
        %v1432 = vmul.f32 %v1378, 0.041666668
        %v1433 = vmul.f32 %v1379, 0.041666668
        %v1434 = vmul.f32 %v1380, 0.041666668
        %v1435 = vmul.f32 %v1381, 0.041666668
        %v1436 = vmul.f32 %v1382, 0.041666668
        %v1437 = vmul.f32 %v1383, 0.041666668
        %v1438 = vmul.f32 %v1384, 0.041666668
        %v1439 = vmul.f32 %v1385, 0.041666668
        %v1440 = vmul.f32 %v1386, 0.041666668
        %v1441 = vmul.f32 %v1387, 0.041666668
        %v1442 = vmul.f32 %v1388, 0.041666668
        %v1443 = vmul.f32 %v1389, 0.041666668
        %v1444 = vmul.f32 %v1390, 0.041666668
        %v1445 = vmul.f32 %v1391, 0.041666668
        %v1446 = vfloor.f32 %v1392
        %v1447 = vfloor.f32 %v1393
        %v1448 = vfloor.f32 %v1394
        %v1449 = vfloor.f32 %v1395
        %v1450 = vfloor.f32 %v1396
        %v1451 = vfloor.f32 %v1397
        %v1452 = vfloor.f32 %v1398
        %v1453 = vfloor.f32 %v1399
        %v1454 = vfloor.f32 %v1400
        %v1455 = vfloor.f32 %v1401
        %v1456 = vfloor.f32 %v1402
        %v1457 = vfloor.f32 %v1403
        %v1458 = vfloor.f32 %v1404
        %v1459 = vfloor.f32 %v1405
        %v1460 = vfloor.f32 %v1406
        %v1461 = vfloor.f32 %v1407
        %v1462 = vfloor.f32 %v1408
        %v1463 = vfloor.f32 %v1409
        %v1464 = vfloor.f32 %v1410
        %v1465 = vfloor.f32 %v1411
        %v1466 = vfloor.f32 %v1412
        %v1467 = vfloor.f32 %v1413
        %v1468 = vfloor.f32 %v1414
        %v1469 = vfloor.f32 %v1415
        %v1470 = vfloor.f32 %v1416
        %v1471 = vfloor.f32 %v1417
        %v1472 = vfloor.f32 %v1418
        %v1473 = vfloor.f32 %v1419
        %v1474 = vfloor.f32 %v1420
        %v1475 = vfloor.f32 %v1421
        %v1476 = vfloor.f32 %v1422
        %v1477 = vfloor.f32 %v1423
        %v1478 = vfloor.f32 %v1424
        %v1479 = vfloor.f32 %v1425
        %v1480 = vfloor.f32 %v1426
        %v1481 = vfloor.f32 %v1427
        %v1482 = vfloor.f32 %v1428
        %v1483 = vfloor.f32 %v1429
        %v1484 = vfloor.f32 %v1430
        %v1485 = vfloor.f32 %v1431
        %v1486 = vfloor.f32 %v1432
        %v1487 = vfloor.f32 %v1433
        %v1488 = vfloor.f32 %v1434
        %v1489 = vfloor.f32 %v1435
        %v1490 = vfloor.f32 %v1436
        %v1491 = vfloor.f32 %v1437
        %v1492 = vfloor.f32 %v1438
        %v1493 = vfloor.f32 %v1439
        %v1494 = vfloor.f32 %v1440
        %v1495 = vfloor.f32 %v1441
        %v1496 = vfloor.f32 %v1442
        %v1497 = vfloor.f32 %v1443
        %v1498 = vfloor.f32 %v1444
        %v1499 = vfloor.f32 %v1445
        %v1500 = vmul.f32 %v1446, 24.0
        %v1501 = vmul.f32 %v1447, 24.0
        %v1502 = vmul.f32 %v1448, 24.0
        %v1503 = vmul.f32 %v1449, 24.0
        %v1504 = vmul.f32 %v1450, 24.0
        %v1505 = vmul.f32 %v1451, 24.0
        %v1506 = vmul.f32 %v1452, 24.0
        %v1507 = vmul.f32 %v1453, 24.0
        %v1508 = vmul.f32 %v1454, 24.0
        %v1509 = vmul.f32 %v1455, 24.0
        %v1510 = vmul.f32 %v1456, 24.0
        %v1511 = vmul.f32 %v1457, 24.0
        %v1512 = vmul.f32 %v1458, 24.0
        %v1513 = vmul.f32 %v1459, 24.0
        %v1514 = vmul.f32 %v1460, 24.0
        %v1515 = vmul.f32 %v1461, 24.0
        %v1516 = vmul.f32 %v1462, 24.0
        %v1517 = vmul.f32 %v1463, 24.0
        %v1518 = vmul.f32 %v1464, 24.0
        %v1519 = vmul.f32 %v1465, 24.0
        %v1520 = vmul.f32 %v1466, 24.0
        %v1521 = vmul.f32 %v1467, 24.0
        %v1522 = vmul.f32 %v1468, 24.0
        %v1523 = vmul.f32 %v1469, 24.0
        %v1524 = vmul.f32 %v1470, 24.0
        %v1525 = vmul.f32 %v1471, 24.0
        %v1526 = vmul.f32 %v1472, 24.0
        %v1527 = vmul.f32 %v1473, 24.0
        %v1528 = vmul.f32 %v1474, 24.0
        %v1529 = vmul.f32 %v1475, 24.0
        %v1530 = vmul.f32 %v1476, 24.0
        %v1531 = vmul.f32 %v1477, 24.0
        %v1532 = vmul.f32 %v1478, 24.0
        %v1533 = vmul.f32 %v1479, 24.0
        %v1534 = vmul.f32 %v1480, 24.0
        %v1535 = vmul.f32 %v1481, 24.0
        %v1536 = vmul.f32 %v1482, 24.0
        %v1537 = vmul.f32 %v1483, 24.0
        %v1538 = vmul.f32 %v1484, 24.0
        %v1539 = vmul.f32 %v1485, 24.0
        %v1540 = vmul.f32 %v1486, 24.0
        %v1541 = vmul.f32 %v1487, 24.0
        %v1542 = vmul.f32 %v1488, 24.0
        %v1543 = vmul.f32 %v1489, 24.0
        %v1544 = vmul.f32 %v1490, 24.0
        %v1545 = vmul.f32 %v1491, 24.0
        %v1546 = vmul.f32 %v1492, 24.0
        %v1547 = vmul.f32 %v1493, 24.0
        %v1548 = vmul.f32 %v1494, 24.0
        %v1549 = vmul.f32 %v1495, 24.0
        %v1550 = vmul.f32 %v1496, 24.0
        %v1551 = vmul.f32 %v1497, 24.0
        %v1552 = vmul.f32 %v1498, 24.0
        %v1553 = vmul.f32 %v1499, 24.0
        %v1554 = vsub.f32 %v1284, %v1500
        %v1555 = vsub.f32 %v1285, %v1501
        %v1556 = vsub.f32 %v1286, %v1502
        %v1557 = vsub.f32 %v1287, %v1503
        %v1558 = vsub.f32 %v1288, %v1504
        %v1559 = vsub.f32 %v1289, %v1505
        %v1560 = vsub.f32 %v1290, %v1506
        %v1561 = vsub.f32 %v1291, %v1507
        %v1562 = vsub.f32 %v1292, %v1508
        %v1563 = vsub.f32 %v1293, %v1509
        %v1564 = vsub.f32 %v1294, %v1510
        %v1565 = vsub.f32 %v1295, %v1511
        %v1566 = vsub.f32 %v1296, %v1512
        %v1567 = vsub.f32 %v1297, %v1513
        %v1568 = vsub.f32 %v1298, %v1514
        %v1569 = vsub.f32 %v1299, %v1515
        %v1570 = vsub.f32 %v1300, %v1516
        %v1571 = vsub.f32 %v1301, %v1517
        %v1572 = vsub.f32 %v1302, %v1518
        %v1573 = vsub.f32 %v1303, %v1519
        %v1574 = vsub.f32 %v1304, %v1520
        %v1575 = vsub.f32 %v1305, %v1521
        %v1576 = vsub.f32 %v1306, %v1522
        %v1577 = vsub.f32 %v1307, %v1523
        %v1578 = vsub.f32 %v1308, %v1524
        %v1579 = vsub.f32 %v1309, %v1525
        %v1580 = vsub.f32 %v1310, %v1526
        %v1581 = vsub.f32 %v1311, %v1527
        %v1582 = vsub.f32 %v1312, %v1528
        %v1583 = vsub.f32 %v1313, %v1529
        %v1584 = vsub.f32 %v1314, %v1530
        %v1585 = vsub.f32 %v1315, %v1531
        %v1586 = vsub.f32 %v1316, %v1532
        %v1587 = vsub.f32 %v1317, %v1533
        %v1588 = vsub.f32 %v1318, %v1534
        %v1589 = vsub.f32 %v1319, %v1535
        %v1590 = vsub.f32 %v1320, %v1536
        %v1591 = vsub.f32 %v1321, %v1537
        %v1592 = vsub.f32 %v1322, %v1538
        %v1593 = vsub.f32 %v1323, %v1539
        %v1594 = vsub.f32 %v1324, %v1540
        %v1595 = vsub.f32 %v1325, %v1541
        %v1596 = vsub.f32 %v1326, %v1542
        %v1597 = vsub.f32 %v1327, %v1543
        %v1598 = vsub.f32 %v1328, %v1544
        %v1599 = vsub.f32 %v1329, %v1545
        %v1600 = vsub.f32 %v1330, %v1546
        %v1601 = vsub.f32 %v1331, %v1547
        %v1602 = vsub.f32 %v1332, %v1548
        %v1603 = vsub.f32 %v1333, %v1549
        %v1604 = vsub.f32 %v1334, %v1550
        %v1605 = vsub.f32 %v1335, %v1551
        %v1606 = vsub.f32 %v1336, %v1552
        %v1607 = vsub.f32 %v1337, %v1553
        %vm1608 = vcmp.ge.f32.partialorder %v1446, 1.0
        %vm1609 = vcmp.ge.f32.partialorder %v1447, 1.0
        %vm1610 = vcmp.ge.f32.partialorder %v1448, 1.0
        %vm1611 = vcmp.ge.f32.partialorder %v1449, 1.0
        %vm1612 = vcmp.ge.f32.partialorder %v1450, 1.0
        %vm1613 = vcmp.ge.f32.partialorder %v1451, 1.0
        %vm1614 = vcmp.ge.f32.partialorder %v1452, 1.0
        %vm1615 = vcmp.ge.f32.partialorder %v1453, 1.0
        %vm1616 = vcmp.ge.f32.partialorder %v1454, 1.0
        %vm1617 = vcmp.ge.f32.partialorder %v1455, 1.0
        %vm1618 = vcmp.ge.f32.partialorder %v1456, 1.0
        %vm1619 = vcmp.ge.f32.partialorder %v1457, 1.0
        %vm1620 = vcmp.ge.f32.partialorder %v1458, 1.0
        %vm1621 = vcmp.ge.f32.partialorder %v1459, 1.0
        %vm1622 = vcmp.ge.f32.partialorder %v1460, 1.0
        %vm1623 = vcmp.ge.f32.partialorder %v1461, 1.0
        %vm1624 = vcmp.ge.f32.partialorder %v1462, 1.0
        %vm1625 = vcmp.ge.f32.partialorder %v1463, 1.0
        %vm1626 = vcmp.ge.f32.partialorder %v1464, 1.0
        %vm1627 = vcmp.ge.f32.partialorder %v1465, 1.0
        %vm1628 = vcmp.ge.f32.partialorder %v1466, 1.0
        %vm1629 = vcmp.ge.f32.partialorder %v1467, 1.0
        %vm1630 = vcmp.ge.f32.partialorder %v1468, 1.0
        %vm1631 = vcmp.ge.f32.partialorder %v1469, 1.0
        %vm1632 = vcmp.ge.f32.partialorder %v1470, 1.0
        %vm1633 = vcmp.ge.f32.partialorder %v1471, 1.0
        %vm1634 = vcmp.ge.f32.partialorder %v1472, 1.0
        %vm1635 = vcmp.ge.f32.partialorder %v1473, 1.0
        %vm1636 = vcmp.ge.f32.partialorder %v1474, 1.0
        %vm1637 = vcmp.ge.f32.partialorder %v1475, 1.0
        %vm1638 = vcmp.ge.f32.partialorder %v1476, 1.0
        %vm1639 = vcmp.ge.f32.partialorder %v1477, 1.0
        %vm1640 = vcmp.ge.f32.partialorder %v1478, 1.0
        %vm1641 = vcmp.ge.f32.partialorder %v1479, 1.0
        %vm1642 = vcmp.ge.f32.partialorder %v1480, 1.0
        %vm1643 = vcmp.ge.f32.partialorder %v1481, 1.0
        %vm1644 = vcmp.ge.f32.partialorder %v1482, 1.0
        %vm1645 = vcmp.ge.f32.partialorder %v1483, 1.0
        %vm1646 = vcmp.ge.f32.partialorder %v1484, 1.0
        %vm1647 = vcmp.ge.f32.partialorder %v1485, 1.0
        %vm1648 = vcmp.ge.f32.partialorder %v1486, 1.0
        %vm1649 = vcmp.ge.f32.partialorder %v1487, 1.0
        %vm1650 = vcmp.ge.f32.partialorder %v1488, 1.0
        %vm1651 = vcmp.ge.f32.partialorder %v1489, 1.0
        %vm1652 = vcmp.ge.f32.partialorder %v1490, 1.0
        %vm1653 = vcmp.ge.f32.partialorder %v1491, 1.0
        %vm1654 = vcmp.ge.f32.partialorder %v1492, 1.0
        %vm1655 = vcmp.ge.f32.partialorder %v1493, 1.0
        %vm1656 = vcmp.ge.f32.partialorder %v1494, 1.0
        %vm1657 = vcmp.ge.f32.partialorder %v1495, 1.0
        %vm1658 = vcmp.ge.f32.partialorder %v1496, 1.0
        %vm1659 = vcmp.ge.f32.partialorder %v1497, 1.0
        %vm1660 = vcmp.ge.f32.partialorder %v1498, 1.0
        %vm1661 = vcmp.ge.f32.partialorder %v1499, 1.0
        %vm1662 = vcmp.le.f32.partialorder %v1446, 16.0
        %vm1663 = vcmp.le.f32.partialorder %v1447, 16.0
        %vm1664 = vcmp.le.f32.partialorder %v1448, 16.0
        %vm1665 = vcmp.le.f32.partialorder %v1449, 16.0
        %vm1666 = vcmp.le.f32.partialorder %v1450, 16.0
        %vm1667 = vcmp.le.f32.partialorder %v1451, 16.0
        %vm1668 = vcmp.le.f32.partialorder %v1452, 16.0
        %vm1669 = vcmp.le.f32.partialorder %v1453, 16.0
        %vm1670 = vcmp.le.f32.partialorder %v1454, 16.0
        %vm1671 = vcmp.le.f32.partialorder %v1455, 16.0
        %vm1672 = vcmp.le.f32.partialorder %v1456, 16.0
        %vm1673 = vcmp.le.f32.partialorder %v1457, 16.0
        %vm1674 = vcmp.le.f32.partialorder %v1458, 16.0
        %vm1675 = vcmp.le.f32.partialorder %v1459, 16.0
        %vm1676 = vcmp.le.f32.partialorder %v1460, 16.0
        %vm1677 = vcmp.le.f32.partialorder %v1461, 16.0
        %vm1678 = vcmp.le.f32.partialorder %v1462, 16.0
        %vm1679 = vcmp.le.f32.partialorder %v1463, 16.0
        %vm1680 = vcmp.le.f32.partialorder %v1464, 16.0
        %vm1681 = vcmp.le.f32.partialorder %v1465, 16.0
        %vm1682 = vcmp.le.f32.partialorder %v1466, 16.0
        %vm1683 = vcmp.le.f32.partialorder %v1467, 16.0
        %vm1684 = vcmp.le.f32.partialorder %v1468, 16.0
        %vm1685 = vcmp.le.f32.partialorder %v1469, 16.0
        %vm1686 = vcmp.le.f32.partialorder %v1470, 16.0
        %vm1687 = vcmp.le.f32.partialorder %v1471, 16.0
        %vm1688 = vcmp.le.f32.partialorder %v1472, 16.0
        %vm1689 = vcmp.le.f32.partialorder %v1473, 16.0
        %vm1690 = vcmp.le.f32.partialorder %v1474, 16.0
        %vm1691 = vcmp.le.f32.partialorder %v1475, 16.0
        %vm1692 = vcmp.le.f32.partialorder %v1476, 16.0
        %vm1693 = vcmp.le.f32.partialorder %v1477, 16.0
        %vm1694 = vcmp.le.f32.partialorder %v1478, 16.0
        %vm1695 = vcmp.le.f32.partialorder %v1479, 16.0
        %vm1696 = vcmp.le.f32.partialorder %v1480, 16.0
        %vm1697 = vcmp.le.f32.partialorder %v1481, 16.0
        %vm1698 = vcmp.le.f32.partialorder %v1482, 16.0
        %vm1699 = vcmp.le.f32.partialorder %v1483, 16.0
        %vm1700 = vcmp.le.f32.partialorder %v1484, 16.0
        %vm1701 = vcmp.le.f32.partialorder %v1485, 16.0
        %vm1702 = vcmp.le.f32.partialorder %v1486, 16.0
        %vm1703 = vcmp.le.f32.partialorder %v1487, 16.0
        %vm1704 = vcmp.le.f32.partialorder %v1488, 16.0
        %vm1705 = vcmp.le.f32.partialorder %v1489, 16.0
        %vm1706 = vcmp.le.f32.partialorder %v1490, 16.0
        %vm1707 = vcmp.le.f32.partialorder %v1491, 16.0
        %vm1708 = vcmp.le.f32.partialorder %v1492, 16.0
        %vm1709 = vcmp.le.f32.partialorder %v1493, 16.0
        %vm1710 = vcmp.le.f32.partialorder %v1494, 16.0
        %vm1711 = vcmp.le.f32.partialorder %v1495, 16.0
        %vm1712 = vcmp.le.f32.partialorder %v1496, 16.0
        %vm1713 = vcmp.le.f32.partialorder %v1497, 16.0
        %vm1714 = vcmp.le.f32.partialorder %v1498, 16.0
        %vm1715 = vcmp.le.f32.partialorder %v1499, 16.0
        %vm1716 = vmand %vm1608, %vm1662
        %vm1717 = vmand %vm1609, %vm1663
        %vm1718 = vmand %vm1610, %vm1664
        %vm1719 = vmand %vm1611, %vm1665
        %vm1720 = vmand %vm1612, %vm1666
        %vm1721 = vmand %vm1613, %vm1667
        %vm1722 = vmand %vm1614, %vm1668
        %vm1723 = vmand %vm1615, %vm1669
        %vm1724 = vmand %vm1616, %vm1670
        %vm1725 = vmand %vm1617, %vm1671
        %vm1726 = vmand %vm1618, %vm1672
        %vm1727 = vmand %vm1619, %vm1673
        %vm1728 = vmand %vm1620, %vm1674
        %vm1729 = vmand %vm1621, %vm1675
        %vm1730 = vmand %vm1622, %vm1676
        %vm1731 = vmand %vm1623, %vm1677
        %vm1732 = vmand %vm1624, %vm1678
        %vm1733 = vmand %vm1625, %vm1679
        %vm1734 = vmand %vm1626, %vm1680
        %vm1735 = vmand %vm1627, %vm1681
        %vm1736 = vmand %vm1628, %vm1682
        %vm1737 = vmand %vm1629, %vm1683
        %vm1738 = vmand %vm1630, %vm1684
        %vm1739 = vmand %vm1631, %vm1685
        %vm1740 = vmand %vm1632, %vm1686
        %vm1741 = vmand %vm1633, %vm1687
        %vm1742 = vmand %vm1634, %vm1688
        %vm1743 = vmand %vm1635, %vm1689
        %vm1744 = vmand %vm1636, %vm1690
        %vm1745 = vmand %vm1637, %vm1691
        %vm1746 = vmand %vm1638, %vm1692
        %vm1747 = vmand %vm1639, %vm1693
        %vm1748 = vmand %vm1640, %vm1694
        %vm1749 = vmand %vm1641, %vm1695
        %vm1750 = vmand %vm1642, %vm1696
        %vm1751 = vmand %vm1643, %vm1697
        %vm1752 = vmand %vm1644, %vm1698
        %vm1753 = vmand %vm1645, %vm1699
        %vm1754 = vmand %vm1646, %vm1700
        %vm1755 = vmand %vm1647, %vm1701
        %vm1756 = vmand %vm1648, %vm1702
        %vm1757 = vmand %vm1649, %vm1703
        %vm1758 = vmand %vm1650, %vm1704
        %vm1759 = vmand %vm1651, %vm1705
        %vm1760 = vmand %vm1652, %vm1706
        %vm1761 = vmand %vm1653, %vm1707
        %vm1762 = vmand %vm1654, %vm1708
        %vm1763 = vmand %vm1655, %vm1709
        %vm1764 = vmand %vm1656, %vm1710
        %vm1765 = vmand %vm1657, %vm1711
        %vm1766 = vmand %vm1658, %vm1712
        %vm1767 = vmand %vm1659, %vm1713
        %vm1768 = vmand %vm1660, %vm1714
        %vm1769 = vmand %vm1661, %vm1715
        %vm1770 = vcmp.ge.f32.partialorder %v1554, 1.0
        %vm1771 = vcmp.ge.f32.partialorder %v1555, 1.0
        %vm1772 = vcmp.ge.f32.partialorder %v1556, 1.0
        %vm1773 = vcmp.ge.f32.partialorder %v1557, 1.0
        %vm1774 = vcmp.ge.f32.partialorder %v1558, 1.0
        %vm1775 = vcmp.ge.f32.partialorder %v1559, 1.0
        %vm1776 = vcmp.ge.f32.partialorder %v1560, 1.0
        %vm1777 = vcmp.ge.f32.partialorder %v1561, 1.0
        %vm1778 = vcmp.ge.f32.partialorder %v1562, 1.0
        %vm1779 = vcmp.ge.f32.partialorder %v1563, 1.0
        %vm1780 = vcmp.ge.f32.partialorder %v1564, 1.0
        %vm1781 = vcmp.ge.f32.partialorder %v1565, 1.0
        %vm1782 = vcmp.ge.f32.partialorder %v1566, 1.0
        %vm1783 = vcmp.ge.f32.partialorder %v1567, 1.0
        %vm1784 = vcmp.ge.f32.partialorder %v1568, 1.0
        %vm1785 = vcmp.ge.f32.partialorder %v1569, 1.0
        %vm1786 = vcmp.ge.f32.partialorder %v1570, 1.0
        %vm1787 = vcmp.ge.f32.partialorder %v1571, 1.0
        %vm1788 = vcmp.ge.f32.partialorder %v1572, 1.0
        %vm1789 = vcmp.ge.f32.partialorder %v1573, 1.0
        %vm1790 = vcmp.ge.f32.partialorder %v1574, 1.0
        %vm1791 = vcmp.ge.f32.partialorder %v1575, 1.0
        %vm1792 = vcmp.ge.f32.partialorder %v1576, 1.0
        %vm1793 = vcmp.ge.f32.partialorder %v1577, 1.0
        %vm1794 = vcmp.ge.f32.partialorder %v1578, 1.0
        %vm1795 = vcmp.ge.f32.partialorder %v1579, 1.0
        %vm1796 = vcmp.ge.f32.partialorder %v1580, 1.0
        %vm1797 = vcmp.ge.f32.partialorder %v1581, 1.0
        %vm1798 = vcmp.ge.f32.partialorder %v1582, 1.0
        %vm1799 = vcmp.ge.f32.partialorder %v1583, 1.0
        %vm1800 = vcmp.ge.f32.partialorder %v1584, 1.0
        %vm1801 = vcmp.ge.f32.partialorder %v1585, 1.0
        %vm1802 = vcmp.ge.f32.partialorder %v1586, 1.0
        %vm1803 = vcmp.ge.f32.partialorder %v1587, 1.0
        %vm1804 = vcmp.ge.f32.partialorder %v1588, 1.0
        %vm1805 = vcmp.ge.f32.partialorder %v1589, 1.0
        %vm1806 = vcmp.ge.f32.partialorder %v1590, 1.0
        %vm1807 = vcmp.ge.f32.partialorder %v1591, 1.0
        %vm1808 = vcmp.ge.f32.partialorder %v1592, 1.0
        %vm1809 = vcmp.ge.f32.partialorder %v1593, 1.0
        %vm1810 = vcmp.ge.f32.partialorder %v1594, 1.0
        %vm1811 = vcmp.ge.f32.partialorder %v1595, 1.0
        %vm1812 = vcmp.ge.f32.partialorder %v1596, 1.0
        %vm1813 = vcmp.ge.f32.partialorder %v1597, 1.0
        %vm1814 = vcmp.ge.f32.partialorder %v1598, 1.0
        %vm1815 = vcmp.ge.f32.partialorder %v1599, 1.0
        %vm1816 = vcmp.ge.f32.partialorder %v1600, 1.0
        %vm1817 = vcmp.ge.f32.partialorder %v1601, 1.0
        %vm1818 = vcmp.ge.f32.partialorder %v1602, 1.0
        %vm1819 = vcmp.ge.f32.partialorder %v1603, 1.0
        %vm1820 = vcmp.ge.f32.partialorder %v1604, 1.0
        %vm1821 = vcmp.ge.f32.partialorder %v1605, 1.0
        %vm1822 = vcmp.ge.f32.partialorder %v1606, 1.0
        %vm1823 = vcmp.ge.f32.partialorder %v1607, 1.0
        %vm1824 = vmand %vm1716, %vm1770
        %vm1825 = vmand %vm1717, %vm1771
        %vm1826 = vmand %vm1718, %vm1772
        %vm1827 = vmand %vm1719, %vm1773
        %vm1828 = vmand %vm1720, %vm1774
        %vm1829 = vmand %vm1721, %vm1775
        %vm1830 = vmand %vm1722, %vm1776
        %vm1831 = vmand %vm1723, %vm1777
        %vm1832 = vmand %vm1724, %vm1778
        %vm1833 = vmand %vm1725, %vm1779
        %vm1834 = vmand %vm1726, %vm1780
        %vm1835 = vmand %vm1727, %vm1781
        %vm1836 = vmand %vm1728, %vm1782
        %vm1837 = vmand %vm1729, %vm1783
        %vm1838 = vmand %vm1730, %vm1784
        %vm1839 = vmand %vm1731, %vm1785
        %vm1840 = vmand %vm1732, %vm1786
        %vm1841 = vmand %vm1733, %vm1787
        %vm1842 = vmand %vm1734, %vm1788
        %vm1843 = vmand %vm1735, %vm1789
        %vm1844 = vmand %vm1736, %vm1790
        %vm1845 = vmand %vm1737, %vm1791
        %vm1846 = vmand %vm1738, %vm1792
        %vm1847 = vmand %vm1739, %vm1793
        %vm1848 = vmand %vm1740, %vm1794
        %vm1849 = vmand %vm1741, %vm1795
        %vm1850 = vmand %vm1742, %vm1796
        %vm1851 = vmand %vm1743, %vm1797
        %vm1852 = vmand %vm1744, %vm1798
        %vm1853 = vmand %vm1745, %vm1799
        %vm1854 = vmand %vm1746, %vm1800
        %vm1855 = vmand %vm1747, %vm1801
        %vm1856 = vmand %vm1748, %vm1802
        %vm1857 = vmand %vm1749, %vm1803
        %vm1858 = vmand %vm1750, %vm1804
        %vm1859 = vmand %vm1751, %vm1805
        %vm1860 = vmand %vm1752, %vm1806
        %vm1861 = vmand %vm1753, %vm1807
        %vm1862 = vmand %vm1754, %vm1808
        %vm1863 = vmand %vm1755, %vm1809
        %vm1864 = vmand %vm1756, %vm1810
        %vm1865 = vmand %vm1757, %vm1811
        %vm1866 = vmand %vm1758, %vm1812
        %vm1867 = vmand %vm1759, %vm1813
        %vm1868 = vmand %vm1760, %vm1814
        %vm1869 = vmand %vm1761, %vm1815
        %vm1870 = vmand %vm1762, %vm1816
        %vm1871 = vmand %vm1763, %vm1817
        %vm1872 = vmand %vm1764, %vm1818
        %vm1873 = vmand %vm1765, %vm1819
        %vm1874 = vmand %vm1766, %vm1820
        %vm1875 = vmand %vm1767, %vm1821
        %vm1876 = vmand %vm1768, %vm1822
        %vm1877 = vmand %vm1769, %vm1823
        %vm1878 = vcmp.le.f32.partialorder %v1554, 16.0
        %vm1879 = vcmp.le.f32.partialorder %v1555, 16.0
        %vm1880 = vcmp.le.f32.partialorder %v1556, 16.0
        %vm1881 = vcmp.le.f32.partialorder %v1557, 16.0
        %vm1882 = vcmp.le.f32.partialorder %v1558, 16.0
        %vm1883 = vcmp.le.f32.partialorder %v1559, 16.0
        %vm1884 = vcmp.le.f32.partialorder %v1560, 16.0
        %vm1885 = vcmp.le.f32.partialorder %v1561, 16.0
        %vm1886 = vcmp.le.f32.partialorder %v1562, 16.0
        %vm1887 = vcmp.le.f32.partialorder %v1563, 16.0
        %vm1888 = vcmp.le.f32.partialorder %v1564, 16.0
        %vm1889 = vcmp.le.f32.partialorder %v1565, 16.0
        %vm1890 = vcmp.le.f32.partialorder %v1566, 16.0
        %vm1891 = vcmp.le.f32.partialorder %v1567, 16.0
        %vm1892 = vcmp.le.f32.partialorder %v1568, 16.0
        %vm1893 = vcmp.le.f32.partialorder %v1569, 16.0
        %vm1894 = vcmp.le.f32.partialorder %v1570, 16.0
        %vm1895 = vcmp.le.f32.partialorder %v1571, 16.0
        %vm1896 = vcmp.le.f32.partialorder %v1572, 16.0
        %vm1897 = vcmp.le.f32.partialorder %v1573, 16.0
        %vm1898 = vcmp.le.f32.partialorder %v1574, 16.0
        %vm1899 = vcmp.le.f32.partialorder %v1575, 16.0
        %vm1900 = vcmp.le.f32.partialorder %v1576, 16.0
        %vm1901 = vcmp.le.f32.partialorder %v1577, 16.0
        %vm1902 = vcmp.le.f32.partialorder %v1578, 16.0
        %vm1903 = vcmp.le.f32.partialorder %v1579, 16.0
        %vm1904 = vcmp.le.f32.partialorder %v1580, 16.0
        %vm1905 = vcmp.le.f32.partialorder %v1581, 16.0
        %vm1906 = vcmp.le.f32.partialorder %v1582, 16.0
        %vm1907 = vcmp.le.f32.partialorder %v1583, 16.0
        %vm1908 = vcmp.le.f32.partialorder %v1584, 16.0
        %vm1909 = vcmp.le.f32.partialorder %v1585, 16.0
        %vm1910 = vcmp.le.f32.partialorder %v1586, 16.0
        %vm1911 = vcmp.le.f32.partialorder %v1587, 16.0
        %vm1912 = vcmp.le.f32.partialorder %v1588, 16.0
        %vm1913 = vcmp.le.f32.partialorder %v1589, 16.0
        %vm1914 = vcmp.le.f32.partialorder %v1590, 16.0
        %vm1915 = vcmp.le.f32.partialorder %v1591, 16.0
        %vm1916 = vcmp.le.f32.partialorder %v1592, 16.0
        %vm1917 = vcmp.le.f32.partialorder %v1593, 16.0
        %vm1918 = vcmp.le.f32.partialorder %v1594, 16.0
        %vm1919 = vcmp.le.f32.partialorder %v1595, 16.0
        %vm1920 = vcmp.le.f32.partialorder %v1596, 16.0
        %vm1921 = vcmp.le.f32.partialorder %v1597, 16.0
        %vm1922 = vcmp.le.f32.partialorder %v1598, 16.0
        %vm1923 = vcmp.le.f32.partialorder %v1599, 16.0
        %vm1924 = vcmp.le.f32.partialorder %v1600, 16.0
        %vm1925 = vcmp.le.f32.partialorder %v1601, 16.0
        %vm1926 = vcmp.le.f32.partialorder %v1602, 16.0
        %vm1927 = vcmp.le.f32.partialorder %v1603, 16.0
        %vm1928 = vcmp.le.f32.partialorder %v1604, 16.0
        %vm1929 = vcmp.le.f32.partialorder %v1605, 16.0
        %vm1930 = vcmp.le.f32.partialorder %v1606, 16.0
        %vm1931 = vcmp.le.f32.partialorder %v1607, 16.0
        %vm1932 = vmand %vm1824, %vm1878
        %vm1933 = vmand %vm1825, %vm1879
        %vm1934 = vmand %vm1826, %vm1880
        %vm1935 = vmand %vm1827, %vm1881
        %vm1936 = vmand %vm1828, %vm1882
        %vm1937 = vmand %vm1829, %vm1883
        %vm1938 = vmand %vm1830, %vm1884
        %vm1939 = vmand %vm1831, %vm1885
        %vm1940 = vmand %vm1832, %vm1886
        %vm1941 = vmand %vm1833, %vm1887
        %vm1942 = vmand %vm1834, %vm1888
        %vm1943 = vmand %vm1835, %vm1889
        %vm1944 = vmand %vm1836, %vm1890
        %vm1945 = vmand %vm1837, %vm1891
        %vm1946 = vmand %vm1838, %vm1892
        %vm1947 = vmand %vm1839, %vm1893
        %vm1948 = vmand %vm1840, %vm1894
        %vm1949 = vmand %vm1841, %vm1895
        %vm1950 = vmand %vm1842, %vm1896
        %vm1951 = vmand %vm1843, %vm1897
        %vm1952 = vmand %vm1844, %vm1898
        %vm1953 = vmand %vm1845, %vm1899
        %vm1954 = vmand %vm1846, %vm1900
        %vm1955 = vmand %vm1847, %vm1901
        %vm1956 = vmand %vm1848, %vm1902
        %vm1957 = vmand %vm1849, %vm1903
        %vm1958 = vmand %vm1850, %vm1904
        %vm1959 = vmand %vm1851, %vm1905
        %vm1960 = vmand %vm1852, %vm1906
        %vm1961 = vmand %vm1853, %vm1907
        %vm1962 = vmand %vm1854, %vm1908
        %vm1963 = vmand %vm1855, %vm1909
        %vm1964 = vmand %vm1856, %vm1910
        %vm1965 = vmand %vm1857, %vm1911
        %vm1966 = vmand %vm1858, %vm1912
        %vm1967 = vmand %vm1859, %vm1913
        %vm1968 = vmand %vm1860, %vm1914
        %vm1969 = vmand %vm1861, %vm1915
        %vm1970 = vmand %vm1862, %vm1916
        %vm1971 = vmand %vm1863, %vm1917
        %vm1972 = vmand %vm1864, %vm1918
        %vm1973 = vmand %vm1865, %vm1919
        %vm1974 = vmand %vm1866, %vm1920
        %vm1975 = vmand %vm1867, %vm1921
        %vm1976 = vmand %vm1868, %vm1922
        %vm1977 = vmand %vm1869, %vm1923
        %vm1978 = vmand %vm1870, %vm1924
        %vm1979 = vmand %vm1871, %vm1925
        %vm1980 = vmand %vm1872, %vm1926
        %vm1981 = vmand %vm1873, %vm1927
        %vm1982 = vmand %vm1874, %vm1928
        %vm1983 = vmand %vm1875, %vm1929
        %vm1984 = vmand %vm1876, %vm1930
        %vm1985 = vmand %vm1877, %vm1931
        %v1986 = vsel %vm1932, 1.0, 0.0
        %v1987 = vsel %vm1933, 1.0, 0.0
        %v1988 = vsel %vm1934, 1.0, 0.0
        %v1989 = vsel %vm1935, 1.0, 0.0
        %v1990 = vsel %vm1936, 1.0, 0.0
        %v1991 = vsel %vm1937, 1.0, 0.0
        %v1992 = vsel %vm1938, 1.0, 0.0
        %v1993 = vsel %vm1939, 1.0, 0.0
        %v1994 = vsel %vm1940, 1.0, 0.0
        %v1995 = vsel %vm1941, 1.0, 0.0
        %v1996 = vsel %vm1942, 1.0, 0.0
        %v1997 = vsel %vm1943, 1.0, 0.0
        %v1998 = vsel %vm1944, 1.0, 0.0
        %v1999 = vsel %vm1945, 1.0, 0.0
        %v2000 = vsel %vm1946, 1.0, 0.0
        %v2001 = vsel %vm1947, 1.0, 0.0
        %v2002 = vsel %vm1948, 1.0, 0.0
        %v2003 = vsel %vm1949, 1.0, 0.0
        %v2004 = vsel %vm1950, 1.0, 0.0
        %v2005 = vsel %vm1951, 1.0, 0.0
        %v2006 = vsel %vm1952, 1.0, 0.0
        %v2007 = vsel %vm1953, 1.0, 0.0
        %v2008 = vsel %vm1954, 1.0, 0.0
        %v2009 = vsel %vm1955, 1.0, 0.0
        %v2010 = vsel %vm1956, 1.0, 0.0
        %v2011 = vsel %vm1957, 1.0, 0.0
        %v2012 = vsel %vm1958, 1.0, 0.0
        %v2013 = vsel %vm1959, 1.0, 0.0
        %v2014 = vsel %vm1960, 1.0, 0.0
        %v2015 = vsel %vm1961, 1.0, 0.0
        %v2016 = vsel %vm1962, 1.0, 0.0
        %v2017 = vsel %vm1963, 1.0, 0.0
        %v2018 = vsel %vm1964, 1.0, 0.0
        %v2019 = vsel %vm1965, 1.0, 0.0
        %v2020 = vsel %vm1966, 1.0, 0.0
        %v2021 = vsel %vm1967, 1.0, 0.0
        %v2022 = vsel %vm1968, 1.0, 0.0
        %v2023 = vsel %vm1969, 1.0, 0.0
        %v2024 = vsel %vm1970, 1.0, 0.0
        %v2025 = vsel %vm1971, 1.0, 0.0
        %v2026 = vsel %vm1972, 1.0, 0.0
        %v2027 = vsel %vm1973, 1.0, 0.0
        %v2028 = vsel %vm1974, 1.0, 0.0
        %v2029 = vsel %vm1975, 1.0, 0.0
        %v2030 = vsel %vm1976, 1.0, 0.0
        %v2031 = vsel %vm1977, 1.0, 0.0
        %v2032 = vsel %vm1978, 1.0, 0.0
        %v2033 = vsel %vm1979, 1.0, 0.0
        %v2034 = vsel %vm1980, 1.0, 0.0
        %v2035 = vsel %vm1981, 1.0, 0.0
        %v2036 = vsel %vm1982, 1.0, 0.0
        %v2037 = vsel %vm1983, 1.0, 0.0
        %v2038 = vsel %vm1984, 1.0, 0.0
        %v2039 = vsel %vm1985, 1.0, 0.0
        %v2040 = vld [vmem:[%s2] sm:$0x1]
        %v2042 = vlaneseq
        %v2043 = vshrl.u32 %v2042, 7
        %v2044 = vsub.s32 0, %v2043
        %v2045 = vrot.slane %v2040, %v2044
        %v2047 = vadd.f32 %v691, %v2045
        %v2048 = vadd.f32 %v695, %v2045
        %v2049 = vadd.f32 %v701, %v2045
        %v2050 = vadd.f32 %v705, %v2045
        %v2051 = vadd.f32 %v711, %v2045
        %v2052 = vadd.f32 %v715, %v2045
        %v2053 = vadd.f32 %v721, %v2045
        %v2054 = vadd.f32 %v725, %v2045
        %v2055 = vadd.f32 %v731, %v2045
        %v2056 = vadd.f32 %v735, %v2045
        %v2057 = vadd.f32 %v741, %v2045
        %v2058 = vadd.f32 %v745, %v2045
        %v2059 = vadd.f32 %v751, %v2045
        %v2060 = vadd.f32 %v755, %v2045
        %v2061 = vadd.f32 %v761, %v2045
        %v2062 = vadd.f32 %v765, %v2045
        %v2063 = vadd.f32 %v771, %v2045
        %v2064 = vadd.f32 %v775, %v2045
        %v2065 = vadd.f32 %v781, %v2045
        %v2066 = vadd.f32 %v785, %v2045
        %v2067 = vadd.f32 %v791, %v2045
        %v2068 = vadd.f32 %v795, %v2045
        %v2069 = vadd.f32 %v801, %v2045
        %v2070 = vadd.f32 %v805, %v2045
        %v2071 = vadd.f32 %v811, %v2045
        %v2072 = vadd.f32 %v815, %v2045
        %v2073 = vadd.f32 %v821, %v2045
        %v2074 = vadd.f32 %v825, %v2045
        %v2075 = vadd.f32 %v831, %v2045
        %v2076 = vadd.f32 %v835, %v2045
        %v2077 = vadd.f32 %v841, %v2045
        %v2078 = vadd.f32 %v845, %v2045
        %v2079 = vadd.f32 %v851, %v2045
        %v2080 = vadd.f32 %v855, %v2045
        %v2081 = vadd.f32 %v861, %v2045
        %v2082 = vadd.f32 %v865, %v2045
        %v2083 = vadd.f32 %v871, %v2045
        %v2084 = vadd.f32 %v875, %v2045
        %v2085 = vadd.f32 %v881, %v2045
        %v2086 = vadd.f32 %v885, %v2045
        %v2087 = vadd.f32 %v891, %v2045
        %v2088 = vadd.f32 %v895, %v2045
        %v2089 = vadd.f32 %v901, %v2045
        %v2090 = vadd.f32 %v905, %v2045
        %v2091 = vadd.f32 %v911, %v2045
        %v2092 = vadd.f32 %v915, %v2045
        %v2093 = vadd.f32 %v921, %v2045
        %v2094 = vadd.f32 %v925, %v2045
        %v2095 = vadd.f32 %v931, %v2045
        %v2096 = vadd.f32 %v935, %v2045
        %v2097 = vadd.f32 %v941, %v2045
        %v2098 = vadd.f32 %v945, %v2045
        %v2099 = vadd.f32 %v951, %v2045
        %v2100 = vadd.f32 %v955, %v2045
        %v2101 = vmax.f32 %v2047, 0.0
        %v2102 = vmax.f32 %v2048, 0.0
        %v2103 = vmax.f32 %v2049, 0.0
        %v2104 = vmax.f32 %v2050, 0.0
        %v2105 = vmax.f32 %v2051, 0.0
        %v2106 = vmax.f32 %v2052, 0.0
        %v2107 = vmax.f32 %v2053, 0.0
        %v2108 = vmax.f32 %v2054, 0.0
        %v2109 = vmax.f32 %v2055, 0.0
        %v2110 = vmax.f32 %v2056, 0.0
        %v2111 = vmax.f32 %v2057, 0.0
        %v2112 = vmax.f32 %v2058, 0.0
        %v2113 = vmax.f32 %v2059, 0.0
        %v2114 = vmax.f32 %v2060, 0.0
        %v2115 = vmax.f32 %v2061, 0.0
        %v2116 = vmax.f32 %v2062, 0.0
        %v2117 = vmax.f32 %v2063, 0.0
        %v2118 = vmax.f32 %v2064, 0.0
        %v2119 = vmax.f32 %v2065, 0.0
        %v2120 = vmax.f32 %v2066, 0.0
        %v2121 = vmax.f32 %v2067, 0.0
        %v2122 = vmax.f32 %v2068, 0.0
        %v2123 = vmax.f32 %v2069, 0.0
        %v2124 = vmax.f32 %v2070, 0.0
        %v2125 = vmax.f32 %v2071, 0.0
        %v2126 = vmax.f32 %v2072, 0.0
        %v2127 = vmax.f32 %v2073, 0.0
        %v2128 = vmax.f32 %v2074, 0.0
        %v2129 = vmax.f32 %v2075, 0.0
        %v2130 = vmax.f32 %v2076, 0.0
        %v2131 = vmax.f32 %v2077, 0.0
        %v2132 = vmax.f32 %v2078, 0.0
        %v2133 = vmax.f32 %v2079, 0.0
        %v2134 = vmax.f32 %v2080, 0.0
        %v2135 = vmax.f32 %v2081, 0.0
        %v2136 = vmax.f32 %v2082, 0.0
        %v2137 = vmax.f32 %v2083, 0.0
        %v2138 = vmax.f32 %v2084, 0.0
        %v2139 = vmax.f32 %v2085, 0.0
        %v2140 = vmax.f32 %v2086, 0.0
        %v2141 = vmax.f32 %v2087, 0.0
        %v2142 = vmax.f32 %v2088, 0.0
        %v2143 = vmax.f32 %v2089, 0.0
        %v2144 = vmax.f32 %v2090, 0.0
        %v2145 = vmax.f32 %v2091, 0.0
        %v2146 = vmax.f32 %v2092, 0.0
        %v2147 = vmax.f32 %v2093, 0.0
        %v2148 = vmax.f32 %v2094, 0.0
        %v2149 = vmax.f32 %v2095, 0.0
        %v2150 = vmax.f32 %v2096, 0.0
        %v2151 = vmax.f32 %v2097, 0.0
        %v2152 = vmax.f32 %v2098, 0.0
        %v2153 = vmax.f32 %v2099, 0.0
        %v2154 = vmax.f32 %v2100, 0.0
        %v2155 = vmul.f32 %v2101, %v1986
        %v2156 = vmul.f32 %v2102, %v1987
        %v2157 = vmul.f32 %v2103, %v1988
        %v2158 = vmul.f32 %v2104, %v1989
        %v2159 = vmul.f32 %v2105, %v1990
        %v2160 = vmul.f32 %v2106, %v1991
        %v2161 = vmul.f32 %v2107, %v1992
        %v2162 = vmul.f32 %v2108, %v1993
        %v2163 = vmul.f32 %v2109, %v1994
        %v2164 = vmul.f32 %v2110, %v1995
        %v2165 = vmul.f32 %v2111, %v1996
        %v2166 = vmul.f32 %v2112, %v1997
        %v2167 = vmul.f32 %v2113, %v1998
        %v2168 = vmul.f32 %v2114, %v1999
        %v2169 = vmul.f32 %v2115, %v2000
        %v2170 = vmul.f32 %v2116, %v2001
        %v2171 = vmul.f32 %v2117, %v2002
        %v2172 = vmul.f32 %v2118, %v2003
        %v2173 = vmul.f32 %v2119, %v2004
        %v2174 = vmul.f32 %v2120, %v2005
        %v2175 = vmul.f32 %v2121, %v2006
        %v2176 = vmul.f32 %v2122, %v2007
        %v2177 = vmul.f32 %v2123, %v2008
        %v2178 = vmul.f32 %v2124, %v2009
        %v2179 = vmul.f32 %v2125, %v2010
        %v2180 = vmul.f32 %v2126, %v2011
        %v2181 = vmul.f32 %v2127, %v2012
        %v2182 = vmul.f32 %v2128, %v2013
        %v2183 = vmul.f32 %v2129, %v2014
        %v2184 = vmul.f32 %v2130, %v2015
        %v2185 = vmul.f32 %v2131, %v2016
        %v2186 = vmul.f32 %v2132, %v2017
        %v2187 = vmul.f32 %v2133, %v2018
        %v2188 = vmul.f32 %v2134, %v2019
        %v2189 = vmul.f32 %v2135, %v2020
        %v2190 = vmul.f32 %v2136, %v2021
        %v2191 = vmul.f32 %v2137, %v2022
        %v2192 = vmul.f32 %v2138, %v2023
        %v2193 = vmul.f32 %v2139, %v2024
        %v2194 = vmul.f32 %v2140, %v2025
        %v2195 = vmul.f32 %v2141, %v2026
        %v2196 = vmul.f32 %v2142, %v2027
        %v2197 = vmul.f32 %v2143, %v2028
        %v2198 = vmul.f32 %v2144, %v2029
        %v2199 = vmul.f32 %v2145, %v2030
        %v2200 = vmul.f32 %v2146, %v2031
        %v2201 = vmul.f32 %v2147, %v2032
        %v2202 = vmul.f32 %v2148, %v2033
        %v2203 = vmul.f32 %v2149, %v2034
        %v2204 = vmul.f32 %v2150, %v2035
        %v2205 = vmul.f32 %v2151, %v2036
        %v2206 = vmul.f32 %v2152, %v2037
        %v2207 = vmul.f32 %v2153, %v2038
        %v2208 = vmul.f32 %v2154, %v2039
        %v2209 = vpack.c.bf16 %v2156, %v2155
        %v2210 = vpack.c.bf16 %v2158, %v2157
        %v2211 = vpack.c.bf16 %v2160, %v2159
        %v2212 = vpack.c.bf16 %v2162, %v2161
        %v2213 = vpack.c.bf16 %v2164, %v2163
        %v2214 = vpack.c.bf16 %v2166, %v2165
        %v2215 = vpack.c.bf16 %v2168, %v2167
        %v2216 = vpack.c.bf16 %v2170, %v2169
        %v2217 = vpack.c.bf16 %v2172, %v2171
        %v2218 = vpack.c.bf16 %v2174, %v2173
        %v2219 = vpack.c.bf16 %v2176, %v2175
        %v2220 = vpack.c.bf16 %v2178, %v2177
        %v2221 = vpack.c.bf16 %v2180, %v2179
        %v2222 = vpack.c.bf16 %v2182, %v2181
        %v2223 = vpack.c.bf16 %v2184, %v2183
        %v2224 = vpack.c.bf16 %v2186, %v2185
        %v2225 = vpack.c.bf16 %v2188, %v2187
        %v2226 = vpack.c.bf16 %v2190, %v2189
        %v2227 = vpack.c.bf16 %v2192, %v2191
        %v2228 = vpack.c.bf16 %v2194, %v2193
        %v2229 = vpack.c.bf16 %v2196, %v2195
        %v2230 = vpack.c.bf16 %v2198, %v2197
        %v2231 = vpack.c.bf16 %v2200, %v2199
        %v2232 = vpack.c.bf16 %v2202, %v2201
        %v2233 = vpack.c.bf16 %v2204, %v2203
        %v2234 = vpack.c.bf16 %v2206, %v2205
        %v2235 = vpack.c.bf16 %v2208, %v2207
        %2236 = vst [vmem:[#allocation2] sm:$0xff] 0
        %2237 = vst [vmem:[#allocation2 + $0x8] sm:$0xff] 0
        %2238 = vst [vmem:[#allocation2 + $0xe8] sm:$0xff] 0
        %2239 = vst [vmem:[#allocation2 + $0xf0] sm:$0xff] 0
        %2240 = vst [vmem:[#allocation2 + $0x10] sm:$0xff] %v2209
        %2241 = vst [vmem:[#allocation2 + $0x18] sm:$0xff] %v2210
        %2242 = vst [vmem:[#allocation2 + $0x20] sm:$0xff] %v2211
        %2243 = vst [vmem:[#allocation2 + $0x28] sm:$0xff] %v2212
        %2244 = vst [vmem:[#allocation2 + $0x30] sm:$0xff] %v2213
        %2245 = vst [vmem:[#allocation2 + $0x38] sm:$0xff] %v2214
        %2246 = vst [vmem:[#allocation2 + $0x40] sm:$0xff] %v2215
        %2247 = vst [vmem:[#allocation2 + $0x48] sm:$0xff] %v2216
        %2248 = vst [vmem:[#allocation2 + $0x50] sm:$0xff] %v2217
        %2249 = vst [vmem:[#allocation2 + $0x58] sm:$0xff] %v2218
        %2250 = vst [vmem:[#allocation2 + $0x60] sm:$0xff] %v2219
        %2251 = vst [vmem:[#allocation2 + $0x68] sm:$0xff] %v2220
        %2252 = vst [vmem:[#allocation2 + $0x70] sm:$0xff] %v2221
        %2253 = vst [vmem:[#allocation2 + $0x78] sm:$0xff] %v2222
        %2254 = vst [vmem:[#allocation2 + $0x80] sm:$0xff] %v2223
        %2255 = vst [vmem:[#allocation2 + $0x88] sm:$0xff] %v2224
        %2256 = vst [vmem:[#allocation2 + $0x90] sm:$0xff] %v2225
        %2257 = vst [vmem:[#allocation2 + $0x98] sm:$0xff] %v2226
        %2258 = vst [vmem:[#allocation2 + $0xa0] sm:$0xff] %v2227
        %2259 = vst [vmem:[#allocation2 + $0xa8] sm:$0xff] %v2228
        %2260 = vst [vmem:[#allocation2 + $0xb0] sm:$0xff] %v2229
        %2261 = vst [vmem:[#allocation2 + $0xb8] sm:$0xff] %v2230
        %2262 = vst [vmem:[#allocation2 + $0xc0] sm:$0xff] %v2231
        %2263 = vst [vmem:[#allocation2 + $0xc8] sm:$0xff] %v2232
        %2264 = vst [vmem:[#allocation2 + $0xd0] sm:$0xff] %v2233
        %2265 = vst [vmem:[#allocation2 + $0xd8] sm:$0xff] %v2234
        %2266 = vst [vmem:[#allocation2 + $0xe0] sm:$0xff] %v2235
        %v2267 = vld [vmem:[#allocation2] sm:$0xf8]
        %v2268 = vld [vmem:[#allocation2 + $0x8] sm:$0xff]
        %v2269 = vld [vmem:[#allocation2 + $0x10] sm:$0xff]
        %v2270 = vld [vmem:[#allocation2 + $0x18] sm:$0xff]
        %v2271 = vld [vmem:[#allocation2 + $0x20] sm:$0xff]
        %v2272 = vld [vmem:[#allocation2 + $0x28] sm:$0xff]
        %v2273 = vld [vmem:[#allocation2 + $0x30] sm:$0xff]
        %v2274 = vld [vmem:[#allocation2 + $0x38] sm:$0xff]
        %v2275 = vld [vmem:[#allocation2 + $0x40] sm:$0xff]
        %v2276 = vld [vmem:[#allocation2 + $0x48] sm:$0xff]
        %v2277 = vld [vmem:[#allocation2 + $0x50] sm:$0xff]
        %v2278 = vld [vmem:[#allocation2 + $0x58] sm:$0xff]
        %v2279 = vld [vmem:[#allocation2 + $0x60] sm:$0xff]
        %v2280 = vld [vmem:[#allocation2 + $0x68] sm:$0xff]
        %v2281 = vld [vmem:[#allocation2 + $0x70] sm:$0xff]
        %v2282 = vld [vmem:[#allocation2 + $0x78] sm:$0xff]
        %v2283 = vld [vmem:[#allocation2 + $0x80] sm:$0xff]
        %v2284 = vld [vmem:[#allocation2 + $0x88] sm:$0xff]
        %v2285 = vld [vmem:[#allocation2 + $0x90] sm:$0xff]
        %v2286 = vld [vmem:[#allocation2 + $0x98] sm:$0xff]
        %v2287 = vld [vmem:[#allocation2 + $0xa0] sm:$0xff]
        %v2288 = vld [vmem:[#allocation2 + $0xa8] sm:$0xff]
        %v2289 = vld [vmem:[#allocation2 + $0xb0] sm:$0xff]
        %v2290 = vld [vmem:[#allocation2 + $0xb8] sm:$0xff]
        %v2291 = vld [vmem:[#allocation2 + $0xc0] sm:$0xff]
        %v2292 = vld [vmem:[#allocation2 + $0xc8] sm:$0xff]
        %v2293 = vld [vmem:[#allocation2 + $0xd0] sm:$0xff]
        %v2294 = vld [vmem:[#allocation2 + $0xd8] sm:$0xf]
        %v2295 = vld [vmem:[#allocation8] sm:$0xf]
        %v2296 = vld [vmem:[#allocation8 + $0x4] sm:$0xf]
        %v2297 = vld [vmem:[#allocation8 + $0x8] sm:$0xf]
        %v2298 = vld [vmem:[#allocation8 + $0xc] sm:$0xf]
        %v2299 = vld [vmem:[#allocation8 + $0x10] sm:$0xf]
        %v2300 = vld [vmem:[#allocation8 + $0x14] sm:$0xf]
        %v2301 = vld [vmem:[#allocation8 + $0x18] sm:$0xf]
        %v2302 = vld [vmem:[#allocation8 + $0x1c] sm:$0xf]
        %v2303 = vld [vmem:[#allocation8 + $0x20] sm:$0xf]
        %v2304 = vld [vmem:[#allocation8 + $0x24] sm:$0xf]
        %v2305 = vld [vmem:[#allocation8 + $0x28] sm:$0xf]
        %v2306 = vld [vmem:[#allocation8 + $0x2c] sm:$0xf]
        %v2307 = vld [vmem:[#allocation8 + $0x30] sm:$0xf]
        %v2308 = vld [vmem:[#allocation8 + $0x34] sm:$0xf]
        %v2309 = vld [vmem:[#allocation8 + $0x38] sm:$0xf]
        %v2310 = vld [vmem:[#allocation8 + $0x3c] sm:$0xf]
        %v2311 = vld [vmem:[#allocation2] sm:$0xf0]
        %v2312 = vld [vmem:[#allocation8 + $0x40] sm:$0xf]
        %v2313 = vld [vmem:[#allocation8 + $0x44] sm:$0xf]
        %v2314 = vld [vmem:[#allocation8 + $0x48] sm:$0xf]
        %v2315 = vld [vmem:[#allocation8 + $0x4c] sm:$0xf]
        %v2316 = vld [vmem:[#allocation8 + $0x50] sm:$0xf]
        %v2317 = vld [vmem:[#allocation8 + $0x54] sm:$0xf]
        %v2318 = vld [vmem:[#allocation8 + $0x58] sm:$0xf]
        %v2319 = vld [vmem:[#allocation8 + $0x5c] sm:$0xf]
        %v2320 = vld [vmem:[#allocation8 + $0x60] sm:$0xf]
        %v2321 = vld [vmem:[#allocation8 + $0x64] sm:$0xf]
        %v2322 = vld [vmem:[#allocation8 + $0x68] sm:$0xf]
        %v2323 = vld [vmem:[#allocation8 + $0x6c] sm:$0xf]
        %v2324 = vld [vmem:[#allocation8 + $0x70] sm:$0xf]
        %v2325 = vld [vmem:[#allocation8 + $0x74] sm:$0xf]
        %v2326 = vld [vmem:[#allocation8 + $0x78] sm:$0xf]
        %v2327 = vld [vmem:[#allocation8 + $0x7c] sm:$0xf]
        %vm2356 = vcmask 1043456
        %v2357 = vrot.slane %v2311, 4
        %v2358 = vrot.slane %v2268, 4
        %v2359 = vsel %vm2356, %v2357, %v2358
        %v2360 = vrot.slane %v2269, 4
        %v2361 = vsel %vm2356, %v2358, %v2360
        %v2362 = vrot.slane %v2270, 4
        %v2363 = vsel %vm2356, %v2360, %v2362
        %v2364 = vrot.slane %v2271, 4
        %v2365 = vsel %vm2356, %v2362, %v2364
        %v2366 = vrot.slane %v2272, 4
        %v2367 = vsel %vm2356, %v2364, %v2366
        %v2368 = vrot.slane %v2273, 4
        %v2369 = vsel %vm2356, %v2366, %v2368
        %v2370 = vrot.slane %v2274, 4
        %v2371 = vsel %vm2356, %v2368, %v2370
        %v2372 = vrot.slane %v2275, 4
        %v2373 = vsel %vm2356, %v2370, %v2372
        %v2374 = vrot.slane %v2276, 4
        %v2375 = vsel %vm2356, %v2372, %v2374
        %v2376 = vrot.slane %v2277, 4
        %v2377 = vsel %vm2356, %v2374, %v2376
        %v2378 = vrot.slane %v2278, 4
        %v2379 = vsel %vm2356, %v2376, %v2378
        %v2380 = vrot.slane %v2279, 4
        %v2381 = vsel %vm2356, %v2378, %v2380
        %v2382 = vrot.slane %v2280, 4
        %v2383 = vsel %vm2356, %v2380, %v2382
        %v2384 = vrot.slane %v2281, 4
        %v2385 = vsel %vm2356, %v2382, %v2384
        %v2386 = vrot.slane %v2282, 4
        %v2387 = vsel %vm2356, %v2384, %v2386
        %v2388 = vrot.slane %v2283, 4
        %v2389 = vsel %vm2356, %v2386, %v2388
        %v2390 = vrot.slane %v2284, 4
        %v2391 = vsel %vm2356, %v2388, %v2390
        %v2392 = vrot.slane %v2285, 4
        %v2393 = vsel %vm2356, %v2390, %v2392
        %v2394 = vrot.slane %v2286, 4
        %v2395 = vsel %vm2356, %v2392, %v2394
        %v2396 = vrot.slane %v2287, 4
        %v2397 = vsel %vm2356, %v2394, %v2396
        %v2398 = vrot.slane %v2288, 4
        %v2399 = vsel %vm2356, %v2396, %v2398
        %v2400 = vrot.slane %v2289, 4
        %v2401 = vsel %vm2356, %v2398, %v2400
        %v2402 = vrot.slane %v2290, 4
        %v2403 = vsel %vm2356, %v2400, %v2402
        %v2404 = vrot.slane %v2291, 4
        %v2405 = vsel %vm2356, %v2402, %v2404
        %v2406 = vrot.slane %v2292, 4
        %v2407 = vsel %vm2356, %v2404, %v2406
        %v2408 = vrot.slane %v2293, 4
        %v2409 = vsel %vm2356, %v2406, %v2408
        %v2410 = vrot.slane %v2294, 4
        %v2411 = vsel %vm2356, %v2408, %v2410
        %v2455 = vunpack.c.l.b16 %v2312
        %v2456 = vunpack.c.l.b16 %v2313
        %v2457 = vunpack.c.l.b16 %v2314
        %v2458 = vunpack.c.l.b16 %v2315
        %v2459 = vunpack.c.l.b16 %v2316
        %v2460 = vunpack.c.l.b16 %v2317
        %v2461 = vunpack.c.l.b16 %v2318
        %v2462 = vunpack.c.l.b16 %v2319
        %v2463 = vunpack.c.l.b16 %v2320
        %v2464 = vunpack.c.l.b16 %v2321
        %v2465 = vunpack.c.l.b16 %v2322
        %v2466 = vunpack.c.l.b16 %v2323
        %v2467 = vunpack.c.l.b16 %v2324
        %v2468 = vunpack.c.l.b16 %v2325
        %v2469 = vunpack.c.l.b16 %v2326
        %v2470 = vunpack.c.l.b16 %v2327
        %v2471 = vpack.c.b16 %v2456, %v2455
        %v2472 = vpack.c.b16 %v2458, %v2457
        %v2473 = vpack.c.b16 %v2460, %v2459
        %v2474 = vpack.c.b16 %v2462, %v2461
        %v2475 = vpack.c.b16 %v2464, %v2463
        %v2476 = vpack.c.b16 %v2466, %v2465
        %v2477 = vpack.c.b16 %v2468, %v2467
        %v2478 = vpack.c.b16 %v2470, %v2469
        %2487 = vmatprep.subr.bf16.mxu0 0
        %2488 = vmatpush1.bf16.msra.mxu0 %v2471
        %2489 = vmatprep.subr.bf16.mxu0 0
        %2490 = vmatpush1.bf16.msra.mxu0 %v2472
        %2491 = vmatprep.subr.bf16.mxu0 0
        %2492 = vmatpush1.bf16.msra.mxu0 %v2473
        %2493 = vmatprep.subr.bf16.mxu0 0
        %2494 = vmatpush1.bf16.msra.mxu0 %v2474
        %2495 = vmatprep.subr.bf16.mxu0 0
        %2496 = vmatpush1.bf16.msra.mxu0 %v2475
        %2497 = vmatprep.subr.bf16.mxu0 0
        %2498 = vmatpush1.bf16.msra.mxu0 %v2476
        %2499 = vmatprep.subr.bf16.mxu0 0
        %2500 = vmatpush1.bf16.msra.mxu0 %v2477
        %2501 = vmatprep.subr.bf16.mxu0 0
        %2502 = vmatpush1.bf16.msra.mxu0 %v2478
        %2503 = vmatprep.subr.bf16.mxu0 0
        %2504 = vmatpush1.bf16.msra.mxu0 0
        %2505 = vmatprep.subr.bf16.mxu0 0
        %2506 = vmatpush1.bf16.msra.mxu0 0
        %2507 = vmatprep.subr.bf16.mxu0 0
        %2508 = vmatpush1.bf16.msra.mxu0 0
        %2509 = vmatprep.subr.bf16.mxu0 0
        %2510 = vmatpush1.bf16.msra.mxu0 0
        %2511 = vmatprep.subr.bf16.mxu0 0
        %2512 = vmatpush1.bf16.msra.mxu0 0
        %2513 = vmatprep.subr.bf16.mxu0 0
        %2514 = vmatpush1.bf16.msra.mxu0 0
        %2515 = vmatprep.subr.bf16.mxu0 0
        %2516 = vmatpush1.bf16.msra.mxu0 0
        %2517 = vmatprep.subr.bf16.mxu0 0
        %2518 = vmatpush1.bf16.msra.mxu0 0
        %2519 = vmatprep.mubr.bf16.mxu0 0
        %2520 = vmatmul.mubr.bf16.gmra.mrb[0].mxu0 %v2359
        %v2521 = vpop.f32.mrb[0].mxu0
        %v2522 = vadd.f32 0.0, %v2521
        %v2523 = vpop.f32.mrb[0].mxu0
        %v2524 = vpop.f32.mrb[0].mxu0
        %v2525 = vadd.f32 0.0, %v2524
        %v2526 = vpop.f32.mrb[0].mxu0
        %2527 = vmatprep.mubr.bf16.mxu0 0
        %2528 = vmatmul.mubr.bf16.gmra.mrb[0].mxu0 %v2361
        %v2529 = vpop.f32.mrb[0].mxu0
        %v2530 = vadd.f32 0.0, %v2529
        %v2531 = vpop.f32.mrb[0].mxu0
        %v2532 = vpop.f32.mrb[0].mxu0
        %v2533 = vadd.f32 0.0, %v2532
        %v2534 = vpop.f32.mrb[0].mxu0
        %2535 = vmatprep.mubr.bf16.mxu0 0
        %2536 = vmatmul.mubr.bf16.gmra.mrb[0].mxu0 %v2363
        %v2537 = vpop.f32.mrb[0].mxu0
        %v2538 = vadd.f32 0.0, %v2537
        %v2539 = vpop.f32.mrb[0].mxu0
        %v2540 = vpop.f32.mrb[0].mxu0
        %v2541 = vadd.f32 0.0, %v2540
        %v2542 = vpop.f32.mrb[0].mxu0
        %2543 = vmatprep.mubr.bf16.mxu0 0
        %2544 = vmatmul.mubr.bf16.gmra.mrb[0].mxu0 %v2365
        %v2545 = vpop.f32.mrb[0].mxu0
        %v2546 = vadd.f32 0.0, %v2545
        %v2547 = vpop.f32.mrb[0].mxu0
        %v2548 = vpop.f32.mrb[0].mxu0
        %v2549 = vadd.f32 0.0, %v2548
        %v2550 = vpop.f32.mrb[0].mxu0
        %2551 = vmatprep.mubr.bf16.mxu0 0
        %2552 = vmatmul.mubr.bf16.gmra.mrb[0].mxu0 %v2367
        %v2553 = vpop.f32.mrb[0].mxu0
        %v2554 = vadd.f32 0.0, %v2553
        %v2555 = vpop.f32.mrb[0].mxu0
        %v2556 = vpop.f32.mrb[0].mxu0
        %v2557 = vadd.f32 0.0, %v2556
        %v2558 = vpop.f32.mrb[0].mxu0
        %2559 = vmatprep.mubr.bf16.mxu0 0
        %2560 = vmatmul.mubr.bf16.gmra.mrb[0].mxu0 %v2369
        %v2561 = vpop.f32.mrb[0].mxu0
        %v2562 = vadd.f32 0.0, %v2561
        %v2563 = vpop.f32.mrb[0].mxu0
        %v2564 = vpop.f32.mrb[0].mxu0
        %v2565 = vadd.f32 0.0, %v2564
        %v2566 = vpop.f32.mrb[0].mxu0
        %2567 = vmatprep.mubr.bf16.mxu0 0
        %2568 = vmatmul.mubr.bf16.gmra.mrb[0].mxu0 %v2371
        %v2569 = vpop.f32.mrb[0].mxu0
        %v2570 = vadd.f32 0.0, %v2569
        %v2571 = vpop.f32.mrb[0].mxu0
        %v2572 = vpop.f32.mrb[0].mxu0
        %v2573 = vadd.f32 0.0, %v2572
        %v2574 = vpop.f32.mrb[0].mxu0
        %2575 = vmatprep.mubr.bf16.mxu0 0
        %2576 = vmatmul.mubr.bf16.gmra.mrb[0].mxu0 %v2373
        %v2577 = vpop.f32.mrb[0].mxu0
        %v2578 = vadd.f32 0.0, %v2577
        %v2579 = vpop.f32.mrb[0].mxu0
        %v2580 = vpop.f32.mrb[0].mxu0
        %v2581 = vadd.f32 0.0, %v2580
        %v2582 = vpop.f32.mrb[0].mxu0
        %2583 = vmatprep.mubr.bf16.mxu0 0
        %2584 = vmatmul.mubr.bf16.gmra.mrb[0].mxu0 %v2375
        %v2585 = vpop.f32.mrb[0].mxu0
        %v2586 = vadd.f32 0.0, %v2585
        %v2587 = vpop.f32.mrb[0].mxu0
        %v2588 = vpop.f32.mrb[0].mxu0
        %v2589 = vadd.f32 0.0, %v2588
        %v2590 = vpop.f32.mrb[0].mxu0
        %2591 = vmatprep.mubr.bf16.mxu0 0
        %2592 = vmatmul.mubr.bf16.gmra.mrb[0].mxu0 %v2377
        %v2593 = vpop.f32.mrb[0].mxu0
        %v2594 = vadd.f32 0.0, %v2593
        %v2595 = vpop.f32.mrb[0].mxu0
        %v2596 = vpop.f32.mrb[0].mxu0
        %v2597 = vadd.f32 0.0, %v2596
        %v2598 = vpop.f32.mrb[0].mxu0
        %2599 = vmatprep.mubr.bf16.mxu0 0
        %2600 = vmatmul.mubr.bf16.gmra.mrb[0].mxu0 %v2379
        %v2601 = vpop.f32.mrb[0].mxu0
        %v2602 = vadd.f32 0.0, %v2601
        %v2603 = vpop.f32.mrb[0].mxu0
        %v2604 = vpop.f32.mrb[0].mxu0
        %v2605 = vadd.f32 0.0, %v2604
        %v2606 = vpop.f32.mrb[0].mxu0
        %2607 = vmatprep.mubr.bf16.mxu0 0
        %2608 = vmatmul.mubr.bf16.gmra.mrb[0].mxu0 %v2381
        %v2609 = vpop.f32.mrb[0].mxu0
        %v2610 = vadd.f32 0.0, %v2609
        %v2611 = vpop.f32.mrb[0].mxu0
        %v2612 = vpop.f32.mrb[0].mxu0
        %v2613 = vadd.f32 0.0, %v2612
        %v2614 = vpop.f32.mrb[0].mxu0
        %2615 = vmatprep.mubr.bf16.mxu0 0
        %2616 = vmatmul.mubr.bf16.gmra.mrb[0].mxu0 %v2383
        %v2617 = vpop.f32.mrb[0].mxu0
        %v2618 = vadd.f32 0.0, %v2617
        %v2619 = vpop.f32.mrb[0].mxu0
        %v2620 = vpop.f32.mrb[0].mxu0
        %v2621 = vadd.f32 0.0, %v2620
        %v2622 = vpop.f32.mrb[0].mxu0
        %2623 = vmatprep.mubr.bf16.mxu0 0
        %2624 = vmatmul.mubr.bf16.gmra.mrb[0].mxu0 %v2385
        %v2625 = vpop.f32.mrb[0].mxu0
        %v2626 = vadd.f32 0.0, %v2625
        %v2627 = vpop.f32.mrb[0].mxu0
        %v2628 = vpop.f32.mrb[0].mxu0
        %v2629 = vadd.f32 0.0, %v2628
        %v2630 = vpop.f32.mrb[0].mxu0
        %2631 = vmatprep.mubr.bf16.mxu0 0
        %2632 = vmatmul.mubr.bf16.gmra.mrb[0].mxu0 %v2387
        %v2633 = vpop.f32.mrb[0].mxu0
        %v2634 = vadd.f32 0.0, %v2633
        %v2635 = vpop.f32.mrb[0].mxu0
        %v2636 = vpop.f32.mrb[0].mxu0
        %v2637 = vadd.f32 0.0, %v2636
        %v2638 = vpop.f32.mrb[0].mxu0
        %2639 = vmatprep.mubr.bf16.mxu0 0
        %2640 = vmatmul.mubr.bf16.gmra.mrb[0].mxu0 %v2389
        %v2641 = vpop.f32.mrb[0].mxu0
        %v2642 = vadd.f32 0.0, %v2641
        %v2643 = vpop.f32.mrb[0].mxu0
        %v2644 = vpop.f32.mrb[0].mxu0
        %v2645 = vadd.f32 0.0, %v2644
        %v2646 = vpop.f32.mrb[0].mxu0
        %2647 = vmatprep.mubr.bf16.mxu0 0
        %2648 = vmatmul.mubr.bf16.gmra.mrb[0].mxu0 %v2391
        %v2649 = vpop.f32.mrb[0].mxu0
        %v2650 = vadd.f32 0.0, %v2649
        %v2651 = vpop.f32.mrb[0].mxu0
        %v2652 = vpop.f32.mrb[0].mxu0
        %v2653 = vadd.f32 0.0, %v2652
        %v2654 = vpop.f32.mrb[0].mxu0
        %2655 = vmatprep.mubr.bf16.mxu0 0
        %2656 = vmatmul.mubr.bf16.gmra.mrb[0].mxu0 %v2393
        %v2657 = vpop.f32.mrb[0].mxu0
        %v2658 = vadd.f32 0.0, %v2657
        %v2659 = vpop.f32.mrb[0].mxu0
        %v2660 = vpop.f32.mrb[0].mxu0
        %v2661 = vadd.f32 0.0, %v2660
        %v2662 = vpop.f32.mrb[0].mxu0
        %2663 = vmatprep.mubr.bf16.mxu0 0
        %2664 = vmatmul.mubr.bf16.gmra.mrb[0].mxu0 %v2395
        %v2665 = vpop.f32.mrb[0].mxu0
        %v2666 = vadd.f32 0.0, %v2665
        %v2667 = vpop.f32.mrb[0].mxu0
        %v2668 = vpop.f32.mrb[0].mxu0
        %v2669 = vadd.f32 0.0, %v2668
        %v2670 = vpop.f32.mrb[0].mxu0
        %2671 = vmatprep.mubr.bf16.mxu0 0
        %2672 = vmatmul.mubr.bf16.gmra.mrb[0].mxu0 %v2397
        %v2673 = vpop.f32.mrb[0].mxu0
        %v2674 = vadd.f32 0.0, %v2673
        %v2675 = vpop.f32.mrb[0].mxu0
        %v2676 = vpop.f32.mrb[0].mxu0
        %v2677 = vadd.f32 0.0, %v2676
        %v2678 = vpop.f32.mrb[0].mxu0
        %2679 = vmatprep.mubr.bf16.mxu0 0
        %2680 = vmatmul.mubr.bf16.gmra.mrb[0].mxu0 %v2399
        %v2681 = vpop.f32.mrb[0].mxu0
        %v2682 = vadd.f32 0.0, %v2681
        %v2683 = vpop.f32.mrb[0].mxu0
        %v2684 = vpop.f32.mrb[0].mxu0
        %v2685 = vadd.f32 0.0, %v2684
        %v2686 = vpop.f32.mrb[0].mxu0
        %2687 = vmatprep.mubr.bf16.mxu0 0
        %2688 = vmatmul.mubr.bf16.gmra.mrb[0].mxu0 %v2401
        %v2689 = vpop.f32.mrb[0].mxu0
        %v2690 = vadd.f32 0.0, %v2689
        %v2691 = vpop.f32.mrb[0].mxu0
        %v2692 = vpop.f32.mrb[0].mxu0
        %v2693 = vadd.f32 0.0, %v2692
        %v2694 = vpop.f32.mrb[0].mxu0
        %2695 = vmatprep.mubr.bf16.mxu0 0
        %2696 = vmatmul.mubr.bf16.gmra.mrb[0].mxu0 %v2403
        %v2697 = vpop.f32.mrb[0].mxu0
        %v2698 = vadd.f32 0.0, %v2697
        %v2699 = vpop.f32.mrb[0].mxu0
        %v2700 = vpop.f32.mrb[0].mxu0
        %v2701 = vadd.f32 0.0, %v2700
        %v2702 = vpop.f32.mrb[0].mxu0
        %2703 = vmatprep.mubr.bf16.mxu0 0
        %2704 = vmatmul.mubr.bf16.gmra.mrb[0].mxu0 %v2405
        %v2705 = vpop.f32.mrb[0].mxu0
        %v2706 = vadd.f32 0.0, %v2705
        %v2707 = vpop.f32.mrb[0].mxu0
        %v2708 = vpop.f32.mrb[0].mxu0
        %v2709 = vadd.f32 0.0, %v2708
        %v2710 = vpop.f32.mrb[0].mxu0
        %2711 = vmatprep.mubr.bf16.mxu0 0
        %2712 = vmatmul.mubr.bf16.gmra.mrb[0].mxu0 %v2407
        %v2713 = vpop.f32.mrb[0].mxu0
        %v2714 = vadd.f32 0.0, %v2713
        %v2715 = vpop.f32.mrb[0].mxu0
        %v2716 = vpop.f32.mrb[0].mxu0
        %v2717 = vadd.f32 0.0, %v2716
        %v2718 = vpop.f32.mrb[0].mxu0
        %2719 = vmatprep.mubr.bf16.mxu0 0
        %2720 = vmatmul.mubr.bf16.gmra.mrb[0].mxu0 %v2409
        %v2721 = vpop.f32.mrb[0].mxu0
        %v2722 = vadd.f32 0.0, %v2721
        %v2723 = vpop.f32.mrb[0].mxu0
        %v2724 = vpop.f32.mrb[0].mxu0
        %v2725 = vadd.f32 0.0, %v2724
        %v2726 = vpop.f32.mrb[0].mxu0
        %2727 = vmatprep.mubr.bf16.mxu0 0
        %2728 = vmatmul.mubr.bf16.gmra.mrb[0].mxu0 %v2411
        %v2729 = vpop.f32.mrb[0].mxu0
        %v2730 = vadd.f32 0.0, %v2729
        %v2731 = vpop.f32.mrb[0].mxu0
        %v2732 = vpop.f32.mrb[0].mxu0
        %v2733 = vadd.f32 0.0, %v2732
        %v2734 = vpop.f32.mrb[0].mxu0
        %2735 = vdwg.mxu0
        %vm2736 = vsmask.f32 4352
        %v2738 = vshrl.u32 %v2267, 16
        %v2740 = vrot.slane %v2738, 3
        %v2741 = vshll.u32 %v2267, 16
        %v2743 = vrot.slane %v2741, 4
        %v2744 = vor.u32 %v2740, %v2743
        %v2746 = vshrl.u32 %v2268, 16
        %v2748 = vrot.slane %v2746, 3
        %v2749 = vshll.u32 %v2268, 16
        %v2751 = vrot.slane %v2749, 4
        %v2752 = vor.u32 %v2748, %v2751
        %v2753 = vsel %vm2736, %v2744, %v2752
        %v2755 = vshrl.u32 %v2269, 16
        %v2757 = vrot.slane %v2755, 3
        %v2758 = vshll.u32 %v2269, 16
        %v2760 = vrot.slane %v2758, 4
        %v2761 = vor.u32 %v2757, %v2760
        %v2762 = vsel %vm2736, %v2752, %v2761
        %v2764 = vshrl.u32 %v2270, 16
        %v2766 = vrot.slane %v2764, 3
        %v2767 = vshll.u32 %v2270, 16
        %v2769 = vrot.slane %v2767, 4
        %v2770 = vor.u32 %v2766, %v2769
        %v2771 = vsel %vm2736, %v2761, %v2770
        %v2773 = vshrl.u32 %v2271, 16
        %v2775 = vrot.slane %v2773, 3
        %v2776 = vshll.u32 %v2271, 16
        %v2778 = vrot.slane %v2776, 4
        %v2779 = vor.u32 %v2775, %v2778
        %v2780 = vsel %vm2736, %v2770, %v2779
        %v2782 = vshrl.u32 %v2272, 16
        %v2784 = vrot.slane %v2782, 3
        %v2785 = vshll.u32 %v2272, 16
        %v2787 = vrot.slane %v2785, 4
        %v2788 = vor.u32 %v2784, %v2787
        %v2789 = vsel %vm2736, %v2779, %v2788
        %v2791 = vshrl.u32 %v2273, 16
        %v2793 = vrot.slane %v2791, 3
        %v2794 = vshll.u32 %v2273, 16
        %v2796 = vrot.slane %v2794, 4
        %v2797 = vor.u32 %v2793, %v2796
        %v2798 = vsel %vm2736, %v2788, %v2797
        %v2800 = vshrl.u32 %v2274, 16
        %v2802 = vrot.slane %v2800, 3
        %v2803 = vshll.u32 %v2274, 16
        %v2805 = vrot.slane %v2803, 4
        %v2806 = vor.u32 %v2802, %v2805
        %v2807 = vsel %vm2736, %v2797, %v2806
        %v2809 = vshrl.u32 %v2275, 16
        %v2811 = vrot.slane %v2809, 3
        %v2812 = vshll.u32 %v2275, 16
        %v2814 = vrot.slane %v2812, 4
        %v2815 = vor.u32 %v2811, %v2814
        %v2816 = vsel %vm2736, %v2806, %v2815
        %v2818 = vshrl.u32 %v2276, 16
        %v2820 = vrot.slane %v2818, 3
        %v2821 = vshll.u32 %v2276, 16
        %v2823 = vrot.slane %v2821, 4
        %v2824 = vor.u32 %v2820, %v2823
        %v2825 = vsel %vm2736, %v2815, %v2824
        %v2827 = vshrl.u32 %v2277, 16
        %v2829 = vrot.slane %v2827, 3
        %v2830 = vshll.u32 %v2277, 16
        %v2832 = vrot.slane %v2830, 4
        %v2833 = vor.u32 %v2829, %v2832
        %v2834 = vsel %vm2736, %v2824, %v2833
        %v2836 = vshrl.u32 %v2278, 16
        %v2838 = vrot.slane %v2836, 3
        %v2839 = vshll.u32 %v2278, 16
        %v2841 = vrot.slane %v2839, 4
        %v2842 = vor.u32 %v2838, %v2841
        %v2843 = vsel %vm2736, %v2833, %v2842
        %v2845 = vshrl.u32 %v2279, 16
        %v2847 = vrot.slane %v2845, 3
        %v2848 = vshll.u32 %v2279, 16
        %v2850 = vrot.slane %v2848, 4
        %v2851 = vor.u32 %v2847, %v2850
        %v2852 = vsel %vm2736, %v2842, %v2851
        %v2854 = vshrl.u32 %v2280, 16
        %v2856 = vrot.slane %v2854, 3
        %v2857 = vshll.u32 %v2280, 16
        %v2859 = vrot.slane %v2857, 4
        %v2860 = vor.u32 %v2856, %v2859
        %v2861 = vsel %vm2736, %v2851, %v2860
        %v2863 = vshrl.u32 %v2281, 16
        %v2865 = vrot.slane %v2863, 3
        %v2866 = vshll.u32 %v2281, 16
        %v2868 = vrot.slane %v2866, 4
        %v2869 = vor.u32 %v2865, %v2868
        %v2870 = vsel %vm2736, %v2860, %v2869
        %v2872 = vshrl.u32 %v2282, 16
        %v2874 = vrot.slane %v2872, 3
        %v2875 = vshll.u32 %v2282, 16
        %v2877 = vrot.slane %v2875, 4
        %v2878 = vor.u32 %v2874, %v2877
        %v2879 = vsel %vm2736, %v2869, %v2878
        %v2881 = vshrl.u32 %v2283, 16
        %v2883 = vrot.slane %v2881, 3
        %v2884 = vshll.u32 %v2283, 16
        %v2886 = vrot.slane %v2884, 4
        %v2887 = vor.u32 %v2883, %v2886
        %v2888 = vsel %vm2736, %v2878, %v2887
        %v2890 = vshrl.u32 %v2284, 16
        %v2892 = vrot.slane %v2890, 3
        %v2893 = vshll.u32 %v2284, 16
        %v2895 = vrot.slane %v2893, 4
        %v2896 = vor.u32 %v2892, %v2895
        %v2897 = vsel %vm2736, %v2887, %v2896
        %v2899 = vshrl.u32 %v2285, 16
        %v2901 = vrot.slane %v2899, 3
        %v2902 = vshll.u32 %v2285, 16
        %v2904 = vrot.slane %v2902, 4
        %v2905 = vor.u32 %v2901, %v2904
        %v2906 = vsel %vm2736, %v2896, %v2905
        %v2908 = vshrl.u32 %v2286, 16
        %v2910 = vrot.slane %v2908, 3
        %v2911 = vshll.u32 %v2286, 16
        %v2913 = vrot.slane %v2911, 4
        %v2914 = vor.u32 %v2910, %v2913
        %v2915 = vsel %vm2736, %v2905, %v2914
        %v2917 = vshrl.u32 %v2287, 16
        %v2919 = vrot.slane %v2917, 3
        %v2920 = vshll.u32 %v2287, 16
        %v2922 = vrot.slane %v2920, 4
        %v2923 = vor.u32 %v2919, %v2922
        %v2924 = vsel %vm2736, %v2914, %v2923
        %v2926 = vshrl.u32 %v2288, 16
        %v2928 = vrot.slane %v2926, 3
        %v2929 = vshll.u32 %v2288, 16
        %v2931 = vrot.slane %v2929, 4
        %v2932 = vor.u32 %v2928, %v2931
        %v2933 = vsel %vm2736, %v2923, %v2932
        %v2935 = vshrl.u32 %v2289, 16
        %v2937 = vrot.slane %v2935, 3
        %v2938 = vshll.u32 %v2289, 16
        %v2940 = vrot.slane %v2938, 4
        %v2941 = vor.u32 %v2937, %v2940
        %v2942 = vsel %vm2736, %v2932, %v2941
        %v2944 = vshrl.u32 %v2290, 16
        %v2946 = vrot.slane %v2944, 3
        %v2947 = vshll.u32 %v2290, 16
        %v2949 = vrot.slane %v2947, 4
        %v2950 = vor.u32 %v2946, %v2949
        %v2951 = vsel %vm2736, %v2941, %v2950
        %v2953 = vshrl.u32 %v2291, 16
        %v2955 = vrot.slane %v2953, 3
        %v2956 = vshll.u32 %v2291, 16
        %v2958 = vrot.slane %v2956, 4
        %v2959 = vor.u32 %v2955, %v2958
        %v2960 = vsel %vm2736, %v2950, %v2959
        %v2962 = vshrl.u32 %v2292, 16
        %v2964 = vrot.slane %v2962, 3
        %v2965 = vshll.u32 %v2292, 16
        %v2967 = vrot.slane %v2965, 4
        %v2968 = vor.u32 %v2964, %v2967
        %v2969 = vsel %vm2736, %v2959, %v2968
        %v2971 = vshrl.u32 %v2293, 16
        %v2973 = vrot.slane %v2971, 3
        %v2974 = vshll.u32 %v2293, 16
        %v2976 = vrot.slane %v2974, 4
        %v2977 = vor.u32 %v2973, %v2976
        %v2978 = vsel %vm2736, %v2968, %v2977
        %v2980 = vshrl.u32 %v2294, 16
        %v2982 = vrot.slane %v2980, 3
        %v2983 = vshll.u32 %v2294, 16
        %v2985 = vrot.slane %v2983, 4
        %v2986 = vor.u32 %v2982, %v2985
        %v2987 = vsel %vm2736, %v2977, %v2986
        %v3031 = vunpack.c.l.b16 %v2295
        %v3032 = vunpack.c.l.b16 %v2296
        %v3033 = vunpack.c.l.b16 %v2297
        %v3034 = vunpack.c.l.b16 %v2298
        %v3035 = vunpack.c.l.b16 %v2299
        %v3036 = vunpack.c.l.b16 %v2300
        %v3037 = vunpack.c.l.b16 %v2301
        %v3038 = vunpack.c.l.b16 %v2302
        %v3039 = vunpack.c.l.b16 %v2303
        %v3040 = vunpack.c.l.b16 %v2304
        %v3041 = vunpack.c.l.b16 %v2305
        %v3042 = vunpack.c.l.b16 %v2306
        %v3043 = vunpack.c.l.b16 %v2307
        %v3044 = vunpack.c.l.b16 %v2308
        %v3045 = vunpack.c.l.b16 %v2309
        %v3046 = vunpack.c.l.b16 %v2310
        %v3047 = vpack.c.b16 %v3032, %v3031
        %v3048 = vpack.c.b16 %v3034, %v3033
        %v3049 = vpack.c.b16 %v3036, %v3035
        %v3050 = vpack.c.b16 %v3038, %v3037
        %v3051 = vpack.c.b16 %v3040, %v3039
        %v3052 = vpack.c.b16 %v3042, %v3041
        %v3053 = vpack.c.b16 %v3044, %v3043
        %v3054 = vpack.c.b16 %v3046, %v3045
        %3063 = vmatprep.subr.bf16.mxu0 0
        %3064 = vmatpush1.bf16.msra.mxu0 %v3047
        %3065 = vmatprep.subr.bf16.mxu0 0
        %3066 = vmatpush1.bf16.msra.mxu0 %v3048
        %3067 = vmatprep.subr.bf16.mxu0 0
        %3068 = vmatpush1.bf16.msra.mxu0 %v3049
        %3069 = vmatprep.subr.bf16.mxu0 0
        %3070 = vmatpush1.bf16.msra.mxu0 %v3050
        %3071 = vmatprep.subr.bf16.mxu0 0
        %3072 = vmatpush1.bf16.msra.mxu0 %v3051
        %3073 = vmatprep.subr.bf16.mxu0 0
        %3074 = vmatpush1.bf16.msra.mxu0 %v3052
        %3075 = vmatprep.subr.bf16.mxu0 0
        %3076 = vmatpush1.bf16.msra.mxu0 %v3053
        %3077 = vmatprep.subr.bf16.mxu0 0
        %3078 = vmatpush1.bf16.msra.mxu0 %v3054
        %3079 = vmatprep.subr.bf16.mxu0 0
        %3080 = vmatpush1.bf16.msra.mxu0 0
        %3081 = vmatprep.subr.bf16.mxu0 0
        %3082 = vmatpush1.bf16.msra.mxu0 0
        %3083 = vmatprep.subr.bf16.mxu0 0
        %3084 = vmatpush1.bf16.msra.mxu0 0
        %3085 = vmatprep.subr.bf16.mxu0 0
        %3086 = vmatpush1.bf16.msra.mxu0 0
        %3087 = vmatprep.subr.bf16.mxu0 0
        %3088 = vmatpush1.bf16.msra.mxu0 0
        %3089 = vmatprep.subr.bf16.mxu0 0
        %3090 = vmatpush1.bf16.msra.mxu0 0
        %3091 = vmatprep.subr.bf16.mxu0 0
        %3092 = vmatpush1.bf16.msra.mxu0 0
        %3093 = vmatprep.subr.bf16.mxu0 0
        %3094 = vmatpush1.bf16.msra.mxu0 0
        %3095 = vmatprep.mubr.bf16.mxu0 0
        %3096 = vmatmul.mubr.bf16.gmra.mrb[0].mxu0 %v2753
        %v3097 = vpop.f32.mrb[0].mxu0
        %v3098 = vadd.f32 %v2522, %v3097
        %v3099 = vpop.f32.mrb[0].mxu0
        %v3100 = vpop.f32.mrb[0].mxu0
        %v3101 = vadd.f32 %v2525, %v3100
        %v3102 = vpop.f32.mrb[0].mxu0
        %3103 = vmatprep.mubr.bf16.mxu0 0
        %3104 = vmatmul.mubr.bf16.gmra.mrb[0].mxu0 %v2762
        %v3105 = vpop.f32.mrb[0].mxu0
        %v3106 = vadd.f32 %v2530, %v3105
        %v3107 = vpop.f32.mrb[0].mxu0
        %v3108 = vpop.f32.mrb[0].mxu0
        %v3109 = vadd.f32 %v2533, %v3108
        %v3110 = vpop.f32.mrb[0].mxu0
        %3111 = vmatprep.mubr.bf16.mxu0 0
        %3112 = vmatmul.mubr.bf16.gmra.mrb[0].mxu0 %v2771
        %v3113 = vpop.f32.mrb[0].mxu0
        %v3114 = vadd.f32 %v2538, %v3113
        %v3115 = vpop.f32.mrb[0].mxu0
        %v3116 = vpop.f32.mrb[0].mxu0
        %v3117 = vadd.f32 %v2541, %v3116
        %v3118 = vpop.f32.mrb[0].mxu0
        %3119 = vmatprep.mubr.bf16.mxu0 0
        %3120 = vmatmul.mubr.bf16.gmra.mrb[0].mxu0 %v2780
        %v3121 = vpop.f32.mrb[0].mxu0
        %v3122 = vadd.f32 %v2546, %v3121
        %v3123 = vpop.f32.mrb[0].mxu0
        %v3124 = vpop.f32.mrb[0].mxu0
        %v3125 = vadd.f32 %v2549, %v3124
        %v3126 = vpop.f32.mrb[0].mxu0
        %3127 = vmatprep.mubr.bf16.mxu0 0
        %3128 = vmatmul.mubr.bf16.gmra.mrb[0].mxu0 %v2789
        %v3129 = vpop.f32.mrb[0].mxu0
        %v3130 = vadd.f32 %v2554, %v3129
        %v3131 = vpop.f32.mrb[0].mxu0
        %v3132 = vpop.f32.mrb[0].mxu0
        %v3133 = vadd.f32 %v2557, %v3132
        %v3134 = vpop.f32.mrb[0].mxu0
        %3135 = vmatprep.mubr.bf16.mxu0 0
        %3136 = vmatmul.mubr.bf16.gmra.mrb[0].mxu0 %v2798
        %v3137 = vpop.f32.mrb[0].mxu0
        %v3138 = vadd.f32 %v2562, %v3137
        %v3139 = vpop.f32.mrb[0].mxu0
        %v3140 = vpop.f32.mrb[0].mxu0
        %v3141 = vadd.f32 %v2565, %v3140
        %v3142 = vpop.f32.mrb[0].mxu0
        %3143 = vmatprep.mubr.bf16.mxu0 0
        %3144 = vmatmul.mubr.bf16.gmra.mrb[0].mxu0 %v2807
        %v3145 = vpop.f32.mrb[0].mxu0
        %v3146 = vadd.f32 %v2570, %v3145
        %v3147 = vpop.f32.mrb[0].mxu0
        %v3148 = vpop.f32.mrb[0].mxu0
        %v3149 = vadd.f32 %v2573, %v3148
        %v3150 = vpop.f32.mrb[0].mxu0
        %3151 = vmatprep.mubr.bf16.mxu0 0
        %3152 = vmatmul.mubr.bf16.gmra.mrb[0].mxu0 %v2816
        %v3153 = vpop.f32.mrb[0].mxu0
        %v3154 = vadd.f32 %v2578, %v3153
        %v3155 = vpop.f32.mrb[0].mxu0
        %v3156 = vpop.f32.mrb[0].mxu0
        %v3157 = vadd.f32 %v2581, %v3156
        %v3158 = vpop.f32.mrb[0].mxu0
        %3159 = vmatprep.mubr.bf16.mxu0 0
        %3160 = vmatmul.mubr.bf16.gmra.mrb[0].mxu0 %v2825
        %v3161 = vpop.f32.mrb[0].mxu0
        %v3162 = vadd.f32 %v2586, %v3161
        %v3163 = vpop.f32.mrb[0].mxu0
        %v3164 = vpop.f32.mrb[0].mxu0
        %v3165 = vadd.f32 %v2589, %v3164
        %v3166 = vpop.f32.mrb[0].mxu0
        %3167 = vmatprep.mubr.bf16.mxu0 0
        %3168 = vmatmul.mubr.bf16.gmra.mrb[0].mxu0 %v2834
        %v3169 = vpop.f32.mrb[0].mxu0
        %v3170 = vadd.f32 %v2594, %v3169
        %v3171 = vpop.f32.mrb[0].mxu0
        %v3172 = vpop.f32.mrb[0].mxu0
        %v3173 = vadd.f32 %v2597, %v3172
        %v3174 = vpop.f32.mrb[0].mxu0
        %3175 = vmatprep.mubr.bf16.mxu0 0
        %3176 = vmatmul.mubr.bf16.gmra.mrb[0].mxu0 %v2843
        %v3177 = vpop.f32.mrb[0].mxu0
        %v3178 = vadd.f32 %v2602, %v3177
        %v3179 = vpop.f32.mrb[0].mxu0
        %v3180 = vpop.f32.mrb[0].mxu0
        %v3181 = vadd.f32 %v2605, %v3180
        %v3182 = vpop.f32.mrb[0].mxu0
        %3183 = vmatprep.mubr.bf16.mxu0 0
        %3184 = vmatmul.mubr.bf16.gmra.mrb[0].mxu0 %v2852
        %v3185 = vpop.f32.mrb[0].mxu0
        %v3186 = vadd.f32 %v2610, %v3185
        %v3187 = vpop.f32.mrb[0].mxu0
        %v3188 = vpop.f32.mrb[0].mxu0
        %v3189 = vadd.f32 %v2613, %v3188
        %v3190 = vpop.f32.mrb[0].mxu0
        %3191 = vmatprep.mubr.bf16.mxu0 0
        %3192 = vmatmul.mubr.bf16.gmra.mrb[0].mxu0 %v2861
        %v3193 = vpop.f32.mrb[0].mxu0
        %v3194 = vadd.f32 %v2618, %v3193
        %v3195 = vpop.f32.mrb[0].mxu0
        %v3196 = vpop.f32.mrb[0].mxu0
        %v3197 = vadd.f32 %v2621, %v3196
        %v3198 = vpop.f32.mrb[0].mxu0
        %3199 = vmatprep.mubr.bf16.mxu0 0
        %3200 = vmatmul.mubr.bf16.gmra.mrb[0].mxu0 %v2870
        %v3201 = vpop.f32.mrb[0].mxu0
        %v3202 = vadd.f32 %v2626, %v3201
        %v3203 = vpop.f32.mrb[0].mxu0
        %v3204 = vpop.f32.mrb[0].mxu0
        %v3205 = vadd.f32 %v2629, %v3204
        %v3206 = vpop.f32.mrb[0].mxu0
        %3207 = vmatprep.mubr.bf16.mxu0 0
        %3208 = vmatmul.mubr.bf16.gmra.mrb[0].mxu0 %v2879
        %v3209 = vpop.f32.mrb[0].mxu0
        %v3210 = vadd.f32 %v2634, %v3209
        %v3211 = vpop.f32.mrb[0].mxu0
        %v3212 = vpop.f32.mrb[0].mxu0
        %v3213 = vadd.f32 %v2637, %v3212
        %v3214 = vpop.f32.mrb[0].mxu0
        %3215 = vmatprep.mubr.bf16.mxu0 0
        %3216 = vmatmul.mubr.bf16.gmra.mrb[0].mxu0 %v2888
        %v3217 = vpop.f32.mrb[0].mxu0
        %v3218 = vadd.f32 %v2642, %v3217
        %v3219 = vpop.f32.mrb[0].mxu0
        %v3220 = vpop.f32.mrb[0].mxu0
        %v3221 = vadd.f32 %v2645, %v3220
        %v3222 = vpop.f32.mrb[0].mxu0
        %3223 = vmatprep.mubr.bf16.mxu0 0
        %3224 = vmatmul.mubr.bf16.gmra.mrb[0].mxu0 %v2897
        %v3225 = vpop.f32.mrb[0].mxu0
        %v3226 = vadd.f32 %v2650, %v3225
        %v3227 = vpop.f32.mrb[0].mxu0
        %v3228 = vpop.f32.mrb[0].mxu0
        %v3229 = vadd.f32 %v2653, %v3228
        %v3230 = vpop.f32.mrb[0].mxu0
        %3231 = vmatprep.mubr.bf16.mxu0 0
        %3232 = vmatmul.mubr.bf16.gmra.mrb[0].mxu0 %v2906
        %v3233 = vpop.f32.mrb[0].mxu0
        %v3234 = vadd.f32 %v2658, %v3233
        %v3235 = vpop.f32.mrb[0].mxu0
        %v3236 = vpop.f32.mrb[0].mxu0
        %v3237 = vadd.f32 %v2661, %v3236
        %v3238 = vpop.f32.mrb[0].mxu0
        %3239 = vmatprep.mubr.bf16.mxu0 0
        %3240 = vmatmul.mubr.bf16.gmra.mrb[0].mxu0 %v2915
        %v3241 = vpop.f32.mrb[0].mxu0
        %v3242 = vadd.f32 %v2666, %v3241
        %v3243 = vpop.f32.mrb[0].mxu0
        %v3244 = vpop.f32.mrb[0].mxu0
        %v3245 = vadd.f32 %v2669, %v3244
        %v3246 = vpop.f32.mrb[0].mxu0
        %3247 = vmatprep.mubr.bf16.mxu0 0
        %3248 = vmatmul.mubr.bf16.gmra.mrb[0].mxu0 %v2924
        %v3249 = vpop.f32.mrb[0].mxu0
        %v3250 = vadd.f32 %v2674, %v3249
        %v3251 = vpop.f32.mrb[0].mxu0
        %v3252 = vpop.f32.mrb[0].mxu0
        %v3253 = vadd.f32 %v2677, %v3252
        %v3254 = vpop.f32.mrb[0].mxu0
        %3255 = vmatprep.mubr.bf16.mxu0 0
        %3256 = vmatmul.mubr.bf16.gmra.mrb[0].mxu0 %v2933
        %v3257 = vpop.f32.mrb[0].mxu0
        %v3258 = vadd.f32 %v2682, %v3257
        %v3259 = vpop.f32.mrb[0].mxu0
        %v3260 = vpop.f32.mrb[0].mxu0
        %v3261 = vadd.f32 %v2685, %v3260
        %v3262 = vpop.f32.mrb[0].mxu0
        %3263 = vmatprep.mubr.bf16.mxu0 0
        %3264 = vmatmul.mubr.bf16.gmra.mrb[0].mxu0 %v2942
        %v3265 = vpop.f32.mrb[0].mxu0
        %v3266 = vadd.f32 %v2690, %v3265
        %v3267 = vpop.f32.mrb[0].mxu0
        %v3268 = vpop.f32.mrb[0].mxu0
        %v3269 = vadd.f32 %v2693, %v3268
        %v3270 = vpop.f32.mrb[0].mxu0
        %3271 = vmatprep.mubr.bf16.mxu0 0
        %3272 = vmatmul.mubr.bf16.gmra.mrb[0].mxu0 %v2951
        %v3273 = vpop.f32.mrb[0].mxu0
        %v3274 = vadd.f32 %v2698, %v3273
        %v3275 = vpop.f32.mrb[0].mxu0
        %v3276 = vpop.f32.mrb[0].mxu0
        %v3277 = vadd.f32 %v2701, %v3276
        %v3278 = vpop.f32.mrb[0].mxu0
        %3279 = vmatprep.mubr.bf16.mxu0 0
        %3280 = vmatmul.mubr.bf16.gmra.mrb[0].mxu0 %v2960
        %v3281 = vpop.f32.mrb[0].mxu0
        %v3282 = vadd.f32 %v2706, %v3281
        %v3283 = vpop.f32.mrb[0].mxu0
        %v3284 = vpop.f32.mrb[0].mxu0
        %v3285 = vadd.f32 %v2709, %v3284
        %v3286 = vpop.f32.mrb[0].mxu0
        %3287 = vmatprep.mubr.bf16.mxu0 0
        %3288 = vmatmul.mubr.bf16.gmra.mrb[0].mxu0 %v2969
        %v3289 = vpop.f32.mrb[0].mxu0
        %v3290 = vadd.f32 %v2714, %v3289
        %v3291 = vpop.f32.mrb[0].mxu0
        %v3292 = vpop.f32.mrb[0].mxu0
        %v3293 = vadd.f32 %v2717, %v3292
        %v3294 = vpop.f32.mrb[0].mxu0
        %3295 = vmatprep.mubr.bf16.mxu0 0
        %3296 = vmatmul.mubr.bf16.gmra.mrb[0].mxu0 %v2978
        %v3297 = vpop.f32.mrb[0].mxu0
        %v3298 = vadd.f32 %v2722, %v3297
        %v3299 = vpop.f32.mrb[0].mxu0
        %v3300 = vpop.f32.mrb[0].mxu0
        %v3301 = vadd.f32 %v2725, %v3300
        %v3302 = vpop.f32.mrb[0].mxu0
        %3303 = vmatprep.mubr.bf16.mxu0 0
        %3304 = vmatmul.mubr.bf16.gmra.mrb[0].mxu0 %v2987
        %v3305 = vpop.f32.mrb[0].mxu0
        %v3306 = vadd.f32 %v2730, %v3305
        %v3307 = vpop.f32.mrb[0].mxu0
        %v3308 = vpop.f32.mrb[0].mxu0
        %v3309 = vadd.f32 %v2733, %v3308
        %v3310 = vpop.f32.mrb[0].mxu0
        %3311 = vdwg.mxu0
        %v3312 = vld [vmem:[#allocation2 + $0xd8] sm:$0x1f]
        %v3313 = vld [vmem:[#allocation8 + $0x80] sm:$0xf]
        %v3314 = vld [vmem:[#allocation8 + $0x84] sm:$0xf]
        %v3315 = vld [vmem:[#allocation8 + $0x88] sm:$0xf]
        %v3316 = vld [vmem:[#allocation8 + $0x8c] sm:$0xf]
        %v3317 = vld [vmem:[#allocation8 + $0x90] sm:$0xf]
        %v3318 = vld [vmem:[#allocation8 + $0x94] sm:$0xf]
        %v3319 = vld [vmem:[#allocation8 + $0x98] sm:$0xf]
        %v3320 = vld [vmem:[#allocation8 + $0x9c] sm:$0xf]
        %v3321 = vld [vmem:[#allocation8 + $0xa0] sm:$0xf]
        %v3322 = vld [vmem:[#allocation8 + $0xa4] sm:$0xf]
        %v3323 = vld [vmem:[#allocation8 + $0xa8] sm:$0xf]
        %v3324 = vld [vmem:[#allocation8 + $0xac] sm:$0xf]
        %v3325 = vld [vmem:[#allocation8 + $0xb0] sm:$0xf]
        %v3326 = vld [vmem:[#allocation8 + $0xb4] sm:$0xf]
        %v3327 = vld [vmem:[#allocation8 + $0xb8] sm:$0xf]
        %v3328 = vld [vmem:[#allocation8 + $0xbc] sm:$0xf]
        %vm3329 = vsmask.f32 3328
        %v3331 = vshrl.u32 %v2311, 16
        %v3333 = vrot.slane %v3331, 4
        %v3334 = vshll.u32 %v2311, 16
        %v3336 = vrot.slane %v3334, 5
        %v3337 = vor.u32 %v3333, %v3336
        %v3338 = vrot.slane %v2746, 4
        %v3339 = vrot.slane %v2749, 5
        %v3340 = vor.u32 %v3338, %v3339
        %v3341 = vsel %vm3329, %v3337, %v3340
        %v3342 = vrot.slane %v2755, 4
        %v3343 = vrot.slane %v2758, 5
        %v3344 = vor.u32 %v3342, %v3343
        %v3345 = vsel %vm3329, %v3340, %v3344
        %v3346 = vrot.slane %v2764, 4
        %v3347 = vrot.slane %v2767, 5
        %v3348 = vor.u32 %v3346, %v3347
        %v3349 = vsel %vm3329, %v3344, %v3348
        %v3350 = vrot.slane %v2773, 4
        %v3351 = vrot.slane %v2776, 5
        %v3352 = vor.u32 %v3350, %v3351
        %v3353 = vsel %vm3329, %v3348, %v3352
        %v3354 = vrot.slane %v2782, 4
        %v3355 = vrot.slane %v2785, 5
        %v3356 = vor.u32 %v3354, %v3355
        %v3357 = vsel %vm3329, %v3352, %v3356
        %v3358 = vrot.slane %v2791, 4
        %v3359 = vrot.slane %v2794, 5
        %v3360 = vor.u32 %v3358, %v3359
        %v3361 = vsel %vm3329, %v3356, %v3360
        %v3362 = vrot.slane %v2800, 4
        %v3363 = vrot.slane %v2803, 5
        %v3364 = vor.u32 %v3362, %v3363
        %v3365 = vsel %vm3329, %v3360, %v3364
        %v3366 = vrot.slane %v2809, 4
        %v3367 = vrot.slane %v2812, 5
        %v3368 = vor.u32 %v3366, %v3367
        %v3369 = vsel %vm3329, %v3364, %v3368
        %v3370 = vrot.slane %v2818, 4
        %v3371 = vrot.slane %v2821, 5
        %v3372 = vor.u32 %v3370, %v3371
        %v3373 = vsel %vm3329, %v3368, %v3372
        %v3374 = vrot.slane %v2827, 4
        %v3375 = vrot.slane %v2830, 5
        %v3376 = vor.u32 %v3374, %v3375
        %v3377 = vsel %vm3329, %v3372, %v3376
        %v3378 = vrot.slane %v2836, 4
        %v3379 = vrot.slane %v2839, 5
        %v3380 = vor.u32 %v3378, %v3379
        %v3381 = vsel %vm3329, %v3376, %v3380
        %v3382 = vrot.slane %v2845, 4
        %v3383 = vrot.slane %v2848, 5
        %v3384 = vor.u32 %v3382, %v3383
        %v3385 = vsel %vm3329, %v3380, %v3384
        %v3386 = vrot.slane %v2854, 4
        %v3387 = vrot.slane %v2857, 5
        %v3388 = vor.u32 %v3386, %v3387
        %v3389 = vsel %vm3329, %v3384, %v3388
        %v3390 = vrot.slane %v2863, 4
        %v3391 = vrot.slane %v2866, 5
        %v3392 = vor.u32 %v3390, %v3391
        %v3393 = vsel %vm3329, %v3388, %v3392
        %v3394 = vrot.slane %v2872, 4
        %v3395 = vrot.slane %v2875, 5
        %v3396 = vor.u32 %v3394, %v3395
        %v3397 = vsel %vm3329, %v3392, %v3396
        %v3398 = vrot.slane %v2881, 4
        %v3399 = vrot.slane %v2884, 5
        %v3400 = vor.u32 %v3398, %v3399
        %v3401 = vsel %vm3329, %v3396, %v3400
        %v3402 = vrot.slane %v2890, 4
        %v3403 = vrot.slane %v2893, 5
        %v3404 = vor.u32 %v3402, %v3403
        %v3405 = vsel %vm3329, %v3400, %v3404
        %v3406 = vrot.slane %v2899, 4
        %v3407 = vrot.slane %v2902, 5
        %v3408 = vor.u32 %v3406, %v3407
        %v3409 = vsel %vm3329, %v3404, %v3408
        %v3410 = vrot.slane %v2908, 4
        %v3411 = vrot.slane %v2911, 5
        %v3412 = vor.u32 %v3410, %v3411
        %v3413 = vsel %vm3329, %v3408, %v3412
        %v3414 = vrot.slane %v2917, 4
        %v3415 = vrot.slane %v2920, 5
        %v3416 = vor.u32 %v3414, %v3415
        %v3417 = vsel %vm3329, %v3412, %v3416
        %v3418 = vrot.slane %v2926, 4
        %v3419 = vrot.slane %v2929, 5
        %v3420 = vor.u32 %v3418, %v3419
        %v3421 = vsel %vm3329, %v3416, %v3420
        %v3422 = vrot.slane %v2935, 4
        %v3423 = vrot.slane %v2938, 5
        %v3424 = vor.u32 %v3422, %v3423
        %v3425 = vsel %vm3329, %v3420, %v3424
        %v3426 = vrot.slane %v2944, 4
        %v3427 = vrot.slane %v2947, 5
        %v3428 = vor.u32 %v3426, %v3427
        %v3429 = vsel %vm3329, %v3424, %v3428
        %v3430 = vrot.slane %v2953, 4
        %v3431 = vrot.slane %v2956, 5
        %v3432 = vor.u32 %v3430, %v3431
        %v3433 = vsel %vm3329, %v3428, %v3432
        %v3434 = vrot.slane %v2962, 4
        %v3435 = vrot.slane %v2965, 5
        %v3436 = vor.u32 %v3434, %v3435
        %v3437 = vsel %vm3329, %v3432, %v3436
        %v3438 = vrot.slane %v2971, 4
        %v3439 = vrot.slane %v2974, 5
        %v3440 = vor.u32 %v3438, %v3439
        %v3441 = vsel %vm3329, %v3436, %v3440
        %v3443 = vshrl.u32 %v3312, 16
        %v3445 = vrot.slane %v3443, 4
        %v3446 = vshll.u32 %v3312, 16
        %v3448 = vrot.slane %v3446, 5
        %v3449 = vor.u32 %v3445, %v3448
        %v3450 = vsel %vm3329, %v3440, %v3449
        %v3494 = vunpack.c.l.b16 %v3313
        %v3495 = vunpack.c.l.b16 %v3314
        %v3496 = vunpack.c.l.b16 %v3315
        %v3497 = vunpack.c.l.b16 %v3316
        %v3498 = vunpack.c.l.b16 %v3317
        %v3499 = vunpack.c.l.b16 %v3318
        %v3500 = vunpack.c.l.b16 %v3319
        %v3501 = vunpack.c.l.b16 %v3320
        %v3502 = vunpack.c.l.b16 %v3321
        %v3503 = vunpack.c.l.b16 %v3322
        %v3504 = vunpack.c.l.b16 %v3323
        %v3505 = vunpack.c.l.b16 %v3324
        %v3506 = vunpack.c.l.b16 %v3325
        %v3507 = vunpack.c.l.b16 %v3326
        %v3508 = vunpack.c.l.b16 %v3327
        %v3509 = vunpack.c.l.b16 %v3328
        %v3510 = vpack.c.b16 %v3495, %v3494
        %v3511 = vpack.c.b16 %v3497, %v3496
        %v3512 = vpack.c.b16 %v3499, %v3498
        %v3513 = vpack.c.b16 %v3501, %v3500
        %v3514 = vpack.c.b16 %v3503, %v3502
        %v3515 = vpack.c.b16 %v3505, %v3504
        %v3516 = vpack.c.b16 %v3507, %v3506
        %v3517 = vpack.c.b16 %v3509, %v3508
        %3526 = vmatprep.subr.bf16.mxu0 0
        %3527 = vmatpush1.bf16.msra.mxu0 %v3510
        %3528 = vmatprep.subr.bf16.mxu0 0
        %3529 = vmatpush1.bf16.msra.mxu0 %v3511
        %3530 = vmatprep.subr.bf16.mxu0 0
        %3531 = vmatpush1.bf16.msra.mxu0 %v3512
        %3532 = vmatprep.subr.bf16.mxu0 0
        %3533 = vmatpush1.bf16.msra.mxu0 %v3513
        %3534 = vmatprep.subr.bf16.mxu0 0
        %3535 = vmatpush1.bf16.msra.mxu0 %v3514
        %3536 = vmatprep.subr.bf16.mxu0 0
        %3537 = vmatpush1.bf16.msra.mxu0 %v3515
        %3538 = vmatprep.subr.bf16.mxu0 0
        %3539 = vmatpush1.bf16.msra.mxu0 %v3516
        %3540 = vmatprep.subr.bf16.mxu0 0
        %3541 = vmatpush1.bf16.msra.mxu0 %v3517
        %3542 = vmatprep.subr.bf16.mxu0 0
        %3543 = vmatpush1.bf16.msra.mxu0 0
        %3544 = vmatprep.subr.bf16.mxu0 0
        %3545 = vmatpush1.bf16.msra.mxu0 0
        %3546 = vmatprep.subr.bf16.mxu0 0
        %3547 = vmatpush1.bf16.msra.mxu0 0
        %3548 = vmatprep.subr.bf16.mxu0 0
        %3549 = vmatpush1.bf16.msra.mxu0 0
        %3550 = vmatprep.subr.bf16.mxu0 0
        %3551 = vmatpush1.bf16.msra.mxu0 0
        %3552 = vmatprep.subr.bf16.mxu0 0
        %3553 = vmatpush1.bf16.msra.mxu0 0
        %3554 = vmatprep.subr.bf16.mxu0 0
        %3555 = vmatpush1.bf16.msra.mxu0 0
        %3556 = vmatprep.subr.bf16.mxu0 0
        %3557 = vmatpush1.bf16.msra.mxu0 0
        %3558 = vmatprep.mubr.bf16.mxu0 0
        %3559 = vmatmul.mubr.bf16.gmra.mrb[0].mxu0 %v3341
        %v3560 = vpop.f32.mrb[0].mxu0
        %v3561 = vadd.f32 0.0, %v3560
        %v3562 = vpop.f32.mrb[0].mxu0
        %v3563 = vpop.f32.mrb[0].mxu0
        %v3564 = vadd.f32 0.0, %v3563
        %v3565 = vpop.f32.mrb[0].mxu0
        %3566 = vmatprep.mubr.bf16.mxu0 0
        %3567 = vmatmul.mubr.bf16.gmra.mrb[0].mxu0 %v3345
        %v3568 = vpop.f32.mrb[0].mxu0
        %v3569 = vadd.f32 0.0, %v3568
        %v3570 = vpop.f32.mrb[0].mxu0
        %v3571 = vpop.f32.mrb[0].mxu0
        %v3572 = vadd.f32 0.0, %v3571
        %v3573 = vpop.f32.mrb[0].mxu0
        %3574 = vmatprep.mubr.bf16.mxu0 0
        %3575 = vmatmul.mubr.bf16.gmra.mrb[0].mxu0 %v3349
        %v3576 = vpop.f32.mrb[0].mxu0
        %v3577 = vadd.f32 0.0, %v3576
        %v3578 = vpop.f32.mrb[0].mxu0
        %v3579 = vpop.f32.mrb[0].mxu0
        %v3580 = vadd.f32 0.0, %v3579
        %v3581 = vpop.f32.mrb[0].mxu0
        %3582 = vmatprep.mubr.bf16.mxu0 0
        %3583 = vmatmul.mubr.bf16.gmra.mrb[0].mxu0 %v3353
        %v3584 = vpop.f32.mrb[0].mxu0
        %v3585 = vadd.f32 0.0, %v3584
        %v3586 = vpop.f32.mrb[0].mxu0
        %v3587 = vpop.f32.mrb[0].mxu0
        %v3588 = vadd.f32 0.0, %v3587
        %v3589 = vpop.f32.mrb[0].mxu0
        %3590 = vmatprep.mubr.bf16.mxu0 0
        %3591 = vmatmul.mubr.bf16.gmra.mrb[0].mxu0 %v3357
        %v3592 = vpop.f32.mrb[0].mxu0
        %v3593 = vadd.f32 0.0, %v3592
        %v3594 = vpop.f32.mrb[0].mxu0
        %v3595 = vpop.f32.mrb[0].mxu0
        %v3596 = vadd.f32 0.0, %v3595
        %v3597 = vpop.f32.mrb[0].mxu0
        %3598 = vmatprep.mubr.bf16.mxu0 0
        %3599 = vmatmul.mubr.bf16.gmra.mrb[0].mxu0 %v3361
        %v3600 = vpop.f32.mrb[0].mxu0
        %v3601 = vadd.f32 0.0, %v3600
        %v3602 = vpop.f32.mrb[0].mxu0
        %v3603 = vpop.f32.mrb[0].mxu0
        %v3604 = vadd.f32 0.0, %v3603
        %v3605 = vpop.f32.mrb[0].mxu0
        %3606 = vmatprep.mubr.bf16.mxu0 0
        %3607 = vmatmul.mubr.bf16.gmra.mrb[0].mxu0 %v3365
        %v3608 = vpop.f32.mrb[0].mxu0
        %v3609 = vadd.f32 0.0, %v3608
        %v3610 = vpop.f32.mrb[0].mxu0
        %v3611 = vpop.f32.mrb[0].mxu0
        %v3612 = vadd.f32 0.0, %v3611
        %v3613 = vpop.f32.mrb[0].mxu0
        %3614 = vmatprep.mubr.bf16.mxu0 0
        %3615 = vmatmul.mubr.bf16.gmra.mrb[0].mxu0 %v3369
        %v3616 = vpop.f32.mrb[0].mxu0
        %v3617 = vadd.f32 0.0, %v3616
        %v3618 = vpop.f32.mrb[0].mxu0
        %v3619 = vpop.f32.mrb[0].mxu0
        %v3620 = vadd.f32 0.0, %v3619
        %v3621 = vpop.f32.mrb[0].mxu0
        %3622 = vmatprep.mubr.bf16.mxu0 0
        %3623 = vmatmul.mubr.bf16.gmra.mrb[0].mxu0 %v3373
        %v3624 = vpop.f32.mrb[0].mxu0
        %v3625 = vadd.f32 0.0, %v3624
        %v3626 = vpop.f32.mrb[0].mxu0
        %v3627 = vpop.f32.mrb[0].mxu0
        %v3628 = vadd.f32 0.0, %v3627
        %v3629 = vpop.f32.mrb[0].mxu0
        %3630 = vmatprep.mubr.bf16.mxu0 0
        %3631 = vmatmul.mubr.bf16.gmra.mrb[0].mxu0 %v3377
        %v3632 = vpop.f32.mrb[0].mxu0
        %v3633 = vadd.f32 0.0, %v3632
        %v3634 = vpop.f32.mrb[0].mxu0
        %v3635 = vpop.f32.mrb[0].mxu0
        %v3636 = vadd.f32 0.0, %v3635
        %v3637 = vpop.f32.mrb[0].mxu0
        %3638 = vmatprep.mubr.bf16.mxu0 0
        %3639 = vmatmul.mubr.bf16.gmra.mrb[0].mxu0 %v3381
        %v3640 = vpop.f32.mrb[0].mxu0
        %v3641 = vadd.f32 0.0, %v3640
        %v3642 = vpop.f32.mrb[0].mxu0
        %v3643 = vpop.f32.mrb[0].mxu0
        %v3644 = vadd.f32 0.0, %v3643
        %v3645 = vpop.f32.mrb[0].mxu0
        %3646 = vmatprep.mubr.bf16.mxu0 0
        %3647 = vmatmul.mubr.bf16.gmra.mrb[0].mxu0 %v3385
        %v3648 = vpop.f32.mrb[0].mxu0
        %v3649 = vadd.f32 0.0, %v3648
        %v3650 = vpop.f32.mrb[0].mxu0
        %v3651 = vpop.f32.mrb[0].mxu0
        %v3652 = vadd.f32 0.0, %v3651
        %v3653 = vpop.f32.mrb[0].mxu0
        %3654 = vmatprep.mubr.bf16.mxu0 0
        %3655 = vmatmul.mubr.bf16.gmra.mrb[0].mxu0 %v3389
        %v3656 = vpop.f32.mrb[0].mxu0
        %v3657 = vadd.f32 0.0, %v3656
        %v3658 = vpop.f32.mrb[0].mxu0
        %v3659 = vpop.f32.mrb[0].mxu0
        %v3660 = vadd.f32 0.0, %v3659
        %v3661 = vpop.f32.mrb[0].mxu0
        %3662 = vmatprep.mubr.bf16.mxu0 0
        %3663 = vmatmul.mubr.bf16.gmra.mrb[0].mxu0 %v3393
        %v3664 = vpop.f32.mrb[0].mxu0
        %v3665 = vadd.f32 0.0, %v3664
        %v3666 = vpop.f32.mrb[0].mxu0
        %v3667 = vpop.f32.mrb[0].mxu0
        %v3668 = vadd.f32 0.0, %v3667
        %v3669 = vpop.f32.mrb[0].mxu0
        %3670 = vmatprep.mubr.bf16.mxu0 0
        %3671 = vmatmul.mubr.bf16.gmra.mrb[0].mxu0 %v3397
        %v3672 = vpop.f32.mrb[0].mxu0
        %v3673 = vadd.f32 0.0, %v3672
        %v3674 = vpop.f32.mrb[0].mxu0
        %v3675 = vpop.f32.mrb[0].mxu0
        %v3676 = vadd.f32 0.0, %v3675
        %v3677 = vpop.f32.mrb[0].mxu0
        %3678 = vmatprep.mubr.bf16.mxu0 0
        %3679 = vmatmul.mubr.bf16.gmra.mrb[0].mxu0 %v3401
        %v3680 = vpop.f32.mrb[0].mxu0
        %v3681 = vadd.f32 0.0, %v3680
        %v3682 = vpop.f32.mrb[0].mxu0
        %v3683 = vpop.f32.mrb[0].mxu0
        %v3684 = vadd.f32 0.0, %v3683
        %v3685 = vpop.f32.mrb[0].mxu0
        %3686 = vmatprep.mubr.bf16.mxu0 0
        %3687 = vmatmul.mubr.bf16.gmra.mrb[0].mxu0 %v3405
        %v3688 = vpop.f32.mrb[0].mxu0
        %v3689 = vadd.f32 0.0, %v3688
        %v3690 = vpop.f32.mrb[0].mxu0
        %v3691 = vpop.f32.mrb[0].mxu0
        %v3692 = vadd.f32 0.0, %v3691
        %v3693 = vpop.f32.mrb[0].mxu0
        %3694 = vmatprep.mubr.bf16.mxu0 0
        %3695 = vmatmul.mubr.bf16.gmra.mrb[0].mxu0 %v3409
        %v3696 = vpop.f32.mrb[0].mxu0
        %v3697 = vadd.f32 0.0, %v3696
        %v3698 = vpop.f32.mrb[0].mxu0
        %v3699 = vpop.f32.mrb[0].mxu0
        %v3700 = vadd.f32 0.0, %v3699
        %v3701 = vpop.f32.mrb[0].mxu0
        %3702 = vmatprep.mubr.bf16.mxu0 0
        %3703 = vmatmul.mubr.bf16.gmra.mrb[0].mxu0 %v3413
        %v3704 = vpop.f32.mrb[0].mxu0
        %v3705 = vadd.f32 0.0, %v3704
        %v3706 = vpop.f32.mrb[0].mxu0
        %v3707 = vpop.f32.mrb[0].mxu0
        %v3708 = vadd.f32 0.0, %v3707
        %v3709 = vpop.f32.mrb[0].mxu0
        %3710 = vmatprep.mubr.bf16.mxu0 0
        %3711 = vmatmul.mubr.bf16.gmra.mrb[0].mxu0 %v3417
        %v3712 = vpop.f32.mrb[0].mxu0
        %v3713 = vadd.f32 0.0, %v3712
        %v3714 = vpop.f32.mrb[0].mxu0
        %v3715 = vpop.f32.mrb[0].mxu0
        %v3716 = vadd.f32 0.0, %v3715
        %v3717 = vpop.f32.mrb[0].mxu0
        %3718 = vmatprep.mubr.bf16.mxu0 0
        %3719 = vmatmul.mubr.bf16.gmra.mrb[0].mxu0 %v3421
        %v3720 = vpop.f32.mrb[0].mxu0
        %v3721 = vadd.f32 0.0, %v3720
        %v3722 = vpop.f32.mrb[0].mxu0
        %v3723 = vpop.f32.mrb[0].mxu0
        %v3724 = vadd.f32 0.0, %v3723
        %v3725 = vpop.f32.mrb[0].mxu0
        %3726 = vmatprep.mubr.bf16.mxu0 0
        %3727 = vmatmul.mubr.bf16.gmra.mrb[0].mxu0 %v3425
        %v3728 = vpop.f32.mrb[0].mxu0
        %v3729 = vadd.f32 0.0, %v3728
        %v3730 = vpop.f32.mrb[0].mxu0
        %v3731 = vpop.f32.mrb[0].mxu0
        %v3732 = vadd.f32 0.0, %v3731
        %v3733 = vpop.f32.mrb[0].mxu0
        %3734 = vmatprep.mubr.bf16.mxu0 0
        %3735 = vmatmul.mubr.bf16.gmra.mrb[0].mxu0 %v3429
        %v3736 = vpop.f32.mrb[0].mxu0
        %v3737 = vadd.f32 0.0, %v3736
        %v3738 = vpop.f32.mrb[0].mxu0
        %v3739 = vpop.f32.mrb[0].mxu0
        %v3740 = vadd.f32 0.0, %v3739
        %v3741 = vpop.f32.mrb[0].mxu0
        %3742 = vmatprep.mubr.bf16.mxu0 0
        %3743 = vmatmul.mubr.bf16.gmra.mrb[0].mxu0 %v3433
        %v3744 = vpop.f32.mrb[0].mxu0
        %v3745 = vadd.f32 0.0, %v3744
        %v3746 = vpop.f32.mrb[0].mxu0
        %v3747 = vpop.f32.mrb[0].mxu0
        %v3748 = vadd.f32 0.0, %v3747
        %v3749 = vpop.f32.mrb[0].mxu0
        %3750 = vmatprep.mubr.bf16.mxu0 0
        %3751 = vmatmul.mubr.bf16.gmra.mrb[0].mxu0 %v3437
        %v3752 = vpop.f32.mrb[0].mxu0
        %v3753 = vadd.f32 0.0, %v3752
        %v3754 = vpop.f32.mrb[0].mxu0
        %v3755 = vpop.f32.mrb[0].mxu0
        %v3756 = vadd.f32 0.0, %v3755
        %v3757 = vpop.f32.mrb[0].mxu0
        %3758 = vmatprep.mubr.bf16.mxu0 0
        %3759 = vmatmul.mubr.bf16.gmra.mrb[0].mxu0 %v3441
        %v3760 = vpop.f32.mrb[0].mxu0
        %v3761 = vadd.f32 0.0, %v3760
        %v3762 = vpop.f32.mrb[0].mxu0
        %v3763 = vpop.f32.mrb[0].mxu0
        %v3764 = vadd.f32 0.0, %v3763
        %v3765 = vpop.f32.mrb[0].mxu0
        %3766 = vmatprep.mubr.bf16.mxu0 0
        %3767 = vmatmul.mubr.bf16.gmra.mrb[0].mxu0 %v3450
        %v3768 = vpop.f32.mrb[0].mxu0
        %v3769 = vadd.f32 0.0, %v3768
        %v3770 = vpop.f32.mrb[0].mxu0
        %v3771 = vpop.f32.mrb[0].mxu0
        %v3772 = vadd.f32 0.0, %v3771
        %v3773 = vpop.f32.mrb[0].mxu0
        %3774 = vdwg.mxu0
        %v3775 = vadd.f32 %v3098, %v3561
        %v3776 = vadd.f32 %v3101, %v3564
        %v3777 = vadd.f32 %v3106, %v3569
        %v3778 = vadd.f32 %v3109, %v3572
        %v3779 = vadd.f32 %v3114, %v3577
        %v3780 = vadd.f32 %v3117, %v3580
        %v3781 = vadd.f32 %v3122, %v3585
        %v3782 = vadd.f32 %v3125, %v3588
        %v3783 = vadd.f32 %v3130, %v3593
        %v3784 = vadd.f32 %v3133, %v3596
        %v3785 = vadd.f32 %v3138, %v3601
        %v3786 = vadd.f32 %v3141, %v3604
        %v3787 = vadd.f32 %v3146, %v3609
        %v3788 = vadd.f32 %v3149, %v3612
        %v3789 = vadd.f32 %v3154, %v3617
        %v3790 = vadd.f32 %v3157, %v3620
        %v3791 = vadd.f32 %v3162, %v3625
        %v3792 = vadd.f32 %v3165, %v3628
        %v3793 = vadd.f32 %v3170, %v3633
        %v3794 = vadd.f32 %v3173, %v3636
        %v3795 = vadd.f32 %v3178, %v3641
        %v3796 = vadd.f32 %v3181, %v3644
        %v3797 = vadd.f32 %v3186, %v3649
        %v3798 = vadd.f32 %v3189, %v3652
        %v3799 = vadd.f32 %v3194, %v3657
        %v3800 = vadd.f32 %v3197, %v3660
        %v3801 = vadd.f32 %v3202, %v3665
        %v3802 = vadd.f32 %v3205, %v3668
        %v3803 = vadd.f32 %v3210, %v3673
        %v3804 = vadd.f32 %v3213, %v3676
        %v3805 = vadd.f32 %v3218, %v3681
        %v3806 = vadd.f32 %v3221, %v3684
        %v3807 = vadd.f32 %v3226, %v3689
        %v3808 = vadd.f32 %v3229, %v3692
        %v3809 = vadd.f32 %v3234, %v3697
        %v3810 = vadd.f32 %v3237, %v3700
        %v3811 = vadd.f32 %v3242, %v3705
        %v3812 = vadd.f32 %v3245, %v3708
        %v3813 = vadd.f32 %v3250, %v3713
        %v3814 = vadd.f32 %v3253, %v3716
        %v3815 = vadd.f32 %v3258, %v3721
        %v3816 = vadd.f32 %v3261, %v3724
        %v3817 = vadd.f32 %v3266, %v3729
        %v3818 = vadd.f32 %v3269, %v3732
        %v3819 = vadd.f32 %v3274, %v3737
        %v3820 = vadd.f32 %v3277, %v3740
        %v3821 = vadd.f32 %v3282, %v3745
        %v3822 = vadd.f32 %v3285, %v3748
        %v3823 = vadd.f32 %v3290, %v3753
        %v3824 = vadd.f32 %v3293, %v3756
        %v3825 = vadd.f32 %v3298, %v3761
        %v3826 = vadd.f32 %v3301, %v3764
        %v3827 = vadd.f32 %v3306, %v3769
        %v3828 = vadd.f32 %v3309, %v3772
        %v3829 = vld [vmem:[#allocation2 + $0x8] sm:$0x80]
        %v3830 = vld [vmem:[#allocation2 + $0x10] sm:$0xff]
        %v3831 = vld [vmem:[#allocation2 + $0x18] sm:$0xff]
        %v3832 = vld [vmem:[#allocation2 + $0x20] sm:$0xff]
        %v3833 = vld [vmem:[#allocation2 + $0x28] sm:$0xff]
        %v3834 = vld [vmem:[#allocation2 + $0x30] sm:$0xff]
        %v3835 = vld [vmem:[#allocation2 + $0x38] sm:$0xff]
        %v3836 = vld [vmem:[#allocation2 + $0x40] sm:$0xff]
        %v3837 = vld [vmem:[#allocation2 + $0x48] sm:$0xff]
        %v3838 = vld [vmem:[#allocation2 + $0x50] sm:$0xff]
        %v3839 = vld [vmem:[#allocation2 + $0x58] sm:$0xff]
        %v3840 = vld [vmem:[#allocation2 + $0x60] sm:$0xff]
        %v3841 = vld [vmem:[#allocation2 + $0x68] sm:$0xff]
        %v3842 = vld [vmem:[#allocation2 + $0x70] sm:$0xff]
        %v3843 = vld [vmem:[#allocation2 + $0x78] sm:$0xff]
        %v3844 = vld [vmem:[#allocation2 + $0x80] sm:$0xff]
        %v3845 = vld [vmem:[#allocation2 + $0x88] sm:$0xff]
        %v3846 = vld [vmem:[#allocation2 + $0x90] sm:$0xff]
        %v3847 = vld [vmem:[#allocation2 + $0x98] sm:$0xff]
        %v3848 = vld [vmem:[#allocation2 + $0xa0] sm:$0xff]
        %v3849 = vld [vmem:[#allocation2 + $0xa8] sm:$0xff]
        %v3850 = vld [vmem:[#allocation2 + $0xb0] sm:$0xff]
        %v3851 = vld [vmem:[#allocation2 + $0xb8] sm:$0xff]
        %v3852 = vld [vmem:[#allocation2 + $0xc0] sm:$0xff]
        %v3853 = vld [vmem:[#allocation2 + $0xc8] sm:$0xff]
        %v3854 = vld [vmem:[#allocation2 + $0xd0] sm:$0xff]
        %v3855 = vld [vmem:[#allocation2 + $0xd8] sm:$0xff]
        %v3856 = vld [vmem:[#allocation2 + $0xe0] sm:$0xff]
        %v3857 = vld [vmem:[#allocation8 + $0xc0] sm:$0xf]
        %v3858 = vld [vmem:[#allocation8 + $0xc4] sm:$0xf]
        %v3859 = vld [vmem:[#allocation8 + $0xc8] sm:$0xf]
        %v3860 = vld [vmem:[#allocation8 + $0xcc] sm:$0xf]
        %v3861 = vld [vmem:[#allocation8 + $0xd0] sm:$0xf]
        %v3862 = vld [vmem:[#allocation8 + $0xd4] sm:$0xf]
        %v3863 = vld [vmem:[#allocation8 + $0xd8] sm:$0xf]
        %v3864 = vld [vmem:[#allocation8 + $0xdc] sm:$0xf]
        %v3865 = vld [vmem:[#allocation8 + $0xe0] sm:$0xf]
        %v3866 = vld [vmem:[#allocation8 + $0xe4] sm:$0xf]
        %v3867 = vld [vmem:[#allocation8 + $0xe8] sm:$0xf]
        %v3868 = vld [vmem:[#allocation8 + $0xec] sm:$0xf]
        %v3869 = vld [vmem:[#allocation8 + $0xf0] sm:$0xf]
        %v3870 = vld [vmem:[#allocation8 + $0xf4] sm:$0xf]
        %v3871 = vld [vmem:[#allocation8 + $0xf8] sm:$0xf]
        %v3872 = vld [vmem:[#allocation8 + $0xfc] sm:$0xf]
        %vm3873 = vsmask.f32 256
        %v3875 = vshrl.u32 %v3829, 16
        %v3877 = vrot.slane %v3875, 7
        %v3879 = vshrl.u32 %v3830, 16
        %v3881 = vrot.slane %v3879, 7
        %v3882 = vshll.u32 %v3830, 16
        %v3884 = vor.u32 %v3881, %v3882
        %v3885 = vsel %vm3873, %v3877, %v3884
        %v3887 = vshrl.u32 %v3831, 16
        %v3889 = vrot.slane %v3887, 7
        %v3890 = vshll.u32 %v3831, 16
        %v3892 = vor.u32 %v3889, %v3890
        %v3893 = vsel %vm3873, %v3881, %v3892
        %v3895 = vshrl.u32 %v3832, 16
        %v3897 = vrot.slane %v3895, 7
        %v3898 = vshll.u32 %v3832, 16
        %v3900 = vor.u32 %v3897, %v3898
        %v3901 = vsel %vm3873, %v3889, %v3900
        %v3903 = vshrl.u32 %v3833, 16
        %v3905 = vrot.slane %v3903, 7
        %v3906 = vshll.u32 %v3833, 16
        %v3908 = vor.u32 %v3905, %v3906
        %v3909 = vsel %vm3873, %v3897, %v3908
        %v3911 = vshrl.u32 %v3834, 16
        %v3913 = vrot.slane %v3911, 7
        %v3914 = vshll.u32 %v3834, 16
        %v3916 = vor.u32 %v3913, %v3914
        %v3917 = vsel %vm3873, %v3905, %v3916
        %v3919 = vshrl.u32 %v3835, 16
        %v3921 = vrot.slane %v3919, 7
        %v3922 = vshll.u32 %v3835, 16
        %v3924 = vor.u32 %v3921, %v3922
        %v3925 = vsel %vm3873, %v3913, %v3924
        %v3927 = vshrl.u32 %v3836, 16
        %v3929 = vrot.slane %v3927, 7
        %v3930 = vshll.u32 %v3836, 16
        %v3932 = vor.u32 %v3929, %v3930
        %v3933 = vsel %vm3873, %v3921, %v3932
        %v3935 = vshrl.u32 %v3837, 16
        %v3937 = vrot.slane %v3935, 7
        %v3938 = vshll.u32 %v3837, 16
        %v3940 = vor.u32 %v3937, %v3938
        %v3941 = vsel %vm3873, %v3929, %v3940
        %v3943 = vshrl.u32 %v3838, 16
        %v3945 = vrot.slane %v3943, 7
        %v3946 = vshll.u32 %v3838, 16
        %v3948 = vor.u32 %v3945, %v3946
        %v3949 = vsel %vm3873, %v3937, %v3948
        %v3951 = vshrl.u32 %v3839, 16
        %v3953 = vrot.slane %v3951, 7
        %v3954 = vshll.u32 %v3839, 16
        %v3956 = vor.u32 %v3953, %v3954
        %v3957 = vsel %vm3873, %v3945, %v3956
        %v3959 = vshrl.u32 %v3840, 16
        %v3961 = vrot.slane %v3959, 7
        %v3962 = vshll.u32 %v3840, 16
        %v3964 = vor.u32 %v3961, %v3962
        %v3965 = vsel %vm3873, %v3953, %v3964
        %v3967 = vshrl.u32 %v3841, 16
        %v3969 = vrot.slane %v3967, 7
        %v3970 = vshll.u32 %v3841, 16
        %v3972 = vor.u32 %v3969, %v3970
        %v3973 = vsel %vm3873, %v3961, %v3972
        %v3975 = vshrl.u32 %v3842, 16
        %v3977 = vrot.slane %v3975, 7
        %v3978 = vshll.u32 %v3842, 16
        %v3980 = vor.u32 %v3977, %v3978
        %v3981 = vsel %vm3873, %v3969, %v3980
        %v3983 = vshrl.u32 %v3843, 16
        %v3985 = vrot.slane %v3983, 7
        %v3986 = vshll.u32 %v3843, 16
        %v3988 = vor.u32 %v3985, %v3986
        %v3989 = vsel %vm3873, %v3977, %v3988
        %v3991 = vshrl.u32 %v3844, 16
        %v3993 = vrot.slane %v3991, 7
        %v3994 = vshll.u32 %v3844, 16
        %v3996 = vor.u32 %v3993, %v3994
        %v3997 = vsel %vm3873, %v3985, %v3996
        %v3999 = vshrl.u32 %v3845, 16
        %v4001 = vrot.slane %v3999, 7
        %v4002 = vshll.u32 %v3845, 16
        %v4004 = vor.u32 %v4001, %v4002
        %v4005 = vsel %vm3873, %v3993, %v4004
        %v4007 = vshrl.u32 %v3846, 16
        %v4009 = vrot.slane %v4007, 7
        %v4010 = vshll.u32 %v3846, 16
        %v4012 = vor.u32 %v4009, %v4010
        %v4013 = vsel %vm3873, %v4001, %v4012
        %v4015 = vshrl.u32 %v3847, 16
        %v4017 = vrot.slane %v4015, 7
        %v4018 = vshll.u32 %v3847, 16
        %v4020 = vor.u32 %v4017, %v4018
        %v4021 = vsel %vm3873, %v4009, %v4020
        %v4023 = vshrl.u32 %v3848, 16
        %v4025 = vrot.slane %v4023, 7
        %v4026 = vshll.u32 %v3848, 16
        %v4028 = vor.u32 %v4025, %v4026
        %v4029 = vsel %vm3873, %v4017, %v4028
        %v4031 = vshrl.u32 %v3849, 16
        %v4033 = vrot.slane %v4031, 7
        %v4034 = vshll.u32 %v3849, 16
        %v4036 = vor.u32 %v4033, %v4034
        %v4037 = vsel %vm3873, %v4025, %v4036
        %v4039 = vshrl.u32 %v3850, 16
        %v4041 = vrot.slane %v4039, 7
        %v4042 = vshll.u32 %v3850, 16
        %v4044 = vor.u32 %v4041, %v4042
        %v4045 = vsel %vm3873, %v4033, %v4044
        %v4047 = vshrl.u32 %v3851, 16
        %v4049 = vrot.slane %v4047, 7
        %v4050 = vshll.u32 %v3851, 16
        %v4052 = vor.u32 %v4049, %v4050
        %v4053 = vsel %vm3873, %v4041, %v4052
        %v4055 = vshrl.u32 %v3852, 16
        %v4057 = vrot.slane %v4055, 7
        %v4058 = vshll.u32 %v3852, 16
        %v4060 = vor.u32 %v4057, %v4058
        %v4061 = vsel %vm3873, %v4049, %v4060
        %v4063 = vshrl.u32 %v3853, 16
        %v4065 = vrot.slane %v4063, 7
        %v4066 = vshll.u32 %v3853, 16
        %v4068 = vor.u32 %v4065, %v4066
        %v4069 = vsel %vm3873, %v4057, %v4068
        %v4071 = vshrl.u32 %v3854, 16
        %v4073 = vrot.slane %v4071, 7
        %v4074 = vshll.u32 %v3854, 16
        %v4076 = vor.u32 %v4073, %v4074
        %v4077 = vsel %vm3873, %v4065, %v4076
        %v4079 = vshrl.u32 %v3855, 16
        %v4081 = vrot.slane %v4079, 7
        %v4082 = vshll.u32 %v3855, 16
        %v4084 = vor.u32 %v4081, %v4082
        %v4085 = vsel %vm3873, %v4073, %v4084
        %v4087 = vshrl.u32 %v3856, 16
        %v4089 = vrot.slane %v4087, 7
        %v4090 = vshll.u32 %v3856, 16
        %v4092 = vor.u32 %v4089, %v4090
        %v4093 = vsel %vm3873, %v4081, %v4092
        %v4137 = vunpack.c.l.b16 %v3857
        %v4138 = vunpack.c.l.b16 %v3858
        %v4139 = vunpack.c.l.b16 %v3859
        %v4140 = vunpack.c.l.b16 %v3860
        %v4141 = vunpack.c.l.b16 %v3861
        %v4142 = vunpack.c.l.b16 %v3862
        %v4143 = vunpack.c.l.b16 %v3863
        %v4144 = vunpack.c.l.b16 %v3864
        %v4145 = vunpack.c.l.b16 %v3865
        %v4146 = vunpack.c.l.b16 %v3866
        %v4147 = vunpack.c.l.b16 %v3867
        %v4148 = vunpack.c.l.b16 %v3868
        %v4149 = vunpack.c.l.b16 %v3869
        %v4150 = vunpack.c.l.b16 %v3870
        %v4151 = vunpack.c.l.b16 %v3871
        %v4152 = vunpack.c.l.b16 %v3872
        %v4153 = vpack.c.b16 %v4138, %v4137
        %v4154 = vpack.c.b16 %v4140, %v4139
        %v4155 = vpack.c.b16 %v4142, %v4141
        %v4156 = vpack.c.b16 %v4144, %v4143
        %v4157 = vpack.c.b16 %v4146, %v4145
        %v4158 = vpack.c.b16 %v4148, %v4147
        %v4159 = vpack.c.b16 %v4150, %v4149
        %v4160 = vpack.c.b16 %v4152, %v4151
        %4169 = vmatprep.subr.bf16.mxu0 0
        %4170 = vmatpush1.bf16.msra.mxu0 %v4153
        %4171 = vmatprep.subr.bf16.mxu0 0
        %4172 = vmatpush1.bf16.msra.mxu0 %v4154
        %4173 = vmatprep.subr.bf16.mxu0 0
        %4174 = vmatpush1.bf16.msra.mxu0 %v4155
        %4175 = vmatprep.subr.bf16.mxu0 0
        %4176 = vmatpush1.bf16.msra.mxu0 %v4156
        %4177 = vmatprep.subr.bf16.mxu0 0
        %4178 = vmatpush1.bf16.msra.mxu0 %v4157
        %4179 = vmatprep.subr.bf16.mxu0 0
        %4180 = vmatpush1.bf16.msra.mxu0 %v4158
        %4181 = vmatprep.subr.bf16.mxu0 0
        %4182 = vmatpush1.bf16.msra.mxu0 %v4159
        %4183 = vmatprep.subr.bf16.mxu0 0
        %4184 = vmatpush1.bf16.msra.mxu0 %v4160
        %4185 = vmatprep.subr.bf16.mxu0 0
        %4186 = vmatpush1.bf16.msra.mxu0 0
        %4187 = vmatprep.subr.bf16.mxu0 0
        %4188 = vmatpush1.bf16.msra.mxu0 0
        %4189 = vmatprep.subr.bf16.mxu0 0
        %4190 = vmatpush1.bf16.msra.mxu0 0
        %4191 = vmatprep.subr.bf16.mxu0 0
        %4192 = vmatpush1.bf16.msra.mxu0 0
        %4193 = vmatprep.subr.bf16.mxu0 0
        %4194 = vmatpush1.bf16.msra.mxu0 0
        %4195 = vmatprep.subr.bf16.mxu0 0
        %4196 = vmatpush1.bf16.msra.mxu0 0
        %4197 = vmatprep.subr.bf16.mxu0 0
        %4198 = vmatpush1.bf16.msra.mxu0 0
        %4199 = vmatprep.subr.bf16.mxu0 0
        %4200 = vmatpush1.bf16.msra.mxu0 0
        %4201 = vmatprep.mubr.bf16.mxu0 0
        %4202 = vmatmul.mubr.bf16.gmra.mrb[0].mxu0 %v3885
        %v4203 = vpop.f32.mrb[0].mxu0
        %v4204 = vadd.f32 0.0, %v4203
        %v4205 = vpop.f32.mrb[0].mxu0
        %v4206 = vpop.f32.mrb[0].mxu0
        %v4207 = vadd.f32 0.0, %v4206
        %v4208 = vpop.f32.mrb[0].mxu0
        %4209 = vmatprep.mubr.bf16.mxu0 0
        %4210 = vmatmul.mubr.bf16.gmra.mrb[0].mxu0 %v3893
        %v4211 = vpop.f32.mrb[0].mxu0
        %v4212 = vadd.f32 0.0, %v4211
        %v4213 = vpop.f32.mrb[0].mxu0
        %v4214 = vpop.f32.mrb[0].mxu0
        %v4215 = vadd.f32 0.0, %v4214
        %v4216 = vpop.f32.mrb[0].mxu0
        %4217 = vmatprep.mubr.bf16.mxu0 0
        %4218 = vmatmul.mubr.bf16.gmra.mrb[0].mxu0 %v3901
        %v4219 = vpop.f32.mrb[0].mxu0
        %v4220 = vadd.f32 0.0, %v4219
        %v4221 = vpop.f32.mrb[0].mxu0
        %v4222 = vpop.f32.mrb[0].mxu0
        %v4223 = vadd.f32 0.0, %v4222
        %v4224 = vpop.f32.mrb[0].mxu0
        %4225 = vmatprep.mubr.bf16.mxu0 0
        %4226 = vmatmul.mubr.bf16.gmra.mrb[0].mxu0 %v3909
        %v4227 = vpop.f32.mrb[0].mxu0
        %v4228 = vadd.f32 0.0, %v4227
        %v4229 = vpop.f32.mrb[0].mxu0
        %v4230 = vpop.f32.mrb[0].mxu0
        %v4231 = vadd.f32 0.0, %v4230
        %v4232 = vpop.f32.mrb[0].mxu0
        %4233 = vmatprep.mubr.bf16.mxu0 0
        %4234 = vmatmul.mubr.bf16.gmra.mrb[0].mxu0 %v3917
        %v4235 = vpop.f32.mrb[0].mxu0
        %v4236 = vadd.f32 0.0, %v4235
        %v4237 = vpop.f32.mrb[0].mxu0
        %v4238 = vpop.f32.mrb[0].mxu0
        %v4239 = vadd.f32 0.0, %v4238
        %v4240 = vpop.f32.mrb[0].mxu0
        %4241 = vmatprep.mubr.bf16.mxu0 0
        %4242 = vmatmul.mubr.bf16.gmra.mrb[0].mxu0 %v3925
        %v4243 = vpop.f32.mrb[0].mxu0
        %v4244 = vadd.f32 0.0, %v4243
        %v4245 = vpop.f32.mrb[0].mxu0
        %v4246 = vpop.f32.mrb[0].mxu0
        %v4247 = vadd.f32 0.0, %v4246
        %v4248 = vpop.f32.mrb[0].mxu0
        %4249 = vmatprep.mubr.bf16.mxu0 0
        %4250 = vmatmul.mubr.bf16.gmra.mrb[0].mxu0 %v3933
        %v4251 = vpop.f32.mrb[0].mxu0
        %v4252 = vadd.f32 0.0, %v4251
        %v4253 = vpop.f32.mrb[0].mxu0
        %v4254 = vpop.f32.mrb[0].mxu0
        %v4255 = vadd.f32 0.0, %v4254
        %v4256 = vpop.f32.mrb[0].mxu0
        %4257 = vmatprep.mubr.bf16.mxu0 0
        %4258 = vmatmul.mubr.bf16.gmra.mrb[0].mxu0 %v3941
        %v4259 = vpop.f32.mrb[0].mxu0
        %v4260 = vadd.f32 0.0, %v4259
        %v4261 = vpop.f32.mrb[0].mxu0
        %v4262 = vpop.f32.mrb[0].mxu0
        %v4263 = vadd.f32 0.0, %v4262
        %v4264 = vpop.f32.mrb[0].mxu0
        %4265 = vmatprep.mubr.bf16.mxu0 0
        %4266 = vmatmul.mubr.bf16.gmra.mrb[0].mxu0 %v3949
        %v4267 = vpop.f32.mrb[0].mxu0
        %v4268 = vadd.f32 0.0, %v4267
        %v4269 = vpop.f32.mrb[0].mxu0
        %v4270 = vpop.f32.mrb[0].mxu0
        %v4271 = vadd.f32 0.0, %v4270
        %v4272 = vpop.f32.mrb[0].mxu0
        %4273 = vmatprep.mubr.bf16.mxu0 0
        %4274 = vmatmul.mubr.bf16.gmra.mrb[0].mxu0 %v3957
        %v4275 = vpop.f32.mrb[0].mxu0
        %v4276 = vadd.f32 0.0, %v4275
        %v4277 = vpop.f32.mrb[0].mxu0
        %v4278 = vpop.f32.mrb[0].mxu0
        %v4279 = vadd.f32 0.0, %v4278
        %v4280 = vpop.f32.mrb[0].mxu0
        %4281 = vmatprep.mubr.bf16.mxu0 0
        %4282 = vmatmul.mubr.bf16.gmra.mrb[0].mxu0 %v3965
        %v4283 = vpop.f32.mrb[0].mxu0
        %v4284 = vadd.f32 0.0, %v4283
        %v4285 = vpop.f32.mrb[0].mxu0
        %v4286 = vpop.f32.mrb[0].mxu0
        %v4287 = vadd.f32 0.0, %v4286
        %v4288 = vpop.f32.mrb[0].mxu0
        %4289 = vmatprep.mubr.bf16.mxu0 0
        %4290 = vmatmul.mubr.bf16.gmra.mrb[0].mxu0 %v3973
        %v4291 = vpop.f32.mrb[0].mxu0
        %v4292 = vadd.f32 0.0, %v4291
        %v4293 = vpop.f32.mrb[0].mxu0
        %v4294 = vpop.f32.mrb[0].mxu0
        %v4295 = vadd.f32 0.0, %v4294
        %v4296 = vpop.f32.mrb[0].mxu0
        %4297 = vmatprep.mubr.bf16.mxu0 0
        %4298 = vmatmul.mubr.bf16.gmra.mrb[0].mxu0 %v3981
        %v4299 = vpop.f32.mrb[0].mxu0
        %v4300 = vadd.f32 0.0, %v4299
        %v4301 = vpop.f32.mrb[0].mxu0
        %v4302 = vpop.f32.mrb[0].mxu0
        %v4303 = vadd.f32 0.0, %v4302
        %v4304 = vpop.f32.mrb[0].mxu0
        %4305 = vmatprep.mubr.bf16.mxu0 0
        %4306 = vmatmul.mubr.bf16.gmra.mrb[0].mxu0 %v3989
        %v4307 = vpop.f32.mrb[0].mxu0
        %v4308 = vadd.f32 0.0, %v4307
        %v4309 = vpop.f32.mrb[0].mxu0
        %v4310 = vpop.f32.mrb[0].mxu0
        %v4311 = vadd.f32 0.0, %v4310
        %v4312 = vpop.f32.mrb[0].mxu0
        %4313 = vmatprep.mubr.bf16.mxu0 0
        %4314 = vmatmul.mubr.bf16.gmra.mrb[0].mxu0 %v3997
        %v4315 = vpop.f32.mrb[0].mxu0
        %v4316 = vadd.f32 0.0, %v4315
        %v4317 = vpop.f32.mrb[0].mxu0
        %v4318 = vpop.f32.mrb[0].mxu0
        %v4319 = vadd.f32 0.0, %v4318
        %v4320 = vpop.f32.mrb[0].mxu0
        %4321 = vmatprep.mubr.bf16.mxu0 0
        %4322 = vmatmul.mubr.bf16.gmra.mrb[0].mxu0 %v4005
        %v4323 = vpop.f32.mrb[0].mxu0
        %v4324 = vadd.f32 0.0, %v4323
        %v4325 = vpop.f32.mrb[0].mxu0
        %v4326 = vpop.f32.mrb[0].mxu0
        %v4327 = vadd.f32 0.0, %v4326
        %v4328 = vpop.f32.mrb[0].mxu0
        %4329 = vmatprep.mubr.bf16.mxu0 0
        %4330 = vmatmul.mubr.bf16.gmra.mrb[0].mxu0 %v4013
        %v4331 = vpop.f32.mrb[0].mxu0
        %v4332 = vadd.f32 0.0, %v4331
        %v4333 = vpop.f32.mrb[0].mxu0
        %v4334 = vpop.f32.mrb[0].mxu0
        %v4335 = vadd.f32 0.0, %v4334
        %v4336 = vpop.f32.mrb[0].mxu0
        %4337 = vmatprep.mubr.bf16.mxu0 0
        %4338 = vmatmul.mubr.bf16.gmra.mrb[0].mxu0 %v4021
        %v4339 = vpop.f32.mrb[0].mxu0
        %v4340 = vadd.f32 0.0, %v4339
        %v4341 = vpop.f32.mrb[0].mxu0
        %v4342 = vpop.f32.mrb[0].mxu0
        %v4343 = vadd.f32 0.0, %v4342
        %v4344 = vpop.f32.mrb[0].mxu0
        %4345 = vmatprep.mubr.bf16.mxu0 0
        %4346 = vmatmul.mubr.bf16.gmra.mrb[0].mxu0 %v4029
        %v4347 = vpop.f32.mrb[0].mxu0
        %v4348 = vadd.f32 0.0, %v4347
        %v4349 = vpop.f32.mrb[0].mxu0
        %v4350 = vpop.f32.mrb[0].mxu0
        %v4351 = vadd.f32 0.0, %v4350
        %v4352 = vpop.f32.mrb[0].mxu0
        %4353 = vmatprep.mubr.bf16.mxu0 0
        %4354 = vmatmul.mubr.bf16.gmra.mrb[0].mxu0 %v4037
        %v4355 = vpop.f32.mrb[0].mxu0
        %v4356 = vadd.f32 0.0, %v4355
        %v4357 = vpop.f32.mrb[0].mxu0
        %v4358 = vpop.f32.mrb[0].mxu0
        %v4359 = vadd.f32 0.0, %v4358
        %v4360 = vpop.f32.mrb[0].mxu0
        %4361 = vmatprep.mubr.bf16.mxu0 0
        %4362 = vmatmul.mubr.bf16.gmra.mrb[0].mxu0 %v4045
        %v4363 = vpop.f32.mrb[0].mxu0
        %v4364 = vadd.f32 0.0, %v4363
        %v4365 = vpop.f32.mrb[0].mxu0
        %v4366 = vpop.f32.mrb[0].mxu0
        %v4367 = vadd.f32 0.0, %v4366
        %v4368 = vpop.f32.mrb[0].mxu0
        %4369 = vmatprep.mubr.bf16.mxu0 0
        %4370 = vmatmul.mubr.bf16.gmra.mrb[0].mxu0 %v4053
        %v4371 = vpop.f32.mrb[0].mxu0
        %v4372 = vadd.f32 0.0, %v4371
        %v4373 = vpop.f32.mrb[0].mxu0
        %v4374 = vpop.f32.mrb[0].mxu0
        %v4375 = vadd.f32 0.0, %v4374
        %v4376 = vpop.f32.mrb[0].mxu0
        %4377 = vmatprep.mubr.bf16.mxu0 0
        %4378 = vmatmul.mubr.bf16.gmra.mrb[0].mxu0 %v4061
        %v4379 = vpop.f32.mrb[0].mxu0
        %v4380 = vadd.f32 0.0, %v4379
        %v4381 = vpop.f32.mrb[0].mxu0
        %v4382 = vpop.f32.mrb[0].mxu0
        %v4383 = vadd.f32 0.0, %v4382
        %v4384 = vpop.f32.mrb[0].mxu0
        %4385 = vmatprep.mubr.bf16.mxu0 0
        %4386 = vmatmul.mubr.bf16.gmra.mrb[0].mxu0 %v4069
        %v4387 = vpop.f32.mrb[0].mxu0
        %v4388 = vadd.f32 0.0, %v4387
        %v4389 = vpop.f32.mrb[0].mxu0
        %v4390 = vpop.f32.mrb[0].mxu0
        %v4391 = vadd.f32 0.0, %v4390
        %v4392 = vpop.f32.mrb[0].mxu0
        %4393 = vmatprep.mubr.bf16.mxu0 0
        %4394 = vmatmul.mubr.bf16.gmra.mrb[0].mxu0 %v4077
        %v4395 = vpop.f32.mrb[0].mxu0
        %v4396 = vadd.f32 0.0, %v4395
        %v4397 = vpop.f32.mrb[0].mxu0
        %v4398 = vpop.f32.mrb[0].mxu0
        %v4399 = vadd.f32 0.0, %v4398
        %v4400 = vpop.f32.mrb[0].mxu0
        %4401 = vmatprep.mubr.bf16.mxu0 0
        %4402 = vmatmul.mubr.bf16.gmra.mrb[0].mxu0 %v4085
        %v4403 = vpop.f32.mrb[0].mxu0
        %v4404 = vadd.f32 0.0, %v4403
        %v4405 = vpop.f32.mrb[0].mxu0
        %v4406 = vpop.f32.mrb[0].mxu0
        %v4407 = vadd.f32 0.0, %v4406
        %v4408 = vpop.f32.mrb[0].mxu0
        %4409 = vmatprep.mubr.bf16.mxu0 0
        %4410 = vmatmul.mubr.bf16.gmra.mrb[0].mxu0 %v4093
        %v4411 = vpop.f32.mrb[0].mxu0
        %v4412 = vadd.f32 0.0, %v4411
        %v4413 = vpop.f32.mrb[0].mxu0
        %v4414 = vpop.f32.mrb[0].mxu0
        %v4415 = vadd.f32 0.0, %v4414
        %v4416 = vpop.f32.mrb[0].mxu0
        %4417 = vdwg.mxu0
        %v4418 = vadd.f32 %v3775, %v4204
        %v4419 = vadd.f32 %v3776, %v4207
        %v4420 = vadd.f32 %v3777, %v4212
        %v4421 = vadd.f32 %v3778, %v4215
        %v4422 = vadd.f32 %v3779, %v4220
        %v4423 = vadd.f32 %v3780, %v4223
        %v4424 = vadd.f32 %v3781, %v4228
        %v4425 = vadd.f32 %v3782, %v4231
        %v4426 = vadd.f32 %v3783, %v4236
        %v4427 = vadd.f32 %v3784, %v4239
        %v4428 = vadd.f32 %v3785, %v4244
        %v4429 = vadd.f32 %v3786, %v4247
        %v4430 = vadd.f32 %v3787, %v4252
        %v4431 = vadd.f32 %v3788, %v4255
        %v4432 = vadd.f32 %v3789, %v4260
        %v4433 = vadd.f32 %v3790, %v4263
        %v4434 = vadd.f32 %v3791, %v4268
        %v4435 = vadd.f32 %v3792, %v4271
        %v4436 = vadd.f32 %v3793, %v4276
        %v4437 = vadd.f32 %v3794, %v4279
        %v4438 = vadd.f32 %v3795, %v4284
        %v4439 = vadd.f32 %v3796, %v4287
        %v4440 = vadd.f32 %v3797, %v4292
        %v4441 = vadd.f32 %v3798, %v4295
        %v4442 = vadd.f32 %v3799, %v4300
        %v4443 = vadd.f32 %v3800, %v4303
        %v4444 = vadd.f32 %v3801, %v4308
        %v4445 = vadd.f32 %v3802, %v4311
        %v4446 = vadd.f32 %v3803, %v4316
        %v4447 = vadd.f32 %v3804, %v4319
        %v4448 = vadd.f32 %v3805, %v4324
        %v4449 = vadd.f32 %v3806, %v4327
        %v4450 = vadd.f32 %v3807, %v4332
        %v4451 = vadd.f32 %v3808, %v4335
        %v4452 = vadd.f32 %v3809, %v4340
        %v4453 = vadd.f32 %v3810, %v4343
        %v4454 = vadd.f32 %v3811, %v4348
        %v4455 = vadd.f32 %v3812, %v4351
        %v4456 = vadd.f32 %v3813, %v4356
        %v4457 = vadd.f32 %v3814, %v4359
        %v4458 = vadd.f32 %v3815, %v4364
        %v4459 = vadd.f32 %v3816, %v4367
        %v4460 = vadd.f32 %v3817, %v4372
        %v4461 = vadd.f32 %v3818, %v4375
        %v4462 = vadd.f32 %v3819, %v4380
        %v4463 = vadd.f32 %v3820, %v4383
        %v4464 = vadd.f32 %v3821, %v4388
        %v4465 = vadd.f32 %v3822, %v4391
        %v4466 = vadd.f32 %v3823, %v4396
        %v4467 = vadd.f32 %v3824, %v4399
        %v4468 = vadd.f32 %v3825, %v4404
        %v4469 = vadd.f32 %v3826, %v4407
        %v4470 = vadd.f32 %v3827, %v4412
        %v4471 = vadd.f32 %v3828, %v4415
        %v4472 = vld [vmem:[#allocation8 + $0x100] sm:$0xf]
        %v4473 = vld [vmem:[#allocation8 + $0x104] sm:$0xf]
        %v4474 = vld [vmem:[#allocation8 + $0x108] sm:$0xf]
        %v4475 = vld [vmem:[#allocation8 + $0x10c] sm:$0xf]
        %v4476 = vld [vmem:[#allocation8 + $0x110] sm:$0xf]
        %v4477 = vld [vmem:[#allocation8 + $0x114] sm:$0xf]
        %v4478 = vld [vmem:[#allocation8 + $0x118] sm:$0xf]
        %v4479 = vld [vmem:[#allocation8 + $0x11c] sm:$0xf]
        %v4480 = vld [vmem:[#allocation8 + $0x120] sm:$0xf]
        %v4481 = vld [vmem:[#allocation8 + $0x124] sm:$0xf]
        %v4482 = vld [vmem:[#allocation8 + $0x128] sm:$0xf]
        %v4483 = vld [vmem:[#allocation8 + $0x12c] sm:$0xf]
        %v4484 = vld [vmem:[#allocation8 + $0x130] sm:$0xf]
        %v4485 = vld [vmem:[#allocation8 + $0x134] sm:$0xf]
        %v4486 = vld [vmem:[#allocation8 + $0x138] sm:$0xf]
        %v4487 = vld [vmem:[#allocation8 + $0x13c] sm:$0xf]
        %v4504 = vunpack.c.l.b16 %v4472
        %v4505 = vunpack.c.l.b16 %v4473
        %v4506 = vunpack.c.l.b16 %v4474
        %v4507 = vunpack.c.l.b16 %v4475
        %v4508 = vunpack.c.l.b16 %v4476
        %v4509 = vunpack.c.l.b16 %v4477
        %v4510 = vunpack.c.l.b16 %v4478
        %v4511 = vunpack.c.l.b16 %v4479
        %v4512 = vunpack.c.l.b16 %v4480
        %v4513 = vunpack.c.l.b16 %v4481
        %v4514 = vunpack.c.l.b16 %v4482
        %v4515 = vunpack.c.l.b16 %v4483
        %v4516 = vunpack.c.l.b16 %v4484
        %v4517 = vunpack.c.l.b16 %v4485
        %v4518 = vunpack.c.l.b16 %v4486
        %v4519 = vunpack.c.l.b16 %v4487
        %v4520 = vpack.c.b16 %v4505, %v4504
        %v4521 = vpack.c.b16 %v4507, %v4506
        %v4522 = vpack.c.b16 %v4509, %v4508
        %v4523 = vpack.c.b16 %v4511, %v4510
        %v4524 = vpack.c.b16 %v4513, %v4512
        %v4525 = vpack.c.b16 %v4515, %v4514
        %v4526 = vpack.c.b16 %v4517, %v4516
        %v4527 = vpack.c.b16 %v4519, %v4518
        %4536 = vmatprep.subr.bf16.mxu0 0
        %4537 = vmatpush1.bf16.msra.mxu0 %v4520
        %4538 = vmatprep.subr.bf16.mxu0 0
        %4539 = vmatpush1.bf16.msra.mxu0 %v4521
        %4540 = vmatprep.subr.bf16.mxu0 0
        %4541 = vmatpush1.bf16.msra.mxu0 %v4522
        %4542 = vmatprep.subr.bf16.mxu0 0
        %4543 = vmatpush1.bf16.msra.mxu0 %v4523
        %4544 = vmatprep.subr.bf16.mxu0 0
        %4545 = vmatpush1.bf16.msra.mxu0 %v4524
        %4546 = vmatprep.subr.bf16.mxu0 0
        %4547 = vmatpush1.bf16.msra.mxu0 %v4525
        %4548 = vmatprep.subr.bf16.mxu0 0
        %4549 = vmatpush1.bf16.msra.mxu0 %v4526
        %4550 = vmatprep.subr.bf16.mxu0 0
        %4551 = vmatpush1.bf16.msra.mxu0 %v4527
        %4552 = vmatprep.subr.bf16.mxu0 0
        %4553 = vmatpush1.bf16.msra.mxu0 0
        %4554 = vmatprep.subr.bf16.mxu0 0
        %4555 = vmatpush1.bf16.msra.mxu0 0
        %4556 = vmatprep.subr.bf16.mxu0 0
        %4557 = vmatpush1.bf16.msra.mxu0 0
        %4558 = vmatprep.subr.bf16.mxu0 0
        %4559 = vmatpush1.bf16.msra.mxu0 0
        %4560 = vmatprep.subr.bf16.mxu0 0
        %4561 = vmatpush1.bf16.msra.mxu0 0
        %4562 = vmatprep.subr.bf16.mxu0 0
        %4563 = vmatpush1.bf16.msra.mxu0 0
        %4564 = vmatprep.subr.bf16.mxu0 0
        %4565 = vmatpush1.bf16.msra.mxu0 0
        %4566 = vmatprep.subr.bf16.mxu0 0
        %4567 = vmatpush1.bf16.msra.mxu0 0
        %4568 = vmatprep.mubr.bf16.mxu0 0
        %4569 = vmatmul.mubr.bf16.gmra.mrb[0].mxu0 %v3830
        %v4570 = vpop.f32.mrb[0].mxu0
        %v4571 = vadd.f32 0.0, %v4570
        %v4572 = vpop.f32.mrb[0].mxu0
        %v4573 = vpop.f32.mrb[0].mxu0
        %v4574 = vadd.f32 0.0, %v4573
        %v4575 = vpop.f32.mrb[0].mxu0
        %4576 = vmatprep.mubr.bf16.mxu0 0
        %4577 = vmatmul.mubr.bf16.gmra.mrb[0].mxu0 %v3831
        %v4578 = vpop.f32.mrb[0].mxu0
        %v4579 = vadd.f32 0.0, %v4578
        %v4580 = vpop.f32.mrb[0].mxu0
        %v4581 = vpop.f32.mrb[0].mxu0
        %v4582 = vadd.f32 0.0, %v4581
        %v4583 = vpop.f32.mrb[0].mxu0
        %4584 = vmatprep.mubr.bf16.mxu0 0
        %4585 = vmatmul.mubr.bf16.gmra.mrb[0].mxu0 %v3832
        %v4586 = vpop.f32.mrb[0].mxu0
        %v4587 = vadd.f32 0.0, %v4586
        %v4588 = vpop.f32.mrb[0].mxu0
        %v4589 = vpop.f32.mrb[0].mxu0
        %v4590 = vadd.f32 0.0, %v4589
        %v4591 = vpop.f32.mrb[0].mxu0
        %4592 = vmatprep.mubr.bf16.mxu0 0
        %4593 = vmatmul.mubr.bf16.gmra.mrb[0].mxu0 %v3833
        %v4594 = vpop.f32.mrb[0].mxu0
        %v4595 = vadd.f32 0.0, %v4594
        %v4596 = vpop.f32.mrb[0].mxu0
        %v4597 = vpop.f32.mrb[0].mxu0
        %v4598 = vadd.f32 0.0, %v4597
        %v4599 = vpop.f32.mrb[0].mxu0
        %4600 = vmatprep.mubr.bf16.mxu0 0
        %4601 = vmatmul.mubr.bf16.gmra.mrb[0].mxu0 %v3834
        %v4602 = vpop.f32.mrb[0].mxu0
        %v4603 = vadd.f32 0.0, %v4602
        %v4604 = vpop.f32.mrb[0].mxu0
        %v4605 = vpop.f32.mrb[0].mxu0
        %v4606 = vadd.f32 0.0, %v4605
        %v4607 = vpop.f32.mrb[0].mxu0
        %4608 = vmatprep.mubr.bf16.mxu0 0
        %4609 = vmatmul.mubr.bf16.gmra.mrb[0].mxu0 %v3835
        %v4610 = vpop.f32.mrb[0].mxu0
        %v4611 = vadd.f32 0.0, %v4610
        %v4612 = vpop.f32.mrb[0].mxu0
        %v4613 = vpop.f32.mrb[0].mxu0
        %v4614 = vadd.f32 0.0, %v4613
        %v4615 = vpop.f32.mrb[0].mxu0
        %4616 = vmatprep.mubr.bf16.mxu0 0
        %4617 = vmatmul.mubr.bf16.gmra.mrb[0].mxu0 %v3836
        %v4618 = vpop.f32.mrb[0].mxu0
        %v4619 = vadd.f32 0.0, %v4618
        %v4620 = vpop.f32.mrb[0].mxu0
        %v4621 = vpop.f32.mrb[0].mxu0
        %v4622 = vadd.f32 0.0, %v4621
        %v4623 = vpop.f32.mrb[0].mxu0
        %4624 = vmatprep.mubr.bf16.mxu0 0
        %4625 = vmatmul.mubr.bf16.gmra.mrb[0].mxu0 %v3837
        %v4626 = vpop.f32.mrb[0].mxu0
        %v4627 = vadd.f32 0.0, %v4626
        %v4628 = vpop.f32.mrb[0].mxu0
        %v4629 = vpop.f32.mrb[0].mxu0
        %v4630 = vadd.f32 0.0, %v4629
        %v4631 = vpop.f32.mrb[0].mxu0
        %4632 = vmatprep.mubr.bf16.mxu0 0
        %4633 = vmatmul.mubr.bf16.gmra.mrb[0].mxu0 %v3838
        %v4634 = vpop.f32.mrb[0].mxu0
        %v4635 = vadd.f32 0.0, %v4634
        %v4636 = vpop.f32.mrb[0].mxu0
        %v4637 = vpop.f32.mrb[0].mxu0
        %v4638 = vadd.f32 0.0, %v4637
        %v4639 = vpop.f32.mrb[0].mxu0
        %4640 = vmatprep.mubr.bf16.mxu0 0
        %4641 = vmatmul.mubr.bf16.gmra.mrb[0].mxu0 %v3839
        %v4642 = vpop.f32.mrb[0].mxu0
        %v4643 = vadd.f32 0.0, %v4642
        %v4644 = vpop.f32.mrb[0].mxu0
        %v4645 = vpop.f32.mrb[0].mxu0
        %v4646 = vadd.f32 0.0, %v4645
        %v4647 = vpop.f32.mrb[0].mxu0
        %4648 = vmatprep.mubr.bf16.mxu0 0
        %4649 = vmatmul.mubr.bf16.gmra.mrb[0].mxu0 %v3840
        %v4650 = vpop.f32.mrb[0].mxu0
        %v4651 = vadd.f32 0.0, %v4650
        %v4652 = vpop.f32.mrb[0].mxu0
        %v4653 = vpop.f32.mrb[0].mxu0
        %v4654 = vadd.f32 0.0, %v4653
        %v4655 = vpop.f32.mrb[0].mxu0
        %4656 = vmatprep.mubr.bf16.mxu0 0
        %4657 = vmatmul.mubr.bf16.gmra.mrb[0].mxu0 %v3841
        %v4658 = vpop.f32.mrb[0].mxu0
        %v4659 = vadd.f32 0.0, %v4658
        %v4660 = vpop.f32.mrb[0].mxu0
        %v4661 = vpop.f32.mrb[0].mxu0
        %v4662 = vadd.f32 0.0, %v4661
        %v4663 = vpop.f32.mrb[0].mxu0
        %4664 = vmatprep.mubr.bf16.mxu0 0
        %4665 = vmatmul.mubr.bf16.gmra.mrb[0].mxu0 %v3842
        %v4666 = vpop.f32.mrb[0].mxu0
        %v4667 = vadd.f32 0.0, %v4666
        %v4668 = vpop.f32.mrb[0].mxu0
        %v4669 = vpop.f32.mrb[0].mxu0
        %v4670 = vadd.f32 0.0, %v4669
        %v4671 = vpop.f32.mrb[0].mxu0
        %4672 = vmatprep.mubr.bf16.mxu0 0
        %4673 = vmatmul.mubr.bf16.gmra.mrb[0].mxu0 %v3843
        %v4674 = vpop.f32.mrb[0].mxu0
        %v4675 = vadd.f32 0.0, %v4674
        %v4676 = vpop.f32.mrb[0].mxu0
        %v4677 = vpop.f32.mrb[0].mxu0
        %v4678 = vadd.f32 0.0, %v4677
        %v4679 = vpop.f32.mrb[0].mxu0
        %4680 = vmatprep.mubr.bf16.mxu0 0
        %4681 = vmatmul.mubr.bf16.gmra.mrb[0].mxu0 %v3844
        %v4682 = vpop.f32.mrb[0].mxu0
        %v4683 = vadd.f32 0.0, %v4682
        %v4684 = vpop.f32.mrb[0].mxu0
        %v4685 = vpop.f32.mrb[0].mxu0
        %v4686 = vadd.f32 0.0, %v4685
        %v4687 = vpop.f32.mrb[0].mxu0
        %4688 = vmatprep.mubr.bf16.mxu0 0
        %4689 = vmatmul.mubr.bf16.gmra.mrb[0].mxu0 %v3845
        %v4690 = vpop.f32.mrb[0].mxu0
        %v4691 = vadd.f32 0.0, %v4690
        %v4692 = vpop.f32.mrb[0].mxu0
        %v4693 = vpop.f32.mrb[0].mxu0
        %v4694 = vadd.f32 0.0, %v4693
        %v4695 = vpop.f32.mrb[0].mxu0
        %4696 = vmatprep.mubr.bf16.mxu0 0
        %4697 = vmatmul.mubr.bf16.gmra.mrb[0].mxu0 %v3846
        %v4698 = vpop.f32.mrb[0].mxu0
        %v4699 = vadd.f32 0.0, %v4698
        %v4700 = vpop.f32.mrb[0].mxu0
        %v4701 = vpop.f32.mrb[0].mxu0
        %v4702 = vadd.f32 0.0, %v4701
        %v4703 = vpop.f32.mrb[0].mxu0
        %4704 = vmatprep.mubr.bf16.mxu0 0
        %4705 = vmatmul.mubr.bf16.gmra.mrb[0].mxu0 %v3847
        %v4706 = vpop.f32.mrb[0].mxu0
        %v4707 = vadd.f32 0.0, %v4706
        %v4708 = vpop.f32.mrb[0].mxu0
        %v4709 = vpop.f32.mrb[0].mxu0
        %v4710 = vadd.f32 0.0, %v4709
        %v4711 = vpop.f32.mrb[0].mxu0
        %4712 = vmatprep.mubr.bf16.mxu0 0
        %4713 = vmatmul.mubr.bf16.gmra.mrb[0].mxu0 %v3848
        %v4714 = vpop.f32.mrb[0].mxu0
        %v4715 = vadd.f32 0.0, %v4714
        %v4716 = vpop.f32.mrb[0].mxu0
        %v4717 = vpop.f32.mrb[0].mxu0
        %v4718 = vadd.f32 0.0, %v4717
        %v4719 = vpop.f32.mrb[0].mxu0
        %4720 = vmatprep.mubr.bf16.mxu0 0
        %4721 = vmatmul.mubr.bf16.gmra.mrb[0].mxu0 %v3849
        %v4722 = vpop.f32.mrb[0].mxu0
        %v4723 = vadd.f32 0.0, %v4722
        %v4724 = vpop.f32.mrb[0].mxu0
        %v4725 = vpop.f32.mrb[0].mxu0
        %v4726 = vadd.f32 0.0, %v4725
        %v4727 = vpop.f32.mrb[0].mxu0
        %4728 = vmatprep.mubr.bf16.mxu0 0
        %4729 = vmatmul.mubr.bf16.gmra.mrb[0].mxu0 %v3850
        %v4730 = vpop.f32.mrb[0].mxu0
        %v4731 = vadd.f32 0.0, %v4730
        %v4732 = vpop.f32.mrb[0].mxu0
        %v4733 = vpop.f32.mrb[0].mxu0
        %v4734 = vadd.f32 0.0, %v4733
        %v4735 = vpop.f32.mrb[0].mxu0
        %4736 = vmatprep.mubr.bf16.mxu0 0
        %4737 = vmatmul.mubr.bf16.gmra.mrb[0].mxu0 %v3851
        %v4738 = vpop.f32.mrb[0].mxu0
        %v4739 = vadd.f32 0.0, %v4738
        %v4740 = vpop.f32.mrb[0].mxu0
        %v4741 = vpop.f32.mrb[0].mxu0
        %v4742 = vadd.f32 0.0, %v4741
        %v4743 = vpop.f32.mrb[0].mxu0
        %4744 = vmatprep.mubr.bf16.mxu0 0
        %4745 = vmatmul.mubr.bf16.gmra.mrb[0].mxu0 %v3852
        %v4746 = vpop.f32.mrb[0].mxu0
        %v4747 = vadd.f32 0.0, %v4746
        %v4748 = vpop.f32.mrb[0].mxu0
        %v4749 = vpop.f32.mrb[0].mxu0
        %v4750 = vadd.f32 0.0, %v4749
        %v4751 = vpop.f32.mrb[0].mxu0
        %4752 = vmatprep.mubr.bf16.mxu0 0
        %4753 = vmatmul.mubr.bf16.gmra.mrb[0].mxu0 %v3853
        %v4754 = vpop.f32.mrb[0].mxu0
        %v4755 = vadd.f32 0.0, %v4754
        %v4756 = vpop.f32.mrb[0].mxu0
        %v4757 = vpop.f32.mrb[0].mxu0
        %v4758 = vadd.f32 0.0, %v4757
        %v4759 = vpop.f32.mrb[0].mxu0
        %4760 = vmatprep.mubr.bf16.mxu0 0
        %4761 = vmatmul.mubr.bf16.gmra.mrb[0].mxu0 %v3854
        %v4762 = vpop.f32.mrb[0].mxu0
        %v4763 = vadd.f32 0.0, %v4762
        %v4764 = vpop.f32.mrb[0].mxu0
        %v4765 = vpop.f32.mrb[0].mxu0
        %v4766 = vadd.f32 0.0, %v4765
        %v4767 = vpop.f32.mrb[0].mxu0
        %4768 = vmatprep.mubr.bf16.mxu0 0
        %4769 = vmatmul.mubr.bf16.gmra.mrb[0].mxu0 %v3855
        %v4770 = vpop.f32.mrb[0].mxu0
        %v4771 = vadd.f32 0.0, %v4770
        %v4772 = vpop.f32.mrb[0].mxu0
        %v4773 = vpop.f32.mrb[0].mxu0
        %v4774 = vadd.f32 0.0, %v4773
        %v4775 = vpop.f32.mrb[0].mxu0
        %4776 = vmatprep.mubr.bf16.mxu0 0
        %4777 = vmatmul.mubr.bf16.gmra.mrb[0].mxu0 %v3856
        %v4778 = vpop.f32.mrb[0].mxu0
        %v4779 = vadd.f32 0.0, %v4778
        %v4780 = vpop.f32.mrb[0].mxu0
        %v4781 = vpop.f32.mrb[0].mxu0
        %v4782 = vadd.f32 0.0, %v4781
        %v4783 = vpop.f32.mrb[0].mxu0
        %4784 = vdwg.mxu0
        %v4785 = vadd.f32 %v4418, %v4571
        %v4786 = vadd.f32 %v4419, %v4574
        %v4787 = vadd.f32 %v4420, %v4579
        %v4788 = vadd.f32 %v4421, %v4582
        %v4789 = vadd.f32 %v4422, %v4587
        %v4790 = vadd.f32 %v4423, %v4590
        %v4791 = vadd.f32 %v4424, %v4595
        %v4792 = vadd.f32 %v4425, %v4598
        %v4793 = vadd.f32 %v4426, %v4603
        %v4794 = vadd.f32 %v4427, %v4606
        %v4795 = vadd.f32 %v4428, %v4611
        %v4796 = vadd.f32 %v4429, %v4614
        %v4797 = vadd.f32 %v4430, %v4619
        %v4798 = vadd.f32 %v4431, %v4622
        %v4799 = vadd.f32 %v4432, %v4627
        %v4800 = vadd.f32 %v4433, %v4630
        %v4801 = vadd.f32 %v4434, %v4635
        %v4802 = vadd.f32 %v4435, %v4638
        %v4803 = vadd.f32 %v4436, %v4643
        %v4804 = vadd.f32 %v4437, %v4646
        %v4805 = vadd.f32 %v4438, %v4651
        %v4806 = vadd.f32 %v4439, %v4654
        %v4807 = vadd.f32 %v4440, %v4659
        %v4808 = vadd.f32 %v4441, %v4662
        %v4809 = vadd.f32 %v4442, %v4667
        %v4810 = vadd.f32 %v4443, %v4670
        %v4811 = vadd.f32 %v4444, %v4675
        %v4812 = vadd.f32 %v4445, %v4678
        %v4813 = vadd.f32 %v4446, %v4683
        %v4814 = vadd.f32 %v4447, %v4686
        %v4815 = vadd.f32 %v4448, %v4691
        %v4816 = vadd.f32 %v4449, %v4694
        %v4817 = vadd.f32 %v4450, %v4699
        %v4818 = vadd.f32 %v4451, %v4702
        %v4819 = vadd.f32 %v4452, %v4707
        %v4820 = vadd.f32 %v4453, %v4710
        %v4821 = vadd.f32 %v4454, %v4715
        %v4822 = vadd.f32 %v4455, %v4718
        %v4823 = vadd.f32 %v4456, %v4723
        %v4824 = vadd.f32 %v4457, %v4726
        %v4825 = vadd.f32 %v4458, %v4731
        %v4826 = vadd.f32 %v4459, %v4734
        %v4827 = vadd.f32 %v4460, %v4739
        %v4828 = vadd.f32 %v4461, %v4742
        %v4829 = vadd.f32 %v4462, %v4747
        %v4830 = vadd.f32 %v4463, %v4750
        %v4831 = vadd.f32 %v4464, %v4755
        %v4832 = vadd.f32 %v4465, %v4758
        %v4833 = vadd.f32 %v4466, %v4763
        %v4834 = vadd.f32 %v4467, %v4766
        %v4835 = vadd.f32 %v4468, %v4771
        %v4836 = vadd.f32 %v4469, %v4774
        %v4837 = vadd.f32 %v4470, %v4779
        %v4838 = vadd.f32 %v4471, %v4782
        %v4839 = vld [vmem:[#allocation2 + $0x10] sm:$0xff]
        %v4840 = vld [vmem:[#allocation2 + $0x18] sm:$0xff]
        %v4841 = vld [vmem:[#allocation2 + $0x20] sm:$0xff]
        %v4842 = vld [vmem:[#allocation2 + $0x28] sm:$0xff]
        %v4843 = vld [vmem:[#allocation2 + $0x30] sm:$0xff]
        %v4844 = vld [vmem:[#allocation2 + $0x38] sm:$0xff]
        %v4845 = vld [vmem:[#allocation2 + $0x40] sm:$0xff]
        %v4846 = vld [vmem:[#allocation2 + $0x48] sm:$0xff]
        %v4847 = vld [vmem:[#allocation2 + $0x50] sm:$0xff]
        %v4848 = vld [vmem:[#allocation2 + $0x58] sm:$0xff]
        %v4849 = vld [vmem:[#allocation2 + $0x60] sm:$0xff]
        %v4850 = vld [vmem:[#allocation2 + $0x68] sm:$0xff]
        %v4851 = vld [vmem:[#allocation2 + $0x70] sm:$0xff]
        %v4852 = vld [vmem:[#allocation2 + $0x78] sm:$0xff]
        %v4853 = vld [vmem:[#allocation2 + $0x80] sm:$0xff]
        %v4854 = vld [vmem:[#allocation2 + $0x88] sm:$0xff]
        %v4855 = vld [vmem:[#allocation2 + $0x90] sm:$0xff]
        %v4856 = vld [vmem:[#allocation2 + $0x98] sm:$0xff]
        %v4857 = vld [vmem:[#allocation2 + $0xa0] sm:$0xff]
        %v4858 = vld [vmem:[#allocation2 + $0xa8] sm:$0xff]
        %v4859 = vld [vmem:[#allocation2 + $0xb0] sm:$0xff]
        %v4860 = vld [vmem:[#allocation2 + $0xb8] sm:$0xff]
        %v4861 = vld [vmem:[#allocation2 + $0xc0] sm:$0xff]
        %v4862 = vld [vmem:[#allocation2 + $0xc8] sm:$0xff]
        %v4863 = vld [vmem:[#allocation2 + $0xd0] sm:$0xff]
        %v4864 = vld [vmem:[#allocation2 + $0xd8] sm:$0xff]
        %v4865 = vld [vmem:[#allocation2 + $0xe0] sm:$0xff]
        %v4866 = vld [vmem:[#allocation2 + $0xe8] sm:$0x1]
        %v4867 = vld [vmem:[#allocation8 + $0x140] sm:$0xf]
        %v4868 = vld [vmem:[#allocation8 + $0x144] sm:$0xf]
        %v4869 = vld [vmem:[#allocation8 + $0x148] sm:$0xf]
        %v4870 = vld [vmem:[#allocation8 + $0x14c] sm:$0xf]
        %v4871 = vld [vmem:[#allocation8 + $0x150] sm:$0xf]
        %v4872 = vld [vmem:[#allocation8 + $0x154] sm:$0xf]
        %v4873 = vld [vmem:[#allocation8 + $0x158] sm:$0xf]
        %v4874 = vld [vmem:[#allocation8 + $0x15c] sm:$0xf]
        %v4875 = vld [vmem:[#allocation8 + $0x160] sm:$0xf]
        %v4876 = vld [vmem:[#allocation8 + $0x164] sm:$0xf]
        %v4877 = vld [vmem:[#allocation8 + $0x168] sm:$0xf]
        %v4878 = vld [vmem:[#allocation8 + $0x16c] sm:$0xf]
        %v4879 = vld [vmem:[#allocation8 + $0x170] sm:$0xf]
        %v4880 = vld [vmem:[#allocation8 + $0x174] sm:$0xf]
        %v4881 = vld [vmem:[#allocation8 + $0x178] sm:$0xf]
        %v4882 = vld [vmem:[#allocation8 + $0x17c] sm:$0xf]
        %vm4883 = vsmask.f32 7424
        %v4885 = vshrl.u32 %v4839, 16
        %v4887 = vshll.u32 %v4839, 16
        %v4889 = vrot.slane %v4887, 1
        %v4890 = vor.u32 %v4885, %v4889
        %v4892 = vshll.u32 %v4840, 16
        %v4894 = vrot.slane %v4892, 1
        %v4895 = vsel %vm4883, %v4890, %v4894
        %v4896 = vshrl.u32 %v4840, 16
        %v4898 = vor.u32 %v4896, %v4894
        %v4900 = vshll.u32 %v4841, 16
        %v4902 = vrot.slane %v4900, 1
        %v4903 = vsel %vm4883, %v4898, %v4902
        %v4904 = vshrl.u32 %v4841, 16
        %v4906 = vor.u32 %v4904, %v4902
        %v4908 = vshll.u32 %v4842, 16
        %v4910 = vrot.slane %v4908, 1
        %v4911 = vsel %vm4883, %v4906, %v4910
        %v4912 = vshrl.u32 %v4842, 16
        %v4914 = vor.u32 %v4912, %v4910
        %v4916 = vshll.u32 %v4843, 16
        %v4918 = vrot.slane %v4916, 1
        %v4919 = vsel %vm4883, %v4914, %v4918
        %v4920 = vshrl.u32 %v4843, 16
        %v4922 = vor.u32 %v4920, %v4918
        %v4924 = vshll.u32 %v4844, 16
        %v4926 = vrot.slane %v4924, 1
        %v4927 = vsel %vm4883, %v4922, %v4926
        %v4928 = vshrl.u32 %v4844, 16
        %v4930 = vor.u32 %v4928, %v4926
        %v4932 = vshll.u32 %v4845, 16
        %v4934 = vrot.slane %v4932, 1
        %v4935 = vsel %vm4883, %v4930, %v4934
        %v4936 = vshrl.u32 %v4845, 16
        %v4938 = vor.u32 %v4936, %v4934
        %v4940 = vshll.u32 %v4846, 16
        %v4942 = vrot.slane %v4940, 1
        %v4943 = vsel %vm4883, %v4938, %v4942
        %v4944 = vshrl.u32 %v4846, 16
        %v4946 = vor.u32 %v4944, %v4942
        %v4948 = vshll.u32 %v4847, 16
        %v4950 = vrot.slane %v4948, 1
        %v4951 = vsel %vm4883, %v4946, %v4950
        %v4952 = vshrl.u32 %v4847, 16
        %v4954 = vor.u32 %v4952, %v4950
        %v4956 = vshll.u32 %v4848, 16
        %v4958 = vrot.slane %v4956, 1
        %v4959 = vsel %vm4883, %v4954, %v4958
        %v4960 = vshrl.u32 %v4848, 16
        %v4962 = vor.u32 %v4960, %v4958
        %v4964 = vshll.u32 %v4849, 16
        %v4966 = vrot.slane %v4964, 1
        %v4967 = vsel %vm4883, %v4962, %v4966
        %v4968 = vshrl.u32 %v4849, 16
        %v4970 = vor.u32 %v4968, %v4966
        %v4972 = vshll.u32 %v4850, 16
        %v4974 = vrot.slane %v4972, 1
        %v4975 = vsel %vm4883, %v4970, %v4974
        %v4976 = vshrl.u32 %v4850, 16
        %v4978 = vor.u32 %v4976, %v4974
        %v4980 = vshll.u32 %v4851, 16
        %v4982 = vrot.slane %v4980, 1
        %v4983 = vsel %vm4883, %v4978, %v4982
        %v4984 = vshrl.u32 %v4851, 16
        %v4986 = vor.u32 %v4984, %v4982
        %v4988 = vshll.u32 %v4852, 16
        %v4990 = vrot.slane %v4988, 1
        %v4991 = vsel %vm4883, %v4986, %v4990
        %v4992 = vshrl.u32 %v4852, 16
        %v4994 = vor.u32 %v4992, %v4990
        %v4996 = vshll.u32 %v4853, 16
        %v4998 = vrot.slane %v4996, 1
        %v4999 = vsel %vm4883, %v4994, %v4998
        %v5000 = vshrl.u32 %v4853, 16
        %v5002 = vor.u32 %v5000, %v4998
        %v5004 = vshll.u32 %v4854, 16
        %v5006 = vrot.slane %v5004, 1
        %v5007 = vsel %vm4883, %v5002, %v5006
        %v5008 = vshrl.u32 %v4854, 16
        %v5010 = vor.u32 %v5008, %v5006
        %v5012 = vshll.u32 %v4855, 16
        %v5014 = vrot.slane %v5012, 1
        %v5015 = vsel %vm4883, %v5010, %v5014
        %v5016 = vshrl.u32 %v4855, 16
        %v5018 = vor.u32 %v5016, %v5014
        %v5020 = vshll.u32 %v4856, 16
        %v5022 = vrot.slane %v5020, 1
        %v5023 = vsel %vm4883, %v5018, %v5022
        %v5024 = vshrl.u32 %v4856, 16
        %v5026 = vor.u32 %v5024, %v5022
        %v5028 = vshll.u32 %v4857, 16
        %v5030 = vrot.slane %v5028, 1
        %v5031 = vsel %vm4883, %v5026, %v5030
        %v5032 = vshrl.u32 %v4857, 16
        %v5034 = vor.u32 %v5032, %v5030
        %v5036 = vshll.u32 %v4858, 16
        %v5038 = vrot.slane %v5036, 1
        %v5039 = vsel %vm4883, %v5034, %v5038
        %v5040 = vshrl.u32 %v4858, 16
        %v5042 = vor.u32 %v5040, %v5038
        %v5044 = vshll.u32 %v4859, 16
        %v5046 = vrot.slane %v5044, 1
        %v5047 = vsel %vm4883, %v5042, %v5046
        %v5048 = vshrl.u32 %v4859, 16
        %v5050 = vor.u32 %v5048, %v5046
        %v5052 = vshll.u32 %v4860, 16
        %v5054 = vrot.slane %v5052, 1
        %v5055 = vsel %vm4883, %v5050, %v5054
        %v5056 = vshrl.u32 %v4860, 16
        %v5058 = vor.u32 %v5056, %v5054
        %v5060 = vshll.u32 %v4861, 16
        %v5062 = vrot.slane %v5060, 1
        %v5063 = vsel %vm4883, %v5058, %v5062
        %v5064 = vshrl.u32 %v4861, 16
        %v5066 = vor.u32 %v5064, %v5062
        %v5068 = vshll.u32 %v4862, 16
        %v5070 = vrot.slane %v5068, 1
        %v5071 = vsel %vm4883, %v5066, %v5070
        %v5072 = vshrl.u32 %v4862, 16
        %v5074 = vor.u32 %v5072, %v5070
        %v5076 = vshll.u32 %v4863, 16
        %v5078 = vrot.slane %v5076, 1
        %v5079 = vsel %vm4883, %v5074, %v5078
        %v5080 = vshrl.u32 %v4863, 16
        %v5082 = vor.u32 %v5080, %v5078
        %v5084 = vshll.u32 %v4864, 16
        %v5086 = vrot.slane %v5084, 1
        %v5087 = vsel %vm4883, %v5082, %v5086
        %v5088 = vshrl.u32 %v4864, 16
        %v5090 = vor.u32 %v5088, %v5086
        %v5092 = vshll.u32 %v4865, 16
        %v5094 = vrot.slane %v5092, 1
        %v5095 = vsel %vm4883, %v5090, %v5094
        %v5096 = vshrl.u32 %v4865, 16
        %v5098 = vor.u32 %v5096, %v5094
        %v5100 = vshll.u32 %v4866, 16
        %v5102 = vrot.slane %v5100, 1
        %v5103 = vsel %vm4883, %v5098, %v5102
        %v5147 = vunpack.c.l.b16 %v4867
        %v5148 = vunpack.c.l.b16 %v4868
        %v5149 = vunpack.c.l.b16 %v4869
        %v5150 = vunpack.c.l.b16 %v4870
        %v5151 = vunpack.c.l.b16 %v4871
        %v5152 = vunpack.c.l.b16 %v4872
        %v5153 = vunpack.c.l.b16 %v4873
        %v5154 = vunpack.c.l.b16 %v4874
        %v5155 = vunpack.c.l.b16 %v4875
        %v5156 = vunpack.c.l.b16 %v4876
        %v5157 = vunpack.c.l.b16 %v4877
        %v5158 = vunpack.c.l.b16 %v4878
        %v5159 = vunpack.c.l.b16 %v4879
        %v5160 = vunpack.c.l.b16 %v4880
        %v5161 = vunpack.c.l.b16 %v4881
        %v5162 = vunpack.c.l.b16 %v4882
        %v5163 = vpack.c.b16 %v5148, %v5147
        %v5164 = vpack.c.b16 %v5150, %v5149
        %v5165 = vpack.c.b16 %v5152, %v5151
        %v5166 = vpack.c.b16 %v5154, %v5153
        %v5167 = vpack.c.b16 %v5156, %v5155
        %v5168 = vpack.c.b16 %v5158, %v5157
        %v5169 = vpack.c.b16 %v5160, %v5159
        %v5170 = vpack.c.b16 %v5162, %v5161
        %5179 = vmatprep.subr.bf16.mxu0 0
        %5180 = vmatpush1.bf16.msra.mxu0 %v5163
        %5181 = vmatprep.subr.bf16.mxu0 0
        %5182 = vmatpush1.bf16.msra.mxu0 %v5164
        %5183 = vmatprep.subr.bf16.mxu0 0
        %5184 = vmatpush1.bf16.msra.mxu0 %v5165
        %5185 = vmatprep.subr.bf16.mxu0 0
        %5186 = vmatpush1.bf16.msra.mxu0 %v5166
        %5187 = vmatprep.subr.bf16.mxu0 0
        %5188 = vmatpush1.bf16.msra.mxu0 %v5167
        %5189 = vmatprep.subr.bf16.mxu0 0
        %5190 = vmatpush1.bf16.msra.mxu0 %v5168
        %5191 = vmatprep.subr.bf16.mxu0 0
        %5192 = vmatpush1.bf16.msra.mxu0 %v5169
        %5193 = vmatprep.subr.bf16.mxu0 0
        %5194 = vmatpush1.bf16.msra.mxu0 %v5170
        %5195 = vmatprep.subr.bf16.mxu0 0
        %5196 = vmatpush1.bf16.msra.mxu0 0
        %5197 = vmatprep.subr.bf16.mxu0 0
        %5198 = vmatpush1.bf16.msra.mxu0 0
        %5199 = vmatprep.subr.bf16.mxu0 0
        %5200 = vmatpush1.bf16.msra.mxu0 0
        %5201 = vmatprep.subr.bf16.mxu0 0
        %5202 = vmatpush1.bf16.msra.mxu0 0
        %5203 = vmatprep.subr.bf16.mxu0 0
        %5204 = vmatpush1.bf16.msra.mxu0 0
        %5205 = vmatprep.subr.bf16.mxu0 0
        %5206 = vmatpush1.bf16.msra.mxu0 0
        %5207 = vmatprep.subr.bf16.mxu0 0
        %5208 = vmatpush1.bf16.msra.mxu0 0
        %5209 = vmatprep.subr.bf16.mxu0 0
        %5210 = vmatpush1.bf16.msra.mxu0 0
        %5211 = vmatprep.mubr.bf16.mxu0 0
        %5212 = vmatmul.mubr.bf16.gmra.mrb[0].mxu0 %v4895
        %v5213 = vpop.f32.mrb[0].mxu0
        %v5214 = vadd.f32 0.0, %v5213
        %v5215 = vpop.f32.mrb[0].mxu0
        %v5216 = vpop.f32.mrb[0].mxu0
        %v5217 = vadd.f32 0.0, %v5216
        %v5218 = vpop.f32.mrb[0].mxu0
        %5219 = vmatprep.mubr.bf16.mxu0 0
        %5220 = vmatmul.mubr.bf16.gmra.mrb[0].mxu0 %v4903
        %v5221 = vpop.f32.mrb[0].mxu0
        %v5222 = vadd.f32 0.0, %v5221
        %v5223 = vpop.f32.mrb[0].mxu0
        %v5224 = vpop.f32.mrb[0].mxu0
        %v5225 = vadd.f32 0.0, %v5224
        %v5226 = vpop.f32.mrb[0].mxu0
        %5227 = vmatprep.mubr.bf16.mxu0 0
        %5228 = vmatmul.mubr.bf16.gmra.mrb[0].mxu0 %v4911
        %v5229 = vpop.f32.mrb[0].mxu0
        %v5230 = vadd.f32 0.0, %v5229
        %v5231 = vpop.f32.mrb[0].mxu0
        %v5232 = vpop.f32.mrb[0].mxu0
        %v5233 = vadd.f32 0.0, %v5232
        %v5234 = vpop.f32.mrb[0].mxu0
        %5235 = vmatprep.mubr.bf16.mxu0 0
        %5236 = vmatmul.mubr.bf16.gmra.mrb[0].mxu0 %v4919
        %v5237 = vpop.f32.mrb[0].mxu0
        %v5238 = vadd.f32 0.0, %v5237
        %v5239 = vpop.f32.mrb[0].mxu0
        %v5240 = vpop.f32.mrb[0].mxu0
        %v5241 = vadd.f32 0.0, %v5240
        %v5242 = vpop.f32.mrb[0].mxu0
        %5243 = vmatprep.mubr.bf16.mxu0 0
        %5244 = vmatmul.mubr.bf16.gmra.mrb[0].mxu0 %v4927
        %v5245 = vpop.f32.mrb[0].mxu0
        %v5246 = vadd.f32 0.0, %v5245
        %v5247 = vpop.f32.mrb[0].mxu0
        %v5248 = vpop.f32.mrb[0].mxu0
        %v5249 = vadd.f32 0.0, %v5248
        %v5250 = vpop.f32.mrb[0].mxu0
        %5251 = vmatprep.mubr.bf16.mxu0 0
        %5252 = vmatmul.mubr.bf16.gmra.mrb[0].mxu0 %v4935
        %v5253 = vpop.f32.mrb[0].mxu0
        %v5254 = vadd.f32 0.0, %v5253
        %v5255 = vpop.f32.mrb[0].mxu0
        %v5256 = vpop.f32.mrb[0].mxu0
        %v5257 = vadd.f32 0.0, %v5256
        %v5258 = vpop.f32.mrb[0].mxu0
        %5259 = vmatprep.mubr.bf16.mxu0 0
        %5260 = vmatmul.mubr.bf16.gmra.mrb[0].mxu0 %v4943
        %v5261 = vpop.f32.mrb[0].mxu0
        %v5262 = vadd.f32 0.0, %v5261
        %v5263 = vpop.f32.mrb[0].mxu0
        %v5264 = vpop.f32.mrb[0].mxu0
        %v5265 = vadd.f32 0.0, %v5264
        %v5266 = vpop.f32.mrb[0].mxu0
        %5267 = vmatprep.mubr.bf16.mxu0 0
        %5268 = vmatmul.mubr.bf16.gmra.mrb[0].mxu0 %v4951
        %v5269 = vpop.f32.mrb[0].mxu0
        %v5270 = vadd.f32 0.0, %v5269
        %v5271 = vpop.f32.mrb[0].mxu0
        %v5272 = vpop.f32.mrb[0].mxu0
        %v5273 = vadd.f32 0.0, %v5272
        %v5274 = vpop.f32.mrb[0].mxu0
        %5275 = vmatprep.mubr.bf16.mxu0 0
        %5276 = vmatmul.mubr.bf16.gmra.mrb[0].mxu0 %v4959
        %v5277 = vpop.f32.mrb[0].mxu0
        %v5278 = vadd.f32 0.0, %v5277
        %v5279 = vpop.f32.mrb[0].mxu0
        %v5280 = vpop.f32.mrb[0].mxu0
        %v5281 = vadd.f32 0.0, %v5280
        %v5282 = vpop.f32.mrb[0].mxu0
        %5283 = vmatprep.mubr.bf16.mxu0 0
        %5284 = vmatmul.mubr.bf16.gmra.mrb[0].mxu0 %v4967
        %v5285 = vpop.f32.mrb[0].mxu0
        %v5286 = vadd.f32 0.0, %v5285
        %v5287 = vpop.f32.mrb[0].mxu0
        %v5288 = vpop.f32.mrb[0].mxu0
        %v5289 = vadd.f32 0.0, %v5288
        %v5290 = vpop.f32.mrb[0].mxu0
        %5291 = vmatprep.mubr.bf16.mxu0 0
        %5292 = vmatmul.mubr.bf16.gmra.mrb[0].mxu0 %v4975
        %v5293 = vpop.f32.mrb[0].mxu0
        %v5294 = vadd.f32 0.0, %v5293
        %v5295 = vpop.f32.mrb[0].mxu0
        %v5296 = vpop.f32.mrb[0].mxu0
        %v5297 = vadd.f32 0.0, %v5296
        %v5298 = vpop.f32.mrb[0].mxu0
        %5299 = vmatprep.mubr.bf16.mxu0 0
        %5300 = vmatmul.mubr.bf16.gmra.mrb[0].mxu0 %v4983
        %v5301 = vpop.f32.mrb[0].mxu0
        %v5302 = vadd.f32 0.0, %v5301
        %v5303 = vpop.f32.mrb[0].mxu0
        %v5304 = vpop.f32.mrb[0].mxu0
        %v5305 = vadd.f32 0.0, %v5304
        %v5306 = vpop.f32.mrb[0].mxu0
        %5307 = vmatprep.mubr.bf16.mxu0 0
        %5308 = vmatmul.mubr.bf16.gmra.mrb[0].mxu0 %v4991
        %v5309 = vpop.f32.mrb[0].mxu0
        %v5310 = vadd.f32 0.0, %v5309
        %v5311 = vpop.f32.mrb[0].mxu0
        %v5312 = vpop.f32.mrb[0].mxu0
        %v5313 = vadd.f32 0.0, %v5312
        %v5314 = vpop.f32.mrb[0].mxu0
        %5315 = vmatprep.mubr.bf16.mxu0 0
        %5316 = vmatmul.mubr.bf16.gmra.mrb[0].mxu0 %v4999
        %v5317 = vpop.f32.mrb[0].mxu0
        %v5318 = vadd.f32 0.0, %v5317
        %v5319 = vpop.f32.mrb[0].mxu0
        %v5320 = vpop.f32.mrb[0].mxu0
        %v5321 = vadd.f32 0.0, %v5320
        %v5322 = vpop.f32.mrb[0].mxu0
        %5323 = vmatprep.mubr.bf16.mxu0 0
        %5324 = vmatmul.mubr.bf16.gmra.mrb[0].mxu0 %v5007
        %v5325 = vpop.f32.mrb[0].mxu0
        %v5326 = vadd.f32 0.0, %v5325
        %v5327 = vpop.f32.mrb[0].mxu0
        %v5328 = vpop.f32.mrb[0].mxu0
        %v5329 = vadd.f32 0.0, %v5328
        %v5330 = vpop.f32.mrb[0].mxu0
        %5331 = vmatprep.mubr.bf16.mxu0 0
        %5332 = vmatmul.mubr.bf16.gmra.mrb[0].mxu0 %v5015
        %v5333 = vpop.f32.mrb[0].mxu0
        %v5334 = vadd.f32 0.0, %v5333
        %v5335 = vpop.f32.mrb[0].mxu0
        %v5336 = vpop.f32.mrb[0].mxu0
        %v5337 = vadd.f32 0.0, %v5336
        %v5338 = vpop.f32.mrb[0].mxu0
        %5339 = vmatprep.mubr.bf16.mxu0 0
        %5340 = vmatmul.mubr.bf16.gmra.mrb[0].mxu0 %v5023
        %v5341 = vpop.f32.mrb[0].mxu0
        %v5342 = vadd.f32 0.0, %v5341
        %v5343 = vpop.f32.mrb[0].mxu0
        %v5344 = vpop.f32.mrb[0].mxu0
        %v5345 = vadd.f32 0.0, %v5344
        %v5346 = vpop.f32.mrb[0].mxu0
        %5347 = vmatprep.mubr.bf16.mxu0 0
        %5348 = vmatmul.mubr.bf16.gmra.mrb[0].mxu0 %v5031
        %v5349 = vpop.f32.mrb[0].mxu0
        %v5350 = vadd.f32 0.0, %v5349
        %v5351 = vpop.f32.mrb[0].mxu0
        %v5352 = vpop.f32.mrb[0].mxu0
        %v5353 = vadd.f32 0.0, %v5352
        %v5354 = vpop.f32.mrb[0].mxu0
        %5355 = vmatprep.mubr.bf16.mxu0 0
        %5356 = vmatmul.mubr.bf16.gmra.mrb[0].mxu0 %v5039
        %v5357 = vpop.f32.mrb[0].mxu0
        %v5358 = vadd.f32 0.0, %v5357
        %v5359 = vpop.f32.mrb[0].mxu0
        %v5360 = vpop.f32.mrb[0].mxu0
        %v5361 = vadd.f32 0.0, %v5360
        %v5362 = vpop.f32.mrb[0].mxu0
        %5363 = vmatprep.mubr.bf16.mxu0 0
        %5364 = vmatmul.mubr.bf16.gmra.mrb[0].mxu0 %v5047
        %v5365 = vpop.f32.mrb[0].mxu0
        %v5366 = vadd.f32 0.0, %v5365
        %v5367 = vpop.f32.mrb[0].mxu0
        %v5368 = vpop.f32.mrb[0].mxu0
        %v5369 = vadd.f32 0.0, %v5368
        %v5370 = vpop.f32.mrb[0].mxu0
        %5371 = vmatprep.mubr.bf16.mxu0 0
        %5372 = vmatmul.mubr.bf16.gmra.mrb[0].mxu0 %v5055
        %v5373 = vpop.f32.mrb[0].mxu0
        %v5374 = vadd.f32 0.0, %v5373
        %v5375 = vpop.f32.mrb[0].mxu0
        %v5376 = vpop.f32.mrb[0].mxu0
        %v5377 = vadd.f32 0.0, %v5376
        %v5378 = vpop.f32.mrb[0].mxu0
        %5379 = vmatprep.mubr.bf16.mxu0 0
        %5380 = vmatmul.mubr.bf16.gmra.mrb[0].mxu0 %v5063
        %v5381 = vpop.f32.mrb[0].mxu0
        %v5382 = vadd.f32 0.0, %v5381
        %v5383 = vpop.f32.mrb[0].mxu0
        %v5384 = vpop.f32.mrb[0].mxu0
        %v5385 = vadd.f32 0.0, %v5384
        %v5386 = vpop.f32.mrb[0].mxu0
        %5387 = vmatprep.mubr.bf16.mxu0 0
        %5388 = vmatmul.mubr.bf16.gmra.mrb[0].mxu0 %v5071
        %v5389 = vpop.f32.mrb[0].mxu0
        %v5390 = vadd.f32 0.0, %v5389
        %v5391 = vpop.f32.mrb[0].mxu0
        %v5392 = vpop.f32.mrb[0].mxu0
        %v5393 = vadd.f32 0.0, %v5392
        %v5394 = vpop.f32.mrb[0].mxu0
        %5395 = vmatprep.mubr.bf16.mxu0 0
        %5396 = vmatmul.mubr.bf16.gmra.mrb[0].mxu0 %v5079
        %v5397 = vpop.f32.mrb[0].mxu0
        %v5398 = vadd.f32 0.0, %v5397
        %v5399 = vpop.f32.mrb[0].mxu0
        %v5400 = vpop.f32.mrb[0].mxu0
        %v5401 = vadd.f32 0.0, %v5400
        %v5402 = vpop.f32.mrb[0].mxu0
        %5403 = vmatprep.mubr.bf16.mxu0 0
        %5404 = vmatmul.mubr.bf16.gmra.mrb[0].mxu0 %v5087
        %v5405 = vpop.f32.mrb[0].mxu0
        %v5406 = vadd.f32 0.0, %v5405
        %v5407 = vpop.f32.mrb[0].mxu0
        %v5408 = vpop.f32.mrb[0].mxu0
        %v5409 = vadd.f32 0.0, %v5408
        %v5410 = vpop.f32.mrb[0].mxu0
        %5411 = vmatprep.mubr.bf16.mxu0 0
        %5412 = vmatmul.mubr.bf16.gmra.mrb[0].mxu0 %v5095
        %v5413 = vpop.f32.mrb[0].mxu0
        %v5414 = vadd.f32 0.0, %v5413
        %v5415 = vpop.f32.mrb[0].mxu0
        %v5416 = vpop.f32.mrb[0].mxu0
        %v5417 = vadd.f32 0.0, %v5416
        %v5418 = vpop.f32.mrb[0].mxu0
        %5419 = vmatprep.mubr.bf16.mxu0 0
        %5420 = vmatmul.mubr.bf16.gmra.mrb[0].mxu0 %v5103
        %v5421 = vpop.f32.mrb[0].mxu0
        %v5422 = vadd.f32 0.0, %v5421
        %v5423 = vpop.f32.mrb[0].mxu0
        %v5424 = vpop.f32.mrb[0].mxu0
        %v5425 = vadd.f32 0.0, %v5424
        %v5426 = vpop.f32.mrb[0].mxu0
        %5427 = vdwg.mxu0
        %v5428 = vadd.f32 %v4785, %v5214
        %v5429 = vadd.f32 %v4786, %v5217
        %v5430 = vadd.f32 %v4787, %v5222
        %v5431 = vadd.f32 %v4788, %v5225
        %v5432 = vadd.f32 %v4789, %v5230
        %v5433 = vadd.f32 %v4790, %v5233
        %v5434 = vadd.f32 %v4791, %v5238
        %v5435 = vadd.f32 %v4792, %v5241
        %v5436 = vadd.f32 %v4793, %v5246
        %v5437 = vadd.f32 %v4794, %v5249
        %v5438 = vadd.f32 %v4795, %v5254
        %v5439 = vadd.f32 %v4796, %v5257
        %v5440 = vadd.f32 %v4797, %v5262
        %v5441 = vadd.f32 %v4798, %v5265
        %v5442 = vadd.f32 %v4799, %v5270
        %v5443 = vadd.f32 %v4800, %v5273
        %v5444 = vadd.f32 %v4801, %v5278
        %v5445 = vadd.f32 %v4802, %v5281
        %v5446 = vadd.f32 %v4803, %v5286
        %v5447 = vadd.f32 %v4804, %v5289
        %v5448 = vadd.f32 %v4805, %v5294
        %v5449 = vadd.f32 %v4806, %v5297
        %v5450 = vadd.f32 %v4807, %v5302
        %v5451 = vadd.f32 %v4808, %v5305
        %v5452 = vadd.f32 %v4809, %v5310
        %v5453 = vadd.f32 %v4810, %v5313
        %v5454 = vadd.f32 %v4811, %v5318
        %v5455 = vadd.f32 %v4812, %v5321
        %v5456 = vadd.f32 %v4813, %v5326
        %v5457 = vadd.f32 %v4814, %v5329
        %v5458 = vadd.f32 %v4815, %v5334
        %v5459 = vadd.f32 %v4816, %v5337
        %v5460 = vadd.f32 %v4817, %v5342
        %v5461 = vadd.f32 %v4818, %v5345
        %v5462 = vadd.f32 %v4819, %v5350
        %v5463 = vadd.f32 %v4820, %v5353
        %v5464 = vadd.f32 %v4821, %v5358
        %v5465 = vadd.f32 %v4822, %v5361
        %v5466 = vadd.f32 %v4823, %v5366
        %v5467 = vadd.f32 %v4824, %v5369
        %v5468 = vadd.f32 %v4825, %v5374
        %v5469 = vadd.f32 %v4826, %v5377
        %v5470 = vadd.f32 %v4827, %v5382
        %v5471 = vadd.f32 %v4828, %v5385
        %v5472 = vadd.f32 %v4829, %v5390
        %v5473 = vadd.f32 %v4830, %v5393
        %v5474 = vadd.f32 %v4831, %v5398
        %v5475 = vadd.f32 %v4832, %v5401
        %v5476 = vadd.f32 %v4833, %v5406
        %v5477 = vadd.f32 %v4834, %v5409
        %v5478 = vadd.f32 %v4835, %v5414
        %v5479 = vadd.f32 %v4836, %v5417
        %v5480 = vadd.f32 %v4837, %v5422
        %v5481 = vadd.f32 %v4838, %v5425
        %v5482 = vld [vmem:[#allocation2 + $0x18] sm:$0xf8]
        %v5483 = vld [vmem:[#allocation2 + $0x20] sm:$0xff]
        %v5484 = vld [vmem:[#allocation2 + $0x28] sm:$0xff]
        %v5485 = vld [vmem:[#allocation2 + $0x30] sm:$0xff]
        %v5486 = vld [vmem:[#allocation2 + $0x38] sm:$0xff]
        %v5487 = vld [vmem:[#allocation2 + $0x40] sm:$0xff]
        %v5488 = vld [vmem:[#allocation2 + $0x48] sm:$0xff]
        %v5489 = vld [vmem:[#allocation2 + $0x50] sm:$0xff]
        %v5490 = vld [vmem:[#allocation2 + $0x58] sm:$0xff]
        %v5491 = vld [vmem:[#allocation2 + $0x60] sm:$0xff]
        %v5492 = vld [vmem:[#allocation2 + $0x68] sm:$0xff]
        %v5493 = vld [vmem:[#allocation2 + $0x70] sm:$0xff]
        %v5494 = vld [vmem:[#allocation2 + $0x78] sm:$0xff]
        %v5495 = vld [vmem:[#allocation2 + $0x80] sm:$0xff]
        %v5496 = vld [vmem:[#allocation2 + $0x88] sm:$0xff]
        %v5497 = vld [vmem:[#allocation2 + $0x90] sm:$0xff]
        %v5498 = vld [vmem:[#allocation2 + $0x98] sm:$0xff]
        %v5499 = vld [vmem:[#allocation2 + $0xa0] sm:$0xff]
        %v5500 = vld [vmem:[#allocation2 + $0xa8] sm:$0xff]
        %v5501 = vld [vmem:[#allocation2 + $0xb0] sm:$0xff]
        %v5502 = vld [vmem:[#allocation2 + $0xb8] sm:$0xff]
        %v5503 = vld [vmem:[#allocation2 + $0xc0] sm:$0xff]
        %v5504 = vld [vmem:[#allocation2 + $0xc8] sm:$0xff]
        %v5505 = vld [vmem:[#allocation2 + $0xd0] sm:$0xff]
        %v5506 = vld [vmem:[#allocation2 + $0xd8] sm:$0xff]
        %v5507 = vld [vmem:[#allocation2 + $0xe0] sm:$0xff]
        %v5508 = vld [vmem:[#allocation2 + $0xe8] sm:$0xff]
        %v5509 = vld [vmem:[#allocation2 + $0xf0] sm:$0xf]
        %v5510 = vld [vmem:[#allocation8 + $0x180] sm:$0xf]
        %v5511 = vld [vmem:[#allocation8 + $0x184] sm:$0xf]
        %v5512 = vld [vmem:[#allocation8 + $0x188] sm:$0xf]
        %v5513 = vld [vmem:[#allocation8 + $0x18c] sm:$0xf]
        %v5514 = vld [vmem:[#allocation8 + $0x190] sm:$0xf]
        %v5515 = vld [vmem:[#allocation8 + $0x194] sm:$0xf]
        %v5516 = vld [vmem:[#allocation8 + $0x198] sm:$0xf]
        %v5517 = vld [vmem:[#allocation8 + $0x19c] sm:$0xf]
        %v5518 = vld [vmem:[#allocation8 + $0x1a0] sm:$0xf]
        %v5519 = vld [vmem:[#allocation8 + $0x1a4] sm:$0xf]
        %v5520 = vld [vmem:[#allocation8 + $0x1a8] sm:$0xf]
        %v5521 = vld [vmem:[#allocation8 + $0x1ac] sm:$0xf]
        %v5522 = vld [vmem:[#allocation8 + $0x1b0] sm:$0xf]
        %v5523 = vld [vmem:[#allocation8 + $0x1b4] sm:$0xf]
        %v5524 = vld [vmem:[#allocation8 + $0x1b8] sm:$0xf]
        %v5525 = vld [vmem:[#allocation8 + $0x1bc] sm:$0xf]
        %v5527 = vshrl.u32 %v5482, 16
        %v5529 = vrot.slane %v5527, 3
        %v5530 = vshll.u32 %v5482, 16
        %v5532 = vrot.slane %v5530, 4
        %v5533 = vor.u32 %v5529, %v5532
        %v5535 = vshrl.u32 %v5483, 16
        %v5537 = vrot.slane %v5535, 3
        %v5538 = vshll.u32 %v5483, 16
        %v5540 = vrot.slane %v5538, 4
        %v5541 = vor.u32 %v5537, %v5540
        %v5542 = vsel %vm2736, %v5533, %v5541
        %v5544 = vshrl.u32 %v5484, 16
        %v5546 = vrot.slane %v5544, 3
        %v5547 = vshll.u32 %v5484, 16
        %v5549 = vrot.slane %v5547, 4
        %v5550 = vor.u32 %v5546, %v5549
        %v5551 = vsel %vm2736, %v5541, %v5550
        %v5553 = vshrl.u32 %v5485, 16
        %v5555 = vrot.slane %v5553, 3
        %v5556 = vshll.u32 %v5485, 16
        %v5558 = vrot.slane %v5556, 4
        %v5559 = vor.u32 %v5555, %v5558
        %v5560 = vsel %vm2736, %v5550, %v5559
        %v5562 = vshrl.u32 %v5486, 16
        %v5564 = vrot.slane %v5562, 3
        %v5565 = vshll.u32 %v5486, 16
        %v5567 = vrot.slane %v5565, 4
        %v5568 = vor.u32 %v5564, %v5567
        %v5569 = vsel %vm2736, %v5559, %v5568
        %v5571 = vshrl.u32 %v5487, 16
        %v5573 = vrot.slane %v5571, 3
        %v5574 = vshll.u32 %v5487, 16
        %v5576 = vrot.slane %v5574, 4
        %v5577 = vor.u32 %v5573, %v5576
        %v5578 = vsel %vm2736, %v5568, %v5577
        %v5580 = vshrl.u32 %v5488, 16
        %v5582 = vrot.slane %v5580, 3
        %v5583 = vshll.u32 %v5488, 16
        %v5585 = vrot.slane %v5583, 4
        %v5586 = vor.u32 %v5582, %v5585
        %v5587 = vsel %vm2736, %v5577, %v5586
        %v5589 = vshrl.u32 %v5489, 16
        %v5591 = vrot.slane %v5589, 3
        %v5592 = vshll.u32 %v5489, 16
        %v5594 = vrot.slane %v5592, 4
        %v5595 = vor.u32 %v5591, %v5594
        %v5596 = vsel %vm2736, %v5586, %v5595
        %v5598 = vshrl.u32 %v5490, 16
        %v5600 = vrot.slane %v5598, 3
        %v5601 = vshll.u32 %v5490, 16
        %v5603 = vrot.slane %v5601, 4
        %v5604 = vor.u32 %v5600, %v5603
        %v5605 = vsel %vm2736, %v5595, %v5604
        %v5607 = vshrl.u32 %v5491, 16
        %v5609 = vrot.slane %v5607, 3
        %v5610 = vshll.u32 %v5491, 16
        %v5612 = vrot.slane %v5610, 4
        %v5613 = vor.u32 %v5609, %v5612
        %v5614 = vsel %vm2736, %v5604, %v5613
        %v5616 = vshrl.u32 %v5492, 16
        %v5618 = vrot.slane %v5616, 3
        %v5619 = vshll.u32 %v5492, 16
        %v5621 = vrot.slane %v5619, 4
        %v5622 = vor.u32 %v5618, %v5621
        %v5623 = vsel %vm2736, %v5613, %v5622
        %v5625 = vshrl.u32 %v5493, 16
        %v5627 = vrot.slane %v5625, 3
        %v5628 = vshll.u32 %v5493, 16
        %v5630 = vrot.slane %v5628, 4
        %v5631 = vor.u32 %v5627, %v5630
        %v5632 = vsel %vm2736, %v5622, %v5631
        %v5634 = vshrl.u32 %v5494, 16
        %v5636 = vrot.slane %v5634, 3
        %v5637 = vshll.u32 %v5494, 16
        %v5639 = vrot.slane %v5637, 4
        %v5640 = vor.u32 %v5636, %v5639
        %v5641 = vsel %vm2736, %v5631, %v5640
        %v5643 = vshrl.u32 %v5495, 16
        %v5645 = vrot.slane %v5643, 3
        %v5646 = vshll.u32 %v5495, 16
        %v5648 = vrot.slane %v5646, 4
        %v5649 = vor.u32 %v5645, %v5648
        %v5650 = vsel %vm2736, %v5640, %v5649
        %v5652 = vshrl.u32 %v5496, 16
        %v5654 = vrot.slane %v5652, 3
        %v5655 = vshll.u32 %v5496, 16
        %v5657 = vrot.slane %v5655, 4
        %v5658 = vor.u32 %v5654, %v5657
        %v5659 = vsel %vm2736, %v5649, %v5658
        %v5661 = vshrl.u32 %v5497, 16
        %v5663 = vrot.slane %v5661, 3
        %v5664 = vshll.u32 %v5497, 16
        %v5666 = vrot.slane %v5664, 4
        %v5667 = vor.u32 %v5663, %v5666
        %v5668 = vsel %vm2736, %v5658, %v5667
        %v5670 = vshrl.u32 %v5498, 16
        %v5672 = vrot.slane %v5670, 3
        %v5673 = vshll.u32 %v5498, 16
        %v5675 = vrot.slane %v5673, 4
        %v5676 = vor.u32 %v5672, %v5675
        %v5677 = vsel %vm2736, %v5667, %v5676
        %v5679 = vshrl.u32 %v5499, 16
        %v5681 = vrot.slane %v5679, 3
        %v5682 = vshll.u32 %v5499, 16
        %v5684 = vrot.slane %v5682, 4
        %v5685 = vor.u32 %v5681, %v5684
        %v5686 = vsel %vm2736, %v5676, %v5685
        %v5688 = vshrl.u32 %v5500, 16
        %v5690 = vrot.slane %v5688, 3
        %v5691 = vshll.u32 %v5500, 16
        %v5693 = vrot.slane %v5691, 4
        %v5694 = vor.u32 %v5690, %v5693
        %v5695 = vsel %vm2736, %v5685, %v5694
        %v5697 = vshrl.u32 %v5501, 16
        %v5699 = vrot.slane %v5697, 3
        %v5700 = vshll.u32 %v5501, 16
        %v5702 = vrot.slane %v5700, 4
        %v5703 = vor.u32 %v5699, %v5702
        %v5704 = vsel %vm2736, %v5694, %v5703
        %v5706 = vshrl.u32 %v5502, 16
        %v5708 = vrot.slane %v5706, 3
        %v5709 = vshll.u32 %v5502, 16
        %v5711 = vrot.slane %v5709, 4
        %v5712 = vor.u32 %v5708, %v5711
        %v5713 = vsel %vm2736, %v5703, %v5712
        %v5715 = vshrl.u32 %v5503, 16
        %v5717 = vrot.slane %v5715, 3
        %v5718 = vshll.u32 %v5503, 16
        %v5720 = vrot.slane %v5718, 4
        %v5721 = vor.u32 %v5717, %v5720
        %v5722 = vsel %vm2736, %v5712, %v5721
        %v5724 = vshrl.u32 %v5504, 16
        %v5726 = vrot.slane %v5724, 3
        %v5727 = vshll.u32 %v5504, 16
        %v5729 = vrot.slane %v5727, 4
        %v5730 = vor.u32 %v5726, %v5729
        %v5731 = vsel %vm2736, %v5721, %v5730
        %v5733 = vshrl.u32 %v5505, 16
        %v5735 = vrot.slane %v5733, 3
        %v5736 = vshll.u32 %v5505, 16
        %v5738 = vrot.slane %v5736, 4
        %v5739 = vor.u32 %v5735, %v5738
        %v5740 = vsel %vm2736, %v5730, %v5739
        %v5742 = vshrl.u32 %v5506, 16
        %v5744 = vrot.slane %v5742, 3
        %v5745 = vshll.u32 %v5506, 16
        %v5747 = vrot.slane %v5745, 4
        %v5748 = vor.u32 %v5744, %v5747
        %v5749 = vsel %vm2736, %v5739, %v5748
        %v5751 = vshrl.u32 %v5507, 16
        %v5753 = vrot.slane %v5751, 3
        %v5754 = vshll.u32 %v5507, 16
        %v5756 = vrot.slane %v5754, 4
        %v5757 = vor.u32 %v5753, %v5756
        %v5758 = vsel %vm2736, %v5748, %v5757
        %v5760 = vshrl.u32 %v5508, 16
        %v5762 = vrot.slane %v5760, 3
        %v5763 = vshll.u32 %v5508, 16
        %v5765 = vrot.slane %v5763, 4
        %v5766 = vor.u32 %v5762, %v5765
        %v5767 = vsel %vm2736, %v5757, %v5766
        %v5769 = vshrl.u32 %v5509, 16
        %v5771 = vrot.slane %v5769, 3
        %v5772 = vshll.u32 %v5509, 16
        %v5774 = vrot.slane %v5772, 4
        %v5775 = vor.u32 %v5771, %v5774
        %v5776 = vsel %vm2736, %v5766, %v5775
        %v5820 = vunpack.c.l.b16 %v5510
        %v5821 = vunpack.c.l.b16 %v5511
        %v5822 = vunpack.c.l.b16 %v5512
        %v5823 = vunpack.c.l.b16 %v5513
        %v5824 = vunpack.c.l.b16 %v5514
        %v5825 = vunpack.c.l.b16 %v5515
        %v5826 = vunpack.c.l.b16 %v5516
        %v5827 = vunpack.c.l.b16 %v5517
        %v5828 = vunpack.c.l.b16 %v5518
        %v5829 = vunpack.c.l.b16 %v5519
        %v5830 = vunpack.c.l.b16 %v5520
        %v5831 = vunpack.c.l.b16 %v5521
        %v5832 = vunpack.c.l.b16 %v5522
        %v5833 = vunpack.c.l.b16 %v5523
        %v5834 = vunpack.c.l.b16 %v5524
        %v5835 = vunpack.c.l.b16 %v5525
        %v5836 = vpack.c.b16 %v5821, %v5820
        %v5837 = vpack.c.b16 %v5823, %v5822
        %v5838 = vpack.c.b16 %v5825, %v5824
        %v5839 = vpack.c.b16 %v5827, %v5826
        %v5840 = vpack.c.b16 %v5829, %v5828
        %v5841 = vpack.c.b16 %v5831, %v5830
        %v5842 = vpack.c.b16 %v5833, %v5832
        %v5843 = vpack.c.b16 %v5835, %v5834
        %5852 = vmatprep.subr.bf16.mxu0 0
        %5853 = vmatpush1.bf16.msra.mxu0 %v5836
        %5854 = vmatprep.subr.bf16.mxu0 0
        %5855 = vmatpush1.bf16.msra.mxu0 %v5837
        %5856 = vmatprep.subr.bf16.mxu0 0
        %5857 = vmatpush1.bf16.msra.mxu0 %v5838
        %5858 = vmatprep.subr.bf16.mxu0 0
        %5859 = vmatpush1.bf16.msra.mxu0 %v5839
        %5860 = vmatprep.subr.bf16.mxu0 0
        %5861 = vmatpush1.bf16.msra.mxu0 %v5840
        %5862 = vmatprep.subr.bf16.mxu0 0
        %5863 = vmatpush1.bf16.msra.mxu0 %v5841
        %5864 = vmatprep.subr.bf16.mxu0 0
        %5865 = vmatpush1.bf16.msra.mxu0 %v5842
        %5866 = vmatprep.subr.bf16.mxu0 0
        %5867 = vmatpush1.bf16.msra.mxu0 %v5843
        %5868 = vmatprep.subr.bf16.mxu0 0
        %5869 = vmatpush1.bf16.msra.mxu0 0
        %5870 = vmatprep.subr.bf16.mxu0 0
        %5871 = vmatpush1.bf16.msra.mxu0 0
        %5872 = vmatprep.subr.bf16.mxu0 0
        %5873 = vmatpush1.bf16.msra.mxu0 0
        %5874 = vmatprep.subr.bf16.mxu0 0
        %5875 = vmatpush1.bf16.msra.mxu0 0
        %5876 = vmatprep.subr.bf16.mxu0 0
        %5877 = vmatpush1.bf16.msra.mxu0 0
        %5878 = vmatprep.subr.bf16.mxu0 0
        %5879 = vmatpush1.bf16.msra.mxu0 0
        %5880 = vmatprep.subr.bf16.mxu0 0
        %5881 = vmatpush1.bf16.msra.mxu0 0
        %5882 = vmatprep.subr.bf16.mxu0 0
        %5883 = vmatpush1.bf16.msra.mxu0 0
        %5884 = vmatprep.mubr.bf16.mxu0 0
        %5885 = vmatmul.mubr.bf16.gmra.mrb[0].mxu0 %v5542
        %v5886 = vpop.f32.mrb[0].mxu0
        %v5887 = vadd.f32 0.0, %v5886
        %v5888 = vpop.f32.mrb[0].mxu0
        %v5889 = vpop.f32.mrb[0].mxu0
        %v5890 = vadd.f32 0.0, %v5889
        %v5891 = vpop.f32.mrb[0].mxu0
        %5892 = vmatprep.mubr.bf16.mxu0 0
        %5893 = vmatmul.mubr.bf16.gmra.mrb[0].mxu0 %v5551
        %v5894 = vpop.f32.mrb[0].mxu0
        %v5895 = vadd.f32 0.0, %v5894
        %v5896 = vpop.f32.mrb[0].mxu0
        %v5897 = vpop.f32.mrb[0].mxu0
        %v5898 = vadd.f32 0.0, %v5897
        %v5899 = vpop.f32.mrb[0].mxu0
        %5900 = vmatprep.mubr.bf16.mxu0 0
        %5901 = vmatmul.mubr.bf16.gmra.mrb[0].mxu0 %v5560
        %v5902 = vpop.f32.mrb[0].mxu0
        %v5903 = vadd.f32 0.0, %v5902
        %v5904 = vpop.f32.mrb[0].mxu0
        %v5905 = vpop.f32.mrb[0].mxu0
        %v5906 = vadd.f32 0.0, %v5905
        %v5907 = vpop.f32.mrb[0].mxu0
        %5908 = vmatprep.mubr.bf16.mxu0 0
        %5909 = vmatmul.mubr.bf16.gmra.mrb[0].mxu0 %v5569
        %v5910 = vpop.f32.mrb[0].mxu0
        %v5911 = vadd.f32 0.0, %v5910
        %v5912 = vpop.f32.mrb[0].mxu0
        %v5913 = vpop.f32.mrb[0].mxu0
        %v5914 = vadd.f32 0.0, %v5913
        %v5915 = vpop.f32.mrb[0].mxu0
        %5916 = vmatprep.mubr.bf16.mxu0 0
        %5917 = vmatmul.mubr.bf16.gmra.mrb[0].mxu0 %v5578
        %v5918 = vpop.f32.mrb[0].mxu0
        %v5919 = vadd.f32 0.0, %v5918
        %v5920 = vpop.f32.mrb[0].mxu0
        %v5921 = vpop.f32.mrb[0].mxu0
        %v5922 = vadd.f32 0.0, %v5921
        %v5923 = vpop.f32.mrb[0].mxu0
        %5924 = vmatprep.mubr.bf16.mxu0 0
        %5925 = vmatmul.mubr.bf16.gmra.mrb[0].mxu0 %v5587
        %v5926 = vpop.f32.mrb[0].mxu0
        %v5927 = vadd.f32 0.0, %v5926
        %v5928 = vpop.f32.mrb[0].mxu0
        %v5929 = vpop.f32.mrb[0].mxu0
        %v5930 = vadd.f32 0.0, %v5929
        %v5931 = vpop.f32.mrb[0].mxu0
        %5932 = vmatprep.mubr.bf16.mxu0 0
        %5933 = vmatmul.mubr.bf16.gmra.mrb[0].mxu0 %v5596
        %v5934 = vpop.f32.mrb[0].mxu0
        %v5935 = vadd.f32 0.0, %v5934
        %v5936 = vpop.f32.mrb[0].mxu0
        %v5937 = vpop.f32.mrb[0].mxu0
        %v5938 = vadd.f32 0.0, %v5937
        %v5939 = vpop.f32.mrb[0].mxu0
        %5940 = vmatprep.mubr.bf16.mxu0 0
        %5941 = vmatmul.mubr.bf16.gmra.mrb[0].mxu0 %v5605
        %v5942 = vpop.f32.mrb[0].mxu0
        %v5943 = vadd.f32 0.0, %v5942
        %v5944 = vpop.f32.mrb[0].mxu0
        %v5945 = vpop.f32.mrb[0].mxu0
        %v5946 = vadd.f32 0.0, %v5945
        %v5947 = vpop.f32.mrb[0].mxu0
        %5948 = vmatprep.mubr.bf16.mxu0 0
        %5949 = vmatmul.mubr.bf16.gmra.mrb[0].mxu0 %v5614
        %v5950 = vpop.f32.mrb[0].mxu0
        %v5951 = vadd.f32 0.0, %v5950
        %v5952 = vpop.f32.mrb[0].mxu0
        %v5953 = vpop.f32.mrb[0].mxu0
        %v5954 = vadd.f32 0.0, %v5953
        %v5955 = vpop.f32.mrb[0].mxu0
        %5956 = vmatprep.mubr.bf16.mxu0 0
        %5957 = vmatmul.mubr.bf16.gmra.mrb[0].mxu0 %v5623
        %v5958 = vpop.f32.mrb[0].mxu0
        %v5959 = vadd.f32 0.0, %v5958
        %v5960 = vpop.f32.mrb[0].mxu0
        %v5961 = vpop.f32.mrb[0].mxu0
        %v5962 = vadd.f32 0.0, %v5961
        %v5963 = vpop.f32.mrb[0].mxu0
        %5964 = vmatprep.mubr.bf16.mxu0 0
        %5965 = vmatmul.mubr.bf16.gmra.mrb[0].mxu0 %v5632
        %v5966 = vpop.f32.mrb[0].mxu0
        %v5967 = vadd.f32 0.0, %v5966
        %v5968 = vpop.f32.mrb[0].mxu0
        %v5969 = vpop.f32.mrb[0].mxu0
        %v5970 = vadd.f32 0.0, %v5969
        %v5971 = vpop.f32.mrb[0].mxu0
        %5972 = vmatprep.mubr.bf16.mxu0 0
        %5973 = vmatmul.mubr.bf16.gmra.mrb[0].mxu0 %v5641
        %v5974 = vpop.f32.mrb[0].mxu0
        %v5975 = vadd.f32 0.0, %v5974
        %v5976 = vpop.f32.mrb[0].mxu0
        %v5977 = vpop.f32.mrb[0].mxu0
        %v5978 = vadd.f32 0.0, %v5977
        %v5979 = vpop.f32.mrb[0].mxu0
        %5980 = vmatprep.mubr.bf16.mxu0 0
        %5981 = vmatmul.mubr.bf16.gmra.mrb[0].mxu0 %v5650
        %v5982 = vpop.f32.mrb[0].mxu0
        %v5983 = vadd.f32 0.0, %v5982
        %v5984 = vpop.f32.mrb[0].mxu0
        %v5985 = vpop.f32.mrb[0].mxu0
        %v5986 = vadd.f32 0.0, %v5985
        %v5987 = vpop.f32.mrb[0].mxu0
        %5988 = vmatprep.mubr.bf16.mxu0 0
        %5989 = vmatmul.mubr.bf16.gmra.mrb[0].mxu0 %v5659
        %v5990 = vpop.f32.mrb[0].mxu0
        %v5991 = vadd.f32 0.0, %v5990
        %v5992 = vpop.f32.mrb[0].mxu0
        %v5993 = vpop.f32.mrb[0].mxu0
        %v5994 = vadd.f32 0.0, %v5993
        %v5995 = vpop.f32.mrb[0].mxu0
        %5996 = vmatprep.mubr.bf16.mxu0 0
        %5997 = vmatmul.mubr.bf16.gmra.mrb[0].mxu0 %v5668
        %v5998 = vpop.f32.mrb[0].mxu0
        %v5999 = vadd.f32 0.0, %v5998
        %v6000 = vpop.f32.mrb[0].mxu0
        %v6001 = vpop.f32.mrb[0].mxu0
        %v6002 = vadd.f32 0.0, %v6001
        %v6003 = vpop.f32.mrb[0].mxu0
        %6004 = vmatprep.mubr.bf16.mxu0 0
        %6005 = vmatmul.mubr.bf16.gmra.mrb[0].mxu0 %v5677
        %v6006 = vpop.f32.mrb[0].mxu0
        %v6007 = vadd.f32 0.0, %v6006
        %v6008 = vpop.f32.mrb[0].mxu0
        %v6009 = vpop.f32.mrb[0].mxu0
        %v6010 = vadd.f32 0.0, %v6009
        %v6011 = vpop.f32.mrb[0].mxu0
        %6012 = vmatprep.mubr.bf16.mxu0 0
        %6013 = vmatmul.mubr.bf16.gmra.mrb[0].mxu0 %v5686
        %v6014 = vpop.f32.mrb[0].mxu0
        %v6015 = vadd.f32 0.0, %v6014
        %v6016 = vpop.f32.mrb[0].mxu0
        %v6017 = vpop.f32.mrb[0].mxu0
        %v6018 = vadd.f32 0.0, %v6017
        %v6019 = vpop.f32.mrb[0].mxu0
        %6020 = vmatprep.mubr.bf16.mxu0 0
        %6021 = vmatmul.mubr.bf16.gmra.mrb[0].mxu0 %v5695
        %v6022 = vpop.f32.mrb[0].mxu0
        %v6023 = vadd.f32 0.0, %v6022
        %v6024 = vpop.f32.mrb[0].mxu0
        %v6025 = vpop.f32.mrb[0].mxu0
        %v6026 = vadd.f32 0.0, %v6025
        %v6027 = vpop.f32.mrb[0].mxu0
        %6028 = vmatprep.mubr.bf16.mxu0 0
        %6029 = vmatmul.mubr.bf16.gmra.mrb[0].mxu0 %v5704
        %v6030 = vpop.f32.mrb[0].mxu0
        %v6031 = vadd.f32 0.0, %v6030
        %v6032 = vpop.f32.mrb[0].mxu0
        %v6033 = vpop.f32.mrb[0].mxu0
        %v6034 = vadd.f32 0.0, %v6033
        %v6035 = vpop.f32.mrb[0].mxu0
        %6036 = vmatprep.mubr.bf16.mxu0 0
        %6037 = vmatmul.mubr.bf16.gmra.mrb[0].mxu0 %v5713
        %v6038 = vpop.f32.mrb[0].mxu0
        %v6039 = vadd.f32 0.0, %v6038
        %v6040 = vpop.f32.mrb[0].mxu0
        %v6041 = vpop.f32.mrb[0].mxu0
        %v6042 = vadd.f32 0.0, %v6041
        %v6043 = vpop.f32.mrb[0].mxu0
        %6044 = vmatprep.mubr.bf16.mxu0 0
        %6045 = vmatmul.mubr.bf16.gmra.mrb[0].mxu0 %v5722
        %v6046 = vpop.f32.mrb[0].mxu0
        %v6047 = vadd.f32 0.0, %v6046
        %v6048 = vpop.f32.mrb[0].mxu0
        %v6049 = vpop.f32.mrb[0].mxu0
        %v6050 = vadd.f32 0.0, %v6049
        %v6051 = vpop.f32.mrb[0].mxu0
        %6052 = vmatprep.mubr.bf16.mxu0 0
        %6053 = vmatmul.mubr.bf16.gmra.mrb[0].mxu0 %v5731
        %v6054 = vpop.f32.mrb[0].mxu0
        %v6055 = vadd.f32 0.0, %v6054
        %v6056 = vpop.f32.mrb[0].mxu0
        %v6057 = vpop.f32.mrb[0].mxu0
        %v6058 = vadd.f32 0.0, %v6057
        %v6059 = vpop.f32.mrb[0].mxu0
        %6060 = vmatprep.mubr.bf16.mxu0 0
        %6061 = vmatmul.mubr.bf16.gmra.mrb[0].mxu0 %v5740
        %v6062 = vpop.f32.mrb[0].mxu0
        %v6063 = vadd.f32 0.0, %v6062
        %v6064 = vpop.f32.mrb[0].mxu0
        %v6065 = vpop.f32.mrb[0].mxu0
        %v6066 = vadd.f32 0.0, %v6065
        %v6067 = vpop.f32.mrb[0].mxu0
        %6068 = vmatprep.mubr.bf16.mxu0 0
        %6069 = vmatmul.mubr.bf16.gmra.mrb[0].mxu0 %v5749
        %v6070 = vpop.f32.mrb[0].mxu0
        %v6071 = vadd.f32 0.0, %v6070
        %v6072 = vpop.f32.mrb[0].mxu0
        %v6073 = vpop.f32.mrb[0].mxu0
        %v6074 = vadd.f32 0.0, %v6073
        %v6075 = vpop.f32.mrb[0].mxu0
        %6076 = vmatprep.mubr.bf16.mxu0 0
        %6077 = vmatmul.mubr.bf16.gmra.mrb[0].mxu0 %v5758
        %v6078 = vpop.f32.mrb[0].mxu0
        %v6079 = vadd.f32 0.0, %v6078
        %v6080 = vpop.f32.mrb[0].mxu0
        %v6081 = vpop.f32.mrb[0].mxu0
        %v6082 = vadd.f32 0.0, %v6081
        %v6083 = vpop.f32.mrb[0].mxu0
        %6084 = vmatprep.mubr.bf16.mxu0 0
        %6085 = vmatmul.mubr.bf16.gmra.mrb[0].mxu0 %v5767
        %v6086 = vpop.f32.mrb[0].mxu0
        %v6087 = vadd.f32 0.0, %v6086
        %v6088 = vpop.f32.mrb[0].mxu0
        %v6089 = vpop.f32.mrb[0].mxu0
        %v6090 = vadd.f32 0.0, %v6089
        %v6091 = vpop.f32.mrb[0].mxu0
        %6092 = vmatprep.mubr.bf16.mxu0 0
        %6093 = vmatmul.mubr.bf16.gmra.mrb[0].mxu0 %v5776
        %v6094 = vpop.f32.mrb[0].mxu0
        %v6095 = vadd.f32 0.0, %v6094
        %v6096 = vpop.f32.mrb[0].mxu0
        %v6097 = vpop.f32.mrb[0].mxu0
        %v6098 = vadd.f32 0.0, %v6097
        %v6099 = vpop.f32.mrb[0].mxu0
        %6100 = vdwg.mxu0
        %v6101 = vadd.f32 %v5428, %v5887
        %v6102 = vadd.f32 %v5429, %v5890
        %v6103 = vadd.f32 %v5430, %v5895
        %v6104 = vadd.f32 %v5431, %v5898
        %v6105 = vadd.f32 %v5432, %v5903
        %v6106 = vadd.f32 %v5433, %v5906
        %v6107 = vadd.f32 %v5434, %v5911
        %v6108 = vadd.f32 %v5435, %v5914
        %v6109 = vadd.f32 %v5436, %v5919
        %v6110 = vadd.f32 %v5437, %v5922
        %v6111 = vadd.f32 %v5438, %v5927
        %v6112 = vadd.f32 %v5439, %v5930
        %v6113 = vadd.f32 %v5440, %v5935
        %v6114 = vadd.f32 %v5441, %v5938
        %v6115 = vadd.f32 %v5442, %v5943
        %v6116 = vadd.f32 %v5443, %v5946
        %v6117 = vadd.f32 %v5444, %v5951
        %v6118 = vadd.f32 %v5445, %v5954
        %v6119 = vadd.f32 %v5446, %v5959
        %v6120 = vadd.f32 %v5447, %v5962
        %v6121 = vadd.f32 %v5448, %v5967
        %v6122 = vadd.f32 %v5449, %v5970
        %v6123 = vadd.f32 %v5450, %v5975
        %v6124 = vadd.f32 %v5451, %v5978
        %v6125 = vadd.f32 %v5452, %v5983
        %v6126 = vadd.f32 %v5453, %v5986
        %v6127 = vadd.f32 %v5454, %v5991
        %v6128 = vadd.f32 %v5455, %v5994
        %v6129 = vadd.f32 %v5456, %v5999
        %v6130 = vadd.f32 %v5457, %v6002
        %v6131 = vadd.f32 %v5458, %v6007
        %v6132 = vadd.f32 %v5459, %v6010
        %v6133 = vadd.f32 %v5460, %v6015
        %v6134 = vadd.f32 %v5461, %v6018
        %v6135 = vadd.f32 %v5462, %v6023
        %v6136 = vadd.f32 %v5463, %v6026
        %v6137 = vadd.f32 %v5464, %v6031
        %v6138 = vadd.f32 %v5465, %v6034
        %v6139 = vadd.f32 %v5466, %v6039
        %v6140 = vadd.f32 %v5467, %v6042
        %v6141 = vadd.f32 %v5468, %v6047
        %v6142 = vadd.f32 %v5469, %v6050
        %v6143 = vadd.f32 %v5470, %v6055
        %v6144 = vadd.f32 %v5471, %v6058
        %v6145 = vadd.f32 %v5472, %v6063
        %v6146 = vadd.f32 %v5473, %v6066
        %v6147 = vadd.f32 %v5474, %v6071
        %v6148 = vadd.f32 %v5475, %v6074
        %v6149 = vadd.f32 %v5476, %v6079
        %v6150 = vadd.f32 %v5477, %v6082
        %v6151 = vadd.f32 %v5478, %v6087
        %v6152 = vadd.f32 %v5479, %v6090
        %v6153 = vadd.f32 %v5480, %v6095
        %v6154 = vadd.f32 %v5481, %v6098
        %v6155 = vld [vmem:[#allocation2 + $0x18] sm:$0xf0]
        %v6156 = vld [vmem:[#allocation8 + $0x1c0] sm:$0xf]
        %v6157 = vld [vmem:[#allocation8 + $0x1c4] sm:$0xf]
        %v6158 = vld [vmem:[#allocation8 + $0x1c8] sm:$0xf]
        %v6159 = vld [vmem:[#allocation8 + $0x1cc] sm:$0xf]
        %v6160 = vld [vmem:[#allocation8 + $0x1d0] sm:$0xf]
        %v6161 = vld [vmem:[#allocation8 + $0x1d4] sm:$0xf]
        %v6162 = vld [vmem:[#allocation8 + $0x1d8] sm:$0xf]
        %v6163 = vld [vmem:[#allocation8 + $0x1dc] sm:$0xf]
        %v6164 = vld [vmem:[#allocation8 + $0x1e0] sm:$0xf]
        %v6165 = vld [vmem:[#allocation8 + $0x1e4] sm:$0xf]
        %v6166 = vld [vmem:[#allocation8 + $0x1e8] sm:$0xf]
        %v6167 = vld [vmem:[#allocation8 + $0x1ec] sm:$0xf]
        %v6168 = vld [vmem:[#allocation8 + $0x1f0] sm:$0xf]
        %v6169 = vld [vmem:[#allocation8 + $0x1f4] sm:$0xf]
        %v6170 = vld [vmem:[#allocation8 + $0x1f8] sm:$0xf]
        %v6171 = vld [vmem:[#allocation8 + $0x1fc] sm:$0xf]
        %v6200 = vrot.slane %v6155, 4
        %v6201 = vrot.slane %v5483, 4
        %v6202 = vsel %vm2356, %v6200, %v6201
        %v6203 = vrot.slane %v5484, 4
        %v6204 = vsel %vm2356, %v6201, %v6203
        %v6205 = vrot.slane %v5485, 4
        %v6206 = vsel %vm2356, %v6203, %v6205
        %v6207 = vrot.slane %v5486, 4
        %v6208 = vsel %vm2356, %v6205, %v6207
        %v6209 = vrot.slane %v5487, 4
        %v6210 = vsel %vm2356, %v6207, %v6209
        %v6211 = vrot.slane %v5488, 4
        %v6212 = vsel %vm2356, %v6209, %v6211
        %v6213 = vrot.slane %v5489, 4
        %v6214 = vsel %vm2356, %v6211, %v6213
        %v6215 = vrot.slane %v5490, 4
        %v6216 = vsel %vm2356, %v6213, %v6215
        %v6217 = vrot.slane %v5491, 4
        %v6218 = vsel %vm2356, %v6215, %v6217
        %v6219 = vrot.slane %v5492, 4
        %v6220 = vsel %vm2356, %v6217, %v6219
        %v6221 = vrot.slane %v5493, 4
        %v6222 = vsel %vm2356, %v6219, %v6221
        %v6223 = vrot.slane %v5494, 4
        %v6224 = vsel %vm2356, %v6221, %v6223
        %v6225 = vrot.slane %v5495, 4
        %v6226 = vsel %vm2356, %v6223, %v6225
        %v6227 = vrot.slane %v5496, 4
        %v6228 = vsel %vm2356, %v6225, %v6227
        %v6229 = vrot.slane %v5497, 4
        %v6230 = vsel %vm2356, %v6227, %v6229
        %v6231 = vrot.slane %v5498, 4
        %v6232 = vsel %vm2356, %v6229, %v6231
        %v6233 = vrot.slane %v5499, 4
        %v6234 = vsel %vm2356, %v6231, %v6233
        %v6235 = vrot.slane %v5500, 4
        %v6236 = vsel %vm2356, %v6233, %v6235
        %v6237 = vrot.slane %v5501, 4
        %v6238 = vsel %vm2356, %v6235, %v6237
        %v6239 = vrot.slane %v5502, 4
        %v6240 = vsel %vm2356, %v6237, %v6239
        %v6241 = vrot.slane %v5503, 4
        %v6242 = vsel %vm2356, %v6239, %v6241
        %v6243 = vrot.slane %v5504, 4
        %v6244 = vsel %vm2356, %v6241, %v6243
        %v6245 = vrot.slane %v5505, 4
        %v6246 = vsel %vm2356, %v6243, %v6245
        %v6247 = vrot.slane %v5506, 4
        %v6248 = vsel %vm2356, %v6245, %v6247
        %v6249 = vrot.slane %v5507, 4
        %v6250 = vsel %vm2356, %v6247, %v6249
        %v6251 = vrot.slane %v5508, 4
        %v6252 = vsel %vm2356, %v6249, %v6251
        %v6253 = vrot.slane %v5509, 4
        %v6254 = vsel %vm2356, %v6251, %v6253
        %v6298 = vunpack.c.l.b16 %v6156
        %v6299 = vunpack.c.l.b16 %v6157
        %v6300 = vunpack.c.l.b16 %v6158
        %v6301 = vunpack.c.l.b16 %v6159
        %v6302 = vunpack.c.l.b16 %v6160
        %v6303 = vunpack.c.l.b16 %v6161
        %v6304 = vunpack.c.l.b16 %v6162
        %v6305 = vunpack.c.l.b16 %v6163
        %v6306 = vunpack.c.l.b16 %v6164
        %v6307 = vunpack.c.l.b16 %v6165
        %v6308 = vunpack.c.l.b16 %v6166
        %v6309 = vunpack.c.l.b16 %v6167
        %v6310 = vunpack.c.l.b16 %v6168
        %v6311 = vunpack.c.l.b16 %v6169
        %v6312 = vunpack.c.l.b16 %v6170
        %v6313 = vunpack.c.l.b16 %v6171
        %v6314 = vpack.c.b16 %v6299, %v6298
        %v6315 = vpack.c.b16 %v6301, %v6300
        %v6316 = vpack.c.b16 %v6303, %v6302
        %v6317 = vpack.c.b16 %v6305, %v6304
        %v6318 = vpack.c.b16 %v6307, %v6306
        %v6319 = vpack.c.b16 %v6309, %v6308
        %v6320 = vpack.c.b16 %v6311, %v6310
        %v6321 = vpack.c.b16 %v6313, %v6312
        %6330 = vmatprep.subr.bf16.mxu0 0
        %6331 = vmatpush1.bf16.msra.mxu0 %v6314
        %6332 = vmatprep.subr.bf16.mxu0 0
        %6333 = vmatpush1.bf16.msra.mxu0 %v6315
        %6334 = vmatprep.subr.bf16.mxu0 0
        %6335 = vmatpush1.bf16.msra.mxu0 %v6316
        %6336 = vmatprep.subr.bf16.mxu0 0
        %6337 = vmatpush1.bf16.msra.mxu0 %v6317
        %6338 = vmatprep.subr.bf16.mxu0 0
        %6339 = vmatpush1.bf16.msra.mxu0 %v6318
        %6340 = vmatprep.subr.bf16.mxu0 0
        %6341 = vmatpush1.bf16.msra.mxu0 %v6319
        %6342 = vmatprep.subr.bf16.mxu0 0
        %6343 = vmatpush1.bf16.msra.mxu0 %v6320
        %6344 = vmatprep.subr.bf16.mxu0 0
        %6345 = vmatpush1.bf16.msra.mxu0 %v6321
        %6346 = vmatprep.subr.bf16.mxu0 0
        %6347 = vmatpush1.bf16.msra.mxu0 0
        %6348 = vmatprep.subr.bf16.mxu0 0
        %6349 = vmatpush1.bf16.msra.mxu0 0
        %6350 = vmatprep.subr.bf16.mxu0 0
        %6351 = vmatpush1.bf16.msra.mxu0 0
        %6352 = vmatprep.subr.bf16.mxu0 0
        %6353 = vmatpush1.bf16.msra.mxu0 0
        %6354 = vmatprep.subr.bf16.mxu0 0
        %6355 = vmatpush1.bf16.msra.mxu0 0
        %6356 = vmatprep.subr.bf16.mxu0 0
        %6357 = vmatpush1.bf16.msra.mxu0 0
        %6358 = vmatprep.subr.bf16.mxu0 0
        %6359 = vmatpush1.bf16.msra.mxu0 0
        %6360 = vmatprep.subr.bf16.mxu0 0
        %6361 = vmatpush1.bf16.msra.mxu0 0
        %6362 = vmatprep.mubr.bf16.mxu0 0
        %6363 = vmatmul.mubr.bf16.gmra.mrb[0].mxu0 %v6202
        %v6364 = vpop.f32.mrb[0].mxu0
        %v6365 = vadd.f32 0.0, %v6364
        %v6366 = vpop.f32.mrb[0].mxu0
        %v6367 = vpop.f32.mrb[0].mxu0
        %v6368 = vadd.f32 0.0, %v6367
        %v6369 = vpop.f32.mrb[0].mxu0
        %6370 = vmatprep.mubr.bf16.mxu0 0
        %6371 = vmatmul.mubr.bf16.gmra.mrb[0].mxu0 %v6204
        %v6372 = vpop.f32.mrb[0].mxu0
        %v6373 = vadd.f32 0.0, %v6372
        %v6374 = vpop.f32.mrb[0].mxu0
        %v6375 = vpop.f32.mrb[0].mxu0
        %v6376 = vadd.f32 0.0, %v6375
        %v6377 = vpop.f32.mrb[0].mxu0
        %6378 = vmatprep.mubr.bf16.mxu0 0
        %6379 = vmatmul.mubr.bf16.gmra.mrb[0].mxu0 %v6206
        %v6380 = vpop.f32.mrb[0].mxu0
        %v6381 = vadd.f32 0.0, %v6380
        %v6382 = vpop.f32.mrb[0].mxu0
        %v6383 = vpop.f32.mrb[0].mxu0
        %v6384 = vadd.f32 0.0, %v6383
        %v6385 = vpop.f32.mrb[0].mxu0
        %6386 = vmatprep.mubr.bf16.mxu0 0
        %6387 = vmatmul.mubr.bf16.gmra.mrb[0].mxu0 %v6208
        %v6388 = vpop.f32.mrb[0].mxu0
        %v6389 = vadd.f32 0.0, %v6388
        %v6390 = vpop.f32.mrb[0].mxu0
        %v6391 = vpop.f32.mrb[0].mxu0
        %v6392 = vadd.f32 0.0, %v6391
        %v6393 = vpop.f32.mrb[0].mxu0
        %6394 = vmatprep.mubr.bf16.mxu0 0
        %6395 = vmatmul.mubr.bf16.gmra.mrb[0].mxu0 %v6210
        %v6396 = vpop.f32.mrb[0].mxu0
        %v6397 = vadd.f32 0.0, %v6396
        %v6398 = vpop.f32.mrb[0].mxu0
        %v6399 = vpop.f32.mrb[0].mxu0
        %v6400 = vadd.f32 0.0, %v6399
        %v6401 = vpop.f32.mrb[0].mxu0
        %6402 = vmatprep.mubr.bf16.mxu0 0
        %6403 = vmatmul.mubr.bf16.gmra.mrb[0].mxu0 %v6212
        %v6404 = vpop.f32.mrb[0].mxu0
        %v6405 = vadd.f32 0.0, %v6404
        %v6406 = vpop.f32.mrb[0].mxu0
        %v6407 = vpop.f32.mrb[0].mxu0
        %v6408 = vadd.f32 0.0, %v6407
        %v6409 = vpop.f32.mrb[0].mxu0
        %6410 = vmatprep.mubr.bf16.mxu0 0
        %6411 = vmatmul.mubr.bf16.gmra.mrb[0].mxu0 %v6214
        %v6412 = vpop.f32.mrb[0].mxu0
        %v6413 = vadd.f32 0.0, %v6412
        %v6414 = vpop.f32.mrb[0].mxu0
        %v6415 = vpop.f32.mrb[0].mxu0
        %v6416 = vadd.f32 0.0, %v6415
        %v6417 = vpop.f32.mrb[0].mxu0
        %6418 = vmatprep.mubr.bf16.mxu0 0
        %6419 = vmatmul.mubr.bf16.gmra.mrb[0].mxu0 %v6216
        %v6420 = vpop.f32.mrb[0].mxu0
        %v6421 = vadd.f32 0.0, %v6420
        %v6422 = vpop.f32.mrb[0].mxu0
        %v6423 = vpop.f32.mrb[0].mxu0
        %v6424 = vadd.f32 0.0, %v6423
        %v6425 = vpop.f32.mrb[0].mxu0
        %6426 = vmatprep.mubr.bf16.mxu0 0
        %6427 = vmatmul.mubr.bf16.gmra.mrb[0].mxu0 %v6218
        %v6428 = vpop.f32.mrb[0].mxu0
        %v6429 = vadd.f32 0.0, %v6428
        %v6430 = vpop.f32.mrb[0].mxu0
        %v6431 = vpop.f32.mrb[0].mxu0
        %v6432 = vadd.f32 0.0, %v6431
        %v6433 = vpop.f32.mrb[0].mxu0
        %6434 = vmatprep.mubr.bf16.mxu0 0
        %6435 = vmatmul.mubr.bf16.gmra.mrb[0].mxu0 %v6220
        %v6436 = vpop.f32.mrb[0].mxu0
        %v6437 = vadd.f32 0.0, %v6436
        %v6438 = vpop.f32.mrb[0].mxu0
        %v6439 = vpop.f32.mrb[0].mxu0
        %v6440 = vadd.f32 0.0, %v6439
        %v6441 = vpop.f32.mrb[0].mxu0
        %6442 = vmatprep.mubr.bf16.mxu0 0
        %6443 = vmatmul.mubr.bf16.gmra.mrb[0].mxu0 %v6222
        %v6444 = vpop.f32.mrb[0].mxu0
        %v6445 = vadd.f32 0.0, %v6444
        %v6446 = vpop.f32.mrb[0].mxu0
        %v6447 = vpop.f32.mrb[0].mxu0
        %v6448 = vadd.f32 0.0, %v6447
        %v6449 = vpop.f32.mrb[0].mxu0
        %6450 = vmatprep.mubr.bf16.mxu0 0
        %6451 = vmatmul.mubr.bf16.gmra.mrb[0].mxu0 %v6224
        %v6452 = vpop.f32.mrb[0].mxu0
        %v6453 = vadd.f32 0.0, %v6452
        %v6454 = vpop.f32.mrb[0].mxu0
        %v6455 = vpop.f32.mrb[0].mxu0
        %v6456 = vadd.f32 0.0, %v6455
        %v6457 = vpop.f32.mrb[0].mxu0
        %6458 = vmatprep.mubr.bf16.mxu0 0
        %6459 = vmatmul.mubr.bf16.gmra.mrb[0].mxu0 %v6226
        %v6460 = vpop.f32.mrb[0].mxu0
        %v6461 = vadd.f32 0.0, %v6460
        %v6462 = vpop.f32.mrb[0].mxu0
        %v6463 = vpop.f32.mrb[0].mxu0
        %v6464 = vadd.f32 0.0, %v6463
        %v6465 = vpop.f32.mrb[0].mxu0
        %6466 = vmatprep.mubr.bf16.mxu0 0
        %6467 = vmatmul.mubr.bf16.gmra.mrb[0].mxu0 %v6228
        %v6468 = vpop.f32.mrb[0].mxu0
        %v6469 = vadd.f32 0.0, %v6468
        %v6470 = vpop.f32.mrb[0].mxu0
        %v6471 = vpop.f32.mrb[0].mxu0
        %v6472 = vadd.f32 0.0, %v6471
        %v6473 = vpop.f32.mrb[0].mxu0
        %6474 = vmatprep.mubr.bf16.mxu0 0
        %6475 = vmatmul.mubr.bf16.gmra.mrb[0].mxu0 %v6230
        %v6476 = vpop.f32.mrb[0].mxu0
        %v6477 = vadd.f32 0.0, %v6476
        %v6478 = vpop.f32.mrb[0].mxu0
        %v6479 = vpop.f32.mrb[0].mxu0
        %v6480 = vadd.f32 0.0, %v6479
        %v6481 = vpop.f32.mrb[0].mxu0
        %6482 = vmatprep.mubr.bf16.mxu0 0
        %6483 = vmatmul.mubr.bf16.gmra.mrb[0].mxu0 %v6232
        %v6484 = vpop.f32.mrb[0].mxu0
        %v6485 = vadd.f32 0.0, %v6484
        %v6486 = vpop.f32.mrb[0].mxu0
        %v6487 = vpop.f32.mrb[0].mxu0
        %v6488 = vadd.f32 0.0, %v6487
        %v6489 = vpop.f32.mrb[0].mxu0
        %6490 = vmatprep.mubr.bf16.mxu0 0
        %6491 = vmatmul.mubr.bf16.gmra.mrb[0].mxu0 %v6234
        %v6492 = vpop.f32.mrb[0].mxu0
        %v6493 = vadd.f32 0.0, %v6492
        %v6494 = vpop.f32.mrb[0].mxu0
        %v6495 = vpop.f32.mrb[0].mxu0
        %v6496 = vadd.f32 0.0, %v6495
        %v6497 = vpop.f32.mrb[0].mxu0
        %6498 = vmatprep.mubr.bf16.mxu0 0
        %6499 = vmatmul.mubr.bf16.gmra.mrb[0].mxu0 %v6236
        %v6500 = vpop.f32.mrb[0].mxu0
        %v6501 = vadd.f32 0.0, %v6500
        %v6502 = vpop.f32.mrb[0].mxu0
        %v6503 = vpop.f32.mrb[0].mxu0
        %v6504 = vadd.f32 0.0, %v6503
        %v6505 = vpop.f32.mrb[0].mxu0
        %6506 = vmatprep.mubr.bf16.mxu0 0
        %6507 = vmatmul.mubr.bf16.gmra.mrb[0].mxu0 %v6238
        %v6508 = vpop.f32.mrb[0].mxu0
        %v6509 = vadd.f32 0.0, %v6508
        %v6510 = vpop.f32.mrb[0].mxu0
        %v6511 = vpop.f32.mrb[0].mxu0
        %v6512 = vadd.f32 0.0, %v6511
        %v6513 = vpop.f32.mrb[0].mxu0
        %6514 = vmatprep.mubr.bf16.mxu0 0
        %6515 = vmatmul.mubr.bf16.gmra.mrb[0].mxu0 %v6240
        %v6516 = vpop.f32.mrb[0].mxu0
        %v6517 = vadd.f32 0.0, %v6516
        %v6518 = vpop.f32.mrb[0].mxu0
        %v6519 = vpop.f32.mrb[0].mxu0
        %v6520 = vadd.f32 0.0, %v6519
        %v6521 = vpop.f32.mrb[0].mxu0
        %6522 = vmatprep.mubr.bf16.mxu0 0
        %6523 = vmatmul.mubr.bf16.gmra.mrb[0].mxu0 %v6242
        %v6524 = vpop.f32.mrb[0].mxu0
        %v6525 = vadd.f32 0.0, %v6524
        %v6526 = vpop.f32.mrb[0].mxu0
        %v6527 = vpop.f32.mrb[0].mxu0
        %v6528 = vadd.f32 0.0, %v6527
        %v6529 = vpop.f32.mrb[0].mxu0
        %6530 = vmatprep.mubr.bf16.mxu0 0
        %6531 = vmatmul.mubr.bf16.gmra.mrb[0].mxu0 %v6244
        %v6532 = vpop.f32.mrb[0].mxu0
        %v6533 = vadd.f32 0.0, %v6532
        %v6534 = vpop.f32.mrb[0].mxu0
        %v6535 = vpop.f32.mrb[0].mxu0
        %v6536 = vadd.f32 0.0, %v6535
        %v6537 = vpop.f32.mrb[0].mxu0
        %6538 = vmatprep.mubr.bf16.mxu0 0
        %6539 = vmatmul.mubr.bf16.gmra.mrb[0].mxu0 %v6246
        %v6540 = vpop.f32.mrb[0].mxu0
        %v6541 = vadd.f32 0.0, %v6540
        %v6542 = vpop.f32.mrb[0].mxu0
        %v6543 = vpop.f32.mrb[0].mxu0
        %v6544 = vadd.f32 0.0, %v6543
        %v6545 = vpop.f32.mrb[0].mxu0
        %6546 = vmatprep.mubr.bf16.mxu0 0
        %6547 = vmatmul.mubr.bf16.gmra.mrb[0].mxu0 %v6248
        %v6548 = vpop.f32.mrb[0].mxu0
        %v6549 = vadd.f32 0.0, %v6548
        %v6550 = vpop.f32.mrb[0].mxu0
        %v6551 = vpop.f32.mrb[0].mxu0
        %v6552 = vadd.f32 0.0, %v6551
        %v6553 = vpop.f32.mrb[0].mxu0
        %6554 = vmatprep.mubr.bf16.mxu0 0
        %6555 = vmatmul.mubr.bf16.gmra.mrb[0].mxu0 %v6250
        %v6556 = vpop.f32.mrb[0].mxu0
        %v6557 = vadd.f32 0.0, %v6556
        %v6558 = vpop.f32.mrb[0].mxu0
        %v6559 = vpop.f32.mrb[0].mxu0
        %v6560 = vadd.f32 0.0, %v6559
        %v6561 = vpop.f32.mrb[0].mxu0
        %6562 = vmatprep.mubr.bf16.mxu0 0
        %6563 = vmatmul.mubr.bf16.gmra.mrb[0].mxu0 %v6252
        %v6564 = vpop.f32.mrb[0].mxu0
        %v6565 = vadd.f32 0.0, %v6564
        %v6566 = vpop.f32.mrb[0].mxu0
        %v6567 = vpop.f32.mrb[0].mxu0
        %v6568 = vadd.f32 0.0, %v6567
        %v6569 = vpop.f32.mrb[0].mxu0
        %6570 = vmatprep.mubr.bf16.mxu0 0
        %6571 = vmatmul.mubr.bf16.gmra.mrb[0].mxu0 %v6254
        %v6572 = vpop.f32.mrb[0].mxu0
        %v6573 = vadd.f32 0.0, %v6572
        %v6574 = vpop.f32.mrb[0].mxu0
        %v6575 = vpop.f32.mrb[0].mxu0
        %v6576 = vadd.f32 0.0, %v6575
        %v6577 = vpop.f32.mrb[0].mxu0
        %6578 = vdwg.mxu0
        %v6579 = vadd.f32 %v6101, %v6365
        %v6580 = vadd.f32 %v6102, %v6368
        %v6581 = vadd.f32 %v6103, %v6373
        %v6582 = vadd.f32 %v6104, %v6376
        %v6583 = vadd.f32 %v6105, %v6381
        %v6584 = vadd.f32 %v6106, %v6384
        %v6585 = vadd.f32 %v6107, %v6389
        %v6586 = vadd.f32 %v6108, %v6392
        %v6587 = vadd.f32 %v6109, %v6397
        %v6588 = vadd.f32 %v6110, %v6400
        %v6589 = vadd.f32 %v6111, %v6405
        %v6590 = vadd.f32 %v6112, %v6408
        %v6591 = vadd.f32 %v6113, %v6413
        %v6592 = vadd.f32 %v6114, %v6416
        %v6593 = vadd.f32 %v6115, %v6421
        %v6594 = vadd.f32 %v6116, %v6424
        %v6595 = vadd.f32 %v6117, %v6429
        %v6596 = vadd.f32 %v6118, %v6432
        %v6597 = vadd.f32 %v6119, %v6437
        %v6598 = vadd.f32 %v6120, %v6440
        %v6599 = vadd.f32 %v6121, %v6445
        %v6600 = vadd.f32 %v6122, %v6448
        %v6601 = vadd.f32 %v6123, %v6453
        %v6602 = vadd.f32 %v6124, %v6456
        %v6603 = vadd.f32 %v6125, %v6461
        %v6604 = vadd.f32 %v6126, %v6464
        %v6605 = vadd.f32 %v6127, %v6469
        %v6606 = vadd.f32 %v6128, %v6472
        %v6607 = vadd.f32 %v6129, %v6477
        %v6608 = vadd.f32 %v6130, %v6480
        %v6609 = vadd.f32 %v6131, %v6485
        %v6610 = vadd.f32 %v6132, %v6488
        %v6611 = vadd.f32 %v6133, %v6493
        %v6612 = vadd.f32 %v6134, %v6496
        %v6613 = vadd.f32 %v6135, %v6501
        %v6614 = vadd.f32 %v6136, %v6504
        %v6615 = vadd.f32 %v6137, %v6509
        %v6616 = vadd.f32 %v6138, %v6512
        %v6617 = vadd.f32 %v6139, %v6517
        %v6618 = vadd.f32 %v6140, %v6520
        %v6619 = vadd.f32 %v6141, %v6525
        %v6620 = vadd.f32 %v6142, %v6528
        %v6621 = vadd.f32 %v6143, %v6533
        %v6622 = vadd.f32 %v6144, %v6536
        %v6623 = vadd.f32 %v6145, %v6541
        %v6624 = vadd.f32 %v6146, %v6544
        %v6625 = vadd.f32 %v6147, %v6549
        %v6626 = vadd.f32 %v6148, %v6552
        %v6627 = vadd.f32 %v6149, %v6557
        %v6628 = vadd.f32 %v6150, %v6560
        %v6629 = vadd.f32 %v6151, %v6565
        %v6630 = vadd.f32 %v6152, %v6568
        %v6631 = vadd.f32 %v6153, %v6573
        %v6632 = vadd.f32 %v6154, %v6576
        %v6633 = vld [vmem:[#allocation2 + $0xf0] sm:$0x1f]
        %v6634 = vld [vmem:[#allocation8 + $0x200] sm:$0xf]
        %v6635 = vld [vmem:[#allocation8 + $0x204] sm:$0xf]
        %v6636 = vld [vmem:[#allocation8 + $0x208] sm:$0xf]
        %v6637 = vld [vmem:[#allocation8 + $0x20c] sm:$0xf]
        %v6638 = vld [vmem:[#allocation8 + $0x210] sm:$0xf]
        %v6639 = vld [vmem:[#allocation8 + $0x214] sm:$0xf]
        %v6640 = vld [vmem:[#allocation8 + $0x218] sm:$0xf]
        %v6641 = vld [vmem:[#allocation8 + $0x21c] sm:$0xf]
        %v6642 = vld [vmem:[#allocation8 + $0x220] sm:$0xf]
        %v6643 = vld [vmem:[#allocation8 + $0x224] sm:$0xf]
        %v6644 = vld [vmem:[#allocation8 + $0x228] sm:$0xf]
        %v6645 = vld [vmem:[#allocation8 + $0x22c] sm:$0xf]
        %v6646 = vld [vmem:[#allocation8 + $0x230] sm:$0xf]
        %v6647 = vld [vmem:[#allocation8 + $0x234] sm:$0xf]
        %v6648 = vld [vmem:[#allocation8 + $0x238] sm:$0xf]
        %v6649 = vld [vmem:[#allocation8 + $0x23c] sm:$0xf]
        %v6651 = vshrl.u32 %v6155, 16
        %v6653 = vrot.slane %v6651, 4
        %v6654 = vshll.u32 %v6155, 16
        %v6656 = vrot.slane %v6654, 5
        %v6657 = vor.u32 %v6653, %v6656
        %v6658 = vrot.slane %v5535, 4
        %v6659 = vrot.slane %v5538, 5
        %v6660 = vor.u32 %v6658, %v6659
        %v6661 = vsel %vm3329, %v6657, %v6660
        %v6662 = vrot.slane %v5544, 4
        %v6663 = vrot.slane %v5547, 5
        %v6664 = vor.u32 %v6662, %v6663
        %v6665 = vsel %vm3329, %v6660, %v6664
        %v6666 = vrot.slane %v5553, 4
        %v6667 = vrot.slane %v5556, 5
        %v6668 = vor.u32 %v6666, %v6667
        %v6669 = vsel %vm3329, %v6664, %v6668
        %v6670 = vrot.slane %v5562, 4
        %v6671 = vrot.slane %v5565, 5
        %v6672 = vor.u32 %v6670, %v6671
        %v6673 = vsel %vm3329, %v6668, %v6672
        %v6674 = vrot.slane %v5571, 4
        %v6675 = vrot.slane %v5574, 5
        %v6676 = vor.u32 %v6674, %v6675
        %v6677 = vsel %vm3329, %v6672, %v6676
        %v6678 = vrot.slane %v5580, 4
        %v6679 = vrot.slane %v5583, 5
        %v6680 = vor.u32 %v6678, %v6679
        %v6681 = vsel %vm3329, %v6676, %v6680
        %v6682 = vrot.slane %v5589, 4
        %v6683 = vrot.slane %v5592, 5
        %v6684 = vor.u32 %v6682, %v6683
        %v6685 = vsel %vm3329, %v6680, %v6684
        %v6686 = vrot.slane %v5598, 4
        %v6687 = vrot.slane %v5601, 5
        %v6688 = vor.u32 %v6686, %v6687
        %v6689 = vsel %vm3329, %v6684, %v6688
        %v6690 = vrot.slane %v5607, 4
        %v6691 = vrot.slane %v5610, 5
        %v6692 = vor.u32 %v6690, %v6691
        %v6693 = vsel %vm3329, %v6688, %v6692
        %v6694 = vrot.slane %v5616, 4
        %v6695 = vrot.slane %v5619, 5
        %v6696 = vor.u32 %v6694, %v6695
        %v6697 = vsel %vm3329, %v6692, %v6696
        %v6698 = vrot.slane %v5625, 4
        %v6699 = vrot.slane %v5628, 5
        %v6700 = vor.u32 %v6698, %v6699
        %v6701 = vsel %vm3329, %v6696, %v6700
        %v6702 = vrot.slane %v5634, 4
        %v6703 = vrot.slane %v5637, 5
        %v6704 = vor.u32 %v6702, %v6703
        %v6705 = vsel %vm3329, %v6700, %v6704
        %v6706 = vrot.slane %v5643, 4
        %v6707 = vrot.slane %v5646, 5
        %v6708 = vor.u32 %v6706, %v6707
        %v6709 = vsel %vm3329, %v6704, %v6708
        %v6710 = vrot.slane %v5652, 4
        %v6711 = vrot.slane %v5655, 5
        %v6712 = vor.u32 %v6710, %v6711
        %v6713 = vsel %vm3329, %v6708, %v6712
        %v6714 = vrot.slane %v5661, 4
        %v6715 = vrot.slane %v5664, 5
        %v6716 = vor.u32 %v6714, %v6715
        %v6717 = vsel %vm3329, %v6712, %v6716
        %v6718 = vrot.slane %v5670, 4
        %v6719 = vrot.slane %v5673, 5
        %v6720 = vor.u32 %v6718, %v6719
        %v6721 = vsel %vm3329, %v6716, %v6720
        %v6722 = vrot.slane %v5679, 4
        %v6723 = vrot.slane %v5682, 5
        %v6724 = vor.u32 %v6722, %v6723
        %v6725 = vsel %vm3329, %v6720, %v6724
        %v6726 = vrot.slane %v5688, 4
        %v6727 = vrot.slane %v5691, 5
        %v6728 = vor.u32 %v6726, %v6727
        %v6729 = vsel %vm3329, %v6724, %v6728
        %v6730 = vrot.slane %v5697, 4
        %v6731 = vrot.slane %v5700, 5
        %v6732 = vor.u32 %v6730, %v6731
        %v6733 = vsel %vm3329, %v6728, %v6732
        %v6734 = vrot.slane %v5706, 4
        %v6735 = vrot.slane %v5709, 5
        %v6736 = vor.u32 %v6734, %v6735
        %v6737 = vsel %vm3329, %v6732, %v6736
        %v6738 = vrot.slane %v5715, 4
        %v6739 = vrot.slane %v5718, 5
        %v6740 = vor.u32 %v6738, %v6739
        %v6741 = vsel %vm3329, %v6736, %v6740
        %v6742 = vrot.slane %v5724, 4
        %v6743 = vrot.slane %v5727, 5
        %v6744 = vor.u32 %v6742, %v6743
        %v6745 = vsel %vm3329, %v6740, %v6744
        %v6746 = vrot.slane %v5733, 4
        %v6747 = vrot.slane %v5736, 5
        %v6748 = vor.u32 %v6746, %v6747
        %v6749 = vsel %vm3329, %v6744, %v6748
        %v6750 = vrot.slane %v5742, 4
        %v6751 = vrot.slane %v5745, 5
        %v6752 = vor.u32 %v6750, %v6751
        %v6753 = vsel %vm3329, %v6748, %v6752
        %v6754 = vrot.slane %v5751, 4
        %v6755 = vrot.slane %v5754, 5
        %v6756 = vor.u32 %v6754, %v6755
        %v6757 = vsel %vm3329, %v6752, %v6756
        %v6758 = vrot.slane %v5760, 4
        %v6759 = vrot.slane %v5763, 5
        %v6760 = vor.u32 %v6758, %v6759
        %v6761 = vsel %vm3329, %v6756, %v6760
        %v6763 = vshrl.u32 %v6633, 16
        %v6765 = vrot.slane %v6763, 4
        %v6766 = vshll.u32 %v6633, 16
        %v6768 = vrot.slane %v6766, 5
        %v6769 = vor.u32 %v6765, %v6768
        %v6770 = vsel %vm3329, %v6760, %v6769
        %v6814 = vunpack.c.l.b16 %v6634
        %v6815 = vunpack.c.l.b16 %v6635
        %v6816 = vunpack.c.l.b16 %v6636
        %v6817 = vunpack.c.l.b16 %v6637
        %v6818 = vunpack.c.l.b16 %v6638
        %v6819 = vunpack.c.l.b16 %v6639
        %v6820 = vunpack.c.l.b16 %v6640
        %v6821 = vunpack.c.l.b16 %v6641
        %v6822 = vunpack.c.l.b16 %v6642
        %v6823 = vunpack.c.l.b16 %v6643
        %v6824 = vunpack.c.l.b16 %v6644
        %v6825 = vunpack.c.l.b16 %v6645
        %v6826 = vunpack.c.l.b16 %v6646
        %v6827 = vunpack.c.l.b16 %v6647
        %v6828 = vunpack.c.l.b16 %v6648
        %v6829 = vunpack.c.l.b16 %v6649
        %v6830 = vpack.c.b16 %v6815, %v6814
        %v6831 = vpack.c.b16 %v6817, %v6816
        %v6832 = vpack.c.b16 %v6819, %v6818
        %v6833 = vpack.c.b16 %v6821, %v6820
        %v6834 = vpack.c.b16 %v6823, %v6822
        %v6835 = vpack.c.b16 %v6825, %v6824
        %v6836 = vpack.c.b16 %v6827, %v6826
        %v6837 = vpack.c.b16 %v6829, %v6828
        %6846 = vmatprep.subr.bf16.mxu0 0
        %6847 = vmatpush1.bf16.msra.mxu0 %v6830
        %6848 = vmatprep.subr.bf16.mxu0 0
        %6849 = vmatpush1.bf16.msra.mxu0 %v6831
        %6850 = vmatprep.subr.bf16.mxu0 0
        %6851 = vmatpush1.bf16.msra.mxu0 %v6832
        %6852 = vmatprep.subr.bf16.mxu0 0
        %6853 = vmatpush1.bf16.msra.mxu0 %v6833
        %6854 = vmatprep.subr.bf16.mxu0 0
        %6855 = vmatpush1.bf16.msra.mxu0 %v6834
        %6856 = vmatprep.subr.bf16.mxu0 0
        %6857 = vmatpush1.bf16.msra.mxu0 %v6835
        %6858 = vmatprep.subr.bf16.mxu0 0
        %6859 = vmatpush1.bf16.msra.mxu0 %v6836
        %6860 = vmatprep.subr.bf16.mxu0 0
        %6861 = vmatpush1.bf16.msra.mxu0 %v6837
        %6862 = vmatprep.subr.bf16.mxu0 0
        %6863 = vmatpush1.bf16.msra.mxu0 0
        %6864 = vmatprep.subr.bf16.mxu0 0
        %6865 = vmatpush1.bf16.msra.mxu0 0
        %6866 = vmatprep.subr.bf16.mxu0 0
        %6867 = vmatpush1.bf16.msra.mxu0 0
        %6868 = vmatprep.subr.bf16.mxu0 0
        %6869 = vmatpush1.bf16.msra.mxu0 0
        %6870 = vmatprep.subr.bf16.mxu0 0
        %6871 = vmatpush1.bf16.msra.mxu0 0
        %6872 = vmatprep.subr.bf16.mxu0 0
        %6873 = vmatpush1.bf16.msra.mxu0 0
        %6874 = vmatprep.subr.bf16.mxu0 0
        %6875 = vmatpush1.bf16.msra.mxu0 0
        %6876 = vmatprep.subr.bf16.mxu0 0
        %6877 = vmatpush1.bf16.msra.mxu0 0
        %6878 = vmatprep.mubr.bf16.mxu0 0
        %6879 = vmatmul.mubr.bf16.gmra.mrb[0].mxu0 %v6661
        %v6880 = vpop.f32.mrb[0].mxu0
        %v6881 = vadd.f32 0.0, %v6880
        %v6882 = vpop.f32.mrb[0].mxu0
        %v6883 = vpop.f32.mrb[0].mxu0
        %v6884 = vadd.f32 0.0, %v6883
        %v6885 = vpop.f32.mrb[0].mxu0
        %6886 = vmatprep.mubr.bf16.mxu0 0
        %6887 = vmatmul.mubr.bf16.gmra.mrb[0].mxu0 %v6665
        %v6888 = vpop.f32.mrb[0].mxu0
        %v6889 = vadd.f32 0.0, %v6888
        %v6890 = vpop.f32.mrb[0].mxu0
        %v6891 = vpop.f32.mrb[0].mxu0
        %v6892 = vadd.f32 0.0, %v6891
        %v6893 = vpop.f32.mrb[0].mxu0
        %6894 = vmatprep.mubr.bf16.mxu0 0
        %6895 = vmatmul.mubr.bf16.gmra.mrb[0].mxu0 %v6669
        %v6896 = vpop.f32.mrb[0].mxu0
        %v6897 = vadd.f32 0.0, %v6896
        %v6898 = vpop.f32.mrb[0].mxu0
        %v6899 = vpop.f32.mrb[0].mxu0
        %v6900 = vadd.f32 0.0, %v6899
        %v6901 = vpop.f32.mrb[0].mxu0
        %6902 = vmatprep.mubr.bf16.mxu0 0
        %6903 = vmatmul.mubr.bf16.gmra.mrb[0].mxu0 %v6673
        %v6904 = vpop.f32.mrb[0].mxu0
        %v6905 = vadd.f32 0.0, %v6904
        %v6906 = vpop.f32.mrb[0].mxu0
        %v6907 = vpop.f32.mrb[0].mxu0
        %v6908 = vadd.f32 0.0, %v6907
        %v6909 = vpop.f32.mrb[0].mxu0
        %6910 = vmatprep.mubr.bf16.mxu0 0
        %6911 = vmatmul.mubr.bf16.gmra.mrb[0].mxu0 %v6677
        %v6912 = vpop.f32.mrb[0].mxu0
        %v6913 = vadd.f32 0.0, %v6912
        %v6914 = vpop.f32.mrb[0].mxu0
        %v6915 = vpop.f32.mrb[0].mxu0
        %v6916 = vadd.f32 0.0, %v6915
        %v6917 = vpop.f32.mrb[0].mxu0
        %6918 = vmatprep.mubr.bf16.mxu0 0
        %6919 = vmatmul.mubr.bf16.gmra.mrb[0].mxu0 %v6681
        %v6920 = vpop.f32.mrb[0].mxu0
        %v6921 = vadd.f32 0.0, %v6920
        %v6922 = vpop.f32.mrb[0].mxu0
        %v6923 = vpop.f32.mrb[0].mxu0
        %v6924 = vadd.f32 0.0, %v6923
        %v6925 = vpop.f32.mrb[0].mxu0
        %6926 = vmatprep.mubr.bf16.mxu0 0
        %6927 = vmatmul.mubr.bf16.gmra.mrb[0].mxu0 %v6685
        %v6928 = vpop.f32.mrb[0].mxu0
        %v6929 = vadd.f32 0.0, %v6928
        %v6930 = vpop.f32.mrb[0].mxu0
        %v6931 = vpop.f32.mrb[0].mxu0
        %v6932 = vadd.f32 0.0, %v6931
        %v6933 = vpop.f32.mrb[0].mxu0
        %6934 = vmatprep.mubr.bf16.mxu0 0
        %6935 = vmatmul.mubr.bf16.gmra.mrb[0].mxu0 %v6689
        %v6936 = vpop.f32.mrb[0].mxu0
        %v6937 = vadd.f32 0.0, %v6936
        %v6938 = vpop.f32.mrb[0].mxu0
        %v6939 = vpop.f32.mrb[0].mxu0
        %v6940 = vadd.f32 0.0, %v6939
        %v6941 = vpop.f32.mrb[0].mxu0
        %6942 = vmatprep.mubr.bf16.mxu0 0
        %6943 = vmatmul.mubr.bf16.gmra.mrb[0].mxu0 %v6693
        %v6944 = vpop.f32.mrb[0].mxu0
        %v6945 = vadd.f32 0.0, %v6944
        %v6946 = vpop.f32.mrb[0].mxu0
        %v6947 = vpop.f32.mrb[0].mxu0
        %v6948 = vadd.f32 0.0, %v6947
        %v6949 = vpop.f32.mrb[0].mxu0
        %6950 = vmatprep.mubr.bf16.mxu0 0
        %6951 = vmatmul.mubr.bf16.gmra.mrb[0].mxu0 %v6697
        %v6952 = vpop.f32.mrb[0].mxu0
        %v6953 = vadd.f32 0.0, %v6952
        %v6954 = vpop.f32.mrb[0].mxu0
        %v6955 = vpop.f32.mrb[0].mxu0
        %v6956 = vadd.f32 0.0, %v6955
        %v6957 = vpop.f32.mrb[0].mxu0
        %6958 = vmatprep.mubr.bf16.mxu0 0
        %6959 = vmatmul.mubr.bf16.gmra.mrb[0].mxu0 %v6701
        %v6960 = vpop.f32.mrb[0].mxu0
        %v6961 = vadd.f32 0.0, %v6960
        %v6962 = vpop.f32.mrb[0].mxu0
        %v6963 = vpop.f32.mrb[0].mxu0
        %v6964 = vadd.f32 0.0, %v6963
        %v6965 = vpop.f32.mrb[0].mxu0
        %6966 = vmatprep.mubr.bf16.mxu0 0
        %6967 = vmatmul.mubr.bf16.gmra.mrb[0].mxu0 %v6705
        %v6968 = vpop.f32.mrb[0].mxu0
        %v6969 = vadd.f32 0.0, %v6968
        %v6970 = vpop.f32.mrb[0].mxu0
        %v6971 = vpop.f32.mrb[0].mxu0
        %v6972 = vadd.f32 0.0, %v6971
        %v6973 = vpop.f32.mrb[0].mxu0
        %6974 = vmatprep.mubr.bf16.mxu0 0
        %6975 = vmatmul.mubr.bf16.gmra.mrb[0].mxu0 %v6709
        %v6976 = vpop.f32.mrb[0].mxu0
        %v6977 = vadd.f32 0.0, %v6976
        %v6978 = vpop.f32.mrb[0].mxu0
        %v6979 = vpop.f32.mrb[0].mxu0
        %v6980 = vadd.f32 0.0, %v6979
        %v6981 = vpop.f32.mrb[0].mxu0
        %6982 = vmatprep.mubr.bf16.mxu0 0
        %6983 = vmatmul.mubr.bf16.gmra.mrb[0].mxu0 %v6713
        %v6984 = vpop.f32.mrb[0].mxu0
        %v6985 = vadd.f32 0.0, %v6984
        %v6986 = vpop.f32.mrb[0].mxu0
        %v6987 = vpop.f32.mrb[0].mxu0
        %v6988 = vadd.f32 0.0, %v6987
        %v6989 = vpop.f32.mrb[0].mxu0
        %6990 = vmatprep.mubr.bf16.mxu0 0
        %6991 = vmatmul.mubr.bf16.gmra.mrb[0].mxu0 %v6717
        %v6992 = vpop.f32.mrb[0].mxu0
        %v6993 = vadd.f32 0.0, %v6992
        %v6994 = vpop.f32.mrb[0].mxu0
        %v6995 = vpop.f32.mrb[0].mxu0
        %v6996 = vadd.f32 0.0, %v6995
        %v6997 = vpop.f32.mrb[0].mxu0
        %6998 = vmatprep.mubr.bf16.mxu0 0
        %6999 = vmatmul.mubr.bf16.gmra.mrb[0].mxu0 %v6721
        %v7000 = vpop.f32.mrb[0].mxu0
        %v7001 = vadd.f32 0.0, %v7000
        %v7002 = vpop.f32.mrb[0].mxu0
        %v7003 = vpop.f32.mrb[0].mxu0
        %v7004 = vadd.f32 0.0, %v7003
        %v7005 = vpop.f32.mrb[0].mxu0
        %7006 = vmatprep.mubr.bf16.mxu0 0
        %7007 = vmatmul.mubr.bf16.gmra.mrb[0].mxu0 %v6725
        %v7008 = vpop.f32.mrb[0].mxu0
        %v7009 = vadd.f32 0.0, %v7008
        %v7010 = vpop.f32.mrb[0].mxu0
        %v7011 = vpop.f32.mrb[0].mxu0
        %v7012 = vadd.f32 0.0, %v7011
        %v7013 = vpop.f32.mrb[0].mxu0
        %7014 = vmatprep.mubr.bf16.mxu0 0
        %7015 = vmatmul.mubr.bf16.gmra.mrb[0].mxu0 %v6729
        %v7016 = vpop.f32.mrb[0].mxu0
        %v7017 = vadd.f32 0.0, %v7016
        %v7018 = vpop.f32.mrb[0].mxu0
        %v7019 = vpop.f32.mrb[0].mxu0
        %v7020 = vadd.f32 0.0, %v7019
        %v7021 = vpop.f32.mrb[0].mxu0
        %7022 = vmatprep.mubr.bf16.mxu0 0
        %7023 = vmatmul.mubr.bf16.gmra.mrb[0].mxu0 %v6733
        %v7024 = vpop.f32.mrb[0].mxu0
        %v7025 = vadd.f32 0.0, %v7024
        %v7026 = vpop.f32.mrb[0].mxu0
        %v7027 = vpop.f32.mrb[0].mxu0
        %v7028 = vadd.f32 0.0, %v7027
        %v7029 = vpop.f32.mrb[0].mxu0
        %7030 = vmatprep.mubr.bf16.mxu0 0
        %7031 = vmatmul.mubr.bf16.gmra.mrb[0].mxu0 %v6737
        %v7032 = vpop.f32.mrb[0].mxu0
        %v7033 = vadd.f32 0.0, %v7032
        %v7034 = vpop.f32.mrb[0].mxu0
        %v7035 = vpop.f32.mrb[0].mxu0
        %v7036 = vadd.f32 0.0, %v7035
        %v7037 = vpop.f32.mrb[0].mxu0
        %7038 = vmatprep.mubr.bf16.mxu0 0
        %7039 = vmatmul.mubr.bf16.gmra.mrb[0].mxu0 %v6741
        %v7040 = vpop.f32.mrb[0].mxu0
        %v7041 = vadd.f32 0.0, %v7040
        %v7042 = vpop.f32.mrb[0].mxu0
        %v7043 = vpop.f32.mrb[0].mxu0
        %v7044 = vadd.f32 0.0, %v7043
        %v7045 = vpop.f32.mrb[0].mxu0
        %7046 = vmatprep.mubr.bf16.mxu0 0
        %7047 = vmatmul.mubr.bf16.gmra.mrb[0].mxu0 %v6745
        %v7048 = vpop.f32.mrb[0].mxu0
        %v7049 = vadd.f32 0.0, %v7048
        %v7050 = vpop.f32.mrb[0].mxu0
        %v7051 = vpop.f32.mrb[0].mxu0
        %v7052 = vadd.f32 0.0, %v7051
        %v7053 = vpop.f32.mrb[0].mxu0
        %7054 = vmatprep.mubr.bf16.mxu0 0
        %7055 = vmatmul.mubr.bf16.gmra.mrb[0].mxu0 %v6749
        %v7056 = vpop.f32.mrb[0].mxu0
        %v7057 = vadd.f32 0.0, %v7056
        %v7058 = vpop.f32.mrb[0].mxu0
        %v7059 = vpop.f32.mrb[0].mxu0
        %v7060 = vadd.f32 0.0, %v7059
        %v7061 = vpop.f32.mrb[0].mxu0
        %7062 = vmatprep.mubr.bf16.mxu0 0
        %7063 = vmatmul.mubr.bf16.gmra.mrb[0].mxu0 %v6753
        %v7064 = vpop.f32.mrb[0].mxu0
        %v7065 = vadd.f32 0.0, %v7064
        %v7066 = vpop.f32.mrb[0].mxu0
        %v7067 = vpop.f32.mrb[0].mxu0
        %v7068 = vadd.f32 0.0, %v7067
        %v7069 = vpop.f32.mrb[0].mxu0
        %7070 = vmatprep.mubr.bf16.mxu0 0
        %7071 = vmatmul.mubr.bf16.gmra.mrb[0].mxu0 %v6757
        %v7072 = vpop.f32.mrb[0].mxu0
        %v7073 = vadd.f32 0.0, %v7072
        %v7074 = vpop.f32.mrb[0].mxu0
        %v7075 = vpop.f32.mrb[0].mxu0
        %v7076 = vadd.f32 0.0, %v7075
        %v7077 = vpop.f32.mrb[0].mxu0
        %7078 = vmatprep.mubr.bf16.mxu0 0
        %7079 = vmatmul.mubr.bf16.gmra.mrb[0].mxu0 %v6761
        %v7080 = vpop.f32.mrb[0].mxu0
        %v7081 = vadd.f32 0.0, %v7080
        %v7082 = vpop.f32.mrb[0].mxu0
        %v7083 = vpop.f32.mrb[0].mxu0
        %v7084 = vadd.f32 0.0, %v7083
        %v7085 = vpop.f32.mrb[0].mxu0
        %7086 = vmatprep.mubr.bf16.mxu0 0
        %7087 = vmatmul.mubr.bf16.gmra.mrb[0].mxu0 %v6770
        %v7088 = vpop.f32.mrb[0].mxu0
        %v7089 = vadd.f32 0.0, %v7088
        %v7090 = vpop.f32.mrb[0].mxu0
        %v7091 = vpop.f32.mrb[0].mxu0
        %v7092 = vadd.f32 0.0, %v7091
        %v7093 = vpop.f32.mrb[0].mxu0
        %7094 = vdwg.mxu0
        %v7095 = vadd.f32 %v6579, %v6881
        %v7096 = vadd.f32 %v6580, %v6884
        %v7097 = vadd.f32 %v6581, %v6889
        %v7098 = vadd.f32 %v6582, %v6892
        %v7099 = vadd.f32 %v6583, %v6897
        %v7100 = vadd.f32 %v6584, %v6900
        %v7101 = vadd.f32 %v6585, %v6905
        %v7102 = vadd.f32 %v6586, %v6908
        %v7103 = vadd.f32 %v6587, %v6913
        %v7104 = vadd.f32 %v6588, %v6916
        %v7105 = vadd.f32 %v6589, %v6921
        %v7106 = vadd.f32 %v6590, %v6924
        %v7107 = vadd.f32 %v6591, %v6929
        %v7108 = vadd.f32 %v6592, %v6932
        %v7109 = vadd.f32 %v6593, %v6937
        %v7110 = vadd.f32 %v6594, %v6940
        %v7111 = vadd.f32 %v6595, %v6945
        %v7112 = vadd.f32 %v6596, %v6948
        %v7113 = vadd.f32 %v6597, %v6953
        %v7114 = vadd.f32 %v6598, %v6956
        %v7115 = vadd.f32 %v6599, %v6961
        %v7116 = vadd.f32 %v6600, %v6964
        %v7117 = vadd.f32 %v6601, %v6969
        %v7118 = vadd.f32 %v6602, %v6972
        %v7119 = vadd.f32 %v6603, %v6977
        %v7120 = vadd.f32 %v6604, %v6980
        %v7121 = vadd.f32 %v6605, %v6985
        %v7122 = vadd.f32 %v6606, %v6988
        %v7123 = vadd.f32 %v6607, %v6993
        %v7124 = vadd.f32 %v6608, %v6996
        %v7125 = vadd.f32 %v6609, %v7001
        %v7126 = vadd.f32 %v6610, %v7004
        %v7127 = vadd.f32 %v6611, %v7009
        %v7128 = vadd.f32 %v6612, %v7012
        %v7129 = vadd.f32 %v6613, %v7017
        %v7130 = vadd.f32 %v6614, %v7020
        %v7131 = vadd.f32 %v6615, %v7025
        %v7132 = vadd.f32 %v6616, %v7028
        %v7133 = vadd.f32 %v6617, %v7033
        %v7134 = vadd.f32 %v6618, %v7036
        %v7135 = vadd.f32 %v6619, %v7041
        %v7136 = vadd.f32 %v6620, %v7044
        %v7137 = vadd.f32 %v6621, %v7049
        %v7138 = vadd.f32 %v6622, %v7052
        %v7139 = vadd.f32 %v6623, %v7057
        %v7140 = vadd.f32 %v6624, %v7060
        %v7141 = vadd.f32 %v6625, %v7065
        %v7142 = vadd.f32 %v6626, %v7068
        %v7143 = vadd.f32 %v6627, %v7073
        %v7144 = vadd.f32 %v6628, %v7076
        %v7145 = vadd.f32 %v6629, %v7081
        %v7146 = vadd.f32 %v6630, %v7084
        %v7147 = vadd.f32 %v6631, %v7089
        %v7148 = vadd.f32 %v6632, %v7092
        %v7149 = vld [vmem:[%s4] sm:$0x1]
        %v7151 = vlaneseq
        %v7152 = vshrl.u32 %v7151, 7
        %v7153 = vsub.s32 0, %v7152
        %v7154 = vrot.slane %v7149, %v7153
        %v7156 = vadd.f32 %v7095, %v7154
        %v7157 = vadd.f32 %v7096, %v7154
        %v7158 = vadd.f32 %v7097, %v7154
        %v7159 = vadd.f32 %v7098, %v7154
        %v7160 = vadd.f32 %v7099, %v7154
        %v7161 = vadd.f32 %v7100, %v7154
        %v7162 = vadd.f32 %v7101, %v7154
        %v7163 = vadd.f32 %v7102, %v7154
        %v7164 = vadd.f32 %v7103, %v7154
        %v7165 = vadd.f32 %v7104, %v7154
        %v7166 = vadd.f32 %v7105, %v7154
        %v7167 = vadd.f32 %v7106, %v7154
        %v7168 = vadd.f32 %v7107, %v7154
        %v7169 = vadd.f32 %v7108, %v7154
        %v7170 = vadd.f32 %v7109, %v7154
        %v7171 = vadd.f32 %v7110, %v7154
        %v7172 = vadd.f32 %v7111, %v7154
        %v7173 = vadd.f32 %v7112, %v7154
        %v7174 = vadd.f32 %v7113, %v7154
        %v7175 = vadd.f32 %v7114, %v7154
        %v7176 = vadd.f32 %v7115, %v7154
        %v7177 = vadd.f32 %v7116, %v7154
        %v7178 = vadd.f32 %v7117, %v7154
        %v7179 = vadd.f32 %v7118, %v7154
        %v7180 = vadd.f32 %v7119, %v7154
        %v7181 = vadd.f32 %v7120, %v7154
        %v7182 = vadd.f32 %v7121, %v7154
        %v7183 = vadd.f32 %v7122, %v7154
        %v7184 = vadd.f32 %v7123, %v7154
        %v7185 = vadd.f32 %v7124, %v7154
        %v7186 = vadd.f32 %v7125, %v7154
        %v7187 = vadd.f32 %v7126, %v7154
        %v7188 = vadd.f32 %v7127, %v7154
        %v7189 = vadd.f32 %v7128, %v7154
        %v7190 = vadd.f32 %v7129, %v7154
        %v7191 = vadd.f32 %v7130, %v7154
        %v7192 = vadd.f32 %v7131, %v7154
        %v7193 = vadd.f32 %v7132, %v7154
        %v7194 = vadd.f32 %v7133, %v7154
        %v7195 = vadd.f32 %v7134, %v7154
        %v7196 = vadd.f32 %v7135, %v7154
        %v7197 = vadd.f32 %v7136, %v7154
        %v7198 = vadd.f32 %v7137, %v7154
        %v7199 = vadd.f32 %v7138, %v7154
        %v7200 = vadd.f32 %v7139, %v7154
        %v7201 = vadd.f32 %v7140, %v7154
        %v7202 = vadd.f32 %v7141, %v7154
        %v7203 = vadd.f32 %v7142, %v7154
        %v7204 = vadd.f32 %v7143, %v7154
        %v7205 = vadd.f32 %v7144, %v7154
        %v7206 = vadd.f32 %v7145, %v7154
        %v7207 = vadd.f32 %v7146, %v7154
        %v7208 = vadd.f32 %v7147, %v7154
        %v7209 = vadd.f32 %v7148, %v7154
        %v7210 = vmax.f32 %v7156, 0.0
        %v7211 = vmax.f32 %v7157, 0.0
        %v7212 = vmax.f32 %v7158, 0.0
        %v7213 = vmax.f32 %v7159, 0.0
        %v7214 = vmax.f32 %v7160, 0.0
        %v7215 = vmax.f32 %v7161, 0.0
        %v7216 = vmax.f32 %v7162, 0.0
        %v7217 = vmax.f32 %v7163, 0.0
        %v7218 = vmax.f32 %v7164, 0.0
        %v7219 = vmax.f32 %v7165, 0.0
        %v7220 = vmax.f32 %v7166, 0.0
        %v7221 = vmax.f32 %v7167, 0.0
        %v7222 = vmax.f32 %v7168, 0.0
        %v7223 = vmax.f32 %v7169, 0.0
        %v7224 = vmax.f32 %v7170, 0.0
        %v7225 = vmax.f32 %v7171, 0.0
        %v7226 = vmax.f32 %v7172, 0.0
        %v7227 = vmax.f32 %v7173, 0.0
        %v7228 = vmax.f32 %v7174, 0.0
        %v7229 = vmax.f32 %v7175, 0.0
        %v7230 = vmax.f32 %v7176, 0.0
        %v7231 = vmax.f32 %v7177, 0.0
        %v7232 = vmax.f32 %v7178, 0.0
        %v7233 = vmax.f32 %v7179, 0.0
        %v7234 = vmax.f32 %v7180, 0.0
        %v7235 = vmax.f32 %v7181, 0.0
        %v7236 = vmax.f32 %v7182, 0.0
        %v7237 = vmax.f32 %v7183, 0.0
        %v7238 = vmax.f32 %v7184, 0.0
        %v7239 = vmax.f32 %v7185, 0.0
        %v7240 = vmax.f32 %v7186, 0.0
        %v7241 = vmax.f32 %v7187, 0.0
        %v7242 = vmax.f32 %v7188, 0.0
        %v7243 = vmax.f32 %v7189, 0.0
        %v7244 = vmax.f32 %v7190, 0.0
        %v7245 = vmax.f32 %v7191, 0.0
        %v7246 = vmax.f32 %v7192, 0.0
        %v7247 = vmax.f32 %v7193, 0.0
        %v7248 = vmax.f32 %v7194, 0.0
        %v7249 = vmax.f32 %v7195, 0.0
        %v7250 = vmax.f32 %v7196, 0.0
        %v7251 = vmax.f32 %v7197, 0.0
        %v7252 = vmax.f32 %v7198, 0.0
        %v7253 = vmax.f32 %v7199, 0.0
        %v7254 = vmax.f32 %v7200, 0.0
        %v7255 = vmax.f32 %v7201, 0.0
        %v7256 = vmax.f32 %v7202, 0.0
        %v7257 = vmax.f32 %v7203, 0.0
        %v7258 = vmax.f32 %v7204, 0.0
        %v7259 = vmax.f32 %v7205, 0.0
        %v7260 = vmax.f32 %v7206, 0.0
        %v7261 = vmax.f32 %v7207, 0.0
        %v7262 = vmax.f32 %v7208, 0.0
        %v7263 = vmax.f32 %v7209, 0.0
        %v7264 = vpack.c.bf16 %v7211, %v7210
        %v7265 = vpack.c.bf16 %v7213, %v7212
        %v7266 = vpack.c.bf16 %v7215, %v7214
        %v7267 = vpack.c.bf16 %v7217, %v7216
        %v7268 = vpack.c.bf16 %v7219, %v7218
        %v7269 = vpack.c.bf16 %v7221, %v7220
        %v7270 = vpack.c.bf16 %v7223, %v7222
        %v7271 = vpack.c.bf16 %v7225, %v7224
        %v7272 = vpack.c.bf16 %v7227, %v7226
        %v7273 = vpack.c.bf16 %v7229, %v7228
        %v7274 = vpack.c.bf16 %v7231, %v7230
        %v7275 = vpack.c.bf16 %v7233, %v7232
        %v7276 = vpack.c.bf16 %v7235, %v7234
        %v7277 = vpack.c.bf16 %v7237, %v7236
        %v7278 = vpack.c.bf16 %v7239, %v7238
        %v7279 = vpack.c.bf16 %v7241, %v7240
        %v7280 = vpack.c.bf16 %v7243, %v7242
        %v7281 = vpack.c.bf16 %v7245, %v7244
        %v7282 = vpack.c.bf16 %v7247, %v7246
        %v7283 = vpack.c.bf16 %v7249, %v7248
        %v7284 = vpack.c.bf16 %v7251, %v7250
        %v7285 = vpack.c.bf16 %v7253, %v7252
        %v7286 = vpack.c.bf16 %v7255, %v7254
        %v7287 = vpack.c.bf16 %v7257, %v7256
        %v7288 = vpack.c.bf16 %v7259, %v7258
        %v7289 = vpack.c.bf16 %v7261, %v7260
        %v7290 = vpack.c.bf16 %v7263, %v7262
        %v7291 = vld [vmem:[#allocation9] sm:$0xf]
        %v7292 = vld [vmem:[#allocation9 + $0x4] sm:$0xf]
        %v7293 = vld [vmem:[#allocation9 + $0x8] sm:$0xf]
        %v7294 = vld [vmem:[#allocation9 + $0xc] sm:$0xf]
        %v7295 = vld [vmem:[#allocation9 + $0x10] sm:$0xf]
        %v7296 = vld [vmem:[#allocation9 + $0x14] sm:$0xf]
        %v7297 = vld [vmem:[#allocation9 + $0x18] sm:$0xf]
        %v7298 = vld [vmem:[#allocation9 + $0x1c] sm:$0xf]
        %v7299 = vld [vmem:[#allocation9 + $0x20] sm:$0xf]
        %v7300 = vld [vmem:[#allocation9 + $0x24] sm:$0xf]
        %v7301 = vld [vmem:[#allocation9 + $0x28] sm:$0xf]
        %v7302 = vld [vmem:[#allocation9 + $0x2c] sm:$0xf]
        %v7303 = vld [vmem:[#allocation9 + $0x30] sm:$0xf]
        %v7304 = vld [vmem:[#allocation9 + $0x34] sm:$0xf]
        %v7305 = vld [vmem:[#allocation9 + $0x38] sm:$0xf]
        %v7306 = vld [vmem:[#allocation9 + $0x3c] sm:$0xf]
        %v7323 = vunpack.c.l.b16 %v7291
        %v7324 = vunpack.c.l.b16 %v7292
        %v7325 = vunpack.c.l.b16 %v7293
        %v7326 = vunpack.c.l.b16 %v7294
        %v7327 = vunpack.c.l.b16 %v7295
        %v7328 = vunpack.c.l.b16 %v7296
        %v7329 = vunpack.c.l.b16 %v7297
        %v7330 = vunpack.c.l.b16 %v7298
        %v7331 = vunpack.c.l.b16 %v7299
        %v7332 = vunpack.c.l.b16 %v7300
        %v7333 = vunpack.c.l.b16 %v7301
        %v7334 = vunpack.c.l.b16 %v7302
        %v7335 = vunpack.c.l.b16 %v7303
        %v7336 = vunpack.c.l.b16 %v7304
        %v7337 = vunpack.c.l.b16 %v7305
        %v7338 = vunpack.c.l.b16 %v7306
        %v7339 = vpack.c.b16 %v7324, %v7323
        %v7340 = vpack.c.b16 %v7326, %v7325
        %v7341 = vpack.c.b16 %v7328, %v7327
        %v7342 = vpack.c.b16 %v7330, %v7329
        %v7343 = vpack.c.b16 %v7332, %v7331
        %v7344 = vpack.c.b16 %v7334, %v7333
        %v7345 = vpack.c.b16 %v7336, %v7335
        %v7346 = vpack.c.b16 %v7338, %v7337
        %7355 = vmatprep.subr.bf16.mxu0 0
        %7356 = vmatpush1.bf16.msra.mxu0 %v7339
        %7357 = vmatprep.subr.bf16.mxu0 0
        %7358 = vmatpush1.bf16.msra.mxu0 %v7340
        %7359 = vmatprep.subr.bf16.mxu0 0
        %7360 = vmatpush1.bf16.msra.mxu0 %v7341
        %7361 = vmatprep.subr.bf16.mxu0 0
        %7362 = vmatpush1.bf16.msra.mxu0 %v7342
        %7363 = vmatprep.subr.bf16.mxu0 0
        %7364 = vmatpush1.bf16.msra.mxu0 %v7343
        %7365 = vmatprep.subr.bf16.mxu0 0
        %7366 = vmatpush1.bf16.msra.mxu0 %v7344
        %7367 = vmatprep.subr.bf16.mxu0 0
        %7368 = vmatpush1.bf16.msra.mxu0 %v7345
        %7369 = vmatprep.subr.bf16.mxu0 0
        %7370 = vmatpush1.bf16.msra.mxu0 %v7346
        %7371 = vmatprep.subr.bf16.mxu0 0
        %7372 = vmatpush1.bf16.msra.mxu0 0
        %7373 = vmatprep.subr.bf16.mxu0 0
        %7374 = vmatpush1.bf16.msra.mxu0 0
        %7375 = vmatprep.subr.bf16.mxu0 0
        %7376 = vmatpush1.bf16.msra.mxu0 0
        %7377 = vmatprep.subr.bf16.mxu0 0
        %7378 = vmatpush1.bf16.msra.mxu0 0
        %7379 = vmatprep.subr.bf16.mxu0 0
        %7380 = vmatpush1.bf16.msra.mxu0 0
        %7381 = vmatprep.subr.bf16.mxu0 0
        %7382 = vmatpush1.bf16.msra.mxu0 0
        %7383 = vmatprep.subr.bf16.mxu0 0
        %7384 = vmatpush1.bf16.msra.mxu0 0
        %7385 = vmatprep.subr.bf16.mxu0 0
        %7386 = vmatpush1.bf16.msra.mxu0 0
        %7387 = vmatprep.mubr.bf16.mxu0 0
        %7388 = vmatmul.mubr.bf16.gmra.mrb[0].mxu0 %v7264
        %v7389 = vpop.f32.mrb[0].mxu0
        %v7390 = vadd.f32 %v693, %v7389
        %v7391 = vpop.f32.mrb[0].mxu0
        %v7392 = vpop.f32.mrb[0].mxu0
        %v7393 = vadd.f32 %v697, %v7392
        %v7394 = vpop.f32.mrb[0].mxu0
        %7395 = vmatprep.mubr.bf16.mxu0 0
        %7396 = vmatmul.mubr.bf16.gmra.mrb[0].mxu0 %v7265
        %v7397 = vpop.f32.mrb[0].mxu0
        %v7398 = vadd.f32 %v703, %v7397
        %v7399 = vpop.f32.mrb[0].mxu0
        %v7400 = vpop.f32.mrb[0].mxu0
        %v7401 = vadd.f32 %v707, %v7400
        %v7402 = vpop.f32.mrb[0].mxu0
        %7403 = vmatprep.mubr.bf16.mxu0 0
        %7404 = vmatmul.mubr.bf16.gmra.mrb[0].mxu0 %v7266
        %v7405 = vpop.f32.mrb[0].mxu0
        %v7406 = vadd.f32 %v713, %v7405
        %v7407 = vpop.f32.mrb[0].mxu0
        %v7408 = vpop.f32.mrb[0].mxu0
        %v7409 = vadd.f32 %v717, %v7408
        %v7410 = vpop.f32.mrb[0].mxu0
        %7411 = vmatprep.mubr.bf16.mxu0 0
        %7412 = vmatmul.mubr.bf16.gmra.mrb[0].mxu0 %v7267
        %v7413 = vpop.f32.mrb[0].mxu0
        %v7414 = vadd.f32 %v723, %v7413
        %v7415 = vpop.f32.mrb[0].mxu0
        %v7416 = vpop.f32.mrb[0].mxu0
        %v7417 = vadd.f32 %v727, %v7416
        %v7418 = vpop.f32.mrb[0].mxu0
        %7419 = vmatprep.mubr.bf16.mxu0 0
        %7420 = vmatmul.mubr.bf16.gmra.mrb[0].mxu0 %v7268
        %v7421 = vpop.f32.mrb[0].mxu0
        %v7422 = vadd.f32 %v733, %v7421
        %v7423 = vpop.f32.mrb[0].mxu0
        %v7424 = vpop.f32.mrb[0].mxu0
        %v7425 = vadd.f32 %v737, %v7424
        %v7426 = vpop.f32.mrb[0].mxu0
        %7427 = vmatprep.mubr.bf16.mxu0 0
        %7428 = vmatmul.mubr.bf16.gmra.mrb[0].mxu0 %v7269
        %v7429 = vpop.f32.mrb[0].mxu0
        %v7430 = vadd.f32 %v743, %v7429
        %v7431 = vpop.f32.mrb[0].mxu0
        %v7432 = vpop.f32.mrb[0].mxu0
        %v7433 = vadd.f32 %v747, %v7432
        %v7434 = vpop.f32.mrb[0].mxu0
        %7435 = vmatprep.mubr.bf16.mxu0 0
        %7436 = vmatmul.mubr.bf16.gmra.mrb[0].mxu0 %v7270
        %v7437 = vpop.f32.mrb[0].mxu0
        %v7438 = vadd.f32 %v753, %v7437
        %v7439 = vpop.f32.mrb[0].mxu0
        %v7440 = vpop.f32.mrb[0].mxu0
        %v7441 = vadd.f32 %v757, %v7440
        %v7442 = vpop.f32.mrb[0].mxu0
        %7443 = vmatprep.mubr.bf16.mxu0 0
        %7444 = vmatmul.mubr.bf16.gmra.mrb[0].mxu0 %v7271
        %v7445 = vpop.f32.mrb[0].mxu0
        %v7446 = vadd.f32 %v763, %v7445
        %v7447 = vpop.f32.mrb[0].mxu0
        %v7448 = vpop.f32.mrb[0].mxu0
        %v7449 = vadd.f32 %v767, %v7448
        %v7450 = vpop.f32.mrb[0].mxu0
        %7451 = vmatprep.mubr.bf16.mxu0 0
        %7452 = vmatmul.mubr.bf16.gmra.mrb[0].mxu0 %v7272
        %v7453 = vpop.f32.mrb[0].mxu0
        %v7454 = vadd.f32 %v773, %v7453
        %v7455 = vpop.f32.mrb[0].mxu0
        %v7456 = vpop.f32.mrb[0].mxu0
        %v7457 = vadd.f32 %v777, %v7456
        %v7458 = vpop.f32.mrb[0].mxu0
        %7459 = vmatprep.mubr.bf16.mxu0 0
        %7460 = vmatmul.mubr.bf16.gmra.mrb[0].mxu0 %v7273
        %v7461 = vpop.f32.mrb[0].mxu0
        %v7462 = vadd.f32 %v783, %v7461
        %v7463 = vpop.f32.mrb[0].mxu0
        %v7464 = vpop.f32.mrb[0].mxu0
        %v7465 = vadd.f32 %v787, %v7464
        %v7466 = vpop.f32.mrb[0].mxu0
        %7467 = vmatprep.mubr.bf16.mxu0 0
        %7468 = vmatmul.mubr.bf16.gmra.mrb[0].mxu0 %v7274
        %v7469 = vpop.f32.mrb[0].mxu0
        %v7470 = vadd.f32 %v793, %v7469
        %v7471 = vpop.f32.mrb[0].mxu0
        %v7472 = vpop.f32.mrb[0].mxu0
        %v7473 = vadd.f32 %v797, %v7472
        %v7474 = vpop.f32.mrb[0].mxu0
        %7475 = vmatprep.mubr.bf16.mxu0 0
        %7476 = vmatmul.mubr.bf16.gmra.mrb[0].mxu0 %v7275
        %v7477 = vpop.f32.mrb[0].mxu0
        %v7478 = vadd.f32 %v803, %v7477
        %v7479 = vpop.f32.mrb[0].mxu0
        %v7480 = vpop.f32.mrb[0].mxu0
        %v7481 = vadd.f32 %v807, %v7480
        %v7482 = vpop.f32.mrb[0].mxu0
        %7483 = vmatprep.mubr.bf16.mxu0 0
        %7484 = vmatmul.mubr.bf16.gmra.mrb[0].mxu0 %v7276
        %v7485 = vpop.f32.mrb[0].mxu0
        %v7486 = vadd.f32 %v813, %v7485
        %v7487 = vpop.f32.mrb[0].mxu0
        %v7488 = vpop.f32.mrb[0].mxu0
        %v7489 = vadd.f32 %v817, %v7488
        %v7490 = vpop.f32.mrb[0].mxu0
        %7491 = vmatprep.mubr.bf16.mxu0 0
        %7492 = vmatmul.mubr.bf16.gmra.mrb[0].mxu0 %v7277
        %v7493 = vpop.f32.mrb[0].mxu0
        %v7494 = vadd.f32 %v823, %v7493
        %v7495 = vpop.f32.mrb[0].mxu0
        %v7496 = vpop.f32.mrb[0].mxu0
        %v7497 = vadd.f32 %v827, %v7496
        %v7498 = vpop.f32.mrb[0].mxu0
        %7499 = vmatprep.mubr.bf16.mxu0 0
        %7500 = vmatmul.mubr.bf16.gmra.mrb[0].mxu0 %v7278
        %v7501 = vpop.f32.mrb[0].mxu0
        %v7502 = vadd.f32 %v833, %v7501
        %v7503 = vpop.f32.mrb[0].mxu0
        %v7504 = vpop.f32.mrb[0].mxu0
        %v7505 = vadd.f32 %v837, %v7504
        %v7506 = vpop.f32.mrb[0].mxu0
        %7507 = vmatprep.mubr.bf16.mxu0 0
        %7508 = vmatmul.mubr.bf16.gmra.mrb[0].mxu0 %v7279
        %v7509 = vpop.f32.mrb[0].mxu0
        %v7510 = vadd.f32 %v843, %v7509
        %v7511 = vpop.f32.mrb[0].mxu0
        %v7512 = vpop.f32.mrb[0].mxu0
        %v7513 = vadd.f32 %v847, %v7512
        %v7514 = vpop.f32.mrb[0].mxu0
        %7515 = vmatprep.mubr.bf16.mxu0 0
        %7516 = vmatmul.mubr.bf16.gmra.mrb[0].mxu0 %v7280
        %v7517 = vpop.f32.mrb[0].mxu0
        %v7518 = vadd.f32 %v853, %v7517
        %v7519 = vpop.f32.mrb[0].mxu0
        %v7520 = vpop.f32.mrb[0].mxu0
        %v7521 = vadd.f32 %v857, %v7520
        %v7522 = vpop.f32.mrb[0].mxu0
        %7523 = vmatprep.mubr.bf16.mxu0 0
        %7524 = vmatmul.mubr.bf16.gmra.mrb[0].mxu0 %v7281
        %v7525 = vpop.f32.mrb[0].mxu0
        %v7526 = vadd.f32 %v863, %v7525
        %v7527 = vpop.f32.mrb[0].mxu0
        %v7528 = vpop.f32.mrb[0].mxu0
        %v7529 = vadd.f32 %v867, %v7528
        %v7530 = vpop.f32.mrb[0].mxu0
        %7531 = vmatprep.mubr.bf16.mxu0 0
        %7532 = vmatmul.mubr.bf16.gmra.mrb[0].mxu0 %v7282
        %v7533 = vpop.f32.mrb[0].mxu0
        %v7534 = vadd.f32 %v873, %v7533
        %v7535 = vpop.f32.mrb[0].mxu0
        %v7536 = vpop.f32.mrb[0].mxu0
        %v7537 = vadd.f32 %v877, %v7536
        %v7538 = vpop.f32.mrb[0].mxu0
        %7539 = vmatprep.mubr.bf16.mxu0 0
        %7540 = vmatmul.mubr.bf16.gmra.mrb[0].mxu0 %v7283
        %v7541 = vpop.f32.mrb[0].mxu0
        %v7542 = vadd.f32 %v883, %v7541
        %v7543 = vpop.f32.mrb[0].mxu0
        %v7544 = vpop.f32.mrb[0].mxu0
        %v7545 = vadd.f32 %v887, %v7544
        %v7546 = vpop.f32.mrb[0].mxu0
        %7547 = vmatprep.mubr.bf16.mxu0 0
        %7548 = vmatmul.mubr.bf16.gmra.mrb[0].mxu0 %v7284
        %v7549 = vpop.f32.mrb[0].mxu0
        %v7550 = vadd.f32 %v893, %v7549
        %v7551 = vpop.f32.mrb[0].mxu0
        %v7552 = vpop.f32.mrb[0].mxu0
        %v7553 = vadd.f32 %v897, %v7552
        %v7554 = vpop.f32.mrb[0].mxu0
        %7555 = vmatprep.mubr.bf16.mxu0 0
        %7556 = vmatmul.mubr.bf16.gmra.mrb[0].mxu0 %v7285
        %v7557 = vpop.f32.mrb[0].mxu0
        %v7558 = vadd.f32 %v903, %v7557
        %v7559 = vpop.f32.mrb[0].mxu0
        %v7560 = vpop.f32.mrb[0].mxu0
        %v7561 = vadd.f32 %v907, %v7560
        %v7562 = vpop.f32.mrb[0].mxu0
        %7563 = vmatprep.mubr.bf16.mxu0 0
        %7564 = vmatmul.mubr.bf16.gmra.mrb[0].mxu0 %v7286
        %v7565 = vpop.f32.mrb[0].mxu0
        %v7566 = vadd.f32 %v913, %v7565
        %v7567 = vpop.f32.mrb[0].mxu0
        %v7568 = vpop.f32.mrb[0].mxu0
        %v7569 = vadd.f32 %v917, %v7568
        %v7570 = vpop.f32.mrb[0].mxu0
        %7571 = vmatprep.mubr.bf16.mxu0 0
        %7572 = vmatmul.mubr.bf16.gmra.mrb[0].mxu0 %v7287
        %v7573 = vpop.f32.mrb[0].mxu0
        %v7574 = vadd.f32 %v923, %v7573
        %v7575 = vpop.f32.mrb[0].mxu0
        %v7576 = vpop.f32.mrb[0].mxu0
        %v7577 = vadd.f32 %v927, %v7576
        %v7578 = vpop.f32.mrb[0].mxu0
        %7579 = vmatprep.mubr.bf16.mxu0 0
        %7580 = vmatmul.mubr.bf16.gmra.mrb[0].mxu0 %v7288
        %v7581 = vpop.f32.mrb[0].mxu0
        %v7582 = vadd.f32 %v933, %v7581
        %v7583 = vpop.f32.mrb[0].mxu0
        %v7584 = vpop.f32.mrb[0].mxu0
        %v7585 = vadd.f32 %v937, %v7584
        %v7586 = vpop.f32.mrb[0].mxu0
        %7587 = vmatprep.mubr.bf16.mxu0 0
        %7588 = vmatmul.mubr.bf16.gmra.mrb[0].mxu0 %v7289
        %v7589 = vpop.f32.mrb[0].mxu0
        %v7590 = vadd.f32 %v943, %v7589
        %v7591 = vpop.f32.mrb[0].mxu0
        %v7592 = vpop.f32.mrb[0].mxu0
        %v7593 = vadd.f32 %v947, %v7592
        %v7594 = vpop.f32.mrb[0].mxu0
        %7595 = vmatprep.mubr.bf16.mxu0 0
        %7596 = vmatmul.mubr.bf16.gmra.mrb[0].mxu0 %v7290
        %v7597 = vpop.f32.mrb[0].mxu0
        %v7598 = vadd.f32 %v953, %v7597
        %v7599 = vpop.f32.mrb[0].mxu0
        %v7600 = vpop.f32.mrb[0].mxu0
        %v7601 = vadd.f32 %v957, %v7600
        %v7602 = vpop.f32.mrb[0].mxu0
        %7603 = vdwg.mxu0
        %v7604 = vld [vmem:[%s6] sm:$0x1]
        %v7606 = vlaneseq
        %v7607 = vshrl.u32 %v7606, 7
        %v7608 = vsub.s32 0, %v7607
        %v7609 = vrot.slane %v7604, %v7608
        %v7611 = vadd.f32 %v7390, %v7609
        %v7612 = vadd.f32 %v7393, %v7609
        %v7613 = vadd.f32 %v7398, %v7609
        %v7614 = vadd.f32 %v7401, %v7609
        %v7615 = vadd.f32 %v7406, %v7609
        %v7616 = vadd.f32 %v7409, %v7609
        %v7617 = vadd.f32 %v7414, %v7609
        %v7618 = vadd.f32 %v7417, %v7609
        %v7619 = vadd.f32 %v7422, %v7609
        %v7620 = vadd.f32 %v7425, %v7609
        %v7621 = vadd.f32 %v7430, %v7609
        %v7622 = vadd.f32 %v7433, %v7609
        %v7623 = vadd.f32 %v7438, %v7609
        %v7624 = vadd.f32 %v7441, %v7609
        %v7625 = vadd.f32 %v7446, %v7609
        %v7626 = vadd.f32 %v7449, %v7609
        %v7627 = vadd.f32 %v7454, %v7609
        %v7628 = vadd.f32 %v7457, %v7609
        %v7629 = vadd.f32 %v7462, %v7609
        %v7630 = vadd.f32 %v7465, %v7609
        %v7631 = vadd.f32 %v7470, %v7609
        %v7632 = vadd.f32 %v7473, %v7609
        %v7633 = vadd.f32 %v7478, %v7609
        %v7634 = vadd.f32 %v7481, %v7609
        %v7635 = vadd.f32 %v7486, %v7609
        %v7636 = vadd.f32 %v7489, %v7609
        %v7637 = vadd.f32 %v7494, %v7609
        %v7638 = vadd.f32 %v7497, %v7609
        %v7639 = vadd.f32 %v7502, %v7609
        %v7640 = vadd.f32 %v7505, %v7609
        %v7641 = vadd.f32 %v7510, %v7609
        %v7642 = vadd.f32 %v7513, %v7609
        %v7643 = vadd.f32 %v7518, %v7609
        %v7644 = vadd.f32 %v7521, %v7609
        %v7645 = vadd.f32 %v7526, %v7609
        %v7646 = vadd.f32 %v7529, %v7609
        %v7647 = vadd.f32 %v7534, %v7609
        %v7648 = vadd.f32 %v7537, %v7609
        %v7649 = vadd.f32 %v7542, %v7609
        %v7650 = vadd.f32 %v7545, %v7609
        %v7651 = vadd.f32 %v7550, %v7609
        %v7652 = vadd.f32 %v7553, %v7609
        %v7653 = vadd.f32 %v7558, %v7609
        %v7654 = vadd.f32 %v7561, %v7609
        %v7655 = vadd.f32 %v7566, %v7609
        %v7656 = vadd.f32 %v7569, %v7609
        %v7657 = vadd.f32 %v7574, %v7609
        %v7658 = vadd.f32 %v7577, %v7609
        %v7659 = vadd.f32 %v7582, %v7609
        %v7660 = vadd.f32 %v7585, %v7609
        %v7661 = vadd.f32 %v7590, %v7609
        %v7662 = vadd.f32 %v7593, %v7609
        %v7663 = vadd.f32 %v7598, %v7609
        %v7664 = vadd.f32 %v7601, %v7609
        %v7665 = vmax.f32 %v7611, 0.0
        %v7666 = vmax.f32 %v7612, 0.0
        %v7667 = vmax.f32 %v7613, 0.0
        %v7668 = vmax.f32 %v7614, 0.0
        %v7669 = vmax.f32 %v7615, 0.0
        %v7670 = vmax.f32 %v7616, 0.0
        %v7671 = vmax.f32 %v7617, 0.0
        %v7672 = vmax.f32 %v7618, 0.0
        %v7673 = vmax.f32 %v7619, 0.0
        %v7674 = vmax.f32 %v7620, 0.0
        %v7675 = vmax.f32 %v7621, 0.0
        %v7676 = vmax.f32 %v7622, 0.0
        %v7677 = vmax.f32 %v7623, 0.0
        %v7678 = vmax.f32 %v7624, 0.0
        %v7679 = vmax.f32 %v7625, 0.0
        %v7680 = vmax.f32 %v7626, 0.0
        %v7681 = vmax.f32 %v7627, 0.0
        %v7682 = vmax.f32 %v7628, 0.0
        %v7683 = vmax.f32 %v7629, 0.0
        %v7684 = vmax.f32 %v7630, 0.0
        %v7685 = vmax.f32 %v7631, 0.0
        %v7686 = vmax.f32 %v7632, 0.0
        %v7687 = vmax.f32 %v7633, 0.0
        %v7688 = vmax.f32 %v7634, 0.0
        %v7689 = vmax.f32 %v7635, 0.0
        %v7690 = vmax.f32 %v7636, 0.0
        %v7691 = vmax.f32 %v7637, 0.0
        %v7692 = vmax.f32 %v7638, 0.0
        %v7693 = vmax.f32 %v7639, 0.0
        %v7694 = vmax.f32 %v7640, 0.0
        %v7695 = vmax.f32 %v7641, 0.0
        %v7696 = vmax.f32 %v7642, 0.0
        %v7697 = vmax.f32 %v7643, 0.0
        %v7698 = vmax.f32 %v7644, 0.0
        %v7699 = vmax.f32 %v7645, 0.0
        %v7700 = vmax.f32 %v7646, 0.0
        %v7701 = vmax.f32 %v7647, 0.0
        %v7702 = vmax.f32 %v7648, 0.0
        %v7703 = vmax.f32 %v7649, 0.0
        %v7704 = vmax.f32 %v7650, 0.0
        %v7705 = vmax.f32 %v7651, 0.0
        %v7706 = vmax.f32 %v7652, 0.0
        %v7707 = vmax.f32 %v7653, 0.0
        %v7708 = vmax.f32 %v7654, 0.0
        %v7709 = vmax.f32 %v7655, 0.0
        %v7710 = vmax.f32 %v7656, 0.0
        %v7711 = vmax.f32 %v7657, 0.0
        %v7712 = vmax.f32 %v7658, 0.0
        %v7713 = vmax.f32 %v7659, 0.0
        %v7714 = vmax.f32 %v7660, 0.0
        %v7715 = vmax.f32 %v7661, 0.0
        %v7716 = vmax.f32 %v7662, 0.0
        %v7717 = vmax.f32 %v7663, 0.0
        %v7718 = vmax.f32 %v7664, 0.0
        %7719 = vst [vmem:[%s340] sm:$0xff] %v7665
        %7720 = vst [vmem:[%s340 + $0x8] sm:$0xff] %v7666
        %7721 = vst [vmem:[%s340 + $0x10] sm:$0xff] %v7667
        %7722 = vst [vmem:[%s340 + $0x18] sm:$0xff] %v7668
        %7723 = vst [vmem:[%s340 + $0x20] sm:$0xff] %v7669
        %7724 = vst [vmem:[%s340 + $0x28] sm:$0xff] %v7670
        %7725 = vst [vmem:[%s340 + $0x30] sm:$0xff] %v7671
        %7726 = vst [vmem:[%s340 + $0x38] sm:$0xff] %v7672
        %7727 = vst [vmem:[%s340 + $0x40] sm:$0xff] %v7673
        %7728 = vst [vmem:[%s340 + $0x48] sm:$0xff] %v7674
        %7729 = vst [vmem:[%s340 + $0x50] sm:$0xff] %v7675
        %7730 = vst [vmem:[%s340 + $0x58] sm:$0xff] %v7676
        %7731 = vst [vmem:[%s340 + $0x60] sm:$0xff] %v7677
        %7732 = vst [vmem:[%s340 + $0x68] sm:$0xff] %v7678
        %7733 = vst [vmem:[%s340 + $0x70] sm:$0xff] %v7679
        %7734 = vst [vmem:[%s340 + $0x78] sm:$0xff] %v7680
        %7735 = vst [vmem:[%s340 + $0x80] sm:$0xff] %v7681
        %7736 = vst [vmem:[%s340 + $0x88] sm:$0xff] %v7682
        %7737 = vst [vmem:[%s340 + $0x90] sm:$0xff] %v7683
        %7738 = vst [vmem:[%s340 + $0x98] sm:$0xff] %v7684
        %7739 = vst [vmem:[%s340 + $0xa0] sm:$0xff] %v7685
        %7740 = vst [vmem:[%s340 + $0xa8] sm:$0xff] %v7686
        %7741 = vst [vmem:[%s340 + $0xb0] sm:$0xff] %v7687
        %7742 = vst [vmem:[%s340 + $0xb8] sm:$0xff] %v7688
        %7743 = vst [vmem:[%s340 + $0xc0] sm:$0xff] %v7689
        %7744 = vst [vmem:[%s340 + $0xc8] sm:$0xff] %v7690
        %7745 = vst [vmem:[%s340 + $0xd0] sm:$0xff] %v7691
        %7746 = vst [vmem:[%s340 + $0xd8] sm:$0xff] %v7692
        %7747 = vst [vmem:[%s340 + $0xe0] sm:$0xff] %v7693
        %7748 = vst [vmem:[%s340 + $0xe8] sm:$0xff] %v7694
        %7749 = vst [vmem:[%s340 + $0xf0] sm:$0xff] %v7695
        %7750 = vst [vmem:[%s340 + $0xf8] sm:$0xff] %v7696
        %7751 = vst [vmem:[%s340 + $0x100] sm:$0xff] %v7697
        %7752 = vst [vmem:[%s340 + $0x108] sm:$0xff] %v7698
        %7753 = vst [vmem:[%s340 + $0x110] sm:$0xff] %v7699
        %7754 = vst [vmem:[%s340 + $0x118] sm:$0xff] %v7700
        %7755 = vst [vmem:[%s340 + $0x120] sm:$0xff] %v7701
        %7756 = vst [vmem:[%s340 + $0x128] sm:$0xff] %v7702
        %7757 = vst [vmem:[%s340 + $0x130] sm:$0xff] %v7703
        %7758 = vst [vmem:[%s340 + $0x138] sm:$0xff] %v7704
        %7759 = vst [vmem:[%s340 + $0x140] sm:$0xff] %v7705
        %7760 = vst [vmem:[%s340 + $0x148] sm:$0xff] %v7706
        %7761 = vst [vmem:[%s340 + $0x150] sm:$0xff] %v7707
        %7762 = vst [vmem:[%s340 + $0x158] sm:$0xff] %v7708
        %7763 = vst [vmem:[%s340 + $0x160] sm:$0xff] %v7709
        %7764 = vst [vmem:[%s340 + $0x168] sm:$0xff] %v7710
        %7765 = vst [vmem:[%s340 + $0x170] sm:$0xff] %v7711
        %7766 = vst [vmem:[%s340 + $0x178] sm:$0xff] %v7712
        %7767 = vst [vmem:[%s340 + $0x180] sm:$0xff] %v7713
        %7768 = vst [vmem:[%s340 + $0x188] sm:$0xff] %v7714
        %7769 = vst [vmem:[%s340 + $0x190] sm:$0xff] %v7715
        %7770 = vst [vmem:[%s340 + $0x198] sm:$0xff] %v7716
        %7771 = vst [vmem:[%s340 + $0x1a0] sm:$0xff] %v7717
        %7772 = vst [vmem:[%s340 + $0x1a8] sm:$0xff] %v7718
        %s7773 = sand.u32 %s186, 1
        %s7774 = scalar_lea.sflag [#allocation5], %s7773
        %s7775 = sand.u32 %s186, 1
        %s7776 = smul.addr %s7775, 432
        %s7777 = scalar_lea.vmem [#allocation11], %s7776
        // Predicated region
        $region65: #{tpu_custom_call.1} parent=47 // pred_check
          %p7778 = pneg %p196
        $region66: #{tpu_custom_call.1} parent=47 // pred_check_branch
          %7780 = sbr.rel (%p7778) target = $region68
        $region67: #{tpu_custom_call.1} parent=47 // pred_region
          %s7781 = smul.u32 54, %s26
          %s7783 = ssub.s32 6912, 6912
          %7784 = vsyncadd %s7774, %s7783
          %s7785 = smul.addr %s7781, 128
          %s7786 = scalar_lea.hbm %s7, %s7785
          %s7787 = sshll.u32 %s7777, 4
          %s7788 = int_to_ptr.vmem [resolvable:$true] %s7787
          %7793 = dma.vmem_to_hbm [thread:$0]  %s7788, 6912, %s7786, %s7774, 128, 128, 8
        $region68: #{tpu_custom_call.1} parent=47 // pred_fallthru
          _
      $region48: #{tpu_custom_call.1} parent=5 // pred_fallthru
        _
      %p7794 = scmp.le.s32.totalorder 2, %s21
      // Predicated region
      $region69: #{tpu_custom_call.1} parent=5 // pred_check
        %p7795 = pneg %p7794
      $region70: #{tpu_custom_call.1} parent=5 // pred_check_branch
        %7797 = sbr.rel (%p7795) target = $region72
      $region71: #{tpu_custom_call.1} parent=5 // pred_region
        %s7798 = ssub.s32 %s21, 2
        // Predicated region
        $region73: #{tpu_custom_call.1} parent=71 // pred_check
          %p7799 = pneg %p202
        $region74: #{tpu_custom_call.1} parent=71 // pred_check_branch
          %7801 = sbr.rel (%p7799) target = $region76
        $region75: #{tpu_custom_call.1} parent=71 // pred_region
          %s7802 = sand.u32 %s187, 1
          %s7803 = scalar_lea.sflag [#allocation5], %s7802
          %s7804 = sand.u32 %s187, 1
          %s7805 = smul.addr %s7804, 432
          %s7806 = scalar_lea.vmem [#allocation11], %s7805
          %7807 = dma.done %s7803, 6912
        $region76: #{tpu_custom_call.1} parent=71 // pred_fallthru
          _
      $region72: #{tpu_custom_call.1} parent=5 // pred_fallthru
        _
    $region6: #{tpu_custom_call.1} parent=1 // loop_footer
      %s25 = sadd.s32 1, %s21
    $region7: #{tpu_custom_call.1} parent=1 // loop_footer_branch
      %20 = sbr.rel target = $region3
    $region8: #{tpu_custom_call.1} parent=1 // loop_exit
      _
    %7808 = vsyncpa [#allocation4], 1
    %s7809 = scalar_lea.sflag [#allocation4], 1
    %7810 = vsyncpa %s7809, 1
    %7811 = vsyncpa [#allocation7], 1
    %7812 = vsyncpa [#allocation10], 1
    %7813 = vsyncpa [#allocation5], 1
    %s7814 = scalar_lea.sflag [#allocation5], 1
    %7815 = vsyncpa %s7814, 1

</llo_original>
